<compile_context>
chip_gen: v5e
topology: v5e:2x2
jax: 0.10.0
libtpu: 0.0.40
codegen_flags: <defaults>
</compile_context>

<pallas_src>
import jax
import jax.numpy as jnp
import numpy as np
from jax.experimental import pallas as pl
from jax.experimental.pallas import tpu as pltpu

_LANE = 128   # lane width: channel padding target
_LPAD = 16    # left pad in the W-staging scratch == bf16 sublane tile (16,128)


def _round_up(x, m):
    return (x + m - 1) // m * m


def _double_conv_kernel(x_ref, w1_ref, b1_ref, w2_ref, b2_ref, o_ref,
                        stage_ref, acc_ref):
    """One batch element per grid step.

    x_ref    : (1, H, W, Cp)            bf16 channel-padded NHWC input tile
    w1_ref   : (9, Cp, Cp)              bf16 per-tap conv1 weights (t = dy*3+dx)
    b1_ref   : (1, Cp)                  f32  conv1 bias
    w2_ref   : (9, Cp, Cp)              bf16 per-tap conv2 weights
    b2_ref   : (1, Cp)                  f32  conv2 bias
    o_ref    : (1, H, W, Cp)            bf16 output tile
    stage_ref: (H+2, W + 2*_LPAD, Cp)   bf16 haloed staging scratch
    acc_ref  : (H*W, Cp)                f32  matmul accumulator
    """
    H = o_ref.shape[1]
    W = o_ref.shape[2]
    Cp = o_ref.shape[3]

    # Zero the 1-element halo border once per grid step (the interior data
    # writes below never touch it, so it stays zero for both convs; re-zeroing
    # every step keeps it correct when the grid is sharded across TensorCores).
    stage_ref[0:1, :, :] = jnp.zeros((1, W + 2 * _LPAD, Cp), jnp.bfloat16)
    stage_ref[H + 1:H + 2, :, :] = jnp.zeros((1, W + 2 * _LPAD, Cp), jnp.bfloat16)
    stage_ref[1:H + 1, _LPAD - 1:_LPAD, :] = jnp.zeros((H, 1, Cp), jnp.bfloat16)
    stage_ref[1:H + 1, _LPAD + W:_LPAD + W + 1, :] = jnp.zeros((H, 1, Cp), jnp.bfloat16)

    def conv3x3_relu(act_hwc, w_ref, b_ref):
        # act_hwc: (H, W, Cp) bf16 -> (H*W, Cp) f32 after bias + ReLU.
        # Stage the activation in the scratch interior.  Row offset 1 is on the
        # untiled major axis; column offset _LPAD=16 is a bf16 (16,128) tile
        # boundary, so this bulk write is an unmasked store.
        stage_ref[1:H + 1, _LPAD:_LPAD + W, :] = act_hwc

        # 9 accumulating per-tap matmuls; each tap is a static slice of the
        # staging scratch (no concatenation, no patch materialization).
        acc_ref[...] = jnp.zeros_like(acc_ref)
        for dy in range(3):
            for dx in range(3):
                tap = stage_ref[dy:dy + H,
                                _LPAD - 1 + dx:_LPAD - 1 + dx + W,
                                :].reshape(H * W, Cp)
                acc_ref[...] += jnp.dot(tap, w_ref[dy * 3 + dx],
                                        preferred_element_type=jnp.float32)

        # Bias + ReLU in f32 on the accumulator (VPU; no bf16 elementwise work).
        return jnp.maximum(acc_ref[...] + b_ref[...], 0.0)

    mid = conv3x3_relu(x_ref[0], w1_ref, b1_ref)                     # (H*W, Cp) f32
    mid_hwc = mid.reshape(H, W, Cp).astype(jnp.bfloat16)
    out = conv3x3_relu(mid_hwc, w2_ref, b2_ref)                      # (H*W, Cp) f32
    o_ref[0] = out.reshape(H, W, Cp).astype(o_ref.dtype)


def double_conv_pallas(x_nchw, w1_oihw, b1, w2_oihw, b2):
    """Forward pass of DoubleConv.  x_nchw: (B, Cin, H, W) float32 (NCHW)."""
    B, Cin, H, W = x_nchw.shape
    Cout = w1_oihw.shape[0]
    Cp = _round_up(max(Cin, Cout, 1), _LANE)

    # NCHW -> NHWC + channel padding to a lane-dense multiple of 128, bf16 for
    # the MXU.  (In an NHWC pipeline with >=128 channels these wrapper ops
    # disappear; kept only to honour the PyTorch NCHW interface.)
    x = jnp.transpose(x_nchw, (0, 2, 3, 1)).astype(jnp.bfloat16)
    x = jnp.pad(x, ((0, 0), (0, 0), (0, 0), (0, Cp - Cin)))

    def prep_w(w_oihw, cin):
        # OIHW -> (kh, kw, cin, cout) -> channel-pad -> (9, Cp, Cp) with
        # tap index t = kh*3 + kw, matching the in-kernel (dy, dx) loop.
        w = jnp.transpose(w_oihw, (2, 3, 1, 0)).astype(jnp.bfloat16)
        w = jnp.pad(w, ((0, 0), (0, 0), (0, Cp - cin), (0, Cp - Cout)))
        return w.reshape(9, Cp, Cp)

    w1p = prep_w(w1_oihw, Cin)
    w2p = prep_w(w2_oihw, Cout)
    b1p = jnp.pad(b1.astype(jnp.float32), (0, Cp - Cout)).reshape(1, Cp)
    b2p = jnp.pad(b2.astype(jnp.float32), (0, Cp - Cout)).reshape(1, Cp)

    # Advisory cost estimate (real matmul flops + HBM bytes touched).
    flops = 2 * 2 * B * H * W * 9 * Cp * Cp                  # two convs
    bytes_accessed = (x.size * 2 + w1p.size * 2 + w2p.size * 2
                      + b1p.size * 4 + b2p.size * 4
                      + B * H * W * Cp * 2)                   # bf16 output
    cost = pl.CostEstimate(flops=flops, transcendentals=0,
                           bytes_accessed=bytes_accessed)

    out_nhwc = pl.pallas_call(
        _double_conv_kernel,
        out_shape=jax.ShapeDtypeStruct((B, H, W, Cp), jnp.bfloat16),
        grid_spec=pltpu.PrefetchScalarGridSpec(
            num_scalar_prefetch=0,
            grid=(B,),
            in_specs=[
                pl.BlockSpec((1, H, W, Cp), lambda b: (b, 0, 0, 0)),
                pl.BlockSpec((9, Cp, Cp), lambda b: (0, 0, 0)),   # VMEM-resident
                pl.BlockSpec((1, Cp), lambda b: (0, 0)),
                pl.BlockSpec((9, Cp, Cp), lambda b: (0, 0, 0)),   # VMEM-resident
                pl.BlockSpec((1, Cp), lambda b: (0, 0)),
            ],
            out_specs=pl.BlockSpec((1, H, W, Cp), lambda b: (b, 0, 0, 0)),
            scratch_shapes=[
                pltpu.VMEM((H + 2, W + 2 * _LPAD, Cp), jnp.bfloat16),  # staging
                pltpu.VMEM((H * W, Cp), jnp.float32),                  # accumulator
            ],
        ),
        compiler_params=pltpu.CompilerParams(
            dimension_semantics=("parallel",)),
        cost_estimate=cost,
    )(x, w1p, b1p, w2p, b2p)

    # Drop channel padding, upcast, back to NCHW.
    return jnp.transpose(out_nhwc[..., :Cout].astype(jnp.float32), (0, 3, 1, 2))


def _ref_double_conv(x_nchw, w1_oihw, b1, w2_oihw, b2):
    """Pure-JAX reference (lax conv) for correctness checking."""
    dn = ("NCHW", "OIHW", "NCHW")
    y = jax.lax.conv_general_dilated(x_nchw, w1_oihw, (1, 1), "SAME",
                                     dimension_numbers=dn)
    y = jax.nn.relu(y + b1[None, :, None, None])
    y = jax.lax.conv_general_dilated(y, w2_oihw, (1, 1), "SAME",
                                     dimension_numbers=dn)
    return jax.nn.relu(y + b2[None, :, None, None])


if __name__ == "__main__":
    B, Cin, Cout, H, W = 2, 4, 8, 16, 16

    key = jax.random.PRNGKey(0)
    kx, kw1, kb1, kw2, kb2 = jax.random.split(key, 5)

    x = jax.random.normal(kx, (B, Cin, H, W), dtype=jnp.float32)

    # PyTorch-style uniform(-1/sqrt(fan_in), +1/sqrt(fan_in)) init.
    fan1 = Cin * 3 * 3
    bound1 = 1.0 / np.sqrt(fan1)
    w1 = jax.random.uniform(kw1, (Cout, Cin, 3, 3), jnp.float32, -bound1, bound1)
    b1 = jax.random.uniform(kb1, (Cout,), jnp.float32, -bound1, bound1)

    fan2 = Cout * 3 * 3
    bound2 = 1.0 / np.sqrt(fan2)
    w2 = jax.random.uniform(kw2, (Cout, Cout, 3, 3), jnp.float32, -bound2, bound2)
    b2 = jax.random.uniform(kb2, (Cout,), jnp.float32, -bound2, bound2)

    out = double_conv_pallas(x, w1, b1, w2, b2)
    out = jax.block_until_ready(out)

    ref = _ref_double_conv(x, w1, b1, w2, b2)
    # bf16 activations/weights/intermediate with f32 accumulation -> loosened tol.
    np.testing.assert_allclose(np.asarray(out), np.asarray(ref),
                               rtol=2e-2, atol=2e-2)

    print("KERNEL_OK")
</pallas_src>

<mosaic_0001>
module attributes {stable_mosaic.version = 11 : i64} {
  func.func @_double_conv_kernel(%arg0: i32, %arg1: memref<1x16x16x128xbf16, #tpu.memory_space<vmem>>, %arg2: memref<9x128x128xbf16, #tpu.memory_space<vmem>>, %arg3: memref<1x128xf32, #tpu.memory_space<vmem>>, %arg4: memref<9x128x128xbf16, #tpu.memory_space<vmem>>, %arg5: memref<1x128xf32, #tpu.memory_space<vmem>>, %arg6: memref<1x16x16x128xbf16, #tpu.memory_space<vmem>>, %arg7: memref<18x48x128xbf16, #tpu.memory_space<vmem>>, %arg8: memref<256x128xf32, #tpu.memory_space<vmem>>) attributes {dimension_semantics = [#tpu.dimension_semantics<parallel>], iteration_bounds = array<i64: 2>, scalar_prefetch = 0 : i64, scratch_operands = 2 : i64, tpu.core_type = #tpu.core_type<tc>, window_params = [{transform_indices = @transform_0, window_bounds = array<i64: 1, 16, 16, 128>}, {pipeline_mode = #tpu.pipeline_mode<synchronous>, transform_indices = @transform_1, window_bounds = array<i64: 9, 128, 128>}, {pipeline_mode = #tpu.pipeline_mode<synchronous>, transform_indices = @transform_2, window_bounds = array<i64: 1, 128>}, {pipeline_mode = #tpu.pipeline_mode<synchronous>, transform_indices = @transform_3, window_bounds = array<i64: 9, 128, 128>}, {pipeline_mode = #tpu.pipeline_mode<synchronous>, transform_indices = @transform_4, window_bounds = array<i64: 1, 128>}, {transform_indices = @transform_5, window_bounds = array<i64: 1, 16, 16, 128>}]} {
    %cst = arith.constant 0.000000e+00 : bf16
    %0 = vector.broadcast %cst : bf16 to vector<1x48x128xbf16>
    %c0 = arith.constant 0 : index
    %c0_0 = arith.constant 0 : index
    %c0_1 = arith.constant 0 : index
    %1 = vector.load %arg7[%c0, %c0_0, %c0_1] : memref<18x48x128xbf16, #tpu.memory_space<vmem>>, vector<1x48x128xbf16>
    tpu.vector_store %arg7[%c0, %c0_0, %c0_1], %0 {strides = array<i32>} : memref<18x48x128xbf16, #tpu.memory_space<vmem>>, vector<1x48x128xbf16>,
    %cst_2 = arith.constant 0.000000e+00 : bf16
    %2 = vector.broadcast %cst_2 : bf16 to vector<1x48x128xbf16>
    %c17 = arith.constant 17 : index
    %c0_3 = arith.constant 0 : index
    %c0_4 = arith.constant 0 : index
    %3 = vector.load %arg7[%c17, %c0_3, %c0_4] : memref<18x48x128xbf16, #tpu.memory_space<vmem>>, vector<1x48x128xbf16>
    tpu.vector_store %arg7[%c17, %c0_3, %c0_4], %2 {strides = array<i32>} : memref<18x48x128xbf16, #tpu.memory_space<vmem>>, vector<1x48x128xbf16>,
    %cst_5 = arith.constant 0.000000e+00 : bf16
    %4 = vector.broadcast %cst_5 : bf16 to vector<16x1x128xbf16>
    %c1 = arith.constant 1 : index
    %c15 = arith.constant 15 : index
    %c0_6 = arith.constant 0 : index
    %5 = vector.load %arg7[%c1, %c15, %c0_6] : memref<18x48x128xbf16, #tpu.memory_space<vmem>>, vector<16x1x128xbf16>
    tpu.vector_store %arg7[%c1, %c15, %c0_6], %4 {strides = array<i32>} : memref<18x48x128xbf16, #tpu.memory_space<vmem>>, vector<16x1x128xbf16>,
    %cst_7 = arith.constant 0.000000e+00 : bf16
    %6 = vector.broadcast %cst_7 : bf16 to vector<16x1x128xbf16>
    %c1_8 = arith.constant 1 : index
    %c32 = arith.constant 32 : index
    %c0_9 = arith.constant 0 : index
    %7 = vector.load %arg7[%c1_8, %c32, %c0_9] : memref<18x48x128xbf16, #tpu.memory_space<vmem>>, vector<16x1x128xbf16>
    tpu.vector_store %arg7[%c1_8, %c32, %c0_9], %6 {strides = array<i32>} : memref<18x48x128xbf16, #tpu.memory_space<vmem>>, vector<16x1x128xbf16>,
    %c0_10 = arith.constant 0 : index
    %c0_11 = arith.constant 0 : index
    %c0_12 = arith.constant 0 : index
    %c0_13 = arith.constant 0 : index
    %8 = vector.load %arg1[%c0_10, %c0_11, %c0_12, %c0_13] : memref<1x16x16x128xbf16, #tpu.memory_space<vmem>>, vector<1x16x16x128xbf16>
    %9 = vector.shape_cast %8 : vector<1x16x16x128xbf16> to vector<16x16x128xbf16>
    %c1_14 = arith.constant 1 : index
    %c16 = arith.constant 16 : index
    %c0_15 = arith.constant 0 : index
    %10 = vector.load %arg7[%c1_14, %c16, %c0_15] : memref<18x48x128xbf16, #tpu.memory_space<vmem>>, vector<16x16x128xbf16>
    tpu.vector_store %arg7[%c1_14, %c16, %c0_15], %9 {strides = array<i32>} : memref<18x48x128xbf16, #tpu.memory_space<vmem>>, vector<16x16x128xbf16>,
    %cst_16 = arith.constant 0.000000e+00 : f32
    %11 = vector.broadcast %cst_16 : f32 to vector<256x128xf32>
    %c0_17 = arith.constant 0 : index
    %c0_18 = arith.constant 0 : index
    %12 = vector.load %arg8[%c0_17, %c0_18] : memref<256x128xf32, #tpu.memory_space<vmem>>, vector<256x128xf32>
    tpu.vector_store %arg8[%c0_17, %c0_18], %11 {strides = array<i32>} : memref<256x128xf32, #tpu.memory_space<vmem>>, vector<256x128xf32>,
    %c0_19 = arith.constant 0 : index
    %c15_20 = arith.constant 15 : index
    %c0_21 = arith.constant 0 : index
    %13 = vector.load %arg7[%c0_19, %c15_20, %c0_21] : memref<18x48x128xbf16, #tpu.memory_space<vmem>>, vector<16x16x128xbf16>
    %14 = vector.shape_cast %13 : vector<16x16x128xbf16> to vector<256x128xbf16>
    %c0_22 = arith.constant 0 : index
    %c0_23 = arith.constant 0 : index
    %15 = vector.load %arg8[%c0_22, %c0_23] : memref<256x128xf32, #tpu.memory_space<vmem>>, vector<256x128xf32>
    %c0_24 = arith.constant 0 : index
    %c0_25 = arith.constant 0 : index
    %c0_26 = arith.constant 0 : index
    %16 = vector.load %arg2[%c0_24, %c0_25, %c0_26] : memref<9x128x128xbf16, #tpu.memory_space<vmem>>, vector<1x128x128xbf16>
    %17 = vector.shape_cast %16 : vector<1x128x128xbf16> to vector<128x128xbf16>
    %cst_27 = arith.constant dense<0.000000e+00> : vector<256x128xf32>
    %18 = tpu.matmul %14, %17, %cst_27 {dimension_numbers = #tpu.dot_dimension_numbers<[1], [0], [0], [1], [0, 0, 1, 1], [], []>} : vector<256x128xbf16>, vector<128x128xbf16>, vector<256x128xf32> -> vector<256x128xf32>
    %19 = arith.addf %15, %18 : vector<256x128xf32>
    %c0_28 = arith.constant 0 : index
    %c0_29 = arith.constant 0 : index
    %20 = vector.load %arg8[%c0_28, %c0_29] : memref<256x128xf32, #tpu.memory_space<vmem>>, vector<256x128xf32>
    tpu.vector_store %arg8[%c0_28, %c0_29], %19 {strides = array<i32>} : memref<256x128xf32, #tpu.memory_space<vmem>>, vector<256x128xf32>,
    %c0_30 = arith.constant 0 : index
    %c16_31 = arith.constant 16 : index
    %c0_32 = arith.constant 0 : index
    %21 = vector.load %arg7[%c0_30, %c16_31, %c0_32] : memref<18x48x128xbf16, #tpu.memory_space<vmem>>, vector<16x16x128xbf16>
    %22 = vector.shape_cast %21 : vector<16x16x128xbf16> to vector<256x128xbf16>
    %c0_33 = arith.constant 0 : index
    %c0_34 = arith.constant 0 : index
    %23 = vector.load %arg8[%c0_33, %c0_34] : memref<256x128xf32, #tpu.memory_space<vmem>>, vector<256x128xf32>
    %c1_35 = arith.constant 1 : index
    %c0_36 = arith.constant 0 : index
    %c0_37 = arith.constant 0 : index
    %24 = vector.load %arg2[%c1_35, %c0_36, %c0_37] : memref<9x128x128xbf16, #tpu.memory_space<vmem>>, vector<1x128x128xbf16>
    %25 = vector.shape_cast %24 : vector<1x128x128xbf16> to vector<128x128xbf16>
    %cst_38 = arith.constant dense<0.000000e+00> : vector<256x128xf32>
    %26 = tpu.matmul %22, %25, %cst_38 {dimension_numbers = #tpu.dot_dimension_numbers<[1], [0], [0], [1], [0, 0, 1, 1], [], []>} : vector<256x128xbf16>, vector<128x128xbf16>, vector<256x128xf32> -> vector<256x128xf32>
    %27 = arith.addf %23, %26 : vector<256x128xf32>
    %c0_39 = arith.constant 0 : index
    %c0_40 = arith.constant 0 : index
    %28 = vector.load %arg8[%c0_39, %c0_40] : memref<256x128xf32, #tpu.memory_space<vmem>>, vector<256x128xf32>
    tpu.vector_store %arg8[%c0_39, %c0_40], %27 {strides = array<i32>} : memref<256x128xf32, #tpu.memory_space<vmem>>, vector<256x128xf32>,
    %c0_41 = arith.constant 0 : index
    %c17_42 = arith.constant 17 : index
    %c0_43 = arith.constant 0 : index
    %29 = vector.load %arg7[%c0_41, %c17_42, %c0_43] : memref<18x48x128xbf16, #tpu.memory_space<vmem>>, vector<16x16x128xbf16>
    %30 = vector.shape_cast %29 : vector<16x16x128xbf16> to vector<256x128xbf16>
    %c0_44 = arith.constant 0 : index
    %c0_45 = arith.constant 0 : index
    %31 = vector.load %arg8[%c0_44, %c0_45] : memref<256x128xf32, #tpu.memory_space<vmem>>, vector<256x128xf32>
    %c2 = arith.constant 2 : index
    %c0_46 = arith.constant 0 : index
    %c0_47 = arith.constant 0 : index
    %32 = vector.load %arg2[%c2, %c0_46, %c0_47] : memref<9x128x128xbf16, #tpu.memory_space<vmem>>, vector<1x128x128xbf16>
    %33 = vector.shape_cast %32 : vector<1x128x128xbf16> to vector<128x128xbf16>
    %cst_48 = arith.constant dense<0.000000e+00> : vector<256x128xf32>
    %34 = tpu.matmul %30, %33, %cst_48 {dimension_numbers = #tpu.dot_dimension_numbers<[1], [0], [0], [1], [0, 0, 1, 1], [], []>} : vector<256x128xbf16>, vector<128x128xbf16>, vector<256x128xf32> -> vector<256x128xf32>
    %35 = arith.addf %31, %34 : vector<256x128xf32>
    %c0_49 = arith.constant 0 : index
    %c0_50 = arith.constant 0 : index
    %36 = vector.load %arg8[%c0_49, %c0_50] : memref<256x128xf32, #tpu.memory_space<vmem>>, vector<256x128xf32>
    tpu.vector_store %arg8[%c0_49, %c0_50], %35 {strides = array<i32>} : memref<256x128xf32, #tpu.memory_space<vmem>>, vector<256x128xf32>,
    %c1_51 = arith.constant 1 : index
    %c15_52 = arith.constant 15 : index
    %c0_53 = arith.constant 0 : index
    %37 = vector.load %arg7[%c1_51, %c15_52, %c0_53] : memref<18x48x128xbf16, #tpu.memory_space<vmem>>, vector<16x16x128xbf16>
    %38 = vector.shape_cast %37 : vector<16x16x128xbf16> to vector<256x128xbf16>
    %c0_54 = arith.constant 0 : index
    %c0_55 = arith.constant 0 : index
    %39 = vector.load %arg8[%c0_54, %c0_55] : memref<256x128xf32, #tpu.memory_space<vmem>>, vector<256x128xf32>
    %c3 = arith.constant 3 : index
    %c0_56 = arith.constant 0 : index
    %c0_57 = arith.constant 0 : index
    %40 = vector.load %arg2[%c3, %c0_56, %c0_57] : memref<9x128x128xbf16, #tpu.memory_space<vmem>>, vector<1x128x128xbf16>
    %41 = vector.shape_cast %40 : vector<1x128x128xbf16> to vector<128x128xbf16>
    %cst_58 = arith.constant dense<0.000000e+00> : vector<256x128xf32>
    %42 = tpu.matmul %38, %41, %cst_58 {dimension_numbers = #tpu.dot_dimension_numbers<[1], [0], [0], [1], [0, 0, 1, 1], [], []>} : vector<256x128xbf16>, vector<128x128xbf16>, vector<256x128xf32> -> vector<256x128xf32>
    %43 = arith.addf %39, %42 : vector<256x128xf32>
    %c0_59 = arith.constant 0 : index
    %c0_60 = arith.constant 0 : index
    %44 = vector.load %arg8[%c0_59, %c0_60] : memref<256x128xf32, #tpu.memory_space<vmem>>, vector<256x128xf32>
    tpu.vector_store %arg8[%c0_59, %c0_60], %43 {strides = array<i32>} : memref<256x128xf32, #tpu.memory_space<vmem>>, vector<256x128xf32>,
    %c1_61 = arith.constant 1 : index
    %c16_62 = arith.constant 16 : index
    %c0_63 = arith.constant 0 : index
    %45 = vector.load %arg7[%c1_61, %c16_62, %c0_63] : memref<18x48x128xbf16, #tpu.memory_space<vmem>>, vector<16x16x128xbf16>
    %46 = vector.shape_cast %45 : vector<16x16x128xbf16> to vector<256x128xbf16>
    %c0_64 = arith.constant 0 : index
    %c0_65 = arith.constant 0 : index
    %47 = vector.load %arg8[%c0_64, %c0_65] : memref<256x128xf32, #tpu.memory_space<vmem>>, vector<256x128xf32>
    %c4 = arith.constant 4 : index
    %c0_66 = arith.constant 0 : index
    %c0_67 = arith.constant 0 : index
    %48 = vector.load %arg2[%c4, %c0_66, %c0_67] : memref<9x128x128xbf16, #tpu.memory_space<vmem>>, vector<1x128x128xbf16>
    %49 = vector.shape_cast %48 : vector<1x128x128xbf16> to vector<128x128xbf16>
    %cst_68 = arith.constant dense<0.000000e+00> : vector<256x128xf32>
    %50 = tpu.matmul %46, %49, %cst_68 {dimension_numbers = #tpu.dot_dimension_numbers<[1], [0], [0], [1], [0, 0, 1, 1], [], []>} : vector<256x128xbf16>, vector<128x128xbf16>, vector<256x128xf32> -> vector<256x128xf32>
    %51 = arith.addf %47, %50 : vector<256x128xf32>
    %c0_69 = arith.constant 0 : index
    %c0_70 = arith.constant 0 : index
    %52 = vector.load %arg8[%c0_69, %c0_70] : memref<256x128xf32, #tpu.memory_space<vmem>>, vector<256x128xf32>
    tpu.vector_store %arg8[%c0_69, %c0_70], %51 {strides = array<i32>} : memref<256x128xf32, #tpu.memory_space<vmem>>, vector<256x128xf32>,
    %c1_71 = arith.constant 1 : index
    %c17_72 = arith.constant 17 : index
    %c0_73 = arith.constant 0 : index
    %53 = vector.load %arg7[%c1_71, %c17_72, %c0_73] : memref<18x48x128xbf16, #tpu.memory_space<vmem>>, vector<16x16x128xbf16>
    %54 = vector.shape_cast %53 : vector<16x16x128xbf16> to vector<256x128xbf16>
    %c0_74 = arith.constant 0 : index
    %c0_75 = arith.constant 0 : index
    %55 = vector.load %arg8[%c0_74, %c0_75] : memref<256x128xf32, #tpu.memory_space<vmem>>, vector<256x128xf32>
    %c5 = arith.constant 5 : index
    %c0_76 = arith.constant 0 : index
    %c0_77 = arith.constant 0 : index
    %56 = vector.load %arg2[%c5, %c0_76, %c0_77] : memref<9x128x128xbf16, #tpu.memory_space<vmem>>, vector<1x128x128xbf16>
    %57 = vector.shape_cast %56 : vector<1x128x128xbf16> to vector<128x128xbf16>
    %cst_78 = arith.constant dense<0.000000e+00> : vector<256x128xf32>
    %58 = tpu.matmul %54, %57, %cst_78 {dimension_numbers = #tpu.dot_dimension_numbers<[1], [0], [0], [1], [0, 0, 1, 1], [], []>} : vector<256x128xbf16>, vector<128x128xbf16>, vector<256x128xf32> -> vector<256x128xf32>
    %59 = arith.addf %55, %58 : vector<256x128xf32>
    %c0_79 = arith.constant 0 : index
    %c0_80 = arith.constant 0 : index
    %60 = vector.load %arg8[%c0_79, %c0_80] : memref<256x128xf32, #tpu.memory_space<vmem>>, vector<256x128xf32>
    tpu.vector_store %arg8[%c0_79, %c0_80], %59 {strides = array<i32>} : memref<256x128xf32, #tpu.memory_space<vmem>>, vector<256x128xf32>,
    %c2_81 = arith.constant 2 : index
    %c15_82 = arith.constant 15 : index
    %c0_83 = arith.constant 0 : index
    %61 = vector.load %arg7[%c2_81, %c15_82, %c0_83] : memref<18x48x128xbf16, #tpu.memory_space<vmem>>, vector<16x16x128xbf16>
    %62 = vector.shape_cast %61 : vector<16x16x128xbf16> to vector<256x128xbf16>
    %c0_84 = arith.constant 0 : index
    %c0_85 = arith.constant 0 : index
    %63 = vector.load %arg8[%c0_84, %c0_85] : memref<256x128xf32, #tpu.memory_space<vmem>>, vector<256x128xf32>
    %c6 = arith.constant 6 : index
    %c0_86 = arith.constant 0 : index
    %c0_87 = arith.constant 0 : index
    %64 = vector.load %arg2[%c6, %c0_86, %c0_87] : memref<9x128x128xbf16, #tpu.memory_space<vmem>>, vector<1x128x128xbf16>
    %65 = vector.shape_cast %64 : vector<1x128x128xbf16> to vector<128x128xbf16>
    %cst_88 = arith.constant dense<0.000000e+00> : vector<256x128xf32>
    %66 = tpu.matmul %62, %65, %cst_88 {dimension_numbers = #tpu.dot_dimension_numbers<[1], [0], [0], [1], [0, 0, 1, 1], [], []>} : vector<256x128xbf16>, vector<128x128xbf16>, vector<256x128xf32> -> vector<256x128xf32>
    %67 = arith.addf %63, %66 : vector<256x128xf32>
    %c0_89 = arith.constant 0 : index
    %c0_90 = arith.constant 0 : index
    %68 = vector.load %arg8[%c0_89, %c0_90] : memref<256x128xf32, #tpu.memory_space<vmem>>, vector<256x128xf32>
    tpu.vector_store %arg8[%c0_89, %c0_90], %67 {strides = array<i32>} : memref<256x128xf32, #tpu.memory_space<vmem>>, vector<256x128xf32>,
    %c2_91 = arith.constant 2 : index
    %c16_92 = arith.constant 16 : index
    %c0_93 = arith.constant 0 : index
    %69 = vector.load %arg7[%c2_91, %c16_92, %c0_93] : memref<18x48x128xbf16, #tpu.memory_space<vmem>>, vector<16x16x128xbf16>
    %70 = vector.shape_cast %69 : vector<16x16x128xbf16> to vector<256x128xbf16>
    %c0_94 = arith.constant 0 : index
    %c0_95 = arith.constant 0 : index
    %71 = vector.load %arg8[%c0_94, %c0_95] : memref<256x128xf32, #tpu.memory_space<vmem>>, vector<256x128xf32>
    %c7 = arith.constant 7 : index
    %c0_96 = arith.constant 0 : index
    %c0_97 = arith.constant 0 : index
    %72 = vector.load %arg2[%c7, %c0_96, %c0_97] : memref<9x128x128xbf16, #tpu.memory_space<vmem>>, vector<1x128x128xbf16>
    %73 = vector.shape_cast %72 : vector<1x128x128xbf16> to vector<128x128xbf16>
    %cst_98 = arith.constant dense<0.000000e+00> : vector<256x128xf32>
    %74 = tpu.matmul %70, %73, %cst_98 {dimension_numbers = #tpu.dot_dimension_numbers<[1], [0], [0], [1], [0, 0, 1, 1], [], []>} : vector<256x128xbf16>, vector<128x128xbf16>, vector<256x128xf32> -> vector<256x128xf32>
    %75 = arith.addf %71, %74 : vector<256x128xf32>
    %c0_99 = arith.constant 0 : index
    %c0_100 = arith.constant 0 : index
    %76 = vector.load %arg8[%c0_99, %c0_100] : memref<256x128xf32, #tpu.memory_space<vmem>>, vector<256x128xf32>
    tpu.vector_store %arg8[%c0_99, %c0_100], %75 {strides = array<i32>} : memref<256x128xf32, #tpu.memory_space<vmem>>, vector<256x128xf32>,
    %c2_101 = arith.constant 2 : index
    %c17_102 = arith.constant 17 : index
    %c0_103 = arith.constant 0 : index
    %77 = vector.load %arg7[%c2_101, %c17_102, %c0_103] : memref<18x48x128xbf16, #tpu.memory_space<vmem>>, vector<16x16x128xbf16>
    %78 = vector.shape_cast %77 : vector<16x16x128xbf16> to vector<256x128xbf16>
    %c0_104 = arith.constant 0 : index
    %c0_105 = arith.constant 0 : index
    %79 = vector.load %arg8[%c0_104, %c0_105] : memref<256x128xf32, #tpu.memory_space<vmem>>, vector<256x128xf32>
    %c8 = arith.constant 8 : index
    %c0_106 = arith.constant 0 : index
    %c0_107 = arith.constant 0 : index
    %80 = vector.load %arg2[%c8, %c0_106, %c0_107] : memref<9x128x128xbf16, #tpu.memory_space<vmem>>, vector<1x128x128xbf16>
    %81 = vector.shape_cast %80 : vector<1x128x128xbf16> to vector<128x128xbf16>
    %cst_108 = arith.constant dense<0.000000e+00> : vector<256x128xf32>
    %82 = tpu.matmul %78, %81, %cst_108 {dimension_numbers = #tpu.dot_dimension_numbers<[1], [0], [0], [1], [0, 0, 1, 1], [], []>} : vector<256x128xbf16>, vector<128x128xbf16>, vector<256x128xf32> -> vector<256x128xf32>
    %83 = arith.addf %79, %82 : vector<256x128xf32>
    %c0_109 = arith.constant 0 : index
    %c0_110 = arith.constant 0 : index
    %84 = vector.load %arg8[%c0_109, %c0_110] : memref<256x128xf32, #tpu.memory_space<vmem>>, vector<256x128xf32>
    tpu.vector_store %arg8[%c0_109, %c0_110], %83 {strides = array<i32>} : memref<256x128xf32, #tpu.memory_space<vmem>>, vector<256x128xf32>,
    %c0_111 = arith.constant 0 : index
    %c0_112 = arith.constant 0 : index
    %85 = vector.load %arg8[%c0_111, %c0_112] : memref<256x128xf32, #tpu.memory_space<vmem>>, vector<256x128xf32>
    %c0_113 = arith.constant 0 : index
    %c0_114 = arith.constant 0 : index
    %86 = vector.load %arg3[%c0_113, %c0_114] : memref<1x128xf32, #tpu.memory_space<vmem>>, vector<1x128xf32>
    %87 = vector.broadcast %86 : vector<1x128xf32> to vector<256x128xf32>
    %88 = arith.addf %85, %87 : vector<256x128xf32>
    %cst_115 = arith.constant 0.000000e+00 : f32
    %89 = vector.broadcast %cst_115 : f32 to vector<256x128xf32>
    %90 = arith.maximumf %88, %89 : vector<256x128xf32>
    %91 = vector.shape_cast %90 : vector<256x128xf32> to vector<16x16x128xf32>
    %92 = arith.truncf %91 : vector<16x16x128xf32> to vector<16x16x128xbf16>
    %c1_116 = arith.constant 1 : index
    %c16_117 = arith.constant 16 : index
    %c0_118 = arith.constant 0 : index
    %93 = vector.load %arg7[%c1_116, %c16_117, %c0_118] : memref<18x48x128xbf16, #tpu.memory_space<vmem>>, vector<16x16x128xbf16>
    tpu.vector_store %arg7[%c1_116, %c16_117, %c0_118], %92 {strides = array<i32>} : memref<18x48x128xbf16, #tpu.memory_space<vmem>>, vector<16x16x128xbf16>,
    %cst_119 = arith.constant 0.000000e+00 : f32
    %94 = vector.broadcast %cst_119 : f32 to vector<256x128xf32>
    %c0_120 = arith.constant 0 : index
    %c0_121 = arith.constant 0 : index
    %95 = vector.load %arg8[%c0_120, %c0_121] : memref<256x128xf32, #tpu.memory_space<vmem>>, vector<256x128xf32>
    tpu.vector_store %arg8[%c0_120, %c0_121], %94 {strides = array<i32>} : memref<256x128xf32, #tpu.memory_space<vmem>>, vector<256x128xf32>,
    %c0_122 = arith.constant 0 : index
    %c15_123 = arith.constant 15 : index
    %c0_124 = arith.constant 0 : index
    %96 = vector.load %arg7[%c0_122, %c15_123, %c0_124] : memref<18x48x128xbf16, #tpu.memory_space<vmem>>, vector<16x16x128xbf16>
    %97 = vector.shape_cast %96 : vector<16x16x128xbf16> to vector<256x128xbf16>
    %c0_125 = arith.constant 0 : index
    %c0_126 = arith.constant 0 : index
    %98 = vector.load %arg8[%c0_125, %c0_126] : memref<256x128xf32, #tpu.memory_space<vmem>>, vector<256x128xf32>
    %c0_127 = arith.constant 0 : index
    %c0_128 = arith.constant 0 : index
    %c0_129 = arith.constant 0 : index
    %99 = vector.load %arg4[%c0_127, %c0_128, %c0_129] : memref<9x128x128xbf16, #tpu.memory_space<vmem>>, vector<1x128x128xbf16>
    %100 = vector.shape_cast %99 : vector<1x128x128xbf16> to vector<128x128xbf16>
    %cst_130 = arith.constant dense<0.000000e+00> : vector<256x128xf32>
    %101 = tpu.matmul %97, %100, %cst_130 {dimension_numbers = #tpu.dot_dimension_numbers<[1], [0], [0], [1], [0, 0, 1, 1], [], []>} : vector<256x128xbf16>, vector<128x128xbf16>, vector<256x128xf32> -> vector<256x128xf32>
    %102 = arith.addf %98, %101 : vector<256x128xf32>
    %c0_131 = arith.constant 0 : index
    %c0_132 = arith.constant 0 : index
    %103 = vector.load %arg8[%c0_131, %c0_132] : memref<256x128xf32, #tpu.memory_space<vmem>>, vector<256x128xf32>
    tpu.vector_store %arg8[%c0_131, %c0_132], %102 {strides = array<i32>} : memref<256x128xf32, #tpu.memory_space<vmem>>, vector<256x128xf32>,
    %c0_133 = arith.constant 0 : index
    %c16_134 = arith.constant 16 : index
    %c0_135 = arith.constant 0 : index
    %104 = vector.load %arg7[%c0_133, %c16_134, %c0_135] : memref<18x48x128xbf16, #tpu.memory_space<vmem>>, vector<16x16x128xbf16>
    %105 = vector.shape_cast %104 : vector<16x16x128xbf16> to vector<256x128xbf16>
    %c0_136 = arith.constant 0 : index
    %c0_137 = arith.constant 0 : index
    %106 = vector.load %arg8[%c0_136, %c0_137] : memref<256x128xf32, #tpu.memory_space<vmem>>, vector<256x128xf32>
    %c1_138 = arith.constant 1 : index
    %c0_139 = arith.constant 0 : index
    %c0_140 = arith.constant 0 : index
    %107 = vector.load %arg4[%c1_138, %c0_139, %c0_140] : memref<9x128x128xbf16, #tpu.memory_space<vmem>>, vector<1x128x128xbf16>
    %108 = vector.shape_cast %107 : vector<1x128x128xbf16> to vector<128x128xbf16>
    %cst_141 = arith.constant dense<0.000000e+00> : vector<256x128xf32>
    %109 = tpu.matmul %105, %108, %cst_141 {dimension_numbers = #tpu.dot_dimension_numbers<[1], [0], [0], [1], [0, 0, 1, 1], [], []>} : vector<256x128xbf16>, vector<128x128xbf16>, vector<256x128xf32> -> vector<256x128xf32>
    %110 = arith.addf %106, %109 : vector<256x128xf32>
    %c0_142 = arith.constant 0 : index
    %c0_143 = arith.constant 0 : index
    %111 = vector.load %arg8[%c0_142, %c0_143] : memref<256x128xf32, #tpu.memory_space<vmem>>, vector<256x128xf32>
    tpu.vector_store %arg8[%c0_142, %c0_143], %110 {strides = array<i32>} : memref<256x128xf32, #tpu.memory_space<vmem>>, vector<256x128xf32>,
    %c0_144 = arith.constant 0 : index
    %c17_145 = arith.constant 17 : index
    %c0_146 = arith.constant 0 : index
    %112 = vector.load %arg7[%c0_144, %c17_145, %c0_146] : memref<18x48x128xbf16, #tpu.memory_space<vmem>>, vector<16x16x128xbf16>
    %113 = vector.shape_cast %112 : vector<16x16x128xbf16> to vector<256x128xbf16>
    %c0_147 = arith.constant 0 : index
    %c0_148 = arith.constant 0 : index
    %114 = vector.load %arg8[%c0_147, %c0_148] : memref<256x128xf32, #tpu.memory_space<vmem>>, vector<256x128xf32>
    %c2_149 = arith.constant 2 : index
    %c0_150 = arith.constant 0 : index
    %c0_151 = arith.constant 0 : index
    %115 = vector.load %arg4[%c2_149, %c0_150, %c0_151] : memref<9x128x128xbf16, #tpu.memory_space<vmem>>, vector<1x128x128xbf16>
    %116 = vector.shape_cast %115 : vector<1x128x128xbf16> to vector<128x128xbf16>
    %cst_152 = arith.constant dense<0.000000e+00> : vector<256x128xf32>
    %117 = tpu.matmul %113, %116, %cst_152 {dimension_numbers = #tpu.dot_dimension_numbers<[1], [0], [0], [1], [0, 0, 1, 1], [], []>} : vector<256x128xbf16>, vector<128x128xbf16>, vector<256x128xf32> -> vector<256x128xf32>
    %118 = arith.addf %114, %117 : vector<256x128xf32>
    %c0_153 = arith.constant 0 : index
    %c0_154 = arith.constant 0 : index
    %119 = vector.load %arg8[%c0_153, %c0_154] : memref<256x128xf32, #tpu.memory_space<vmem>>, vector<256x128xf32>
    tpu.vector_store %arg8[%c0_153, %c0_154], %118 {strides = array<i32>} : memref<256x128xf32, #tpu.memory_space<vmem>>, vector<256x128xf32>,
    %c1_155 = arith.constant 1 : index
    %c15_156 = arith.constant 15 : index
    %c0_157 = arith.constant 0 : index
    %120 = vector.load %arg7[%c1_155, %c15_156, %c0_157] : memref<18x48x128xbf16, #tpu.memory_space<vmem>>, vector<16x16x128xbf16>
    %121 = vector.shape_cast %120 : vector<16x16x128xbf16> to vector<256x128xbf16>
    %c0_158 = arith.constant 0 : index
    %c0_159 = arith.constant 0 : index
    %122 = vector.load %arg8[%c0_158, %c0_159] : memref<256x128xf32, #tpu.memory_space<vmem>>, vector<256x128xf32>
    %c3_160 = arith.constant 3 : index
    %c0_161 = arith.constant 0 : index
    %c0_162 = arith.constant 0 : index
    %123 = vector.load %arg4[%c3_160, %c0_161, %c0_162] : memref<9x128x128xbf16, #tpu.memory_space<vmem>>, vector<1x128x128xbf16>
    %124 = vector.shape_cast %123 : vector<1x128x128xbf16> to vector<128x128xbf16>
    %cst_163 = arith.constant dense<0.000000e+00> : vector<256x128xf32>
    %125 = tpu.matmul %121, %124, %cst_163 {dimension_numbers = #tpu.dot_dimension_numbers<[1], [0], [0], [1], [0, 0, 1, 1], [], []>} : vector<256x128xbf16>, vector<128x128xbf16>, vector<256x128xf32> -> vector<256x128xf32>
    %126 = arith.addf %122, %125 : vector<256x128xf32>
    %c0_164 = arith.constant 0 : index
    %c0_165 = arith.constant 0 : index
    %127 = vector.load %arg8[%c0_164, %c0_165] : memref<256x128xf32, #tpu.memory_space<vmem>>, vector<256x128xf32>
    tpu.vector_store %arg8[%c0_164, %c0_165], %126 {strides = array<i32>} : memref<256x128xf32, #tpu.memory_space<vmem>>, vector<256x128xf32>,
    %c1_166 = arith.constant 1 : index
    %c16_167 = arith.constant 16 : index
    %c0_168 = arith.constant 0 : index
    %128 = vector.load %arg7[%c1_166, %c16_167, %c0_168] : memref<18x48x128xbf16, #tpu.memory_space<vmem>>, vector<16x16x128xbf16>
    %129 = vector.shape_cast %128 : vector<16x16x128xbf16> to vector<256x128xbf16>
    %c0_169 = arith.constant 0 : index
    %c0_170 = arith.constant 0 : index
    %130 = vector.load %arg8[%c0_169, %c0_170] : memref<256x128xf32, #tpu.memory_space<vmem>>, vector<256x128xf32>
    %c4_171 = arith.constant 4 : index
    %c0_172 = arith.constant 0 : index
    %c0_173 = arith.constant 0 : index
    %131 = vector.load %arg4[%c4_171, %c0_172, %c0_173] : memref<9x128x128xbf16, #tpu.memory_space<vmem>>, vector<1x128x128xbf16>
    %132 = vector.shape_cast %131 : vector<1x128x128xbf16> to vector<128x128xbf16>
    %cst_174 = arith.constant dense<0.000000e+00> : vector<256x128xf32>
    %133 = tpu.matmul %129, %132, %cst_174 {dimension_numbers = #tpu.dot_dimension_numbers<[1], [0], [0], [1], [0, 0, 1, 1], [], []>} : vector<256x128xbf16>, vector<128x128xbf16>, vector<256x128xf32> -> vector<256x128xf32>
    %134 = arith.addf %130, %133 : vector<256x128xf32>
    %c0_175 = arith.constant 0 : index
    %c0_176 = arith.constant 0 : index
    %135 = vector.load %arg8[%c0_175, %c0_176] : memref<256x128xf32, #tpu.memory_space<vmem>>, vector<256x128xf32>
    tpu.vector_store %arg8[%c0_175, %c0_176], %134 {strides = array<i32>} : memref<256x128xf32, #tpu.memory_space<vmem>>, vector<256x128xf32>,
    %c1_177 = arith.constant 1 : index
    %c17_178 = arith.constant 17 : index
    %c0_179 = arith.constant 0 : index
    %136 = vector.load %arg7[%c1_177, %c17_178, %c0_179] : memref<18x48x128xbf16, #tpu.memory_space<vmem>>, vector<16x16x128xbf16>
    %137 = vector.shape_cast %136 : vector<16x16x128xbf16> to vector<256x128xbf16>
    %c0_180 = arith.constant 0 : index
    %c0_181 = arith.constant 0 : index
    %138 = vector.load %arg8[%c0_180, %c0_181] : memref<256x128xf32, #tpu.memory_space<vmem>>, vector<256x128xf32>
    %c5_182 = arith.constant 5 : index
    %c0_183 = arith.constant 0 : index
    %c0_184 = arith.constant 0 : index
    %139 = vector.load %arg4[%c5_182, %c0_183, %c0_184] : memref<9x128x128xbf16, #tpu.memory_space<vmem>>, vector<1x128x128xbf16>
    %140 = vector.shape_cast %139 : vector<1x128x128xbf16> to vector<128x128xbf16>
    %cst_185 = arith.constant dense<0.000000e+00> : vector<256x128xf32>
    %141 = tpu.matmul %137, %140, %cst_185 {dimension_numbers = #tpu.dot_dimension_numbers<[1], [0], [0], [1], [0, 0, 1, 1], [], []>} : vector<256x128xbf16>, vector<128x128xbf16>, vector<256x128xf32> -> vector<256x128xf32>
    %142 = arith.addf %138, %141 : vector<256x128xf32>
    %c0_186 = arith.constant 0 : index
    %c0_187 = arith.constant 0 : index
    %143 = vector.load %arg8[%c0_186, %c0_187] : memref<256x128xf32, #tpu.memory_space<vmem>>, vector<256x128xf32>
    tpu.vector_store %arg8[%c0_186, %c0_187], %142 {strides = array<i32>} : memref<256x128xf32, #tpu.memory_space<vmem>>, vector<256x128xf32>,
    %c2_188 = arith.constant 2 : index
    %c15_189 = arith.constant 15 : index
    %c0_190 = arith.constant 0 : index
    %144 = vector.load %arg7[%c2_188, %c15_189, %c0_190] : memref<18x48x128xbf16, #tpu.memory_space<vmem>>, vector<16x16x128xbf16>
    %145 = vector.shape_cast %144 : vector<16x16x128xbf16> to vector<256x128xbf16>
    %c0_191 = arith.constant 0 : index
    %c0_192 = arith.constant 0 : index
    %146 = vector.load %arg8[%c0_191, %c0_192] : memref<256x128xf32, #tpu.memory_space<vmem>>, vector<256x128xf32>
    %c6_193 = arith.constant 6 : index
    %c0_194 = arith.constant 0 : index
    %c0_195 = arith.constant 0 : index
    %147 = vector.load %arg4[%c6_193, %c0_194, %c0_195] : memref<9x128x128xbf16, #tpu.memory_space<vmem>>, vector<1x128x128xbf16>
    %148 = vector.shape_cast %147 : vector<1x128x128xbf16> to vector<128x128xbf16>
    %cst_196 = arith.constant dense<0.000000e+00> : vector<256x128xf32>
    %149 = tpu.matmul %145, %148, %cst_196 {dimension_numbers = #tpu.dot_dimension_numbers<[1], [0], [0], [1], [0, 0, 1, 1], [], []>} : vector<256x128xbf16>, vector<128x128xbf16>, vector<256x128xf32> -> vector<256x128xf32>
    %150 = arith.addf %146, %149 : vector<256x128xf32>
    %c0_197 = arith.constant 0 : index
    %c0_198 = arith.constant 0 : index
    %151 = vector.load %arg8[%c0_197, %c0_198] : memref<256x128xf32, #tpu.memory_space<vmem>>, vector<256x128xf32>
    tpu.vector_store %arg8[%c0_197, %c0_198], %150 {strides = array<i32>} : memref<256x128xf32, #tpu.memory_space<vmem>>, vector<256x128xf32>,
    %c2_199 = arith.constant 2 : index
    %c16_200 = arith.constant 16 : index
    %c0_201 = arith.constant 0 : index
    %152 = vector.load %arg7[%c2_199, %c16_200, %c0_201] : memref<18x48x128xbf16, #tpu.memory_space<vmem>>, vector<16x16x128xbf16>
    %153 = vector.shape_cast %152 : vector<16x16x128xbf16> to vector<256x128xbf16>
    %c0_202 = arith.constant 0 : index
    %c0_203 = arith.constant 0 : index
    %154 = vector.load %arg8[%c0_202, %c0_203] : memref<256x128xf32, #tpu.memory_space<vmem>>, vector<256x128xf32>
    %c7_204 = arith.constant 7 : index
    %c0_205 = arith.constant 0 : index
    %c0_206 = arith.constant 0 : index
    %155 = vector.load %arg4[%c7_204, %c0_205, %c0_206] : memref<9x128x128xbf16, #tpu.memory_space<vmem>>, vector<1x128x128xbf16>
    %156 = vector.shape_cast %155 : vector<1x128x128xbf16> to vector<128x128xbf16>
    %cst_207 = arith.constant dense<0.000000e+00> : vector<256x128xf32>
    %157 = tpu.matmul %153, %156, %cst_207 {dimension_numbers = #tpu.dot_dimension_numbers<[1], [0], [0], [1], [0, 0, 1, 1], [], []>} : vector<256x128xbf16>, vector<128x128xbf16>, vector<256x128xf32> -> vector<256x128xf32>
    %158 = arith.addf %154, %157 : vector<256x128xf32>
    %c0_208 = arith.constant 0 : index
    %c0_209 = arith.constant 0 : index
    %159 = vector.load %arg8[%c0_208, %c0_209] : memref<256x128xf32, #tpu.memory_space<vmem>>, vector<256x128xf32>
    tpu.vector_store %arg8[%c0_208, %c0_209], %158 {strides = array<i32>} : memref<256x128xf32, #tpu.memory_space<vmem>>, vector<256x128xf32>,
    %c2_210 = arith.constant 2 : index
    %c17_211 = arith.constant 17 : index
    %c0_212 = arith.constant 0 : index
    %160 = vector.load %arg7[%c2_210, %c17_211, %c0_212] : memref<18x48x128xbf16, #tpu.memory_space<vmem>>, vector<16x16x128xbf16>
    %161 = vector.shape_cast %160 : vector<16x16x128xbf16> to vector<256x128xbf16>
    %c0_213 = arith.constant 0 : index
    %c0_214 = arith.constant 0 : index
    %162 = vector.load %arg8[%c0_213, %c0_214] : memref<256x128xf32, #tpu.memory_space<vmem>>, vector<256x128xf32>
    %c8_215 = arith.constant 8 : index
    %c0_216 = arith.constant 0 : index
    %c0_217 = arith.constant 0 : index
    %163 = vector.load %arg4[%c8_215, %c0_216, %c0_217] : memref<9x128x128xbf16, #tpu.memory_space<vmem>>, vector<1x128x128xbf16>
    %164 = vector.shape_cast %163 : vector<1x128x128xbf16> to vector<128x128xbf16>
    %cst_218 = arith.constant dense<0.000000e+00> : vector<256x128xf32>
    %165 = tpu.matmul %161, %164, %cst_218 {dimension_numbers = #tpu.dot_dimension_numbers<[1], [0], [0], [1], [0, 0, 1, 1], [], []>} : vector<256x128xbf16>, vector<128x128xbf16>, vector<256x128xf32> -> vector<256x128xf32>
    %166 = arith.addf %162, %165 : vector<256x128xf32>
    %c0_219 = arith.constant 0 : index
    %c0_220 = arith.constant 0 : index
    %167 = vector.load %arg8[%c0_219, %c0_220] : memref<256x128xf32, #tpu.memory_space<vmem>>, vector<256x128xf32>
    tpu.vector_store %arg8[%c0_219, %c0_220], %166 {strides = array<i32>} : memref<256x128xf32, #tpu.memory_space<vmem>>, vector<256x128xf32>,
    %c0_221 = arith.constant 0 : index
    %c0_222 = arith.constant 0 : index
    %168 = vector.load %arg8[%c0_221, %c0_222] : memref<256x128xf32, #tpu.memory_space<vmem>>, vector<256x128xf32>
    %c0_223 = arith.constant 0 : index
    %c0_224 = arith.constant 0 : index
    %169 = vector.load %arg5[%c0_223, %c0_224] : memref<1x128xf32, #tpu.memory_space<vmem>>, vector<1x128xf32>
    %170 = vector.broadcast %169 : vector<1x128xf32> to vector<256x128xf32>
    %171 = arith.addf %168, %170 : vector<256x128xf32>
    %cst_225 = arith.constant 0.000000e+00 : f32
    %172 = vector.broadcast %cst_225 : f32 to vector<256x128xf32>
    %173 = arith.maximumf %171, %172 : vector<256x128xf32>
    %174 = vector.shape_cast %173 : vector<256x128xf32> to vector<16x16x128xf32>
    %175 = arith.truncf %174 : vector<16x16x128xf32> to vector<16x16x128xbf16>
    %c0_226 = arith.constant 0 : index
    %c0_227 = arith.constant 0 : index
    %c0_228 = arith.constant 0 : index
    %c0_229 = arith.constant 0 : index
    %176 = vector.load %arg6[%c0_226, %c0_227, %c0_228, %c0_229] : memref<1x16x16x128xbf16, #tpu.memory_space<vmem>>, vector<1x16x16x128xbf16>
    %177 = vector.shape_cast %176 : vector<1x16x16x128xbf16> to vector<16x16x128xbf16>
    %178 = vector.shape_cast %175 : vector<16x16x128xbf16> to vector<1x16x16x128xbf16>
    tpu.vector_store %arg6[%c0_226, %c0_227, %c0_228, %c0_229], %178 {strides = array<i32>} : memref<1x16x16x128xbf16, #tpu.memory_space<vmem>>, vector<1x16x16x128xbf16>,
    return
  }
  func.func @transform_0(%arg0: i32) -> (i32, i32, i32, i32) {
    %c0_i32 = arith.constant 0 : i32
    %c0_i32_0 = arith.constant 0 : i32
    %c0_i32_1 = arith.constant 0 : i32
    %c0_i32_2 = arith.constant 0 : i32
    return %arg0, %c0_i32, %c0_i32_0, %c0_i32_1 : i32, i32, i32, i32
  }
  func.func @transform_1(%arg0: i32) -> (i32, i32, i32) {
    %c0_i32 = arith.constant 0 : i32
    %c0_i32_0 = arith.constant 0 : i32
    %c0_i32_1 = arith.constant 0 : i32
    %c0_i32_2 = arith.constant 0 : i32
    return %c0_i32, %c0_i32_0, %c0_i32_1 : i32, i32, i32
  }
  func.func @transform_2(%arg0: i32) -> (i32, i32) {
    %c0_i32 = arith.constant 0 : i32
    %c0_i32_0 = arith.constant 0 : i32
    %c0_i32_1 = arith.constant 0 : i32
    return %c0_i32, %c0_i32_0 : i32, i32
  }
  func.func @transform_3(%arg0: i32) -> (i32, i32, i32) {
    %c0_i32 = arith.constant 0 : i32
    %c0_i32_0 = arith.constant 0 : i32
    %c0_i32_1 = arith.constant 0 : i32
    %c0_i32_2 = arith.constant 0 : i32
    return %c0_i32, %c0_i32_0, %c0_i32_1 : i32, i32, i32
  }
  func.func @transform_4(%arg0: i32) -> (i32, i32) {
    %c0_i32 = arith.constant 0 : i32
    %c0_i32_0 = arith.constant 0 : i32
    %c0_i32_1 = arith.constant 0 : i32
    return %c0_i32, %c0_i32_0 : i32, i32
  }
  func.func @transform_5(%arg0: i32) -> (i32, i32, i32, i32) {
    %c0_i32 = arith.constant 0 : i32
    %c0_i32_0 = arith.constant 0 : i32
    %c0_i32_1 = arith.constant 0 : i32
    %c0_i32_2 = arith.constant 0 : i32
    return %arg0, %c0_i32, %c0_i32_0, %c0_i32_1 : i32, i32, i32, i32
  }
}

</mosaic_0001>

<llo_original>
// kernel: tpu_custom_call.1
$region0: #{tpu_custom_call.1}
  #allocation0 [shape = 'u32[]', space=smem, size = 0x4, offset = 0x4, fixed_abs, tag = 'smem constant byte address 0x4 - core index']
  #allocation1 [shape = 'u32[72,128]{1,0:T(1,128)}', space=vmem, size = 0x9000, scoped, tag = 'internal scratch']
  #allocation2 [shape = 'bf16[18,48,128]{2,1,0:T(8,128)(2,1)}', space=vmem, size = 0x36000, scoped, tag = 'scratch operand']
  #allocation3 [shape = 'f32[256,128]{1,0:T(8,128)}', space=vmem, size = 0x20000, scoped, tag = 'scratch operand']
  %s0 = inlined_call_operand.hbm [shape: bf16[2,16,16,128], index: 0, kind: input, shape index: {}]
  %s1 = inlined_call_operand.hbm [shape: bf16[9,128,128], index: 1, kind: input, shape index: {}]
  %s2 = inlined_call_operand.vmem [shape: f32[1,128], index: 2, kind: input, shape index: {}]
  %s3 = inlined_call_operand.hbm [shape: bf16[9,128,128], index: 3, kind: input, shape index: {}]
  %s4 = inlined_call_operand.vmem [shape: f32[1,128], index: 4, kind: input, shape index: {}]
  %s5 = inlined_call_operand.hbm [shape: bf16[2,16,16,128], index: 5, kind: output, shape index: {}]
  %s6 = sld [smem:[#allocation0]]
  $region65: #{tpu_custom_call.1} parent=0
    _
  %s8 = ssub.s32 1, %s6
  %s9 = scalar_select 0, %s8, %s6
  $region1: #{tpu_custom_call.1} parent=0
    #allocation4 [shape = 'u8[131072]{0}', space=vmem, size = 0x20000, scoped, tag = 'input window, operand 0']
    #allocation5 [shape = 's32[2]{0}', space=sflag, size = 0x8, scoped, tag = 'scoped memory for tpu_custom_call.1']
    #allocation6 [shape = 's32[2]{0}', space=sflag, size = 0x8, scoped, tag = 'scoped memory for tpu_custom_call.1']
    #allocation7 [shape = 'u8[294912]{0}', space=vmem, size = 0x48000, scoped, tag = 'input window, operand 1, single buffered']
    #allocation8 [shape = 's32[1]{0}', space=sflag, size = 0x4, scoped, tag = 'scoped memory for tpu_custom_call.1']
    #allocation9 [shape = 'u8[294912]{0}', space=vmem, size = 0x48000, scoped, tag = 'input window, operand 3, single buffered']
    #allocation10 [shape = 'u8[131072]{0}', space=vmem, size = 0x20000, scoped, tag = 'output window, operand 0']
    %10 = vsyncpa [#allocation5], 0
    %s11 = scalar_lea.sflag [#allocation5], 1
    %12 = vsyncpa %s11, 0
    %13 = vsyncpa [#allocation8], 0
    %14 = vsyncpa [#allocation6], 0
    %s15 = scalar_lea.sflag [#allocation6], 1
    %16 = vsyncpa %s15, 0
    loop: start=0, step=1, limit=4
    $region2: #{tpu_custom_call.1} parent=1 // loop_pre_header
      _
    $region3: #{tpu_custom_call.1} parent=1 // loop_header
      %s18 = sphi 0, %s22
      %p19 = scmp.ge.s32.totalorder %s18, 4
      %s28 = sphi 0, %s30
      %s31 = sphi 0, %s28
      %s32 = sphi 0, %s31
      %s48 = sphi 0, %s32
      %s52 = sphi 0, %s52
      %s54 = sphi 0, %s52
      %s55 = sphi 0, %s54
      %s69 = sphi 0, %s55
      %s73 = sphi 0, %s73
      %s75 = sphi 0, %s73
      %s76 = sphi 0, %s75
      %s90 = sphi 0, %s76
      %s94 = sphi 0, %s94
      %s96 = sphi 0, %s94
      %s97 = sphi 0, %s96
      %s111 = sphi 0, %s97
      %s115 = sphi 0, %s115
      %s117 = sphi 0, %s115
      %s118 = sphi 0, %s117
      %s132 = sphi 0, %s118
      %s138 = sphi 0, %s140
      %s141 = sphi 0, %s138
      %s142 = sphi 0, %s141
      %s158 = sphi 0, %s142
    $region4: #{tpu_custom_call.1} parent=1 // loop_header_branch
      %21 = sbr.rel (%p19) target = $region8
    $region5: #{tpu_custom_call.1} parent=1 // loop_body
      %s23 = ssub.s32 %s18, 1
      %s24 = ssub.s32 %s18, 2
      %s25 = sadd.s32 %s18, 1
      %s26 = ssub.s32 %s18, %s25
      %p27 = scmp.eq.s32.totalorder %s26, 0
      %s29 = sadd.s32 %s28, 1
      %s30 = scalar_select %p27, %s28, %s29
      %p33 = pneg %p27
      %p34 = scmp.eq.s32.totalorder %s18, 1
      %p35 = por %p33, %p34
      %p36 = scmp.ne.s32.totalorder %s28, %s31
      %p37 = scmp.eq.s32.totalorder %s18, 0
      %p38 = por %p36, %p37
      %p39 = scmp.ne.s32.totalorder %s28, %s31
      %p40 = scmp.eq.s32.totalorder %s23, 1
      %p41 = por %p39, %p40
      %p42 = scmp.ne.s32.totalorder %s31, %s32
      %p43 = scmp.eq.s32.totalorder %s23, 0
      %p44 = por %p42, %p43
      %p45 = scmp.ne.s32.totalorder %s31, %s32
      %p46 = scmp.eq.s32.totalorder %s24, 1
      %p47 = por %p45, %p46
      %p49 = scmp.ne.s32.totalorder %s32, %s48
      %p50 = scmp.eq.s32.totalorder %s24, 0
      %p51 = por %p49, %p50
      %s53 = sadd.s32 %s52, 1
      %p56 = scmp.eq.s32.totalorder %s18, 1
      %p57 = scmp.ne.s32.totalorder %s52, %s54
      %p58 = scmp.eq.s32.totalorder %s18, 0
      %p59 = por %p57, %p58
      %p60 = scmp.ne.s32.totalorder %s52, %s54
      %p61 = scmp.eq.s32.totalorder %s23, 1
      %p62 = por %p60, %p61
      %p63 = scmp.ne.s32.totalorder %s54, %s55
      %p64 = scmp.eq.s32.totalorder %s23, 0
      %p65 = por %p63, %p64
      %p66 = scmp.ne.s32.totalorder %s54, %s55
      %p67 = scmp.eq.s32.totalorder %s24, 1
      %p68 = por %p66, %p67
      %p70 = scmp.ne.s32.totalorder %s55, %s69
      %p71 = scmp.eq.s32.totalorder %s24, 0
      %p72 = por %p70, %p71
      %s74 = sadd.s32 %s73, 1
      %p77 = scmp.eq.s32.totalorder %s18, 1
      %p78 = scmp.ne.s32.totalorder %s73, %s75
      %p79 = scmp.eq.s32.totalorder %s18, 0
      %p80 = por %p78, %p79
      %p81 = scmp.ne.s32.totalorder %s73, %s75
      %p82 = scmp.eq.s32.totalorder %s23, 1
      %p83 = por %p81, %p82
      %p84 = scmp.ne.s32.totalorder %s75, %s76
      %p85 = scmp.eq.s32.totalorder %s23, 0
      %p86 = por %p84, %p85
      %p87 = scmp.ne.s32.totalorder %s75, %s76
      %p88 = scmp.eq.s32.totalorder %s24, 1
      %p89 = por %p87, %p88
      %p91 = scmp.ne.s32.totalorder %s76, %s90
      %p92 = scmp.eq.s32.totalorder %s24, 0
      %p93 = por %p91, %p92
      %s95 = sadd.s32 %s94, 1
      %p98 = scmp.eq.s32.totalorder %s18, 1
      %p99 = scmp.ne.s32.totalorder %s94, %s96
      %p100 = scmp.eq.s32.totalorder %s18, 0
      %p101 = por %p99, %p100
      %p102 = scmp.ne.s32.totalorder %s94, %s96
      %p103 = scmp.eq.s32.totalorder %s23, 1
      %p104 = por %p102, %p103
      %p105 = scmp.ne.s32.totalorder %s96, %s97
      %p106 = scmp.eq.s32.totalorder %s23, 0
      %p107 = por %p105, %p106
      %p108 = scmp.ne.s32.totalorder %s96, %s97
      %p109 = scmp.eq.s32.totalorder %s24, 1
      %p110 = por %p108, %p109
      %p112 = scmp.ne.s32.totalorder %s97, %s111
      %p113 = scmp.eq.s32.totalorder %s24, 0
      %p114 = por %p112, %p113
      %s116 = sadd.s32 %s115, 1
      %p119 = scmp.eq.s32.totalorder %s18, 1
      %p120 = scmp.ne.s32.totalorder %s115, %s117
      %p121 = scmp.eq.s32.totalorder %s18, 0
      %p122 = por %p120, %p121
      %p123 = scmp.ne.s32.totalorder %s115, %s117
      %p124 = scmp.eq.s32.totalorder %s23, 1
      %p125 = por %p123, %p124
      %p126 = scmp.ne.s32.totalorder %s117, %s118
      %p127 = scmp.eq.s32.totalorder %s23, 0
      %p128 = por %p126, %p127
      %p129 = scmp.ne.s32.totalorder %s117, %s118
      %p130 = scmp.eq.s32.totalorder %s24, 1
      %p131 = por %p129, %p130
      %p133 = scmp.ne.s32.totalorder %s118, %s132
      %p134 = scmp.eq.s32.totalorder %s24, 0
      %p135 = por %p133, %p134
      %s136 = ssub.s32 %s18, %s25
      %p137 = scmp.eq.s32.totalorder %s136, 0
      %s139 = sadd.s32 %s138, 1
      %s140 = scalar_select %p137, %s138, %s139
      %p143 = pneg %p137
      %p144 = scmp.eq.s32.totalorder %s18, 1
      %p145 = por %p143, %p144
      %p146 = scmp.ne.s32.totalorder %s138, %s141
      %p147 = scmp.eq.s32.totalorder %s18, 0
      %p148 = por %p146, %p147
      %p149 = scmp.ne.s32.totalorder %s138, %s141
      %p150 = scmp.eq.s32.totalorder %s23, 1
      %p151 = por %p149, %p150
      %p152 = scmp.ne.s32.totalorder %s141, %s142
      %p153 = scmp.eq.s32.totalorder %s23, 0
      %p154 = por %p152, %p153
      %p155 = scmp.ne.s32.totalorder %s141, %s142
      %p156 = scmp.eq.s32.totalorder %s24, 1
      %p157 = por %p155, %p156
      %p159 = scmp.ne.s32.totalorder %s142, %s158
      %p160 = scmp.eq.s32.totalorder %s24, 0
      %p161 = por %p159, %p160
      %p162 = scmp.le.s32.totalorder 1, %s18
      %p163 = scmp.lt.s32.totalorder %s18, 3
      %p164 = pnand %p162, %p163
      %p165 = pneg %p164
      // Predicated region
      $region9: #{tpu_custom_call.1} parent=5 // pred_check
        _
      $region10: #{tpu_custom_call.1} parent=5 // pred_check_branch
        %167 = sbr.rel (%p164) target = $region12
      $region11: #{tpu_custom_call.1} parent=5 // pred_region
        %s168 = ssub.s32 %s18, 1
        // Predicated region
        $region13: #{tpu_custom_call.1} parent=11 // pred_check
          %p169 = pneg %p65
        $region14: #{tpu_custom_call.1} parent=11 // pred_check_branch
          %171 = sbr.rel (%p169) target = $region16
        $region15: #{tpu_custom_call.1} parent=11 // pred_region
          %173 = vsyncadd [#allocation8], 0
          %s174 = sshll.u32 %s1, 4
          %s175 = int_to_ptr.hbm [resolvable:$true] %s174
          %s176 = sshll.u32 [#allocation7], 4
          %s177 = int_to_ptr.vmem [resolvable:$true] %s176
          %182 = dma.hbm_to_vmem [thread:$0]  %s175, 9216, %s177, [#allocation8], 64, 64, 4
        $region16: #{tpu_custom_call.1} parent=11 // pred_fallthru
          _
        // Predicated region
        $region17: #{tpu_custom_call.1} parent=11 // pred_check
          %p183 = pneg %p86
        $region18: #{tpu_custom_call.1} parent=11 // pred_check_branch
          %185 = sbr.rel (%p183) target = $region20
        $region19: #{tpu_custom_call.1} parent=11 // pred_region
          _
        $region20: #{tpu_custom_call.1} parent=11 // pred_fallthru
          _
        // Predicated region
        $region21: #{tpu_custom_call.1} parent=11 // pred_check
          %p186 = pneg %p107
        $region22: #{tpu_custom_call.1} parent=11 // pred_check_branch
          %188 = sbr.rel (%p186) target = $region24
        $region23: #{tpu_custom_call.1} parent=11 // pred_region
          %190 = vsyncadd [#allocation8], 0
          %s191 = sshll.u32 %s3, 4
          %s192 = int_to_ptr.hbm [resolvable:$true] %s191
          %s193 = sshll.u32 [#allocation9], 4
          %s194 = int_to_ptr.vmem [resolvable:$true] %s193
          %199 = dma.hbm_to_vmem [thread:$0]  %s192, 9216, %s194, [#allocation8], 64, 64, 4
        $region24: #{tpu_custom_call.1} parent=11 // pred_fallthru
          _
        // Predicated region
        $region25: #{tpu_custom_call.1} parent=11 // pred_check
          %p200 = pneg %p128
        $region26: #{tpu_custom_call.1} parent=11 // pred_check_branch
          %202 = sbr.rel (%p200) target = $region28
        $region27: #{tpu_custom_call.1} parent=11 // pred_region
          _
        $region28: #{tpu_custom_call.1} parent=11 // pred_fallthru
          _
      $region12: #{tpu_custom_call.1} parent=5 // pred_fallthru
        _
      %p203 = scmp.lt.s32.totalorder %s18, 2
      // Predicated region
      $region29: #{tpu_custom_call.1} parent=5 // pred_check
        %p204 = pneg %p203
      $region30: #{tpu_custom_call.1} parent=5 // pred_check_branch
        %206 = sbr.rel (%p204) target = $region32
      $region31: #{tpu_custom_call.1} parent=5 // pred_region
        // Predicated region
        $region33: #{tpu_custom_call.1} parent=31 // pred_check
          %p207 = pneg %p38
        $region34: #{tpu_custom_call.1} parent=31 // pred_check_branch
          %209 = sbr.rel (%p207) target = $region36
        $region35: #{tpu_custom_call.1} parent=31 // pred_region
          %s210 = sand.u32 %s28, 1
          %s211 = scalar_lea.sflag [#allocation5], %s210
          %s212 = sand.u32 %s28, 1
          %s213 = smul.addr %s212, 128
          %s214 = scalar_lea.vmem [#allocation4], %s213
          %216 = vsyncadd %s211, 0
          %s217 = smul.addr %s18, 32
          %s218 = smul.addr %s217, 4
          %s219 = scalar_lea.hbm %s0, %s218
          %s220 = sshll.u32 %s219, 4
          %s221 = int_to_ptr.hbm [resolvable:$true] %s220
          %s222 = sshll.u32 %s214, 4
          %s223 = int_to_ptr.vmem [resolvable:$true] %s222
          %228 = dma.hbm_to_vmem [thread:$0]  %s221, 2048, %s223, %s211, 64, 64, 4
        $region36: #{tpu_custom_call.1} parent=31 // pred_fallthru
          _
      $region32: #{tpu_custom_call.1} parent=5 // pred_fallthru
        _
      %p229 = scmp.le.s32.totalorder 1, %s18
      %p230 = scmp.lt.s32.totalorder %s18, 3
      %p231 = pnand %p229, %p230
      %p232 = pneg %p231
      // Predicated region
      $region37: #{tpu_custom_call.1} parent=5 // pred_check
        _
      $region38: #{tpu_custom_call.1} parent=5 // pred_check_branch
        %234 = sbr.rel (%p231) target = $region40
      $region39: #{tpu_custom_call.1} parent=5 // pred_region
        %s235 = ssub.s32 %s18, 1
        %s236 = sand.u32 %s31, 1
        %s237 = scalar_lea.sflag [#allocation5], %s236
        %s238 = sand.u32 %s31, 1
        %s239 = smul.addr %s238, 128
        %s240 = scalar_lea.vmem [#allocation4], %s239
        // Predicated region
        $region41: #{tpu_custom_call.1} parent=39 // pred_check
          %p241 = pneg %p44
        $region42: #{tpu_custom_call.1} parent=39 // pred_check_branch
          %243 = sbr.rel (%p241) target = $region44
        $region43: #{tpu_custom_call.1} parent=39 // pred_region
          %245 = dma.done %s237, 2048
        $region44: #{tpu_custom_call.1} parent=39 // pred_fallthru
          _
        // Predicated region
        $region45: #{tpu_custom_call.1} parent=39 // pred_check
          %p246 = pneg %p65
        $region46: #{tpu_custom_call.1} parent=39 // pred_check_branch
          %248 = sbr.rel (%p246) target = $region48
        $region47: #{tpu_custom_call.1} parent=39 // pred_region
          %250 = dma.done [#allocation8], 9216
        $region48: #{tpu_custom_call.1} parent=39 // pred_fallthru
          _
        // Predicated region
        $region49: #{tpu_custom_call.1} parent=39 // pred_check
          %p251 = pneg %p107
        $region50: #{tpu_custom_call.1} parent=39 // pred_check_branch
          %253 = sbr.rel (%p251) target = $region52
        $region51: #{tpu_custom_call.1} parent=39 // pred_region
          %255 = dma.done [#allocation8], 9216
        $region52: #{tpu_custom_call.1} parent=39 // pred_fallthru
          _
        %s256 = sand.u32 %s31, 1
        %s257 = scalar_lea.sflag [#allocation5], %s256
        %s258 = sand.u32 %s31, 1
        %s259 = smul.addr %s258, 128
        %s260 = scalar_lea.vmem [#allocation4], %s259
        %p261 = pneg %p44
        %p262 = pneg %p41
        %p263 = pneg %p65
        %p264 = pneg %p62
        %p265 = pneg %p86
        %p266 = pneg %p83
        %p267 = pneg %p107
        %p268 = pneg %p104
        %p269 = pneg %p128
        %p270 = pneg %p125
        %p271 = pneg %p154
        %p272 = pneg %p151
        %s273 = sand.u32 %s141, 1
        %s274 = scalar_lea.sflag [#allocation6], %s273
        %s275 = sand.u32 %s141, 1
        %s276 = smul.addr %s275, 128
        %s277 = scalar_lea.vmem [#allocation10], %s276
        %279 = vst [vmem:[#allocation2] sm:$0xf] 0
        %280 = vst [vmem:[#allocation2 + $0x4] sm:$0xf] 0
        %281 = vst [vmem:[#allocation2 + $0x8] sm:$0xf] 0
        %282 = vst [vmem:[#allocation2 + $0xc] sm:$0xf] 0
        %283 = vst [vmem:[#allocation2 + $0x10] sm:$0xf] 0
        %284 = vst [vmem:[#allocation2 + $0x14] sm:$0xf] 0
        %s285 = scalar_lea.vmem [#allocation2], 408
        %286 = vst [vmem:[%s285] sm:$0xf] 0
        %287 = vst [vmem:[%s285 + $0x4] sm:$0xf] 0
        %288 = vst [vmem:[%s285 + $0x8] sm:$0xf] 0
        %289 = vst [vmem:[%s285 + $0xc] sm:$0xf] 0
        %290 = vst [vmem:[%s285 + $0x10] sm:$0xf] 0
        %291 = vst [vmem:[%s285 + $0x14] sm:$0xf] 0
        %s292 = scalar_lea.vmem [#allocation2], 24
        %vm293 = vcmask 1043459
        %vm294 = vsmask.f32 7950
        %vm295 = vmand %vm293, %vm294
        %v296 = vld [vmem:[%s292 + $0x4] sm:$0x8]
        %v297 = vsel %vm295, 0, %v296
        %298 = vst [vmem:[%s292 + $0x4] sm:$0x8] %v297
        %v299 = vld [vmem:[%s292 + $0x1c] sm:$0x8]
        %v300 = vsel %vm295, 0, %v299
        %301 = vst [vmem:[%s292 + $0x1c] sm:$0x8] %v300
        %v302 = vld [vmem:[%s292 + $0x34] sm:$0x8]
        %v303 = vsel %vm295, 0, %v302
        %304 = vst [vmem:[%s292 + $0x34] sm:$0x8] %v303
        %v305 = vld [vmem:[%s292 + $0x4c] sm:$0x8]
        %v306 = vsel %vm295, 0, %v305
        %307 = vst [vmem:[%s292 + $0x4c] sm:$0x8] %v306
        %v308 = vld [vmem:[%s292 + $0x64] sm:$0x8]
        %v309 = vsel %vm295, 0, %v308
        %310 = vst [vmem:[%s292 + $0x64] sm:$0x8] %v309
        %v311 = vld [vmem:[%s292 + $0x7c] sm:$0x8]
        %v312 = vsel %vm295, 0, %v311
        %313 = vst [vmem:[%s292 + $0x7c] sm:$0x8] %v312
        %v314 = vld [vmem:[%s292 + $0x94] sm:$0x8]
        %v315 = vsel %vm295, 0, %v314
        %316 = vst [vmem:[%s292 + $0x94] sm:$0x8] %v315
        %v317 = vld [vmem:[%s292 + $0xac] sm:$0x8]
        %v318 = vsel %vm295, 0, %v317
        %319 = vst [vmem:[%s292 + $0xac] sm:$0x8] %v318
        %v320 = vld [vmem:[%s292 + $0xc4] sm:$0x8]
        %v321 = vsel %vm295, 0, %v320
        %322 = vst [vmem:[%s292 + $0xc4] sm:$0x8] %v321
        %v323 = vld [vmem:[%s292 + $0xdc] sm:$0x8]
        %v324 = vsel %vm295, 0, %v323
        %325 = vst [vmem:[%s292 + $0xdc] sm:$0x8] %v324
        %v326 = vld [vmem:[%s292 + $0xf4] sm:$0x8]
        %v327 = vsel %vm295, 0, %v326
        %328 = vst [vmem:[%s292 + $0xf4] sm:$0x8] %v327
        %v329 = vld [vmem:[%s292 + $0x10c] sm:$0x8]
        %v330 = vsel %vm295, 0, %v329
        %331 = vst [vmem:[%s292 + $0x10c] sm:$0x8] %v330
        %v332 = vld [vmem:[%s292 + $0x124] sm:$0x8]
        %v333 = vsel %vm295, 0, %v332
        %334 = vst [vmem:[%s292 + $0x124] sm:$0x8] %v333
        %v335 = vld [vmem:[%s292 + $0x13c] sm:$0x8]
        %v336 = vsel %vm295, 0, %v335
        %337 = vst [vmem:[%s292 + $0x13c] sm:$0x8] %v336
        %v338 = vld [vmem:[%s292 + $0x154] sm:$0x8]
        %v339 = vsel %vm295, 0, %v338
        %340 = vst [vmem:[%s292 + $0x154] sm:$0x8] %v339
        %v341 = vld [vmem:[%s292 + $0x16c] sm:$0x8]
        %v342 = vsel %vm295, 0, %v341
        %343 = vst [vmem:[%s292 + $0x16c] sm:$0x8] %v342
        %vm344 = vcmask 1040384
        %vm345 = vsmask.f32 256
        %vm346 = vmand %vm344, %vm345
        %v347 = vld [vmem:[%s292 + $0x10] sm:$0x1]
        %v348 = vsel %vm346, 0, %v347
        %349 = vst [vmem:[%s292 + $0x10] sm:$0x1] %v348
        %v350 = vld [vmem:[%s292 + $0x28] sm:$0x1]
        %v351 = vsel %vm346, 0, %v350
        %352 = vst [vmem:[%s292 + $0x28] sm:$0x1] %v351
        %v353 = vld [vmem:[%s292 + $0x40] sm:$0x1]
        %v354 = vsel %vm346, 0, %v353
        %355 = vst [vmem:[%s292 + $0x40] sm:$0x1] %v354
        %v356 = vld [vmem:[%s292 + $0x58] sm:$0x1]
        %v357 = vsel %vm346, 0, %v356
        %358 = vst [vmem:[%s292 + $0x58] sm:$0x1] %v357
        %v359 = vld [vmem:[%s292 + $0x70] sm:$0x1]
        %v360 = vsel %vm346, 0, %v359
        %361 = vst [vmem:[%s292 + $0x70] sm:$0x1] %v360
        %v362 = vld [vmem:[%s292 + $0x88] sm:$0x1]
        %v363 = vsel %vm346, 0, %v362
        %364 = vst [vmem:[%s292 + $0x88] sm:$0x1] %v363
        %v365 = vld [vmem:[%s292 + $0xa0] sm:$0x1]
        %v366 = vsel %vm346, 0, %v365
        %367 = vst [vmem:[%s292 + $0xa0] sm:$0x1] %v366
        %v368 = vld [vmem:[%s292 + $0xb8] sm:$0x1]
        %v369 = vsel %vm346, 0, %v368
        %370 = vst [vmem:[%s292 + $0xb8] sm:$0x1] %v369
        %v371 = vld [vmem:[%s292 + $0xd0] sm:$0x1]
        %v372 = vsel %vm346, 0, %v371
        %373 = vst [vmem:[%s292 + $0xd0] sm:$0x1] %v372
        %v374 = vld [vmem:[%s292 + $0xe8] sm:$0x1]
        %v375 = vsel %vm346, 0, %v374
        %376 = vst [vmem:[%s292 + $0xe8] sm:$0x1] %v375
        %v377 = vld [vmem:[%s292 + $0x100] sm:$0x1]
        %v378 = vsel %vm346, 0, %v377
        %379 = vst [vmem:[%s292 + $0x100] sm:$0x1] %v378
        %v380 = vld [vmem:[%s292 + $0x118] sm:$0x1]
        %v381 = vsel %vm346, 0, %v380
        %382 = vst [vmem:[%s292 + $0x118] sm:$0x1] %v381
        %v383 = vld [vmem:[%s292 + $0x130] sm:$0x1]
        %v384 = vsel %vm346, 0, %v383
        %385 = vst [vmem:[%s292 + $0x130] sm:$0x1] %v384
        %v386 = vld [vmem:[%s292 + $0x148] sm:$0x1]
        %v387 = vsel %vm346, 0, %v386
        %388 = vst [vmem:[%s292 + $0x148] sm:$0x1] %v387
        %v389 = vld [vmem:[%s292 + $0x160] sm:$0x1]
        %v390 = vsel %vm346, 0, %v389
        %391 = vst [vmem:[%s292 + $0x160] sm:$0x1] %v390
        %v392 = vld [vmem:[%s292 + $0x178] sm:$0x1]
        %v393 = vsel %vm346, 0, %v392
        %394 = vst [vmem:[%s292 + $0x178] sm:$0x1] %v393
        %v395 = vld [vmem:[%s240] sm:$0xf]
        %v396 = vld [vmem:[%s240 + $0x4] sm:$0xf]
        %v397 = vld [vmem:[%s240 + $0x8] sm:$0xf]
        %v398 = vld [vmem:[%s240 + $0xc] sm:$0xf]
        %v399 = vld [vmem:[%s240 + $0x10] sm:$0xf]
        %v400 = vld [vmem:[%s240 + $0x14] sm:$0xf]
        %v401 = vld [vmem:[%s240 + $0x18] sm:$0xf]
        %v402 = vld [vmem:[%s240 + $0x1c] sm:$0xf]
        %v403 = vld [vmem:[%s240 + $0x20] sm:$0xf]
        %v404 = vld [vmem:[%s240 + $0x24] sm:$0xf]
        %v405 = vld [vmem:[%s240 + $0x28] sm:$0xf]
        %v406 = vld [vmem:[%s240 + $0x2c] sm:$0xf]
        %v407 = vld [vmem:[%s240 + $0x30] sm:$0xf]
        %v408 = vld [vmem:[%s240 + $0x34] sm:$0xf]
        %v409 = vld [vmem:[%s240 + $0x38] sm:$0xf]
        %v410 = vld [vmem:[%s240 + $0x3c] sm:$0xf]
        %v411 = vld [vmem:[%s240 + $0x40] sm:$0xf]
        %v412 = vld [vmem:[%s240 + $0x44] sm:$0xf]
        %v413 = vld [vmem:[%s240 + $0x48] sm:$0xf]
        %v414 = vld [vmem:[%s240 + $0x4c] sm:$0xf]
        %v415 = vld [vmem:[%s240 + $0x50] sm:$0xf]
        %v416 = vld [vmem:[%s240 + $0x54] sm:$0xf]
        %v417 = vld [vmem:[%s240 + $0x58] sm:$0xf]
        %v418 = vld [vmem:[%s240 + $0x5c] sm:$0xf]
        %v419 = vld [vmem:[%s240 + $0x60] sm:$0xf]
        %v420 = vld [vmem:[%s240 + $0x64] sm:$0xf]
        %v421 = vld [vmem:[%s240 + $0x68] sm:$0xf]
        %v422 = vld [vmem:[%s240 + $0x6c] sm:$0xf]
        %v423 = vld [vmem:[%s240 + $0x70] sm:$0xf]
        %v424 = vld [vmem:[%s240 + $0x74] sm:$0xf]
        %v425 = vld [vmem:[%s240 + $0x78] sm:$0xf]
        %v426 = vld [vmem:[%s240 + $0x7c] sm:$0xf]
        %427 = vst [vmem:[%s292 + $0x8] sm:$0xf] %v395
        %428 = vst [vmem:[%s292 + $0xc] sm:$0xf] %v396
        %429 = vst [vmem:[%s292 + $0x20] sm:$0xf] %v397
        %430 = vst [vmem:[%s292 + $0x24] sm:$0xf] %v398
        %431 = vst [vmem:[%s292 + $0x38] sm:$0xf] %v399
        %432 = vst [vmem:[%s292 + $0x3c] sm:$0xf] %v400
        %433 = vst [vmem:[%s292 + $0x50] sm:$0xf] %v401
        %434 = vst [vmem:[%s292 + $0x54] sm:$0xf] %v402
        %435 = vst [vmem:[%s292 + $0x68] sm:$0xf] %v403
        %436 = vst [vmem:[%s292 + $0x6c] sm:$0xf] %v404
        %437 = vst [vmem:[%s292 + $0x80] sm:$0xf] %v405
        %438 = vst [vmem:[%s292 + $0x84] sm:$0xf] %v406
        %439 = vst [vmem:[%s292 + $0x98] sm:$0xf] %v407
        %440 = vst [vmem:[%s292 + $0x9c] sm:$0xf] %v408
        %441 = vst [vmem:[%s292 + $0xb0] sm:$0xf] %v409
        %442 = vst [vmem:[%s292 + $0xb4] sm:$0xf] %v410
        %443 = vst [vmem:[%s292 + $0xc8] sm:$0xf] %v411
        %444 = vst [vmem:[%s292 + $0xcc] sm:$0xf] %v412
        %445 = vst [vmem:[%s292 + $0xe0] sm:$0xf] %v413
        %446 = vst [vmem:[%s292 + $0xe4] sm:$0xf] %v414
        %447 = vst [vmem:[%s292 + $0xf8] sm:$0xf] %v415
        %448 = vst [vmem:[%s292 + $0xfc] sm:$0xf] %v416
        %449 = vst [vmem:[%s292 + $0x110] sm:$0xf] %v417
        %450 = vst [vmem:[%s292 + $0x114] sm:$0xf] %v418
        %451 = vst [vmem:[%s292 + $0x128] sm:$0xf] %v419
        %452 = vst [vmem:[%s292 + $0x12c] sm:$0xf] %v420
        %453 = vst [vmem:[%s292 + $0x140] sm:$0xf] %v421
        %454 = vst [vmem:[%s292 + $0x144] sm:$0xf] %v422
        %455 = vst [vmem:[%s292 + $0x158] sm:$0xf] %v423
        %456 = vst [vmem:[%s292 + $0x15c] sm:$0xf] %v424
        %457 = vst [vmem:[%s292 + $0x170] sm:$0xf] %v425
        %458 = vst [vmem:[%s292 + $0x174] sm:$0xf] %v426
        %459 = vst [vmem:[#allocation3] sm:$0xff] 0.0
        %460 = vst [vmem:[#allocation3 + $0x8] sm:$0xff] 0.0
        %461 = vst [vmem:[#allocation3 + $0x10] sm:$0xff] 0.0
        %462 = vst [vmem:[#allocation3 + $0x18] sm:$0xff] 0.0
        %463 = vst [vmem:[#allocation3 + $0x20] sm:$0xff] 0.0
        %464 = vst [vmem:[#allocation3 + $0x28] sm:$0xff] 0.0
        %465 = vst [vmem:[#allocation3 + $0x30] sm:$0xff] 0.0
        %466 = vst [vmem:[#allocation3 + $0x38] sm:$0xff] 0.0
        %467 = vst [vmem:[#allocation3 + $0x40] sm:$0xff] 0.0
        %468 = vst [vmem:[#allocation3 + $0x48] sm:$0xff] 0.0
        %469 = vst [vmem:[#allocation3 + $0x50] sm:$0xff] 0.0
        %470 = vst [vmem:[#allocation3 + $0x58] sm:$0xff] 0.0
        %471 = vst [vmem:[#allocation3 + $0x60] sm:$0xff] 0.0
        %472 = vst [vmem:[#allocation3 + $0x68] sm:$0xff] 0.0
        %473 = vst [vmem:[#allocation3 + $0x70] sm:$0xff] 0.0
        %474 = vst [vmem:[#allocation3 + $0x78] sm:$0xff] 0.0
        %475 = vst [vmem:[#allocation3 + $0x80] sm:$0xff] 0.0
        %476 = vst [vmem:[#allocation3 + $0x88] sm:$0xff] 0.0
        %477 = vst [vmem:[#allocation3 + $0x90] sm:$0xff] 0.0
        %478 = vst [vmem:[#allocation3 + $0x98] sm:$0xff] 0.0
        %479 = vst [vmem:[#allocation3 + $0xa0] sm:$0xff] 0.0
        %480 = vst [vmem:[#allocation3 + $0xa8] sm:$0xff] 0.0
        %481 = vst [vmem:[#allocation3 + $0xb0] sm:$0xff] 0.0
        %482 = vst [vmem:[#allocation3 + $0xb8] sm:$0xff] 0.0
        %483 = vst [vmem:[#allocation3 + $0xc0] sm:$0xff] 0.0
        %484 = vst [vmem:[#allocation3 + $0xc8] sm:$0xff] 0.0
        %485 = vst [vmem:[#allocation3 + $0xd0] sm:$0xff] 0.0
        %486 = vst [vmem:[#allocation3 + $0xd8] sm:$0xff] 0.0
        %487 = vst [vmem:[#allocation3 + $0xe0] sm:$0xff] 0.0
        %488 = vst [vmem:[#allocation3 + $0xe8] sm:$0xff] 0.0
        %489 = vst [vmem:[#allocation3 + $0xf0] sm:$0xff] 0.0
        %490 = vst [vmem:[#allocation3 + $0xf8] sm:$0xff] 0.0
        %v491 = vld [vmem:[#allocation2 + $0x4] sm:$0x8]
        %v492 = vld [vmem:[#allocation2 + $0x8] sm:$0xf]
        %v493 = vld [vmem:[#allocation2 + $0xc] sm:$0xf]
        %v494 = vld [vmem:[#allocation2 + $0x1c] sm:$0x8]
        %v495 = vld [vmem:[#allocation2 + $0x20] sm:$0xf]
        %v496 = vld [vmem:[#allocation2 + $0x24] sm:$0xf]
        %v497 = vld [vmem:[#allocation2 + $0x34] sm:$0x8]
        %v498 = vld [vmem:[#allocation2 + $0x38] sm:$0xf]
        %v499 = vld [vmem:[#allocation2 + $0x3c] sm:$0xf]
        %v500 = vld [vmem:[#allocation2 + $0x4c] sm:$0x8]
        %v501 = vld [vmem:[#allocation2 + $0x50] sm:$0xf]
        %v502 = vld [vmem:[#allocation2 + $0x54] sm:$0xf]
        %v503 = vld [vmem:[#allocation2 + $0x64] sm:$0x8]
        %v504 = vld [vmem:[#allocation2 + $0x68] sm:$0xf]
        %v505 = vld [vmem:[#allocation2 + $0x6c] sm:$0xf]
        %v506 = vld [vmem:[#allocation2 + $0x7c] sm:$0x8]
        %v507 = vld [vmem:[#allocation2 + $0x80] sm:$0xf]
        %v508 = vld [vmem:[#allocation2 + $0x84] sm:$0xf]
        %v509 = vld [vmem:[#allocation2 + $0x94] sm:$0x8]
        %v510 = vld [vmem:[#allocation2 + $0x98] sm:$0xf]
        %v511 = vld [vmem:[#allocation2 + $0x9c] sm:$0xf]
        %v512 = vld [vmem:[#allocation2 + $0xac] sm:$0x8]
        %v513 = vld [vmem:[#allocation2 + $0xb0] sm:$0xf]
        %v514 = vld [vmem:[#allocation2 + $0xb4] sm:$0xf]
        %v515 = vld [vmem:[#allocation2 + $0xc4] sm:$0x8]
        %v516 = vld [vmem:[#allocation2 + $0xc8] sm:$0xf]
        %v517 = vld [vmem:[#allocation2 + $0xcc] sm:$0xf]
        %v518 = vld [vmem:[#allocation2 + $0xdc] sm:$0x8]
        %v519 = vld [vmem:[#allocation2 + $0xe0] sm:$0xf]
        %v520 = vld [vmem:[#allocation2 + $0xe4] sm:$0xf]
        %v521 = vld [vmem:[#allocation2 + $0xf4] sm:$0x8]
        %v522 = vld [vmem:[#allocation2 + $0xf8] sm:$0xf]
        %v523 = vld [vmem:[#allocation2 + $0xfc] sm:$0xf]
        %v524 = vld [vmem:[#allocation2 + $0x10c] sm:$0x8]
        %v525 = vld [vmem:[#allocation2 + $0x110] sm:$0xf]
        %v526 = vld [vmem:[#allocation2 + $0x114] sm:$0xf]
        %v527 = vld [vmem:[#allocation2 + $0x124] sm:$0x8]
        %v528 = vld [vmem:[#allocation2 + $0x128] sm:$0xf]
        %v529 = vld [vmem:[#allocation2 + $0x12c] sm:$0xf]
        %v530 = vld [vmem:[#allocation2 + $0x13c] sm:$0x8]
        %v531 = vld [vmem:[#allocation2 + $0x140] sm:$0xf]
        %v532 = vld [vmem:[#allocation2 + $0x144] sm:$0xf]
        %v533 = vld [vmem:[#allocation2 + $0x154] sm:$0x8]
        %v534 = vld [vmem:[#allocation2 + $0x158] sm:$0xf]
        %v535 = vld [vmem:[#allocation2 + $0x15c] sm:$0xf]
        %v536 = vld [vmem:[#allocation2 + $0x16c] sm:$0x8]
        %v537 = vld [vmem:[#allocation2 + $0x170] sm:$0xf]
        %v538 = vld [vmem:[#allocation2 + $0x174] sm:$0xf]
        %vm539 = vsmask.f32 4368
        %vm540 = vmor %vm345, %vm539
        %v542 = vshrl.u32 %v491, 16
        %v544 = vrot.slane %v542, 7
        %v545 = vrot.slane %v544, 4
        %v547 = vshrl.u32 %v492, 16
        %v549 = vrot.slane %v547, 7
        %v550 = vshll.u32 %v492, 16
        %v552 = vor.u32 %v549, %v550
        %v553 = vsel %vm540, %v545, %v552
        %v554 = vrot.slane %v549, 4
        %v556 = vshrl.u32 %v493, 16
        %v558 = vrot.slane %v556, 7
        %v559 = vshll.u32 %v493, 16
        %v561 = vor.u32 %v558, %v559
        %v562 = vsel %vm540, %v554, %v561
        %v564 = vshrl.u32 %v494, 16
        %v566 = vrot.slane %v564, 7
        %v567 = vrot.slane %v566, 4
        %v569 = vshrl.u32 %v495, 16
        %v571 = vrot.slane %v569, 7
        %v572 = vshll.u32 %v495, 16
        %v574 = vor.u32 %v571, %v572
        %v575 = vsel %vm540, %v567, %v574
        %v576 = vrot.slane %v571, 4
        %v578 = vshrl.u32 %v496, 16
        %v580 = vrot.slane %v578, 7
        %v581 = vshll.u32 %v496, 16
        %v583 = vor.u32 %v580, %v581
        %v584 = vsel %vm540, %v576, %v583
        %v586 = vshrl.u32 %v497, 16
        %v588 = vrot.slane %v586, 7
        %v589 = vrot.slane %v588, 4
        %v591 = vshrl.u32 %v498, 16
        %v593 = vrot.slane %v591, 7
        %v594 = vshll.u32 %v498, 16
        %v596 = vor.u32 %v593, %v594
        %v597 = vsel %vm540, %v589, %v596
        %v598 = vrot.slane %v593, 4
        %v600 = vshrl.u32 %v499, 16
        %v602 = vrot.slane %v600, 7
        %v603 = vshll.u32 %v499, 16
        %v605 = vor.u32 %v602, %v603
        %v606 = vsel %vm540, %v598, %v605
        %v608 = vshrl.u32 %v500, 16
        %v610 = vrot.slane %v608, 7
        %v611 = vrot.slane %v610, 4
        %v613 = vshrl.u32 %v501, 16
        %v615 = vrot.slane %v613, 7
        %v616 = vshll.u32 %v501, 16
        %v618 = vor.u32 %v615, %v616
        %v619 = vsel %vm540, %v611, %v618
        %v620 = vrot.slane %v615, 4
        %v622 = vshrl.u32 %v502, 16
        %v624 = vrot.slane %v622, 7
        %v625 = vshll.u32 %v502, 16
        %v627 = vor.u32 %v624, %v625
        %v628 = vsel %vm540, %v620, %v627
        %v630 = vshrl.u32 %v503, 16
        %v632 = vrot.slane %v630, 7
        %v633 = vrot.slane %v632, 4
        %v635 = vshrl.u32 %v504, 16
        %v637 = vrot.slane %v635, 7
        %v638 = vshll.u32 %v504, 16
        %v640 = vor.u32 %v637, %v638
        %v641 = vsel %vm540, %v633, %v640
        %v642 = vrot.slane %v637, 4
        %v644 = vshrl.u32 %v505, 16
        %v646 = vrot.slane %v644, 7
        %v647 = vshll.u32 %v505, 16
        %v649 = vor.u32 %v646, %v647
        %v650 = vsel %vm540, %v642, %v649
        %v652 = vshrl.u32 %v506, 16
        %v654 = vrot.slane %v652, 7
        %v655 = vrot.slane %v654, 4
        %v657 = vshrl.u32 %v507, 16
        %v659 = vrot.slane %v657, 7
        %v660 = vshll.u32 %v507, 16
        %v662 = vor.u32 %v659, %v660
        %v663 = vsel %vm540, %v655, %v662
        %v664 = vrot.slane %v659, 4
        %v666 = vshrl.u32 %v508, 16
        %v668 = vrot.slane %v666, 7
        %v669 = vshll.u32 %v508, 16
        %v671 = vor.u32 %v668, %v669
        %v672 = vsel %vm540, %v664, %v671
        %v674 = vshrl.u32 %v509, 16
        %v676 = vrot.slane %v674, 7
        %v677 = vrot.slane %v676, 4
        %v679 = vshrl.u32 %v510, 16
        %v681 = vrot.slane %v679, 7
        %v682 = vshll.u32 %v510, 16
        %v684 = vor.u32 %v681, %v682
        %v685 = vsel %vm540, %v677, %v684
        %v686 = vrot.slane %v681, 4
        %v688 = vshrl.u32 %v511, 16
        %v690 = vrot.slane %v688, 7
        %v691 = vshll.u32 %v511, 16
        %v693 = vor.u32 %v690, %v691
        %v694 = vsel %vm540, %v686, %v693
        %v696 = vshrl.u32 %v512, 16
        %v698 = vrot.slane %v696, 7
        %v699 = vrot.slane %v698, 4
        %v701 = vshrl.u32 %v513, 16
        %v703 = vrot.slane %v701, 7
        %v704 = vshll.u32 %v513, 16
        %v706 = vor.u32 %v703, %v704
        %v707 = vsel %vm540, %v699, %v706
        %v708 = vrot.slane %v703, 4
        %v710 = vshrl.u32 %v514, 16
        %v712 = vrot.slane %v710, 7
        %v713 = vshll.u32 %v514, 16
        %v715 = vor.u32 %v712, %v713
        %v716 = vsel %vm540, %v708, %v715
        %v718 = vshrl.u32 %v515, 16
        %v720 = vrot.slane %v718, 7
        %v721 = vrot.slane %v720, 4
        %v723 = vshrl.u32 %v516, 16
        %v725 = vrot.slane %v723, 7
        %v726 = vshll.u32 %v516, 16
        %v728 = vor.u32 %v725, %v726
        %v729 = vsel %vm540, %v721, %v728
        %v730 = vrot.slane %v725, 4
        %v732 = vshrl.u32 %v517, 16
        %v734 = vrot.slane %v732, 7
        %v735 = vshll.u32 %v517, 16
        %v737 = vor.u32 %v734, %v735
        %v738 = vsel %vm540, %v730, %v737
        %v740 = vshrl.u32 %v518, 16
        %v742 = vrot.slane %v740, 7
        %v743 = vrot.slane %v742, 4
        %v745 = vshrl.u32 %v519, 16
        %v747 = vrot.slane %v745, 7
        %v748 = vshll.u32 %v519, 16
        %v750 = vor.u32 %v747, %v748
        %v751 = vsel %vm540, %v743, %v750
        %v752 = vrot.slane %v747, 4
        %v754 = vshrl.u32 %v520, 16
        %v756 = vrot.slane %v754, 7
        %v757 = vshll.u32 %v520, 16
        %v759 = vor.u32 %v756, %v757
        %v760 = vsel %vm540, %v752, %v759
        %v762 = vshrl.u32 %v521, 16
        %v764 = vrot.slane %v762, 7
        %v765 = vrot.slane %v764, 4
        %v767 = vshrl.u32 %v522, 16
        %v769 = vrot.slane %v767, 7
        %v770 = vshll.u32 %v522, 16
        %v772 = vor.u32 %v769, %v770
        %v773 = vsel %vm540, %v765, %v772
        %v774 = vrot.slane %v769, 4
        %v776 = vshrl.u32 %v523, 16
        %v778 = vrot.slane %v776, 7
        %v779 = vshll.u32 %v523, 16
        %v781 = vor.u32 %v778, %v779
        %v782 = vsel %vm540, %v774, %v781
        %v784 = vshrl.u32 %v524, 16
        %v786 = vrot.slane %v784, 7
        %v787 = vrot.slane %v786, 4
        %v789 = vshrl.u32 %v525, 16
        %v791 = vrot.slane %v789, 7
        %v792 = vshll.u32 %v525, 16
        %v794 = vor.u32 %v791, %v792
        %v795 = vsel %vm540, %v787, %v794
        %v796 = vrot.slane %v791, 4
        %v798 = vshrl.u32 %v526, 16
        %v800 = vrot.slane %v798, 7
        %v801 = vshll.u32 %v526, 16
        %v803 = vor.u32 %v800, %v801
        %v804 = vsel %vm540, %v796, %v803
        %v806 = vshrl.u32 %v527, 16
        %v808 = vrot.slane %v806, 7
        %v809 = vrot.slane %v808, 4
        %v811 = vshrl.u32 %v528, 16
        %v813 = vrot.slane %v811, 7
        %v814 = vshll.u32 %v528, 16
        %v816 = vor.u32 %v813, %v814
        %v817 = vsel %vm540, %v809, %v816
        %v818 = vrot.slane %v813, 4
        %v820 = vshrl.u32 %v529, 16
        %v822 = vrot.slane %v820, 7
        %v823 = vshll.u32 %v529, 16
        %v825 = vor.u32 %v822, %v823
        %v826 = vsel %vm540, %v818, %v825
        %v828 = vshrl.u32 %v530, 16
        %v830 = vrot.slane %v828, 7
        %v831 = vrot.slane %v830, 4
        %v833 = vshrl.u32 %v531, 16
        %v835 = vrot.slane %v833, 7
        %v836 = vshll.u32 %v531, 16
        %v838 = vor.u32 %v835, %v836
        %v839 = vsel %vm540, %v831, %v838
        %v840 = vrot.slane %v835, 4
        %v842 = vshrl.u32 %v532, 16
        %v844 = vrot.slane %v842, 7
        %v845 = vshll.u32 %v532, 16
        %v847 = vor.u32 %v844, %v845
        %v848 = vsel %vm540, %v840, %v847
        %v850 = vshrl.u32 %v533, 16
        %v852 = vrot.slane %v850, 7
        %v853 = vrot.slane %v852, 4
        %v855 = vshrl.u32 %v534, 16
        %v857 = vrot.slane %v855, 7
        %v858 = vshll.u32 %v534, 16
        %v860 = vor.u32 %v857, %v858
        %v861 = vsel %vm540, %v853, %v860
        %v862 = vrot.slane %v857, 4
        %v864 = vshrl.u32 %v535, 16
        %v866 = vrot.slane %v864, 7
        %v867 = vshll.u32 %v535, 16
        %v869 = vor.u32 %v866, %v867
        %v870 = vsel %vm540, %v862, %v869
        %v872 = vshrl.u32 %v536, 16
        %v874 = vrot.slane %v872, 7
        %v875 = vrot.slane %v874, 4
        %v877 = vshrl.u32 %v537, 16
        %v879 = vrot.slane %v877, 7
        %v880 = vshll.u32 %v537, 16
        %v882 = vor.u32 %v879, %v880
        %v883 = vsel %vm540, %v875, %v882
        %v884 = vrot.slane %v879, 4
        %v886 = vshrl.u32 %v538, 16
        %v888 = vrot.slane %v886, 7
        %v889 = vshll.u32 %v538, 16
        %v891 = vor.u32 %v888, %v889
        %v892 = vsel %vm540, %v884, %v891
        %v893 = vld [vmem:[#allocation3] sm:$0xff]
        %v894 = vld [vmem:[#allocation3 + $0x8] sm:$0xff]
        %v895 = vld [vmem:[#allocation3 + $0x10] sm:$0xff]
        %v896 = vld [vmem:[#allocation3 + $0x18] sm:$0xff]
        %v897 = vld [vmem:[#allocation3 + $0x20] sm:$0xff]
        %v898 = vld [vmem:[#allocation3 + $0x28] sm:$0xff]
        %v899 = vld [vmem:[#allocation3 + $0x30] sm:$0xff]
        %v900 = vld [vmem:[#allocation3 + $0x38] sm:$0xff]
        %v901 = vld [vmem:[#allocation3 + $0x40] sm:$0xff]
        %v902 = vld [vmem:[#allocation3 + $0x48] sm:$0xff]
        %v903 = vld [vmem:[#allocation3 + $0x50] sm:$0xff]
        %v904 = vld [vmem:[#allocation3 + $0x58] sm:$0xff]
        %v905 = vld [vmem:[#allocation3 + $0x60] sm:$0xff]
        %v906 = vld [vmem:[#allocation3 + $0x68] sm:$0xff]
        %v907 = vld [vmem:[#allocation3 + $0x70] sm:$0xff]
        %v908 = vld [vmem:[#allocation3 + $0x78] sm:$0xff]
        %v909 = vld [vmem:[#allocation3 + $0x80] sm:$0xff]
        %v910 = vld [vmem:[#allocation3 + $0x88] sm:$0xff]
        %v911 = vld [vmem:[#allocation3 + $0x90] sm:$0xff]
        %v912 = vld [vmem:[#allocation3 + $0x98] sm:$0xff]
        %v913 = vld [vmem:[#allocation3 + $0xa0] sm:$0xff]
        %v914 = vld [vmem:[#allocation3 + $0xa8] sm:$0xff]
        %v915 = vld [vmem:[#allocation3 + $0xb0] sm:$0xff]
        %v916 = vld [vmem:[#allocation3 + $0xb8] sm:$0xff]
        %v917 = vld [vmem:[#allocation3 + $0xc0] sm:$0xff]
        %v918 = vld [vmem:[#allocation3 + $0xc8] sm:$0xff]
        %v919 = vld [vmem:[#allocation3 + $0xd0] sm:$0xff]
        %v920 = vld [vmem:[#allocation3 + $0xd8] sm:$0xff]
        %v921 = vld [vmem:[#allocation3 + $0xe0] sm:$0xff]
        %v922 = vld [vmem:[#allocation3 + $0xe8] sm:$0xff]
        %v923 = vld [vmem:[#allocation3 + $0xf0] sm:$0xff]
        %v924 = vld [vmem:[#allocation3 + $0xf8] sm:$0xff]
        %v925 = vld [vmem:[#allocation7] sm:$0xf]
        %v926 = vld [vmem:[#allocation7 + $0x4] sm:$0xf]
        %v927 = vld [vmem:[#allocation7 + $0x8] sm:$0xf]
        %v928 = vld [vmem:[#allocation7 + $0xc] sm:$0xf]
        %v929 = vld [vmem:[#allocation7 + $0x10] sm:$0xf]
        %v930 = vld [vmem:[#allocation7 + $0x14] sm:$0xf]
        %v931 = vld [vmem:[#allocation7 + $0x18] sm:$0xf]
        %v932 = vld [vmem:[#allocation7 + $0x1c] sm:$0xf]
        %v933 = vld [vmem:[#allocation7 + $0x20] sm:$0xf]
        %v934 = vld [vmem:[#allocation7 + $0x24] sm:$0xf]
        %v935 = vld [vmem:[#allocation7 + $0x28] sm:$0xf]
        %v936 = vld [vmem:[#allocation7 + $0x2c] sm:$0xf]
        %v937 = vld [vmem:[#allocation7 + $0x30] sm:$0xf]
        %v938 = vld [vmem:[#allocation7 + $0x34] sm:$0xf]
        %v939 = vld [vmem:[#allocation7 + $0x38] sm:$0xf]
        %v940 = vld [vmem:[#allocation7 + $0x3c] sm:$0xf]
        %v941 = vunpack.c.l.b16 %v553
        %v942 = vunpack.c.l.b16 %v562
        %v943 = vunpack.c.l.b16 %v575
        %v944 = vunpack.c.l.b16 %v584
        %v945 = vunpack.c.l.b16 %v597
        %v946 = vunpack.c.l.b16 %v606
        %v947 = vunpack.c.l.b16 %v619
        %v948 = vunpack.c.l.b16 %v628
        %v949 = vunpack.c.l.b16 %v641
        %v950 = vunpack.c.l.b16 %v650
        %v951 = vunpack.c.l.b16 %v663
        %v952 = vunpack.c.l.b16 %v672
        %v953 = vunpack.c.l.b16 %v685
        %v954 = vunpack.c.l.b16 %v694
        %v955 = vunpack.c.l.b16 %v707
        %v956 = vunpack.c.l.b16 %v716
        %v957 = vunpack.c.l.b16 %v729
        %v958 = vunpack.c.l.b16 %v738
        %v959 = vunpack.c.l.b16 %v751
        %v960 = vunpack.c.l.b16 %v760
        %v961 = vunpack.c.l.b16 %v773
        %v962 = vunpack.c.l.b16 %v782
        %v963 = vunpack.c.l.b16 %v795
        %v964 = vunpack.c.l.b16 %v804
        %v965 = vunpack.c.l.b16 %v817
        %v966 = vunpack.c.l.b16 %v826
        %v967 = vunpack.c.l.b16 %v839
        %v968 = vunpack.c.l.b16 %v848
        %v969 = vunpack.c.l.b16 %v861
        %v970 = vunpack.c.l.b16 %v870
        %v971 = vunpack.c.l.b16 %v883
        %v972 = vunpack.c.l.b16 %v892
        %v973 = vpack.c.b16 %v942, %v941
        %v974 = vpack.c.b16 %v944, %v943
        %v975 = vpack.c.b16 %v946, %v945
        %v976 = vpack.c.b16 %v948, %v947
        %v977 = vpack.c.b16 %v950, %v949
        %v978 = vpack.c.b16 %v952, %v951
        %v979 = vpack.c.b16 %v954, %v953
        %v980 = vpack.c.b16 %v956, %v955
        %v981 = vpack.c.b16 %v958, %v957
        %v982 = vpack.c.b16 %v960, %v959
        %v983 = vpack.c.b16 %v962, %v961
        %v984 = vpack.c.b16 %v964, %v963
        %v985 = vpack.c.b16 %v966, %v965
        %v986 = vpack.c.b16 %v968, %v967
        %v987 = vpack.c.b16 %v970, %v969
        %v988 = vpack.c.b16 %v972, %v971
        %v1021 = vunpack.c.l.b16 %v925
        %v1022 = vunpack.c.l.b16 %v926
        %v1023 = vunpack.c.l.b16 %v927
        %v1024 = vunpack.c.l.b16 %v928
        %v1025 = vunpack.c.l.b16 %v929
        %v1026 = vunpack.c.l.b16 %v930
        %v1027 = vunpack.c.l.b16 %v931
        %v1028 = vunpack.c.l.b16 %v932
        %v1029 = vunpack.c.l.b16 %v933
        %v1030 = vunpack.c.l.b16 %v934
        %v1031 = vunpack.c.l.b16 %v935
        %v1032 = vunpack.c.l.b16 %v936
        %v1033 = vunpack.c.l.b16 %v937
        %v1034 = vunpack.c.l.b16 %v938
        %v1035 = vunpack.c.l.b16 %v939
        %v1036 = vunpack.c.l.b16 %v940
        %v1037 = vpack.c.b16 %v1022, %v1021
        %v1038 = vpack.c.b16 %v1024, %v1023
        %v1039 = vpack.c.b16 %v1026, %v1025
        %v1040 = vpack.c.b16 %v1028, %v1027
        %v1041 = vpack.c.b16 %v1030, %v1029
        %v1042 = vpack.c.b16 %v1032, %v1031
        %v1043 = vpack.c.b16 %v1034, %v1033
        %v1044 = vpack.c.b16 %v1036, %v1035
        %1053 = vmatpush.bf16.msra.mxu0 %v1044
        %1054 = vmatpush.bf16.msra.mxu0 %v1043
        %1055 = vmatpush.bf16.msra.mxu0 %v1042
        %1056 = vmatpush.bf16.msra.mxu0 %v1041
        %1057 = vmatpush.bf16.msra.mxu0 %v1040
        %1058 = vmatpush.bf16.msra.mxu0 %v1039
        %1059 = vmatpush.bf16.msra.mxu0 %v1038
        %1060 = vmatpush.bf16.msra.mxu0 %v1037
        %1061 = vmatmul.bf16.gmra.mxu0 %v973
        %v1062 = vpop.f32.mrf.mxu0
        %v1063 = vadd.f32 0.0, %v1062
        %v1064 = vpop.f32.mrf.mxu0
        %v1065 = vadd.f32 0.0, %v1064
        %1066 = vmatmul.bf16.gmra.mxu0 %v974
        %v1067 = vpop.f32.mrf.mxu0
        %v1068 = vadd.f32 0.0, %v1067
        %v1069 = vpop.f32.mrf.mxu0
        %v1070 = vadd.f32 0.0, %v1069
        %1071 = vmatmul.bf16.gmra.mxu0 %v975
        %v1072 = vpop.f32.mrf.mxu0
        %v1073 = vadd.f32 0.0, %v1072
        %v1074 = vpop.f32.mrf.mxu0
        %v1075 = vadd.f32 0.0, %v1074
        %1076 = vmatmul.bf16.gmra.mxu0 %v976
        %v1077 = vpop.f32.mrf.mxu0
        %v1078 = vadd.f32 0.0, %v1077
        %v1079 = vpop.f32.mrf.mxu0
        %v1080 = vadd.f32 0.0, %v1079
        %1081 = vmatmul.bf16.gmra.mxu0 %v977
        %v1082 = vpop.f32.mrf.mxu0
        %v1083 = vadd.f32 0.0, %v1082
        %v1084 = vpop.f32.mrf.mxu0
        %v1085 = vadd.f32 0.0, %v1084
        %1086 = vmatmul.bf16.gmra.mxu0 %v978
        %v1087 = vpop.f32.mrf.mxu0
        %v1088 = vadd.f32 0.0, %v1087
        %v1089 = vpop.f32.mrf.mxu0
        %v1090 = vadd.f32 0.0, %v1089
        %1091 = vmatmul.bf16.gmra.mxu0 %v979
        %v1092 = vpop.f32.mrf.mxu0
        %v1093 = vadd.f32 0.0, %v1092
        %v1094 = vpop.f32.mrf.mxu0
        %v1095 = vadd.f32 0.0, %v1094
        %1096 = vmatmul.bf16.gmra.mxu0 %v980
        %v1097 = vpop.f32.mrf.mxu0
        %v1098 = vadd.f32 0.0, %v1097
        %v1099 = vpop.f32.mrf.mxu0
        %v1100 = vadd.f32 0.0, %v1099
        %1101 = vmatmul.bf16.gmra.mxu0 %v981
        %v1102 = vpop.f32.mrf.mxu0
        %v1103 = vadd.f32 0.0, %v1102
        %v1104 = vpop.f32.mrf.mxu0
        %v1105 = vadd.f32 0.0, %v1104
        %1106 = vmatmul.bf16.gmra.mxu0 %v982
        %v1107 = vpop.f32.mrf.mxu0
        %v1108 = vadd.f32 0.0, %v1107
        %v1109 = vpop.f32.mrf.mxu0
        %v1110 = vadd.f32 0.0, %v1109
        %1111 = vmatmul.bf16.gmra.mxu0 %v983
        %v1112 = vpop.f32.mrf.mxu0
        %v1113 = vadd.f32 0.0, %v1112
        %v1114 = vpop.f32.mrf.mxu0
        %v1115 = vadd.f32 0.0, %v1114
        %1116 = vmatmul.bf16.gmra.mxu0 %v984
        %v1117 = vpop.f32.mrf.mxu0
        %v1118 = vadd.f32 0.0, %v1117
        %v1119 = vpop.f32.mrf.mxu0
        %v1120 = vadd.f32 0.0, %v1119
        %1121 = vmatmul.bf16.gmra.mxu0 %v985
        %v1122 = vpop.f32.mrf.mxu0
        %v1123 = vadd.f32 0.0, %v1122
        %v1124 = vpop.f32.mrf.mxu0
        %v1125 = vadd.f32 0.0, %v1124
        %1126 = vmatmul.bf16.gmra.mxu0 %v986
        %v1127 = vpop.f32.mrf.mxu0
        %v1128 = vadd.f32 0.0, %v1127
        %v1129 = vpop.f32.mrf.mxu0
        %v1130 = vadd.f32 0.0, %v1129
        %1131 = vmatmul.bf16.gmra.mxu0 %v987
        %v1132 = vpop.f32.mrf.mxu0
        %v1133 = vadd.f32 0.0, %v1132
        %v1134 = vpop.f32.mrf.mxu0
        %v1135 = vadd.f32 0.0, %v1134
        %1136 = vmatmul.bf16.gmra.mxu0 %v988
        %v1137 = vpop.f32.mrf.mxu0
        %v1138 = vadd.f32 0.0, %v1137
        %v1139 = vpop.f32.mrf.mxu0
        %v1140 = vadd.f32 0.0, %v1139
        %1141 = vdwg.mxu0
        %v1142 = vadd.f32 %v893, %v1063
        %v1143 = vadd.f32 %v894, %v1065
        %v1144 = vadd.f32 %v895, %v1068
        %v1145 = vadd.f32 %v896, %v1070
        %v1146 = vadd.f32 %v897, %v1073
        %v1147 = vadd.f32 %v898, %v1075
        %v1148 = vadd.f32 %v899, %v1078
        %v1149 = vadd.f32 %v900, %v1080
        %v1150 = vadd.f32 %v901, %v1083
        %v1151 = vadd.f32 %v902, %v1085
        %v1152 = vadd.f32 %v903, %v1088
        %v1153 = vadd.f32 %v904, %v1090
        %v1154 = vadd.f32 %v905, %v1093
        %v1155 = vadd.f32 %v906, %v1095
        %v1156 = vadd.f32 %v907, %v1098
        %v1157 = vadd.f32 %v908, %v1100
        %v1158 = vadd.f32 %v909, %v1103
        %v1159 = vadd.f32 %v910, %v1105
        %v1160 = vadd.f32 %v911, %v1108
        %v1161 = vadd.f32 %v912, %v1110
        %v1162 = vadd.f32 %v913, %v1113
        %v1163 = vadd.f32 %v914, %v1115
        %v1164 = vadd.f32 %v915, %v1118
        %v1165 = vadd.f32 %v916, %v1120
        %v1166 = vadd.f32 %v917, %v1123
        %v1167 = vadd.f32 %v918, %v1125
        %v1168 = vadd.f32 %v919, %v1128
        %v1169 = vadd.f32 %v920, %v1130
        %v1170 = vadd.f32 %v921, %v1133
        %v1171 = vadd.f32 %v922, %v1135
        %v1172 = vadd.f32 %v923, %v1138
        %v1173 = vadd.f32 %v924, %v1140
        %1174 = vst [vmem:[#allocation3] sm:$0xff] %v1142
        %1175 = vst [vmem:[#allocation3 + $0x8] sm:$0xff] %v1143
        %1176 = vst [vmem:[#allocation3 + $0x10] sm:$0xff] %v1144
        %1177 = vst [vmem:[#allocation3 + $0x18] sm:$0xff] %v1145
        %1178 = vst [vmem:[#allocation3 + $0x20] sm:$0xff] %v1146
        %1179 = vst [vmem:[#allocation3 + $0x28] sm:$0xff] %v1147
        %1180 = vst [vmem:[#allocation3 + $0x30] sm:$0xff] %v1148
        %1181 = vst [vmem:[#allocation3 + $0x38] sm:$0xff] %v1149
        %1182 = vst [vmem:[#allocation3 + $0x40] sm:$0xff] %v1150
        %1183 = vst [vmem:[#allocation3 + $0x48] sm:$0xff] %v1151
        %1184 = vst [vmem:[#allocation3 + $0x50] sm:$0xff] %v1152
        %1185 = vst [vmem:[#allocation3 + $0x58] sm:$0xff] %v1153
        %1186 = vst [vmem:[#allocation3 + $0x60] sm:$0xff] %v1154
        %1187 = vst [vmem:[#allocation3 + $0x68] sm:$0xff] %v1155
        %1188 = vst [vmem:[#allocation3 + $0x70] sm:$0xff] %v1156
        %1189 = vst [vmem:[#allocation3 + $0x78] sm:$0xff] %v1157
        %1190 = vst [vmem:[#allocation3 + $0x80] sm:$0xff] %v1158
        %1191 = vst [vmem:[#allocation3 + $0x88] sm:$0xff] %v1159
        %1192 = vst [vmem:[#allocation3 + $0x90] sm:$0xff] %v1160
        %1193 = vst [vmem:[#allocation3 + $0x98] sm:$0xff] %v1161
        %1194 = vst [vmem:[#allocation3 + $0xa0] sm:$0xff] %v1162
        %1195 = vst [vmem:[#allocation3 + $0xa8] sm:$0xff] %v1163
        %1196 = vst [vmem:[#allocation3 + $0xb0] sm:$0xff] %v1164
        %1197 = vst [vmem:[#allocation3 + $0xb8] sm:$0xff] %v1165
        %1198 = vst [vmem:[#allocation3 + $0xc0] sm:$0xff] %v1166
        %1199 = vst [vmem:[#allocation3 + $0xc8] sm:$0xff] %v1167
        %1200 = vst [vmem:[#allocation3 + $0xd0] sm:$0xff] %v1168
        %1201 = vst [vmem:[#allocation3 + $0xd8] sm:$0xff] %v1169
        %1202 = vst [vmem:[#allocation3 + $0xe0] sm:$0xff] %v1170
        %1203 = vst [vmem:[#allocation3 + $0xe8] sm:$0xff] %v1171
        %1204 = vst [vmem:[#allocation3 + $0xf0] sm:$0xff] %v1172
        %1205 = vst [vmem:[#allocation3 + $0xf8] sm:$0xff] %v1173
        %v1206 = vld [vmem:[#allocation2 + $0x8] sm:$0xf]
        %v1207 = vld [vmem:[#allocation2 + $0xc] sm:$0xf]
        %v1208 = vld [vmem:[#allocation2 + $0x20] sm:$0xf]
        %v1209 = vld [vmem:[#allocation2 + $0x24] sm:$0xf]
        %v1210 = vld [vmem:[#allocation2 + $0x38] sm:$0xf]
        %v1211 = vld [vmem:[#allocation2 + $0x3c] sm:$0xf]
        %v1212 = vld [vmem:[#allocation2 + $0x50] sm:$0xf]
        %v1213 = vld [vmem:[#allocation2 + $0x54] sm:$0xf]
        %v1214 = vld [vmem:[#allocation2 + $0x68] sm:$0xf]
        %v1215 = vld [vmem:[#allocation2 + $0x6c] sm:$0xf]
        %v1216 = vld [vmem:[#allocation2 + $0x80] sm:$0xf]
        %v1217 = vld [vmem:[#allocation2 + $0x84] sm:$0xf]
        %v1218 = vld [vmem:[#allocation2 + $0x98] sm:$0xf]
        %v1219 = vld [vmem:[#allocation2 + $0x9c] sm:$0xf]
        %v1220 = vld [vmem:[#allocation2 + $0xb0] sm:$0xf]
        %v1221 = vld [vmem:[#allocation2 + $0xb4] sm:$0xf]
        %v1222 = vld [vmem:[#allocation2 + $0xc8] sm:$0xf]
        %v1223 = vld [vmem:[#allocation2 + $0xcc] sm:$0xf]
        %v1224 = vld [vmem:[#allocation2 + $0xe0] sm:$0xf]
        %v1225 = vld [vmem:[#allocation2 + $0xe4] sm:$0xf]
        %v1226 = vld [vmem:[#allocation2 + $0xf8] sm:$0xf]
        %v1227 = vld [vmem:[#allocation2 + $0xfc] sm:$0xf]
        %v1228 = vld [vmem:[#allocation2 + $0x110] sm:$0xf]
        %v1229 = vld [vmem:[#allocation2 + $0x114] sm:$0xf]
        %v1230 = vld [vmem:[#allocation2 + $0x128] sm:$0xf]
        %v1231 = vld [vmem:[#allocation2 + $0x12c] sm:$0xf]
        %v1232 = vld [vmem:[#allocation2 + $0x140] sm:$0xf]
        %v1233 = vld [vmem:[#allocation2 + $0x144] sm:$0xf]
        %v1234 = vld [vmem:[#allocation2 + $0x158] sm:$0xf]
        %v1235 = vld [vmem:[#allocation2 + $0x15c] sm:$0xf]
        %v1236 = vld [vmem:[#allocation2 + $0x170] sm:$0xf]
        %v1237 = vld [vmem:[#allocation2 + $0x174] sm:$0xf]
        %v1238 = vld [vmem:[#allocation3] sm:$0xff]
        %v1239 = vld [vmem:[#allocation3 + $0x8] sm:$0xff]
        %v1240 = vld [vmem:[#allocation3 + $0x10] sm:$0xff]
        %v1241 = vld [vmem:[#allocation3 + $0x18] sm:$0xff]
        %v1242 = vld [vmem:[#allocation3 + $0x20] sm:$0xff]
        %v1243 = vld [vmem:[#allocation3 + $0x28] sm:$0xff]
        %v1244 = vld [vmem:[#allocation3 + $0x30] sm:$0xff]
        %v1245 = vld [vmem:[#allocation3 + $0x38] sm:$0xff]
        %v1246 = vld [vmem:[#allocation3 + $0x40] sm:$0xff]
        %v1247 = vld [vmem:[#allocation3 + $0x48] sm:$0xff]
        %v1248 = vld [vmem:[#allocation3 + $0x50] sm:$0xff]
        %v1249 = vld [vmem:[#allocation3 + $0x58] sm:$0xff]
        %v1250 = vld [vmem:[#allocation3 + $0x60] sm:$0xff]
        %v1251 = vld [vmem:[#allocation3 + $0x68] sm:$0xff]
        %v1252 = vld [vmem:[#allocation3 + $0x70] sm:$0xff]
        %v1253 = vld [vmem:[#allocation3 + $0x78] sm:$0xff]
        %v1254 = vld [vmem:[#allocation3 + $0x80] sm:$0xff]
        %v1255 = vld [vmem:[#allocation3 + $0x88] sm:$0xff]
        %v1256 = vld [vmem:[#allocation3 + $0x90] sm:$0xff]
        %v1257 = vld [vmem:[#allocation3 + $0x98] sm:$0xff]
        %v1258 = vld [vmem:[#allocation3 + $0xa0] sm:$0xff]
        %v1259 = vld [vmem:[#allocation3 + $0xa8] sm:$0xff]
        %v1260 = vld [vmem:[#allocation3 + $0xb0] sm:$0xff]
        %v1261 = vld [vmem:[#allocation3 + $0xb8] sm:$0xff]
        %v1262 = vld [vmem:[#allocation3 + $0xc0] sm:$0xff]
        %v1263 = vld [vmem:[#allocation3 + $0xc8] sm:$0xff]
        %v1264 = vld [vmem:[#allocation3 + $0xd0] sm:$0xff]
        %v1265 = vld [vmem:[#allocation3 + $0xd8] sm:$0xff]
        %v1266 = vld [vmem:[#allocation3 + $0xe0] sm:$0xff]
        %v1267 = vld [vmem:[#allocation3 + $0xe8] sm:$0xff]
        %v1268 = vld [vmem:[#allocation3 + $0xf0] sm:$0xff]
        %v1269 = vld [vmem:[#allocation3 + $0xf8] sm:$0xff]
        %s1270 = scalar_lea.vmem [#allocation7], 64
        %v1271 = vld [vmem:[%s1270] sm:$0xf]
        %v1272 = vld [vmem:[%s1270 + $0x4] sm:$0xf]
        %v1273 = vld [vmem:[%s1270 + $0x8] sm:$0xf]
        %v1274 = vld [vmem:[%s1270 + $0xc] sm:$0xf]
        %v1275 = vld [vmem:[%s1270 + $0x10] sm:$0xf]
        %v1276 = vld [vmem:[%s1270 + $0x14] sm:$0xf]
        %v1277 = vld [vmem:[%s1270 + $0x18] sm:$0xf]
        %v1278 = vld [vmem:[%s1270 + $0x1c] sm:$0xf]
        %v1279 = vld [vmem:[%s1270 + $0x20] sm:$0xf]
        %v1280 = vld [vmem:[%s1270 + $0x24] sm:$0xf]
        %v1281 = vld [vmem:[%s1270 + $0x28] sm:$0xf]
        %v1282 = vld [vmem:[%s1270 + $0x2c] sm:$0xf]
        %v1283 = vld [vmem:[%s1270 + $0x30] sm:$0xf]
        %v1284 = vld [vmem:[%s1270 + $0x34] sm:$0xf]
        %v1285 = vld [vmem:[%s1270 + $0x38] sm:$0xf]
        %v1286 = vld [vmem:[%s1270 + $0x3c] sm:$0xf]
        %v1319 = vunpack.c.l.b16 %v1206
        %v1320 = vunpack.c.l.b16 %v1207
        %v1321 = vunpack.c.l.b16 %v1208
        %v1322 = vunpack.c.l.b16 %v1209
        %v1323 = vunpack.c.l.b16 %v1210
        %v1324 = vunpack.c.l.b16 %v1211
        %v1325 = vunpack.c.l.b16 %v1212
        %v1326 = vunpack.c.l.b16 %v1213
        %v1327 = vunpack.c.l.b16 %v1214
        %v1328 = vunpack.c.l.b16 %v1215
        %v1329 = vunpack.c.l.b16 %v1216
        %v1330 = vunpack.c.l.b16 %v1217
        %v1331 = vunpack.c.l.b16 %v1218
        %v1332 = vunpack.c.l.b16 %v1219
        %v1333 = vunpack.c.l.b16 %v1220
        %v1334 = vunpack.c.l.b16 %v1221
        %v1335 = vunpack.c.l.b16 %v1222
        %v1336 = vunpack.c.l.b16 %v1223
        %v1337 = vunpack.c.l.b16 %v1224
        %v1338 = vunpack.c.l.b16 %v1225
        %v1339 = vunpack.c.l.b16 %v1226
        %v1340 = vunpack.c.l.b16 %v1227
        %v1341 = vunpack.c.l.b16 %v1228
        %v1342 = vunpack.c.l.b16 %v1229
        %v1343 = vunpack.c.l.b16 %v1230
        %v1344 = vunpack.c.l.b16 %v1231
        %v1345 = vunpack.c.l.b16 %v1232
        %v1346 = vunpack.c.l.b16 %v1233
        %v1347 = vunpack.c.l.b16 %v1234
        %v1348 = vunpack.c.l.b16 %v1235
        %v1349 = vunpack.c.l.b16 %v1236
        %v1350 = vunpack.c.l.b16 %v1237
        %v1351 = vpack.c.b16 %v1320, %v1319
        %v1352 = vpack.c.b16 %v1322, %v1321
        %v1353 = vpack.c.b16 %v1324, %v1323
        %v1354 = vpack.c.b16 %v1326, %v1325
        %v1355 = vpack.c.b16 %v1328, %v1327
        %v1356 = vpack.c.b16 %v1330, %v1329
        %v1357 = vpack.c.b16 %v1332, %v1331
        %v1358 = vpack.c.b16 %v1334, %v1333
        %v1359 = vpack.c.b16 %v1336, %v1335
        %v1360 = vpack.c.b16 %v1338, %v1337
        %v1361 = vpack.c.b16 %v1340, %v1339
        %v1362 = vpack.c.b16 %v1342, %v1341
        %v1363 = vpack.c.b16 %v1344, %v1343
        %v1364 = vpack.c.b16 %v1346, %v1345
        %v1365 = vpack.c.b16 %v1348, %v1347
        %v1366 = vpack.c.b16 %v1350, %v1349
        %v1399 = vunpack.c.l.b16 %v1271
        %v1400 = vunpack.c.l.b16 %v1272
        %v1401 = vunpack.c.l.b16 %v1273
        %v1402 = vunpack.c.l.b16 %v1274
        %v1403 = vunpack.c.l.b16 %v1275
        %v1404 = vunpack.c.l.b16 %v1276
        %v1405 = vunpack.c.l.b16 %v1277
        %v1406 = vunpack.c.l.b16 %v1278
        %v1407 = vunpack.c.l.b16 %v1279
        %v1408 = vunpack.c.l.b16 %v1280
        %v1409 = vunpack.c.l.b16 %v1281
        %v1410 = vunpack.c.l.b16 %v1282
        %v1411 = vunpack.c.l.b16 %v1283
        %v1412 = vunpack.c.l.b16 %v1284
        %v1413 = vunpack.c.l.b16 %v1285
        %v1414 = vunpack.c.l.b16 %v1286
        %v1415 = vpack.c.b16 %v1400, %v1399
        %v1416 = vpack.c.b16 %v1402, %v1401
        %v1417 = vpack.c.b16 %v1404, %v1403
        %v1418 = vpack.c.b16 %v1406, %v1405
        %v1419 = vpack.c.b16 %v1408, %v1407
        %v1420 = vpack.c.b16 %v1410, %v1409
        %v1421 = vpack.c.b16 %v1412, %v1411
        %v1422 = vpack.c.b16 %v1414, %v1413
        %1431 = vmatpush.bf16.msra.mxu0 %v1422
        %1432 = vmatpush.bf16.msra.mxu0 %v1421
        %1433 = vmatpush.bf16.msra.mxu0 %v1420
        %1434 = vmatpush.bf16.msra.mxu0 %v1419
        %1435 = vmatpush.bf16.msra.mxu0 %v1418
        %1436 = vmatpush.bf16.msra.mxu0 %v1417
        %1437 = vmatpush.bf16.msra.mxu0 %v1416
        %1438 = vmatpush.bf16.msra.mxu0 %v1415
        %1439 = vmatmul.bf16.gmra.mxu0 %v1351
        %v1440 = vpop.f32.mrf.mxu0
        %v1441 = vadd.f32 0.0, %v1440
        %v1442 = vpop.f32.mrf.mxu0
        %v1443 = vadd.f32 0.0, %v1442
        %1444 = vmatmul.bf16.gmra.mxu0 %v1352
        %v1445 = vpop.f32.mrf.mxu0
        %v1446 = vadd.f32 0.0, %v1445
        %v1447 = vpop.f32.mrf.mxu0
        %v1448 = vadd.f32 0.0, %v1447
        %1449 = vmatmul.bf16.gmra.mxu0 %v1353
        %v1450 = vpop.f32.mrf.mxu0
        %v1451 = vadd.f32 0.0, %v1450
        %v1452 = vpop.f32.mrf.mxu0
        %v1453 = vadd.f32 0.0, %v1452
        %1454 = vmatmul.bf16.gmra.mxu0 %v1354
        %v1455 = vpop.f32.mrf.mxu0
        %v1456 = vadd.f32 0.0, %v1455
        %v1457 = vpop.f32.mrf.mxu0
        %v1458 = vadd.f32 0.0, %v1457
        %1459 = vmatmul.bf16.gmra.mxu0 %v1355
        %v1460 = vpop.f32.mrf.mxu0
        %v1461 = vadd.f32 0.0, %v1460
        %v1462 = vpop.f32.mrf.mxu0
        %v1463 = vadd.f32 0.0, %v1462
        %1464 = vmatmul.bf16.gmra.mxu0 %v1356
        %v1465 = vpop.f32.mrf.mxu0
        %v1466 = vadd.f32 0.0, %v1465
        %v1467 = vpop.f32.mrf.mxu0
        %v1468 = vadd.f32 0.0, %v1467
        %1469 = vmatmul.bf16.gmra.mxu0 %v1357
        %v1470 = vpop.f32.mrf.mxu0
        %v1471 = vadd.f32 0.0, %v1470
        %v1472 = vpop.f32.mrf.mxu0
        %v1473 = vadd.f32 0.0, %v1472
        %1474 = vmatmul.bf16.gmra.mxu0 %v1358
        %v1475 = vpop.f32.mrf.mxu0
        %v1476 = vadd.f32 0.0, %v1475
        %v1477 = vpop.f32.mrf.mxu0
        %v1478 = vadd.f32 0.0, %v1477
        %1479 = vmatmul.bf16.gmra.mxu0 %v1359
        %v1480 = vpop.f32.mrf.mxu0
        %v1481 = vadd.f32 0.0, %v1480
        %v1482 = vpop.f32.mrf.mxu0
        %v1483 = vadd.f32 0.0, %v1482
        %1484 = vmatmul.bf16.gmra.mxu0 %v1360
        %v1485 = vpop.f32.mrf.mxu0
        %v1486 = vadd.f32 0.0, %v1485
        %v1487 = vpop.f32.mrf.mxu0
        %v1488 = vadd.f32 0.0, %v1487
        %1489 = vmatmul.bf16.gmra.mxu0 %v1361
        %v1490 = vpop.f32.mrf.mxu0
        %v1491 = vadd.f32 0.0, %v1490
        %v1492 = vpop.f32.mrf.mxu0
        %v1493 = vadd.f32 0.0, %v1492
        %1494 = vmatmul.bf16.gmra.mxu0 %v1362
        %v1495 = vpop.f32.mrf.mxu0
        %v1496 = vadd.f32 0.0, %v1495
        %v1497 = vpop.f32.mrf.mxu0
        %v1498 = vadd.f32 0.0, %v1497
        %1499 = vmatmul.bf16.gmra.mxu0 %v1363
        %v1500 = vpop.f32.mrf.mxu0
        %v1501 = vadd.f32 0.0, %v1500
        %v1502 = vpop.f32.mrf.mxu0
        %v1503 = vadd.f32 0.0, %v1502
        %1504 = vmatmul.bf16.gmra.mxu0 %v1364
        %v1505 = vpop.f32.mrf.mxu0
        %v1506 = vadd.f32 0.0, %v1505
        %v1507 = vpop.f32.mrf.mxu0
        %v1508 = vadd.f32 0.0, %v1507
        %1509 = vmatmul.bf16.gmra.mxu0 %v1365
        %v1510 = vpop.f32.mrf.mxu0
        %v1511 = vadd.f32 0.0, %v1510
        %v1512 = vpop.f32.mrf.mxu0
        %v1513 = vadd.f32 0.0, %v1512
        %1514 = vmatmul.bf16.gmra.mxu0 %v1366
        %v1515 = vpop.f32.mrf.mxu0
        %v1516 = vadd.f32 0.0, %v1515
        %v1517 = vpop.f32.mrf.mxu0
        %v1518 = vadd.f32 0.0, %v1517
        %1519 = vdwg.mxu0
        %v1520 = vadd.f32 %v1238, %v1441
        %v1521 = vadd.f32 %v1239, %v1443
        %v1522 = vadd.f32 %v1240, %v1446
        %v1523 = vadd.f32 %v1241, %v1448
        %v1524 = vadd.f32 %v1242, %v1451
        %v1525 = vadd.f32 %v1243, %v1453
        %v1526 = vadd.f32 %v1244, %v1456
        %v1527 = vadd.f32 %v1245, %v1458
        %v1528 = vadd.f32 %v1246, %v1461
        %v1529 = vadd.f32 %v1247, %v1463
        %v1530 = vadd.f32 %v1248, %v1466
        %v1531 = vadd.f32 %v1249, %v1468
        %v1532 = vadd.f32 %v1250, %v1471
        %v1533 = vadd.f32 %v1251, %v1473
        %v1534 = vadd.f32 %v1252, %v1476
        %v1535 = vadd.f32 %v1253, %v1478
        %v1536 = vadd.f32 %v1254, %v1481
        %v1537 = vadd.f32 %v1255, %v1483
        %v1538 = vadd.f32 %v1256, %v1486
        %v1539 = vadd.f32 %v1257, %v1488
        %v1540 = vadd.f32 %v1258, %v1491
        %v1541 = vadd.f32 %v1259, %v1493
        %v1542 = vadd.f32 %v1260, %v1496
        %v1543 = vadd.f32 %v1261, %v1498
        %v1544 = vadd.f32 %v1262, %v1501
        %v1545 = vadd.f32 %v1263, %v1503
        %v1546 = vadd.f32 %v1264, %v1506
        %v1547 = vadd.f32 %v1265, %v1508
        %v1548 = vadd.f32 %v1266, %v1511
        %v1549 = vadd.f32 %v1267, %v1513
        %v1550 = vadd.f32 %v1268, %v1516
        %v1551 = vadd.f32 %v1269, %v1518
        %1552 = vst [vmem:[#allocation3] sm:$0xff] %v1520
        %1553 = vst [vmem:[#allocation3 + $0x8] sm:$0xff] %v1521
        %1554 = vst [vmem:[#allocation3 + $0x10] sm:$0xff] %v1522
        %1555 = vst [vmem:[#allocation3 + $0x18] sm:$0xff] %v1523
        %1556 = vst [vmem:[#allocation3 + $0x20] sm:$0xff] %v1524
        %1557 = vst [vmem:[#allocation3 + $0x28] sm:$0xff] %v1525
        %1558 = vst [vmem:[#allocation3 + $0x30] sm:$0xff] %v1526
        %1559 = vst [vmem:[#allocation3 + $0x38] sm:$0xff] %v1527
        %1560 = vst [vmem:[#allocation3 + $0x40] sm:$0xff] %v1528
        %1561 = vst [vmem:[#allocation3 + $0x48] sm:$0xff] %v1529
        %1562 = vst [vmem:[#allocation3 + $0x50] sm:$0xff] %v1530
        %1563 = vst [vmem:[#allocation3 + $0x58] sm:$0xff] %v1531
        %1564 = vst [vmem:[#allocation3 + $0x60] sm:$0xff] %v1532
        %1565 = vst [vmem:[#allocation3 + $0x68] sm:$0xff] %v1533
        %1566 = vst [vmem:[#allocation3 + $0x70] sm:$0xff] %v1534
        %1567 = vst [vmem:[#allocation3 + $0x78] sm:$0xff] %v1535
        %1568 = vst [vmem:[#allocation3 + $0x80] sm:$0xff] %v1536
        %1569 = vst [vmem:[#allocation3 + $0x88] sm:$0xff] %v1537
        %1570 = vst [vmem:[#allocation3 + $0x90] sm:$0xff] %v1538
        %1571 = vst [vmem:[#allocation3 + $0x98] sm:$0xff] %v1539
        %1572 = vst [vmem:[#allocation3 + $0xa0] sm:$0xff] %v1540
        %1573 = vst [vmem:[#allocation3 + $0xa8] sm:$0xff] %v1541
        %1574 = vst [vmem:[#allocation3 + $0xb0] sm:$0xff] %v1542
        %1575 = vst [vmem:[#allocation3 + $0xb8] sm:$0xff] %v1543
        %1576 = vst [vmem:[#allocation3 + $0xc0] sm:$0xff] %v1544
        %1577 = vst [vmem:[#allocation3 + $0xc8] sm:$0xff] %v1545
        %1578 = vst [vmem:[#allocation3 + $0xd0] sm:$0xff] %v1546
        %1579 = vst [vmem:[#allocation3 + $0xd8] sm:$0xff] %v1547
        %1580 = vst [vmem:[#allocation3 + $0xe0] sm:$0xff] %v1548
        %1581 = vst [vmem:[#allocation3 + $0xe8] sm:$0xff] %v1549
        %1582 = vst [vmem:[#allocation3 + $0xf0] sm:$0xff] %v1550
        %1583 = vst [vmem:[#allocation3 + $0xf8] sm:$0xff] %v1551
        %v1584 = vld [vmem:[#allocation2 + $0x8] sm:$0xf]
        %v1585 = vld [vmem:[#allocation2 + $0xc] sm:$0xf]
        %v1586 = vld [vmem:[#allocation2 + $0x10] sm:$0x1]
        %v1587 = vld [vmem:[#allocation2 + $0x20] sm:$0xf]
        %v1588 = vld [vmem:[#allocation2 + $0x24] sm:$0xf]
        %v1589 = vld [vmem:[#allocation2 + $0x28] sm:$0x1]
        %v1590 = vld [vmem:[#allocation2 + $0x38] sm:$0xf]
        %v1591 = vld [vmem:[#allocation2 + $0x3c] sm:$0xf]
        %v1592 = vld [vmem:[#allocation2 + $0x40] sm:$0x1]
        %v1593 = vld [vmem:[#allocation2 + $0x50] sm:$0xf]
        %v1594 = vld [vmem:[#allocation2 + $0x54] sm:$0xf]
        %v1595 = vld [vmem:[#allocation2 + $0x58] sm:$0x1]
        %v1596 = vld [vmem:[#allocation2 + $0x68] sm:$0xf]
        %v1597 = vld [vmem:[#allocation2 + $0x6c] sm:$0xf]
        %v1598 = vld [vmem:[#allocation2 + $0x70] sm:$0x1]
        %v1599 = vld [vmem:[#allocation2 + $0x80] sm:$0xf]
        %v1600 = vld [vmem:[#allocation2 + $0x84] sm:$0xf]
        %v1601 = vld [vmem:[#allocation2 + $0x88] sm:$0x1]
        %v1602 = vld [vmem:[#allocation2 + $0x98] sm:$0xf]
        %v1603 = vld [vmem:[#allocation2 + $0x9c] sm:$0xf]
        %v1604 = vld [vmem:[#allocation2 + $0xa0] sm:$0x1]
        %v1605 = vld [vmem:[#allocation2 + $0xb0] sm:$0xf]
        %v1606 = vld [vmem:[#allocation2 + $0xb4] sm:$0xf]
        %v1607 = vld [vmem:[#allocation2 + $0xb8] sm:$0x1]
        %v1608 = vld [vmem:[#allocation2 + $0xc8] sm:$0xf]
        %v1609 = vld [vmem:[#allocation2 + $0xcc] sm:$0xf]
        %v1610 = vld [vmem:[#allocation2 + $0xd0] sm:$0x1]
        %v1611 = vld [vmem:[#allocation2 + $0xe0] sm:$0xf]
        %v1612 = vld [vmem:[#allocation2 + $0xe4] sm:$0xf]
        %v1613 = vld [vmem:[#allocation2 + $0xe8] sm:$0x1]
        %v1614 = vld [vmem:[#allocation2 + $0xf8] sm:$0xf]
        %v1615 = vld [vmem:[#allocation2 + $0xfc] sm:$0xf]
        %v1616 = vld [vmem:[#allocation2 + $0x100] sm:$0x1]
        %v1617 = vld [vmem:[#allocation2 + $0x110] sm:$0xf]
        %v1618 = vld [vmem:[#allocation2 + $0x114] sm:$0xf]
        %v1619 = vld [vmem:[#allocation2 + $0x118] sm:$0x1]
        %v1620 = vld [vmem:[#allocation2 + $0x128] sm:$0xf]
        %v1621 = vld [vmem:[#allocation2 + $0x12c] sm:$0xf]
        %v1622 = vld [vmem:[#allocation2 + $0x130] sm:$0x1]
        %v1623 = vld [vmem:[#allocation2 + $0x140] sm:$0xf]
        %v1624 = vld [vmem:[#allocation2 + $0x144] sm:$0xf]
        %v1625 = vld [vmem:[#allocation2 + $0x148] sm:$0x1]
        %v1626 = vld [vmem:[#allocation2 + $0x158] sm:$0xf]
        %v1627 = vld [vmem:[#allocation2 + $0x15c] sm:$0xf]
        %v1628 = vld [vmem:[#allocation2 + $0x160] sm:$0x1]
        %v1629 = vld [vmem:[#allocation2 + $0x170] sm:$0xf]
        %v1630 = vld [vmem:[#allocation2 + $0x174] sm:$0xf]
        %v1631 = vld [vmem:[#allocation2 + $0x178] sm:$0x1]
        %vm1632 = vsmask.f32 3328
        %vm1633 = vsmask.f32 7440
        %vm1634 = vmor %vm1632, %vm1633
        %v1636 = vshrl.u32 %v1584, 16
        %v1638 = vrot.slane %v1636, 4
        %v1639 = vshll.u32 %v1584, 16
        %v1641 = vrot.slane %v1639, 5
        %v1642 = vor.u32 %v1638, %v1641
        %v1643 = vrot.slane %v1642, 4
        %v1645 = vshll.u32 %v1585, 16
        %v1647 = vrot.slane %v1645, 5
        %v1648 = vsel %vm1634, %v1643, %v1647
        %v1649 = vshrl.u32 %v1585, 16
        %v1651 = vrot.slane %v1649, 4
        %v1652 = vor.u32 %v1651, %v1647
        %v1653 = vrot.slane %v1652, 4
        %v1655 = vshll.u32 %v1586, 16
        %v1657 = vrot.slane %v1655, 5
        %v1658 = vsel %vm1634, %v1653, %v1657
        %v1660 = vshrl.u32 %v1587, 16
        %v1662 = vrot.slane %v1660, 4
        %v1663 = vshll.u32 %v1587, 16
        %v1665 = vrot.slane %v1663, 5
        %v1666 = vor.u32 %v1662, %v1665
        %v1667 = vrot.slane %v1666, 4
        %v1669 = vshll.u32 %v1588, 16
        %v1671 = vrot.slane %v1669, 5
        %v1672 = vsel %vm1634, %v1667, %v1671
        %v1673 = vshrl.u32 %v1588, 16
        %v1675 = vrot.slane %v1673, 4
        %v1676 = vor.u32 %v1675, %v1671
        %v1677 = vrot.slane %v1676, 4
        %v1679 = vshll.u32 %v1589, 16
        %v1681 = vrot.slane %v1679, 5
        %v1682 = vsel %vm1634, %v1677, %v1681
        %v1684 = vshrl.u32 %v1590, 16
        %v1686 = vrot.slane %v1684, 4
        %v1687 = vshll.u32 %v1590, 16
        %v1689 = vrot.slane %v1687, 5
        %v1690 = vor.u32 %v1686, %v1689
        %v1691 = vrot.slane %v1690, 4
        %v1693 = vshll.u32 %v1591, 16
        %v1695 = vrot.slane %v1693, 5
        %v1696 = vsel %vm1634, %v1691, %v1695
        %v1697 = vshrl.u32 %v1591, 16
        %v1699 = vrot.slane %v1697, 4
        %v1700 = vor.u32 %v1699, %v1695
        %v1701 = vrot.slane %v1700, 4
        %v1703 = vshll.u32 %v1592, 16
        %v1705 = vrot.slane %v1703, 5
        %v1706 = vsel %vm1634, %v1701, %v1705
        %v1708 = vshrl.u32 %v1593, 16
        %v1710 = vrot.slane %v1708, 4
        %v1711 = vshll.u32 %v1593, 16
        %v1713 = vrot.slane %v1711, 5
        %v1714 = vor.u32 %v1710, %v1713
        %v1715 = vrot.slane %v1714, 4
        %v1717 = vshll.u32 %v1594, 16
        %v1719 = vrot.slane %v1717, 5
        %v1720 = vsel %vm1634, %v1715, %v1719
        %v1721 = vshrl.u32 %v1594, 16
        %v1723 = vrot.slane %v1721, 4
        %v1724 = vor.u32 %v1723, %v1719
        %v1725 = vrot.slane %v1724, 4
        %v1727 = vshll.u32 %v1595, 16
        %v1729 = vrot.slane %v1727, 5
        %v1730 = vsel %vm1634, %v1725, %v1729
        %v1732 = vshrl.u32 %v1596, 16
        %v1734 = vrot.slane %v1732, 4
        %v1735 = vshll.u32 %v1596, 16
        %v1737 = vrot.slane %v1735, 5
        %v1738 = vor.u32 %v1734, %v1737
        %v1739 = vrot.slane %v1738, 4
        %v1741 = vshll.u32 %v1597, 16
        %v1743 = vrot.slane %v1741, 5
        %v1744 = vsel %vm1634, %v1739, %v1743
        %v1745 = vshrl.u32 %v1597, 16
        %v1747 = vrot.slane %v1745, 4
        %v1748 = vor.u32 %v1747, %v1743
        %v1749 = vrot.slane %v1748, 4
        %v1751 = vshll.u32 %v1598, 16
        %v1753 = vrot.slane %v1751, 5
        %v1754 = vsel %vm1634, %v1749, %v1753
        %v1756 = vshrl.u32 %v1599, 16
        %v1758 = vrot.slane %v1756, 4
        %v1759 = vshll.u32 %v1599, 16
        %v1761 = vrot.slane %v1759, 5
        %v1762 = vor.u32 %v1758, %v1761
        %v1763 = vrot.slane %v1762, 4
        %v1765 = vshll.u32 %v1600, 16
        %v1767 = vrot.slane %v1765, 5
        %v1768 = vsel %vm1634, %v1763, %v1767
        %v1769 = vshrl.u32 %v1600, 16
        %v1771 = vrot.slane %v1769, 4
        %v1772 = vor.u32 %v1771, %v1767
        %v1773 = vrot.slane %v1772, 4
        %v1775 = vshll.u32 %v1601, 16
        %v1777 = vrot.slane %v1775, 5
        %v1778 = vsel %vm1634, %v1773, %v1777
        %v1780 = vshrl.u32 %v1602, 16
        %v1782 = vrot.slane %v1780, 4
        %v1783 = vshll.u32 %v1602, 16
        %v1785 = vrot.slane %v1783, 5
        %v1786 = vor.u32 %v1782, %v1785
        %v1787 = vrot.slane %v1786, 4
        %v1789 = vshll.u32 %v1603, 16
        %v1791 = vrot.slane %v1789, 5
        %v1792 = vsel %vm1634, %v1787, %v1791
        %v1793 = vshrl.u32 %v1603, 16
        %v1795 = vrot.slane %v1793, 4
        %v1796 = vor.u32 %v1795, %v1791
        %v1797 = vrot.slane %v1796, 4
        %v1799 = vshll.u32 %v1604, 16
        %v1801 = vrot.slane %v1799, 5
        %v1802 = vsel %vm1634, %v1797, %v1801
        %v1804 = vshrl.u32 %v1605, 16
        %v1806 = vrot.slane %v1804, 4
        %v1807 = vshll.u32 %v1605, 16
        %v1809 = vrot.slane %v1807, 5
        %v1810 = vor.u32 %v1806, %v1809
        %v1811 = vrot.slane %v1810, 4
        %v1813 = vshll.u32 %v1606, 16
        %v1815 = vrot.slane %v1813, 5
        %v1816 = vsel %vm1634, %v1811, %v1815
        %v1817 = vshrl.u32 %v1606, 16
        %v1819 = vrot.slane %v1817, 4
        %v1820 = vor.u32 %v1819, %v1815
        %v1821 = vrot.slane %v1820, 4
        %v1823 = vshll.u32 %v1607, 16
        %v1825 = vrot.slane %v1823, 5
        %v1826 = vsel %vm1634, %v1821, %v1825
        %v1828 = vshrl.u32 %v1608, 16
        %v1830 = vrot.slane %v1828, 4
        %v1831 = vshll.u32 %v1608, 16
        %v1833 = vrot.slane %v1831, 5
        %v1834 = vor.u32 %v1830, %v1833
        %v1835 = vrot.slane %v1834, 4
        %v1837 = vshll.u32 %v1609, 16
        %v1839 = vrot.slane %v1837, 5
        %v1840 = vsel %vm1634, %v1835, %v1839
        %v1841 = vshrl.u32 %v1609, 16
        %v1843 = vrot.slane %v1841, 4
        %v1844 = vor.u32 %v1843, %v1839
        %v1845 = vrot.slane %v1844, 4
        %v1847 = vshll.u32 %v1610, 16
        %v1849 = vrot.slane %v1847, 5
        %v1850 = vsel %vm1634, %v1845, %v1849
        %v1852 = vshrl.u32 %v1611, 16
        %v1854 = vrot.slane %v1852, 4
        %v1855 = vshll.u32 %v1611, 16
        %v1857 = vrot.slane %v1855, 5
        %v1858 = vor.u32 %v1854, %v1857
        %v1859 = vrot.slane %v1858, 4
        %v1861 = vshll.u32 %v1612, 16
        %v1863 = vrot.slane %v1861, 5
        %v1864 = vsel %vm1634, %v1859, %v1863
        %v1865 = vshrl.u32 %v1612, 16
        %v1867 = vrot.slane %v1865, 4
        %v1868 = vor.u32 %v1867, %v1863
        %v1869 = vrot.slane %v1868, 4
        %v1871 = vshll.u32 %v1613, 16
        %v1873 = vrot.slane %v1871, 5
        %v1874 = vsel %vm1634, %v1869, %v1873
        %v1876 = vshrl.u32 %v1614, 16
        %v1878 = vrot.slane %v1876, 4
        %v1879 = vshll.u32 %v1614, 16
        %v1881 = vrot.slane %v1879, 5
        %v1882 = vor.u32 %v1878, %v1881
        %v1883 = vrot.slane %v1882, 4
        %v1885 = vshll.u32 %v1615, 16
        %v1887 = vrot.slane %v1885, 5
        %v1888 = vsel %vm1634, %v1883, %v1887
        %v1889 = vshrl.u32 %v1615, 16
        %v1891 = vrot.slane %v1889, 4
        %v1892 = vor.u32 %v1891, %v1887
        %v1893 = vrot.slane %v1892, 4
        %v1895 = vshll.u32 %v1616, 16
        %v1897 = vrot.slane %v1895, 5
        %v1898 = vsel %vm1634, %v1893, %v1897
        %v1900 = vshrl.u32 %v1617, 16
        %v1902 = vrot.slane %v1900, 4
        %v1903 = vshll.u32 %v1617, 16
        %v1905 = vrot.slane %v1903, 5
        %v1906 = vor.u32 %v1902, %v1905
        %v1907 = vrot.slane %v1906, 4
        %v1909 = vshll.u32 %v1618, 16
        %v1911 = vrot.slane %v1909, 5
        %v1912 = vsel %vm1634, %v1907, %v1911
        %v1913 = vshrl.u32 %v1618, 16
        %v1915 = vrot.slane %v1913, 4
        %v1916 = vor.u32 %v1915, %v1911
        %v1917 = vrot.slane %v1916, 4
        %v1919 = vshll.u32 %v1619, 16
        %v1921 = vrot.slane %v1919, 5
        %v1922 = vsel %vm1634, %v1917, %v1921
        %v1924 = vshrl.u32 %v1620, 16
        %v1926 = vrot.slane %v1924, 4
        %v1927 = vshll.u32 %v1620, 16
        %v1929 = vrot.slane %v1927, 5
        %v1930 = vor.u32 %v1926, %v1929
        %v1931 = vrot.slane %v1930, 4
        %v1933 = vshll.u32 %v1621, 16
        %v1935 = vrot.slane %v1933, 5
        %v1936 = vsel %vm1634, %v1931, %v1935
        %v1937 = vshrl.u32 %v1621, 16
        %v1939 = vrot.slane %v1937, 4
        %v1940 = vor.u32 %v1939, %v1935
        %v1941 = vrot.slane %v1940, 4
        %v1943 = vshll.u32 %v1622, 16
        %v1945 = vrot.slane %v1943, 5
        %v1946 = vsel %vm1634, %v1941, %v1945
        %v1948 = vshrl.u32 %v1623, 16
        %v1950 = vrot.slane %v1948, 4
        %v1951 = vshll.u32 %v1623, 16
        %v1953 = vrot.slane %v1951, 5
        %v1954 = vor.u32 %v1950, %v1953
        %v1955 = vrot.slane %v1954, 4
        %v1957 = vshll.u32 %v1624, 16
        %v1959 = vrot.slane %v1957, 5
        %v1960 = vsel %vm1634, %v1955, %v1959
        %v1961 = vshrl.u32 %v1624, 16
        %v1963 = vrot.slane %v1961, 4
        %v1964 = vor.u32 %v1963, %v1959
        %v1965 = vrot.slane %v1964, 4
        %v1967 = vshll.u32 %v1625, 16
        %v1969 = vrot.slane %v1967, 5
        %v1970 = vsel %vm1634, %v1965, %v1969
        %v1972 = vshrl.u32 %v1626, 16
        %v1974 = vrot.slane %v1972, 4
        %v1975 = vshll.u32 %v1626, 16
        %v1977 = vrot.slane %v1975, 5
        %v1978 = vor.u32 %v1974, %v1977
        %v1979 = vrot.slane %v1978, 4
        %v1981 = vshll.u32 %v1627, 16
        %v1983 = vrot.slane %v1981, 5
        %v1984 = vsel %vm1634, %v1979, %v1983
        %v1985 = vshrl.u32 %v1627, 16
        %v1987 = vrot.slane %v1985, 4
        %v1988 = vor.u32 %v1987, %v1983
        %v1989 = vrot.slane %v1988, 4
        %v1991 = vshll.u32 %v1628, 16
        %v1993 = vrot.slane %v1991, 5
        %v1994 = vsel %vm1634, %v1989, %v1993
        %v1996 = vshrl.u32 %v1629, 16
        %v1998 = vrot.slane %v1996, 4
        %v1999 = vshll.u32 %v1629, 16
        %v2001 = vrot.slane %v1999, 5
        %v2002 = vor.u32 %v1998, %v2001
        %v2003 = vrot.slane %v2002, 4
        %v2005 = vshll.u32 %v1630, 16
        %v2007 = vrot.slane %v2005, 5
        %v2008 = vsel %vm1634, %v2003, %v2007
        %v2009 = vshrl.u32 %v1630, 16
        %v2011 = vrot.slane %v2009, 4
        %v2012 = vor.u32 %v2011, %v2007
        %v2013 = vrot.slane %v2012, 4
        %v2015 = vshll.u32 %v1631, 16
        %v2017 = vrot.slane %v2015, 5
        %v2018 = vsel %vm1634, %v2013, %v2017
        %v2019 = vld [vmem:[#allocation3] sm:$0xff]
        %v2020 = vld [vmem:[#allocation3 + $0x8] sm:$0xff]
        %v2021 = vld [vmem:[#allocation3 + $0x10] sm:$0xff]
        %v2022 = vld [vmem:[#allocation3 + $0x18] sm:$0xff]
        %v2023 = vld [vmem:[#allocation3 + $0x20] sm:$0xff]
        %v2024 = vld [vmem:[#allocation3 + $0x28] sm:$0xff]
        %v2025 = vld [vmem:[#allocation3 + $0x30] sm:$0xff]
        %v2026 = vld [vmem:[#allocation3 + $0x38] sm:$0xff]
        %v2027 = vld [vmem:[#allocation3 + $0x40] sm:$0xff]
        %v2028 = vld [vmem:[#allocation3 + $0x48] sm:$0xff]
        %v2029 = vld [vmem:[#allocation3 + $0x50] sm:$0xff]
        %v2030 = vld [vmem:[#allocation3 + $0x58] sm:$0xff]
        %v2031 = vld [vmem:[#allocation3 + $0x60] sm:$0xff]
        %v2032 = vld [vmem:[#allocation3 + $0x68] sm:$0xff]
        %v2033 = vld [vmem:[#allocation3 + $0x70] sm:$0xff]
        %v2034 = vld [vmem:[#allocation3 + $0x78] sm:$0xff]
        %v2035 = vld [vmem:[#allocation3 + $0x80] sm:$0xff]
        %v2036 = vld [vmem:[#allocation3 + $0x88] sm:$0xff]
        %v2037 = vld [vmem:[#allocation3 + $0x90] sm:$0xff]
        %v2038 = vld [vmem:[#allocation3 + $0x98] sm:$0xff]
        %v2039 = vld [vmem:[#allocation3 + $0xa0] sm:$0xff]
        %v2040 = vld [vmem:[#allocation3 + $0xa8] sm:$0xff]
        %v2041 = vld [vmem:[#allocation3 + $0xb0] sm:$0xff]
        %v2042 = vld [vmem:[#allocation3 + $0xb8] sm:$0xff]
        %v2043 = vld [vmem:[#allocation3 + $0xc0] sm:$0xff]
        %v2044 = vld [vmem:[#allocation3 + $0xc8] sm:$0xff]
        %v2045 = vld [vmem:[#allocation3 + $0xd0] sm:$0xff]
        %v2046 = vld [vmem:[#allocation3 + $0xd8] sm:$0xff]
        %v2047 = vld [vmem:[#allocation3 + $0xe0] sm:$0xff]
        %v2048 = vld [vmem:[#allocation3 + $0xe8] sm:$0xff]
        %v2049 = vld [vmem:[#allocation3 + $0xf0] sm:$0xff]
        %v2050 = vld [vmem:[#allocation3 + $0xf8] sm:$0xff]
        %s2051 = scalar_lea.vmem [#allocation7], 128
        %v2052 = vld [vmem:[%s2051] sm:$0xf]
        %v2053 = vld [vmem:[%s2051 + $0x4] sm:$0xf]
        %v2054 = vld [vmem:[%s2051 + $0x8] sm:$0xf]
        %v2055 = vld [vmem:[%s2051 + $0xc] sm:$0xf]
        %v2056 = vld [vmem:[%s2051 + $0x10] sm:$0xf]
        %v2057 = vld [vmem:[%s2051 + $0x14] sm:$0xf]
        %v2058 = vld [vmem:[%s2051 + $0x18] sm:$0xf]
        %v2059 = vld [vmem:[%s2051 + $0x1c] sm:$0xf]
        %v2060 = vld [vmem:[%s2051 + $0x20] sm:$0xf]
        %v2061 = vld [vmem:[%s2051 + $0x24] sm:$0xf]
        %v2062 = vld [vmem:[%s2051 + $0x28] sm:$0xf]
        %v2063 = vld [vmem:[%s2051 + $0x2c] sm:$0xf]
        %v2064 = vld [vmem:[%s2051 + $0x30] sm:$0xf]
        %v2065 = vld [vmem:[%s2051 + $0x34] sm:$0xf]
        %v2066 = vld [vmem:[%s2051 + $0x38] sm:$0xf]
        %v2067 = vld [vmem:[%s2051 + $0x3c] sm:$0xf]
        %v2068 = vunpack.c.l.b16 %v1648
        %v2069 = vunpack.c.l.b16 %v1658
        %v2070 = vunpack.c.l.b16 %v1672
        %v2071 = vunpack.c.l.b16 %v1682
        %v2072 = vunpack.c.l.b16 %v1696
        %v2073 = vunpack.c.l.b16 %v1706
        %v2074 = vunpack.c.l.b16 %v1720
        %v2075 = vunpack.c.l.b16 %v1730
        %v2076 = vunpack.c.l.b16 %v1744
        %v2077 = vunpack.c.l.b16 %v1754
        %v2078 = vunpack.c.l.b16 %v1768
        %v2079 = vunpack.c.l.b16 %v1778
        %v2080 = vunpack.c.l.b16 %v1792
        %v2081 = vunpack.c.l.b16 %v1802
        %v2082 = vunpack.c.l.b16 %v1816
        %v2083 = vunpack.c.l.b16 %v1826
        %v2084 = vunpack.c.l.b16 %v1840
        %v2085 = vunpack.c.l.b16 %v1850
        %v2086 = vunpack.c.l.b16 %v1864
        %v2087 = vunpack.c.l.b16 %v1874
        %v2088 = vunpack.c.l.b16 %v1888
        %v2089 = vunpack.c.l.b16 %v1898
        %v2090 = vunpack.c.l.b16 %v1912
        %v2091 = vunpack.c.l.b16 %v1922
        %v2092 = vunpack.c.l.b16 %v1936
        %v2093 = vunpack.c.l.b16 %v1946
        %v2094 = vunpack.c.l.b16 %v1960
        %v2095 = vunpack.c.l.b16 %v1970
        %v2096 = vunpack.c.l.b16 %v1984
        %v2097 = vunpack.c.l.b16 %v1994
        %v2098 = vunpack.c.l.b16 %v2008
        %v2099 = vunpack.c.l.b16 %v2018
        %v2100 = vpack.c.b16 %v2069, %v2068
        %v2101 = vpack.c.b16 %v2071, %v2070
        %v2102 = vpack.c.b16 %v2073, %v2072
        %v2103 = vpack.c.b16 %v2075, %v2074
        %v2104 = vpack.c.b16 %v2077, %v2076
        %v2105 = vpack.c.b16 %v2079, %v2078
        %v2106 = vpack.c.b16 %v2081, %v2080
        %v2107 = vpack.c.b16 %v2083, %v2082
        %v2108 = vpack.c.b16 %v2085, %v2084
        %v2109 = vpack.c.b16 %v2087, %v2086
        %v2110 = vpack.c.b16 %v2089, %v2088
        %v2111 = vpack.c.b16 %v2091, %v2090
        %v2112 = vpack.c.b16 %v2093, %v2092
        %v2113 = vpack.c.b16 %v2095, %v2094
        %v2114 = vpack.c.b16 %v2097, %v2096
        %v2115 = vpack.c.b16 %v2099, %v2098
        %v2148 = vunpack.c.l.b16 %v2052
        %v2149 = vunpack.c.l.b16 %v2053
        %v2150 = vunpack.c.l.b16 %v2054
        %v2151 = vunpack.c.l.b16 %v2055
        %v2152 = vunpack.c.l.b16 %v2056
        %v2153 = vunpack.c.l.b16 %v2057
        %v2154 = vunpack.c.l.b16 %v2058
        %v2155 = vunpack.c.l.b16 %v2059
        %v2156 = vunpack.c.l.b16 %v2060
        %v2157 = vunpack.c.l.b16 %v2061
        %v2158 = vunpack.c.l.b16 %v2062
        %v2159 = vunpack.c.l.b16 %v2063
        %v2160 = vunpack.c.l.b16 %v2064
        %v2161 = vunpack.c.l.b16 %v2065
        %v2162 = vunpack.c.l.b16 %v2066
        %v2163 = vunpack.c.l.b16 %v2067
        %v2164 = vpack.c.b16 %v2149, %v2148
        %v2165 = vpack.c.b16 %v2151, %v2150
        %v2166 = vpack.c.b16 %v2153, %v2152
        %v2167 = vpack.c.b16 %v2155, %v2154
        %v2168 = vpack.c.b16 %v2157, %v2156
        %v2169 = vpack.c.b16 %v2159, %v2158
        %v2170 = vpack.c.b16 %v2161, %v2160
        %v2171 = vpack.c.b16 %v2163, %v2162
        %2180 = vmatpush.bf16.msra.mxu0 %v2171
        %2181 = vmatpush.bf16.msra.mxu0 %v2170
        %2182 = vmatpush.bf16.msra.mxu0 %v2169
        %2183 = vmatpush.bf16.msra.mxu0 %v2168
        %2184 = vmatpush.bf16.msra.mxu0 %v2167
        %2185 = vmatpush.bf16.msra.mxu0 %v2166
        %2186 = vmatpush.bf16.msra.mxu0 %v2165
        %2187 = vmatpush.bf16.msra.mxu0 %v2164
        %2188 = vmatmul.bf16.gmra.mxu0 %v2100
        %v2189 = vpop.f32.mrf.mxu0
        %v2190 = vadd.f32 0.0, %v2189
        %v2191 = vpop.f32.mrf.mxu0
        %v2192 = vadd.f32 0.0, %v2191
        %2193 = vmatmul.bf16.gmra.mxu0 %v2101
        %v2194 = vpop.f32.mrf.mxu0
        %v2195 = vadd.f32 0.0, %v2194
        %v2196 = vpop.f32.mrf.mxu0
        %v2197 = vadd.f32 0.0, %v2196
        %2198 = vmatmul.bf16.gmra.mxu0 %v2102
        %v2199 = vpop.f32.mrf.mxu0
        %v2200 = vadd.f32 0.0, %v2199
        %v2201 = vpop.f32.mrf.mxu0
        %v2202 = vadd.f32 0.0, %v2201
        %2203 = vmatmul.bf16.gmra.mxu0 %v2103
        %v2204 = vpop.f32.mrf.mxu0
        %v2205 = vadd.f32 0.0, %v2204
        %v2206 = vpop.f32.mrf.mxu0
        %v2207 = vadd.f32 0.0, %v2206
        %2208 = vmatmul.bf16.gmra.mxu0 %v2104
        %v2209 = vpop.f32.mrf.mxu0
        %v2210 = vadd.f32 0.0, %v2209
        %v2211 = vpop.f32.mrf.mxu0
        %v2212 = vadd.f32 0.0, %v2211
        %2213 = vmatmul.bf16.gmra.mxu0 %v2105
        %v2214 = vpop.f32.mrf.mxu0
        %v2215 = vadd.f32 0.0, %v2214
        %v2216 = vpop.f32.mrf.mxu0
        %v2217 = vadd.f32 0.0, %v2216
        %2218 = vmatmul.bf16.gmra.mxu0 %v2106
        %v2219 = vpop.f32.mrf.mxu0
        %v2220 = vadd.f32 0.0, %v2219
        %v2221 = vpop.f32.mrf.mxu0
        %v2222 = vadd.f32 0.0, %v2221
        %2223 = vmatmul.bf16.gmra.mxu0 %v2107
        %v2224 = vpop.f32.mrf.mxu0
        %v2225 = vadd.f32 0.0, %v2224
        %v2226 = vpop.f32.mrf.mxu0
        %v2227 = vadd.f32 0.0, %v2226
        %2228 = vmatmul.bf16.gmra.mxu0 %v2108
        %v2229 = vpop.f32.mrf.mxu0
        %v2230 = vadd.f32 0.0, %v2229
        %v2231 = vpop.f32.mrf.mxu0
        %v2232 = vadd.f32 0.0, %v2231
        %2233 = vmatmul.bf16.gmra.mxu0 %v2109
        %v2234 = vpop.f32.mrf.mxu0
        %v2235 = vadd.f32 0.0, %v2234
        %v2236 = vpop.f32.mrf.mxu0
        %v2237 = vadd.f32 0.0, %v2236
        %2238 = vmatmul.bf16.gmra.mxu0 %v2110
        %v2239 = vpop.f32.mrf.mxu0
        %v2240 = vadd.f32 0.0, %v2239
        %v2241 = vpop.f32.mrf.mxu0
        %v2242 = vadd.f32 0.0, %v2241
        %2243 = vmatmul.bf16.gmra.mxu0 %v2111
        %v2244 = vpop.f32.mrf.mxu0
        %v2245 = vadd.f32 0.0, %v2244
        %v2246 = vpop.f32.mrf.mxu0
        %v2247 = vadd.f32 0.0, %v2246
        %2248 = vmatmul.bf16.gmra.mxu0 %v2112
        %v2249 = vpop.f32.mrf.mxu0
        %v2250 = vadd.f32 0.0, %v2249
        %v2251 = vpop.f32.mrf.mxu0
        %v2252 = vadd.f32 0.0, %v2251
        %2253 = vmatmul.bf16.gmra.mxu0 %v2113
        %v2254 = vpop.f32.mrf.mxu0
        %v2255 = vadd.f32 0.0, %v2254
        %v2256 = vpop.f32.mrf.mxu0
        %v2257 = vadd.f32 0.0, %v2256
        %2258 = vmatmul.bf16.gmra.mxu0 %v2114
        %v2259 = vpop.f32.mrf.mxu0
        %v2260 = vadd.f32 0.0, %v2259
        %v2261 = vpop.f32.mrf.mxu0
        %v2262 = vadd.f32 0.0, %v2261
        %2263 = vmatmul.bf16.gmra.mxu0 %v2115
        %v2264 = vpop.f32.mrf.mxu0
        %v2265 = vadd.f32 0.0, %v2264
        %v2266 = vpop.f32.mrf.mxu0
        %v2267 = vadd.f32 0.0, %v2266
        %2268 = vdwg.mxu0
        %v2269 = vadd.f32 %v2019, %v2190
        %v2270 = vadd.f32 %v2020, %v2192
        %v2271 = vadd.f32 %v2021, %v2195
        %v2272 = vadd.f32 %v2022, %v2197
        %v2273 = vadd.f32 %v2023, %v2200
        %v2274 = vadd.f32 %v2024, %v2202
        %v2275 = vadd.f32 %v2025, %v2205
        %v2276 = vadd.f32 %v2026, %v2207
        %v2277 = vadd.f32 %v2027, %v2210
        %v2278 = vadd.f32 %v2028, %v2212
        %v2279 = vadd.f32 %v2029, %v2215
        %v2280 = vadd.f32 %v2030, %v2217
        %v2281 = vadd.f32 %v2031, %v2220
        %v2282 = vadd.f32 %v2032, %v2222
        %v2283 = vadd.f32 %v2033, %v2225
        %v2284 = vadd.f32 %v2034, %v2227
        %v2285 = vadd.f32 %v2035, %v2230
        %v2286 = vadd.f32 %v2036, %v2232
        %v2287 = vadd.f32 %v2037, %v2235
        %v2288 = vadd.f32 %v2038, %v2237
        %v2289 = vadd.f32 %v2039, %v2240
        %v2290 = vadd.f32 %v2040, %v2242
        %v2291 = vadd.f32 %v2041, %v2245
        %v2292 = vadd.f32 %v2042, %v2247
        %v2293 = vadd.f32 %v2043, %v2250
        %v2294 = vadd.f32 %v2044, %v2252
        %v2295 = vadd.f32 %v2045, %v2255
        %v2296 = vadd.f32 %v2046, %v2257
        %v2297 = vadd.f32 %v2047, %v2260
        %v2298 = vadd.f32 %v2048, %v2262
        %v2299 = vadd.f32 %v2049, %v2265
        %v2300 = vadd.f32 %v2050, %v2267
        %2301 = vst [vmem:[#allocation3] sm:$0xff] %v2269
        %2302 = vst [vmem:[#allocation3 + $0x8] sm:$0xff] %v2270
        %2303 = vst [vmem:[#allocation3 + $0x10] sm:$0xff] %v2271
        %2304 = vst [vmem:[#allocation3 + $0x18] sm:$0xff] %v2272
        %2305 = vst [vmem:[#allocation3 + $0x20] sm:$0xff] %v2273
        %2306 = vst [vmem:[#allocation3 + $0x28] sm:$0xff] %v2274
        %2307 = vst [vmem:[#allocation3 + $0x30] sm:$0xff] %v2275
        %2308 = vst [vmem:[#allocation3 + $0x38] sm:$0xff] %v2276
        %2309 = vst [vmem:[#allocation3 + $0x40] sm:$0xff] %v2277
        %2310 = vst [vmem:[#allocation3 + $0x48] sm:$0xff] %v2278
        %2311 = vst [vmem:[#allocation3 + $0x50] sm:$0xff] %v2279
        %2312 = vst [vmem:[#allocation3 + $0x58] sm:$0xff] %v2280
        %2313 = vst [vmem:[#allocation3 + $0x60] sm:$0xff] %v2281
        %2314 = vst [vmem:[#allocation3 + $0x68] sm:$0xff] %v2282
        %2315 = vst [vmem:[#allocation3 + $0x70] sm:$0xff] %v2283
        %2316 = vst [vmem:[#allocation3 + $0x78] sm:$0xff] %v2284
        %2317 = vst [vmem:[#allocation3 + $0x80] sm:$0xff] %v2285
        %2318 = vst [vmem:[#allocation3 + $0x88] sm:$0xff] %v2286
        %2319 = vst [vmem:[#allocation3 + $0x90] sm:$0xff] %v2287
        %2320 = vst [vmem:[#allocation3 + $0x98] sm:$0xff] %v2288
        %2321 = vst [vmem:[#allocation3 + $0xa0] sm:$0xff] %v2289
        %2322 = vst [vmem:[#allocation3 + $0xa8] sm:$0xff] %v2290
        %2323 = vst [vmem:[#allocation3 + $0xb0] sm:$0xff] %v2291
        %2324 = vst [vmem:[#allocation3 + $0xb8] sm:$0xff] %v2292
        %2325 = vst [vmem:[#allocation3 + $0xc0] sm:$0xff] %v2293
        %2326 = vst [vmem:[#allocation3 + $0xc8] sm:$0xff] %v2294
        %2327 = vst [vmem:[#allocation3 + $0xd0] sm:$0xff] %v2295
        %2328 = vst [vmem:[#allocation3 + $0xd8] sm:$0xff] %v2296
        %2329 = vst [vmem:[#allocation3 + $0xe0] sm:$0xff] %v2297
        %2330 = vst [vmem:[#allocation3 + $0xe8] sm:$0xff] %v2298
        %2331 = vst [vmem:[#allocation3 + $0xf0] sm:$0xff] %v2299
        %2332 = vst [vmem:[#allocation3 + $0xf8] sm:$0xff] %v2300
        %v2333 = vld [vmem:[%s292 + $0x4] sm:$0x8]
        %v2334 = vld [vmem:[%s292 + $0x8] sm:$0xf]
        %v2335 = vld [vmem:[%s292 + $0xc] sm:$0xf]
        %v2336 = vld [vmem:[%s292 + $0x1c] sm:$0x8]
        %v2337 = vld [vmem:[%s292 + $0x20] sm:$0xf]
        %v2338 = vld [vmem:[%s292 + $0x24] sm:$0xf]
        %v2339 = vld [vmem:[%s292 + $0x34] sm:$0x8]
        %v2340 = vld [vmem:[%s292 + $0x38] sm:$0xf]
        %v2341 = vld [vmem:[%s292 + $0x3c] sm:$0xf]
        %v2342 = vld [vmem:[%s292 + $0x4c] sm:$0x8]
        %v2343 = vld [vmem:[%s292 + $0x50] sm:$0xf]
        %v2344 = vld [vmem:[%s292 + $0x54] sm:$0xf]
        %v2345 = vld [vmem:[%s292 + $0x64] sm:$0x8]
        %v2346 = vld [vmem:[%s292 + $0x68] sm:$0xf]
        %v2347 = vld [vmem:[%s292 + $0x6c] sm:$0xf]
        %v2348 = vld [vmem:[%s292 + $0x7c] sm:$0x8]
        %v2349 = vld [vmem:[%s292 + $0x80] sm:$0xf]
        %v2350 = vld [vmem:[%s292 + $0x84] sm:$0xf]
        %v2351 = vld [vmem:[%s292 + $0x94] sm:$0x8]
        %v2352 = vld [vmem:[%s292 + $0x98] sm:$0xf]
        %v2353 = vld [vmem:[%s292 + $0x9c] sm:$0xf]
        %v2354 = vld [vmem:[%s292 + $0xac] sm:$0x8]
        %v2355 = vld [vmem:[%s292 + $0xb0] sm:$0xf]
        %v2356 = vld [vmem:[%s292 + $0xb4] sm:$0xf]
        %v2357 = vld [vmem:[%s292 + $0xc4] sm:$0x8]
        %v2358 = vld [vmem:[%s292 + $0xc8] sm:$0xf]
        %v2359 = vld [vmem:[%s292 + $0xcc] sm:$0xf]
        %v2360 = vld [vmem:[%s292 + $0xdc] sm:$0x8]
        %v2361 = vld [vmem:[%s292 + $0xe0] sm:$0xf]
        %v2362 = vld [vmem:[%s292 + $0xe4] sm:$0xf]
        %v2363 = vld [vmem:[%s292 + $0xf4] sm:$0x8]
        %v2364 = vld [vmem:[%s292 + $0xf8] sm:$0xf]
        %v2365 = vld [vmem:[%s292 + $0xfc] sm:$0xf]
        %v2366 = vld [vmem:[%s292 + $0x10c] sm:$0x8]
        %v2367 = vld [vmem:[%s292 + $0x110] sm:$0xf]
        %v2368 = vld [vmem:[%s292 + $0x114] sm:$0xf]
        %v2369 = vld [vmem:[%s292 + $0x124] sm:$0x8]
        %v2370 = vld [vmem:[%s292 + $0x128] sm:$0xf]
        %v2371 = vld [vmem:[%s292 + $0x12c] sm:$0xf]
        %v2372 = vld [vmem:[%s292 + $0x13c] sm:$0x8]
        %v2373 = vld [vmem:[%s292 + $0x140] sm:$0xf]
        %v2374 = vld [vmem:[%s292 + $0x144] sm:$0xf]
        %v2375 = vld [vmem:[%s292 + $0x154] sm:$0x8]
        %v2376 = vld [vmem:[%s292 + $0x158] sm:$0xf]
        %v2377 = vld [vmem:[%s292 + $0x15c] sm:$0xf]
        %v2378 = vld [vmem:[%s292 + $0x16c] sm:$0x8]
        %v2379 = vld [vmem:[%s292 + $0x170] sm:$0xf]
        %v2380 = vld [vmem:[%s292 + $0x174] sm:$0xf]
        %v2382 = vshrl.u32 %v2333, 16
        %v2384 = vrot.slane %v2382, 7
        %v2385 = vrot.slane %v2384, 4
        %v2387 = vshrl.u32 %v2334, 16
        %v2389 = vrot.slane %v2387, 7
        %v2390 = vshll.u32 %v2334, 16
        %v2392 = vor.u32 %v2389, %v2390
        %v2393 = vsel %vm540, %v2385, %v2392
        %v2394 = vrot.slane %v2389, 4
        %v2396 = vshrl.u32 %v2335, 16
        %v2398 = vrot.slane %v2396, 7
        %v2399 = vshll.u32 %v2335, 16
        %v2401 = vor.u32 %v2398, %v2399
        %v2402 = vsel %vm540, %v2394, %v2401
        %v2404 = vshrl.u32 %v2336, 16
        %v2406 = vrot.slane %v2404, 7
        %v2407 = vrot.slane %v2406, 4
        %v2409 = vshrl.u32 %v2337, 16
        %v2411 = vrot.slane %v2409, 7
        %v2412 = vshll.u32 %v2337, 16
        %v2414 = vor.u32 %v2411, %v2412
        %v2415 = vsel %vm540, %v2407, %v2414
        %v2416 = vrot.slane %v2411, 4
        %v2418 = vshrl.u32 %v2338, 16
        %v2420 = vrot.slane %v2418, 7
        %v2421 = vshll.u32 %v2338, 16
        %v2423 = vor.u32 %v2420, %v2421
        %v2424 = vsel %vm540, %v2416, %v2423
        %v2426 = vshrl.u32 %v2339, 16
        %v2428 = vrot.slane %v2426, 7
        %v2429 = vrot.slane %v2428, 4
        %v2431 = vshrl.u32 %v2340, 16
        %v2433 = vrot.slane %v2431, 7
        %v2434 = vshll.u32 %v2340, 16
        %v2436 = vor.u32 %v2433, %v2434
        %v2437 = vsel %vm540, %v2429, %v2436
        %v2438 = vrot.slane %v2433, 4
        %v2440 = vshrl.u32 %v2341, 16
        %v2442 = vrot.slane %v2440, 7
        %v2443 = vshll.u32 %v2341, 16
        %v2445 = vor.u32 %v2442, %v2443
        %v2446 = vsel %vm540, %v2438, %v2445
        %v2448 = vshrl.u32 %v2342, 16
        %v2450 = vrot.slane %v2448, 7
        %v2451 = vrot.slane %v2450, 4
        %v2453 = vshrl.u32 %v2343, 16
        %v2455 = vrot.slane %v2453, 7
        %v2456 = vshll.u32 %v2343, 16
        %v2458 = vor.u32 %v2455, %v2456
        %v2459 = vsel %vm540, %v2451, %v2458
        %v2460 = vrot.slane %v2455, 4
        %v2462 = vshrl.u32 %v2344, 16
        %v2464 = vrot.slane %v2462, 7
        %v2465 = vshll.u32 %v2344, 16
        %v2467 = vor.u32 %v2464, %v2465
        %v2468 = vsel %vm540, %v2460, %v2467
        %v2470 = vshrl.u32 %v2345, 16
        %v2472 = vrot.slane %v2470, 7
        %v2473 = vrot.slane %v2472, 4
        %v2475 = vshrl.u32 %v2346, 16
        %v2477 = vrot.slane %v2475, 7
        %v2478 = vshll.u32 %v2346, 16
        %v2480 = vor.u32 %v2477, %v2478
        %v2481 = vsel %vm540, %v2473, %v2480
        %v2482 = vrot.slane %v2477, 4
        %v2484 = vshrl.u32 %v2347, 16
        %v2486 = vrot.slane %v2484, 7
        %v2487 = vshll.u32 %v2347, 16
        %v2489 = vor.u32 %v2486, %v2487
        %v2490 = vsel %vm540, %v2482, %v2489
        %v2492 = vshrl.u32 %v2348, 16
        %v2494 = vrot.slane %v2492, 7
        %v2495 = vrot.slane %v2494, 4
        %v2497 = vshrl.u32 %v2349, 16
        %v2499 = vrot.slane %v2497, 7
        %v2500 = vshll.u32 %v2349, 16
        %v2502 = vor.u32 %v2499, %v2500
        %v2503 = vsel %vm540, %v2495, %v2502
        %v2504 = vrot.slane %v2499, 4
        %v2506 = vshrl.u32 %v2350, 16
        %v2508 = vrot.slane %v2506, 7
        %v2509 = vshll.u32 %v2350, 16
        %v2511 = vor.u32 %v2508, %v2509
        %v2512 = vsel %vm540, %v2504, %v2511
        %v2514 = vshrl.u32 %v2351, 16
        %v2516 = vrot.slane %v2514, 7
        %v2517 = vrot.slane %v2516, 4
        %v2519 = vshrl.u32 %v2352, 16
        %v2521 = vrot.slane %v2519, 7
        %v2522 = vshll.u32 %v2352, 16
        %v2524 = vor.u32 %v2521, %v2522
        %v2525 = vsel %vm540, %v2517, %v2524
        %v2526 = vrot.slane %v2521, 4
        %v2528 = vshrl.u32 %v2353, 16
        %v2530 = vrot.slane %v2528, 7
        %v2531 = vshll.u32 %v2353, 16
        %v2533 = vor.u32 %v2530, %v2531
        %v2534 = vsel %vm540, %v2526, %v2533
        %v2536 = vshrl.u32 %v2354, 16
        %v2538 = vrot.slane %v2536, 7
        %v2539 = vrot.slane %v2538, 4
        %v2541 = vshrl.u32 %v2355, 16
        %v2543 = vrot.slane %v2541, 7
        %v2544 = vshll.u32 %v2355, 16
        %v2546 = vor.u32 %v2543, %v2544
        %v2547 = vsel %vm540, %v2539, %v2546
        %v2548 = vrot.slane %v2543, 4
        %v2550 = vshrl.u32 %v2356, 16
        %v2552 = vrot.slane %v2550, 7
        %v2553 = vshll.u32 %v2356, 16
        %v2555 = vor.u32 %v2552, %v2553
        %v2556 = vsel %vm540, %v2548, %v2555
        %v2558 = vshrl.u32 %v2357, 16
        %v2560 = vrot.slane %v2558, 7
        %v2561 = vrot.slane %v2560, 4
        %v2563 = vshrl.u32 %v2358, 16
        %v2565 = vrot.slane %v2563, 7
        %v2566 = vshll.u32 %v2358, 16
        %v2568 = vor.u32 %v2565, %v2566
        %v2569 = vsel %vm540, %v2561, %v2568
        %v2570 = vrot.slane %v2565, 4
        %v2572 = vshrl.u32 %v2359, 16
        %v2574 = vrot.slane %v2572, 7
        %v2575 = vshll.u32 %v2359, 16
        %v2577 = vor.u32 %v2574, %v2575
        %v2578 = vsel %vm540, %v2570, %v2577
        %v2580 = vshrl.u32 %v2360, 16
        %v2582 = vrot.slane %v2580, 7
        %v2583 = vrot.slane %v2582, 4
        %v2585 = vshrl.u32 %v2361, 16
        %v2587 = vrot.slane %v2585, 7
        %v2588 = vshll.u32 %v2361, 16
        %v2590 = vor.u32 %v2587, %v2588
        %v2591 = vsel %vm540, %v2583, %v2590
        %v2592 = vrot.slane %v2587, 4
        %v2594 = vshrl.u32 %v2362, 16
        %v2596 = vrot.slane %v2594, 7
        %v2597 = vshll.u32 %v2362, 16
        %v2599 = vor.u32 %v2596, %v2597
        %v2600 = vsel %vm540, %v2592, %v2599
        %v2602 = vshrl.u32 %v2363, 16
        %v2604 = vrot.slane %v2602, 7
        %v2605 = vrot.slane %v2604, 4
        %v2607 = vshrl.u32 %v2364, 16
        %v2609 = vrot.slane %v2607, 7
        %v2610 = vshll.u32 %v2364, 16
        %v2612 = vor.u32 %v2609, %v2610
        %v2613 = vsel %vm540, %v2605, %v2612
        %v2614 = vrot.slane %v2609, 4
        %v2616 = vshrl.u32 %v2365, 16
        %v2618 = vrot.slane %v2616, 7
        %v2619 = vshll.u32 %v2365, 16
        %v2621 = vor.u32 %v2618, %v2619
        %v2622 = vsel %vm540, %v2614, %v2621
        %v2624 = vshrl.u32 %v2366, 16
        %v2626 = vrot.slane %v2624, 7
        %v2627 = vrot.slane %v2626, 4
        %v2629 = vshrl.u32 %v2367, 16
        %v2631 = vrot.slane %v2629, 7
        %v2632 = vshll.u32 %v2367, 16
        %v2634 = vor.u32 %v2631, %v2632
        %v2635 = vsel %vm540, %v2627, %v2634
        %v2636 = vrot.slane %v2631, 4
        %v2638 = vshrl.u32 %v2368, 16
        %v2640 = vrot.slane %v2638, 7
        %v2641 = vshll.u32 %v2368, 16
        %v2643 = vor.u32 %v2640, %v2641
        %v2644 = vsel %vm540, %v2636, %v2643
        %v2646 = vshrl.u32 %v2369, 16
        %v2648 = vrot.slane %v2646, 7
        %v2649 = vrot.slane %v2648, 4
        %v2651 = vshrl.u32 %v2370, 16
        %v2653 = vrot.slane %v2651, 7
        %v2654 = vshll.u32 %v2370, 16
        %v2656 = vor.u32 %v2653, %v2654
        %v2657 = vsel %vm540, %v2649, %v2656
        %v2658 = vrot.slane %v2653, 4
        %v2660 = vshrl.u32 %v2371, 16
        %v2662 = vrot.slane %v2660, 7
        %v2663 = vshll.u32 %v2371, 16
        %v2665 = vor.u32 %v2662, %v2663
        %v2666 = vsel %vm540, %v2658, %v2665
        %v2668 = vshrl.u32 %v2372, 16
        %v2670 = vrot.slane %v2668, 7
        %v2671 = vrot.slane %v2670, 4
        %v2673 = vshrl.u32 %v2373, 16
        %v2675 = vrot.slane %v2673, 7
        %v2676 = vshll.u32 %v2373, 16
        %v2678 = vor.u32 %v2675, %v2676
        %v2679 = vsel %vm540, %v2671, %v2678
        %v2680 = vrot.slane %v2675, 4
        %v2682 = vshrl.u32 %v2374, 16
        %v2684 = vrot.slane %v2682, 7
        %v2685 = vshll.u32 %v2374, 16
        %v2687 = vor.u32 %v2684, %v2685
        %v2688 = vsel %vm540, %v2680, %v2687
        %v2690 = vshrl.u32 %v2375, 16
        %v2692 = vrot.slane %v2690, 7
        %v2693 = vrot.slane %v2692, 4
        %v2695 = vshrl.u32 %v2376, 16
        %v2697 = vrot.slane %v2695, 7
        %v2698 = vshll.u32 %v2376, 16
        %v2700 = vor.u32 %v2697, %v2698
        %v2701 = vsel %vm540, %v2693, %v2700
        %v2702 = vrot.slane %v2697, 4
        %v2704 = vshrl.u32 %v2377, 16
        %v2706 = vrot.slane %v2704, 7
        %v2707 = vshll.u32 %v2377, 16
        %v2709 = vor.u32 %v2706, %v2707
        %v2710 = vsel %vm540, %v2702, %v2709
        %v2712 = vshrl.u32 %v2378, 16
        %v2714 = vrot.slane %v2712, 7
        %v2715 = vrot.slane %v2714, 4
        %v2717 = vshrl.u32 %v2379, 16
        %v2719 = vrot.slane %v2717, 7
        %v2720 = vshll.u32 %v2379, 16
        %v2722 = vor.u32 %v2719, %v2720
        %v2723 = vsel %vm540, %v2715, %v2722
        %v2724 = vrot.slane %v2719, 4
        %v2726 = vshrl.u32 %v2380, 16
        %v2728 = vrot.slane %v2726, 7
        %v2729 = vshll.u32 %v2380, 16
        %v2731 = vor.u32 %v2728, %v2729
        %v2732 = vsel %vm540, %v2724, %v2731
        %v2733 = vld [vmem:[#allocation3] sm:$0xff]
        %v2734 = vld [vmem:[#allocation3 + $0x8] sm:$0xff]
        %v2735 = vld [vmem:[#allocation3 + $0x10] sm:$0xff]
        %v2736 = vld [vmem:[#allocation3 + $0x18] sm:$0xff]
        %v2737 = vld [vmem:[#allocation3 + $0x20] sm:$0xff]
        %v2738 = vld [vmem:[#allocation3 + $0x28] sm:$0xff]
        %v2739 = vld [vmem:[#allocation3 + $0x30] sm:$0xff]
        %v2740 = vld [vmem:[#allocation3 + $0x38] sm:$0xff]
        %v2741 = vld [vmem:[#allocation3 + $0x40] sm:$0xff]
        %v2742 = vld [vmem:[#allocation3 + $0x48] sm:$0xff]
        %v2743 = vld [vmem:[#allocation3 + $0x50] sm:$0xff]
        %v2744 = vld [vmem:[#allocation3 + $0x58] sm:$0xff]
        %v2745 = vld [vmem:[#allocation3 + $0x60] sm:$0xff]
        %v2746 = vld [vmem:[#allocation3 + $0x68] sm:$0xff]
        %v2747 = vld [vmem:[#allocation3 + $0x70] sm:$0xff]
        %v2748 = vld [vmem:[#allocation3 + $0x78] sm:$0xff]
        %v2749 = vld [vmem:[#allocation3 + $0x80] sm:$0xff]
        %v2750 = vld [vmem:[#allocation3 + $0x88] sm:$0xff]
        %v2751 = vld [vmem:[#allocation3 + $0x90] sm:$0xff]
        %v2752 = vld [vmem:[#allocation3 + $0x98] sm:$0xff]
        %v2753 = vld [vmem:[#allocation3 + $0xa0] sm:$0xff]
        %v2754 = vld [vmem:[#allocation3 + $0xa8] sm:$0xff]
        %v2755 = vld [vmem:[#allocation3 + $0xb0] sm:$0xff]
        %v2756 = vld [vmem:[#allocation3 + $0xb8] sm:$0xff]
        %v2757 = vld [vmem:[#allocation3 + $0xc0] sm:$0xff]
        %v2758 = vld [vmem:[#allocation3 + $0xc8] sm:$0xff]
        %v2759 = vld [vmem:[#allocation3 + $0xd0] sm:$0xff]
        %v2760 = vld [vmem:[#allocation3 + $0xd8] sm:$0xff]
        %v2761 = vld [vmem:[#allocation3 + $0xe0] sm:$0xff]
        %v2762 = vld [vmem:[#allocation3 + $0xe8] sm:$0xff]
        %v2763 = vld [vmem:[#allocation3 + $0xf0] sm:$0xff]
        %v2764 = vld [vmem:[#allocation3 + $0xf8] sm:$0xff]
        %s2765 = scalar_lea.vmem [#allocation7], 192
        %v2766 = vld [vmem:[%s2765] sm:$0xf]
        %v2767 = vld [vmem:[%s2765 + $0x4] sm:$0xf]
        %v2768 = vld [vmem:[%s2765 + $0x8] sm:$0xf]
        %v2769 = vld [vmem:[%s2765 + $0xc] sm:$0xf]
        %v2770 = vld [vmem:[%s2765 + $0x10] sm:$0xf]
        %v2771 = vld [vmem:[%s2765 + $0x14] sm:$0xf]
        %v2772 = vld [vmem:[%s2765 + $0x18] sm:$0xf]
        %v2773 = vld [vmem:[%s2765 + $0x1c] sm:$0xf]
        %v2774 = vld [vmem:[%s2765 + $0x20] sm:$0xf]
        %v2775 = vld [vmem:[%s2765 + $0x24] sm:$0xf]
        %v2776 = vld [vmem:[%s2765 + $0x28] sm:$0xf]
        %v2777 = vld [vmem:[%s2765 + $0x2c] sm:$0xf]
        %v2778 = vld [vmem:[%s2765 + $0x30] sm:$0xf]
        %v2779 = vld [vmem:[%s2765 + $0x34] sm:$0xf]
        %v2780 = vld [vmem:[%s2765 + $0x38] sm:$0xf]
        %v2781 = vld [vmem:[%s2765 + $0x3c] sm:$0xf]
        %v2782 = vunpack.c.l.b16 %v2393
        %v2783 = vunpack.c.l.b16 %v2402
        %v2784 = vunpack.c.l.b16 %v2415
        %v2785 = vunpack.c.l.b16 %v2424
        %v2786 = vunpack.c.l.b16 %v2437
        %v2787 = vunpack.c.l.b16 %v2446
        %v2788 = vunpack.c.l.b16 %v2459
        %v2789 = vunpack.c.l.b16 %v2468
        %v2790 = vunpack.c.l.b16 %v2481
        %v2791 = vunpack.c.l.b16 %v2490
        %v2792 = vunpack.c.l.b16 %v2503
        %v2793 = vunpack.c.l.b16 %v2512
        %v2794 = vunpack.c.l.b16 %v2525
        %v2795 = vunpack.c.l.b16 %v2534
        %v2796 = vunpack.c.l.b16 %v2547
        %v2797 = vunpack.c.l.b16 %v2556
        %v2798 = vunpack.c.l.b16 %v2569
        %v2799 = vunpack.c.l.b16 %v2578
        %v2800 = vunpack.c.l.b16 %v2591
        %v2801 = vunpack.c.l.b16 %v2600
        %v2802 = vunpack.c.l.b16 %v2613
        %v2803 = vunpack.c.l.b16 %v2622
        %v2804 = vunpack.c.l.b16 %v2635
        %v2805 = vunpack.c.l.b16 %v2644
        %v2806 = vunpack.c.l.b16 %v2657
        %v2807 = vunpack.c.l.b16 %v2666
        %v2808 = vunpack.c.l.b16 %v2679
        %v2809 = vunpack.c.l.b16 %v2688
        %v2810 = vunpack.c.l.b16 %v2701
        %v2811 = vunpack.c.l.b16 %v2710
        %v2812 = vunpack.c.l.b16 %v2723
        %v2813 = vunpack.c.l.b16 %v2732
        %v2814 = vpack.c.b16 %v2783, %v2782
        %v2815 = vpack.c.b16 %v2785, %v2784
        %v2816 = vpack.c.b16 %v2787, %v2786
        %v2817 = vpack.c.b16 %v2789, %v2788
        %v2818 = vpack.c.b16 %v2791, %v2790
        %v2819 = vpack.c.b16 %v2793, %v2792
        %v2820 = vpack.c.b16 %v2795, %v2794
        %v2821 = vpack.c.b16 %v2797, %v2796
        %v2822 = vpack.c.b16 %v2799, %v2798
        %v2823 = vpack.c.b16 %v2801, %v2800
        %v2824 = vpack.c.b16 %v2803, %v2802
        %v2825 = vpack.c.b16 %v2805, %v2804
        %v2826 = vpack.c.b16 %v2807, %v2806
        %v2827 = vpack.c.b16 %v2809, %v2808
        %v2828 = vpack.c.b16 %v2811, %v2810
        %v2829 = vpack.c.b16 %v2813, %v2812
        %v2862 = vunpack.c.l.b16 %v2766
        %v2863 = vunpack.c.l.b16 %v2767
        %v2864 = vunpack.c.l.b16 %v2768
        %v2865 = vunpack.c.l.b16 %v2769
        %v2866 = vunpack.c.l.b16 %v2770
        %v2867 = vunpack.c.l.b16 %v2771
        %v2868 = vunpack.c.l.b16 %v2772
        %v2869 = vunpack.c.l.b16 %v2773
        %v2870 = vunpack.c.l.b16 %v2774
        %v2871 = vunpack.c.l.b16 %v2775
        %v2872 = vunpack.c.l.b16 %v2776
        %v2873 = vunpack.c.l.b16 %v2777
        %v2874 = vunpack.c.l.b16 %v2778
        %v2875 = vunpack.c.l.b16 %v2779
        %v2876 = vunpack.c.l.b16 %v2780
        %v2877 = vunpack.c.l.b16 %v2781
        %v2878 = vpack.c.b16 %v2863, %v2862
        %v2879 = vpack.c.b16 %v2865, %v2864
        %v2880 = vpack.c.b16 %v2867, %v2866
        %v2881 = vpack.c.b16 %v2869, %v2868
        %v2882 = vpack.c.b16 %v2871, %v2870
        %v2883 = vpack.c.b16 %v2873, %v2872
        %v2884 = vpack.c.b16 %v2875, %v2874
        %v2885 = vpack.c.b16 %v2877, %v2876
        %2894 = vmatpush.bf16.msra.mxu0 %v2885
        %2895 = vmatpush.bf16.msra.mxu0 %v2884
        %2896 = vmatpush.bf16.msra.mxu0 %v2883
        %2897 = vmatpush.bf16.msra.mxu0 %v2882
        %2898 = vmatpush.bf16.msra.mxu0 %v2881
        %2899 = vmatpush.bf16.msra.mxu0 %v2880
        %2900 = vmatpush.bf16.msra.mxu0 %v2879
        %2901 = vmatpush.bf16.msra.mxu0 %v2878
        %2902 = vmatmul.bf16.gmra.mxu0 %v2814
        %v2903 = vpop.f32.mrf.mxu0
        %v2904 = vadd.f32 0.0, %v2903
        %v2905 = vpop.f32.mrf.mxu0
        %v2906 = vadd.f32 0.0, %v2905
        %2907 = vmatmul.bf16.gmra.mxu0 %v2815
        %v2908 = vpop.f32.mrf.mxu0
        %v2909 = vadd.f32 0.0, %v2908
        %v2910 = vpop.f32.mrf.mxu0
        %v2911 = vadd.f32 0.0, %v2910
        %2912 = vmatmul.bf16.gmra.mxu0 %v2816
        %v2913 = vpop.f32.mrf.mxu0
        %v2914 = vadd.f32 0.0, %v2913
        %v2915 = vpop.f32.mrf.mxu0
        %v2916 = vadd.f32 0.0, %v2915
        %2917 = vmatmul.bf16.gmra.mxu0 %v2817
        %v2918 = vpop.f32.mrf.mxu0
        %v2919 = vadd.f32 0.0, %v2918
        %v2920 = vpop.f32.mrf.mxu0
        %v2921 = vadd.f32 0.0, %v2920
        %2922 = vmatmul.bf16.gmra.mxu0 %v2818
        %v2923 = vpop.f32.mrf.mxu0
        %v2924 = vadd.f32 0.0, %v2923
        %v2925 = vpop.f32.mrf.mxu0
        %v2926 = vadd.f32 0.0, %v2925
        %2927 = vmatmul.bf16.gmra.mxu0 %v2819
        %v2928 = vpop.f32.mrf.mxu0
        %v2929 = vadd.f32 0.0, %v2928
        %v2930 = vpop.f32.mrf.mxu0
        %v2931 = vadd.f32 0.0, %v2930
        %2932 = vmatmul.bf16.gmra.mxu0 %v2820
        %v2933 = vpop.f32.mrf.mxu0
        %v2934 = vadd.f32 0.0, %v2933
        %v2935 = vpop.f32.mrf.mxu0
        %v2936 = vadd.f32 0.0, %v2935
        %2937 = vmatmul.bf16.gmra.mxu0 %v2821
        %v2938 = vpop.f32.mrf.mxu0
        %v2939 = vadd.f32 0.0, %v2938
        %v2940 = vpop.f32.mrf.mxu0
        %v2941 = vadd.f32 0.0, %v2940
        %2942 = vmatmul.bf16.gmra.mxu0 %v2822
        %v2943 = vpop.f32.mrf.mxu0
        %v2944 = vadd.f32 0.0, %v2943
        %v2945 = vpop.f32.mrf.mxu0
        %v2946 = vadd.f32 0.0, %v2945
        %2947 = vmatmul.bf16.gmra.mxu0 %v2823
        %v2948 = vpop.f32.mrf.mxu0
        %v2949 = vadd.f32 0.0, %v2948
        %v2950 = vpop.f32.mrf.mxu0
        %v2951 = vadd.f32 0.0, %v2950
        %2952 = vmatmul.bf16.gmra.mxu0 %v2824
        %v2953 = vpop.f32.mrf.mxu0
        %v2954 = vadd.f32 0.0, %v2953
        %v2955 = vpop.f32.mrf.mxu0
        %v2956 = vadd.f32 0.0, %v2955
        %2957 = vmatmul.bf16.gmra.mxu0 %v2825
        %v2958 = vpop.f32.mrf.mxu0
        %v2959 = vadd.f32 0.0, %v2958
        %v2960 = vpop.f32.mrf.mxu0
        %v2961 = vadd.f32 0.0, %v2960
        %2962 = vmatmul.bf16.gmra.mxu0 %v2826
        %v2963 = vpop.f32.mrf.mxu0
        %v2964 = vadd.f32 0.0, %v2963
        %v2965 = vpop.f32.mrf.mxu0
        %v2966 = vadd.f32 0.0, %v2965
        %2967 = vmatmul.bf16.gmra.mxu0 %v2827
        %v2968 = vpop.f32.mrf.mxu0
        %v2969 = vadd.f32 0.0, %v2968
        %v2970 = vpop.f32.mrf.mxu0
        %v2971 = vadd.f32 0.0, %v2970
        %2972 = vmatmul.bf16.gmra.mxu0 %v2828
        %v2973 = vpop.f32.mrf.mxu0
        %v2974 = vadd.f32 0.0, %v2973
        %v2975 = vpop.f32.mrf.mxu0
        %v2976 = vadd.f32 0.0, %v2975
        %2977 = vmatmul.bf16.gmra.mxu0 %v2829
        %v2978 = vpop.f32.mrf.mxu0
        %v2979 = vadd.f32 0.0, %v2978
        %v2980 = vpop.f32.mrf.mxu0
        %v2981 = vadd.f32 0.0, %v2980
        %2982 = vdwg.mxu0
        %v2983 = vadd.f32 %v2733, %v2904
        %v2984 = vadd.f32 %v2734, %v2906
        %v2985 = vadd.f32 %v2735, %v2909
        %v2986 = vadd.f32 %v2736, %v2911
        %v2987 = vadd.f32 %v2737, %v2914
        %v2988 = vadd.f32 %v2738, %v2916
        %v2989 = vadd.f32 %v2739, %v2919
        %v2990 = vadd.f32 %v2740, %v2921
        %v2991 = vadd.f32 %v2741, %v2924
        %v2992 = vadd.f32 %v2742, %v2926
        %v2993 = vadd.f32 %v2743, %v2929
        %v2994 = vadd.f32 %v2744, %v2931
        %v2995 = vadd.f32 %v2745, %v2934
        %v2996 = vadd.f32 %v2746, %v2936
        %v2997 = vadd.f32 %v2747, %v2939
        %v2998 = vadd.f32 %v2748, %v2941
        %v2999 = vadd.f32 %v2749, %v2944
        %v3000 = vadd.f32 %v2750, %v2946
        %v3001 = vadd.f32 %v2751, %v2949
        %v3002 = vadd.f32 %v2752, %v2951
        %v3003 = vadd.f32 %v2753, %v2954
        %v3004 = vadd.f32 %v2754, %v2956
        %v3005 = vadd.f32 %v2755, %v2959
        %v3006 = vadd.f32 %v2756, %v2961
        %v3007 = vadd.f32 %v2757, %v2964
        %v3008 = vadd.f32 %v2758, %v2966
        %v3009 = vadd.f32 %v2759, %v2969
        %v3010 = vadd.f32 %v2760, %v2971
        %v3011 = vadd.f32 %v2761, %v2974
        %v3012 = vadd.f32 %v2762, %v2976
        %v3013 = vadd.f32 %v2763, %v2979
        %v3014 = vadd.f32 %v2764, %v2981
        %3015 = vst [vmem:[#allocation3] sm:$0xff] %v2983
        %3016 = vst [vmem:[#allocation3 + $0x8] sm:$0xff] %v2984
        %3017 = vst [vmem:[#allocation3 + $0x10] sm:$0xff] %v2985
        %3018 = vst [vmem:[#allocation3 + $0x18] sm:$0xff] %v2986
        %3019 = vst [vmem:[#allocation3 + $0x20] sm:$0xff] %v2987
        %3020 = vst [vmem:[#allocation3 + $0x28] sm:$0xff] %v2988
        %3021 = vst [vmem:[#allocation3 + $0x30] sm:$0xff] %v2989
        %3022 = vst [vmem:[#allocation3 + $0x38] sm:$0xff] %v2990
        %3023 = vst [vmem:[#allocation3 + $0x40] sm:$0xff] %v2991
        %3024 = vst [vmem:[#allocation3 + $0x48] sm:$0xff] %v2992
        %3025 = vst [vmem:[#allocation3 + $0x50] sm:$0xff] %v2993
        %3026 = vst [vmem:[#allocation3 + $0x58] sm:$0xff] %v2994
        %3027 = vst [vmem:[#allocation3 + $0x60] sm:$0xff] %v2995
        %3028 = vst [vmem:[#allocation3 + $0x68] sm:$0xff] %v2996
        %3029 = vst [vmem:[#allocation3 + $0x70] sm:$0xff] %v2997
        %3030 = vst [vmem:[#allocation3 + $0x78] sm:$0xff] %v2998
        %3031 = vst [vmem:[#allocation3 + $0x80] sm:$0xff] %v2999
        %3032 = vst [vmem:[#allocation3 + $0x88] sm:$0xff] %v3000
        %3033 = vst [vmem:[#allocation3 + $0x90] sm:$0xff] %v3001
        %3034 = vst [vmem:[#allocation3 + $0x98] sm:$0xff] %v3002
        %3035 = vst [vmem:[#allocation3 + $0xa0] sm:$0xff] %v3003
        %3036 = vst [vmem:[#allocation3 + $0xa8] sm:$0xff] %v3004
        %3037 = vst [vmem:[#allocation3 + $0xb0] sm:$0xff] %v3005
        %3038 = vst [vmem:[#allocation3 + $0xb8] sm:$0xff] %v3006
        %3039 = vst [vmem:[#allocation3 + $0xc0] sm:$0xff] %v3007
        %3040 = vst [vmem:[#allocation3 + $0xc8] sm:$0xff] %v3008
        %3041 = vst [vmem:[#allocation3 + $0xd0] sm:$0xff] %v3009
        %3042 = vst [vmem:[#allocation3 + $0xd8] sm:$0xff] %v3010
        %3043 = vst [vmem:[#allocation3 + $0xe0] sm:$0xff] %v3011
        %3044 = vst [vmem:[#allocation3 + $0xe8] sm:$0xff] %v3012
        %3045 = vst [vmem:[#allocation3 + $0xf0] sm:$0xff] %v3013
        %3046 = vst [vmem:[#allocation3 + $0xf8] sm:$0xff] %v3014
        %v3047 = vld [vmem:[%s292 + $0x8] sm:$0xf]
        %v3048 = vld [vmem:[%s292 + $0xc] sm:$0xf]
        %v3049 = vld [vmem:[%s292 + $0x20] sm:$0xf]
        %v3050 = vld [vmem:[%s292 + $0x24] sm:$0xf]
        %v3051 = vld [vmem:[%s292 + $0x38] sm:$0xf]
        %v3052 = vld [vmem:[%s292 + $0x3c] sm:$0xf]
        %v3053 = vld [vmem:[%s292 + $0x50] sm:$0xf]
        %v3054 = vld [vmem:[%s292 + $0x54] sm:$0xf]
        %v3055 = vld [vmem:[%s292 + $0x68] sm:$0xf]
        %v3056 = vld [vmem:[%s292 + $0x6c] sm:$0xf]
        %v3057 = vld [vmem:[%s292 + $0x80] sm:$0xf]
        %v3058 = vld [vmem:[%s292 + $0x84] sm:$0xf]
        %v3059 = vld [vmem:[%s292 + $0x98] sm:$0xf]
        %v3060 = vld [vmem:[%s292 + $0x9c] sm:$0xf]
        %v3061 = vld [vmem:[%s292 + $0xb0] sm:$0xf]
        %v3062 = vld [vmem:[%s292 + $0xb4] sm:$0xf]
        %v3063 = vld [vmem:[%s292 + $0xc8] sm:$0xf]
        %v3064 = vld [vmem:[%s292 + $0xcc] sm:$0xf]
        %v3065 = vld [vmem:[%s292 + $0xe0] sm:$0xf]
        %v3066 = vld [vmem:[%s292 + $0xe4] sm:$0xf]
        %v3067 = vld [vmem:[%s292 + $0xf8] sm:$0xf]
        %v3068 = vld [vmem:[%s292 + $0xfc] sm:$0xf]
        %v3069 = vld [vmem:[%s292 + $0x110] sm:$0xf]
        %v3070 = vld [vmem:[%s292 + $0x114] sm:$0xf]
        %v3071 = vld [vmem:[%s292 + $0x128] sm:$0xf]
        %v3072 = vld [vmem:[%s292 + $0x12c] sm:$0xf]
        %v3073 = vld [vmem:[%s292 + $0x140] sm:$0xf]
        %v3074 = vld [vmem:[%s292 + $0x144] sm:$0xf]
        %v3075 = vld [vmem:[%s292 + $0x158] sm:$0xf]
        %v3076 = vld [vmem:[%s292 + $0x15c] sm:$0xf]
        %v3077 = vld [vmem:[%s292 + $0x170] sm:$0xf]
        %v3078 = vld [vmem:[%s292 + $0x174] sm:$0xf]
        %v3079 = vld [vmem:[#allocation3] sm:$0xff]
        %v3080 = vld [vmem:[#allocation3 + $0x8] sm:$0xff]
        %v3081 = vld [vmem:[#allocation3 + $0x10] sm:$0xff]
        %v3082 = vld [vmem:[#allocation3 + $0x18] sm:$0xff]
        %v3083 = vld [vmem:[#allocation3 + $0x20] sm:$0xff]
        %v3084 = vld [vmem:[#allocation3 + $0x28] sm:$0xff]
        %v3085 = vld [vmem:[#allocation3 + $0x30] sm:$0xff]
        %v3086 = vld [vmem:[#allocation3 + $0x38] sm:$0xff]
        %v3087 = vld [vmem:[#allocation3 + $0x40] sm:$0xff]
        %v3088 = vld [vmem:[#allocation3 + $0x48] sm:$0xff]
        %v3089 = vld [vmem:[#allocation3 + $0x50] sm:$0xff]
        %v3090 = vld [vmem:[#allocation3 + $0x58] sm:$0xff]
        %v3091 = vld [vmem:[#allocation3 + $0x60] sm:$0xff]
        %v3092 = vld [vmem:[#allocation3 + $0x68] sm:$0xff]
        %v3093 = vld [vmem:[#allocation3 + $0x70] sm:$0xff]
        %v3094 = vld [vmem:[#allocation3 + $0x78] sm:$0xff]
        %v3095 = vld [vmem:[#allocation3 + $0x80] sm:$0xff]
        %v3096 = vld [vmem:[#allocation3 + $0x88] sm:$0xff]
        %v3097 = vld [vmem:[#allocation3 + $0x90] sm:$0xff]
        %v3098 = vld [vmem:[#allocation3 + $0x98] sm:$0xff]
        %v3099 = vld [vmem:[#allocation3 + $0xa0] sm:$0xff]
        %v3100 = vld [vmem:[#allocation3 + $0xa8] sm:$0xff]
        %v3101 = vld [vmem:[#allocation3 + $0xb0] sm:$0xff]
        %v3102 = vld [vmem:[#allocation3 + $0xb8] sm:$0xff]
        %v3103 = vld [vmem:[#allocation3 + $0xc0] sm:$0xff]
        %v3104 = vld [vmem:[#allocation3 + $0xc8] sm:$0xff]
        %v3105 = vld [vmem:[#allocation3 + $0xd0] sm:$0xff]
        %v3106 = vld [vmem:[#allocation3 + $0xd8] sm:$0xff]
        %v3107 = vld [vmem:[#allocation3 + $0xe0] sm:$0xff]
        %v3108 = vld [vmem:[#allocation3 + $0xe8] sm:$0xff]
        %v3109 = vld [vmem:[#allocation3 + $0xf0] sm:$0xff]
        %v3110 = vld [vmem:[#allocation3 + $0xf8] sm:$0xff]
        %s3111 = scalar_lea.vmem [#allocation7], 256
        %v3112 = vld [vmem:[%s3111] sm:$0xf]
        %v3113 = vld [vmem:[%s3111 + $0x4] sm:$0xf]
        %v3114 = vld [vmem:[%s3111 + $0x8] sm:$0xf]
        %v3115 = vld [vmem:[%s3111 + $0xc] sm:$0xf]
        %v3116 = vld [vmem:[%s3111 + $0x10] sm:$0xf]
        %v3117 = vld [vmem:[%s3111 + $0x14] sm:$0xf]
        %v3118 = vld [vmem:[%s3111 + $0x18] sm:$0xf]
        %v3119 = vld [vmem:[%s3111 + $0x1c] sm:$0xf]
        %v3120 = vld [vmem:[%s3111 + $0x20] sm:$0xf]
        %v3121 = vld [vmem:[%s3111 + $0x24] sm:$0xf]
        %v3122 = vld [vmem:[%s3111 + $0x28] sm:$0xf]
        %v3123 = vld [vmem:[%s3111 + $0x2c] sm:$0xf]
        %v3124 = vld [vmem:[%s3111 + $0x30] sm:$0xf]
        %v3125 = vld [vmem:[%s3111 + $0x34] sm:$0xf]
        %v3126 = vld [vmem:[%s3111 + $0x38] sm:$0xf]
        %v3127 = vld [vmem:[%s3111 + $0x3c] sm:$0xf]
        %v3160 = vunpack.c.l.b16 %v3047
        %v3161 = vunpack.c.l.b16 %v3048
        %v3162 = vunpack.c.l.b16 %v3049
        %v3163 = vunpack.c.l.b16 %v3050
        %v3164 = vunpack.c.l.b16 %v3051
        %v3165 = vunpack.c.l.b16 %v3052
        %v3166 = vunpack.c.l.b16 %v3053
        %v3167 = vunpack.c.l.b16 %v3054
        %v3168 = vunpack.c.l.b16 %v3055
        %v3169 = vunpack.c.l.b16 %v3056
        %v3170 = vunpack.c.l.b16 %v3057
        %v3171 = vunpack.c.l.b16 %v3058
        %v3172 = vunpack.c.l.b16 %v3059
        %v3173 = vunpack.c.l.b16 %v3060
        %v3174 = vunpack.c.l.b16 %v3061
        %v3175 = vunpack.c.l.b16 %v3062
        %v3176 = vunpack.c.l.b16 %v3063
        %v3177 = vunpack.c.l.b16 %v3064
        %v3178 = vunpack.c.l.b16 %v3065
        %v3179 = vunpack.c.l.b16 %v3066
        %v3180 = vunpack.c.l.b16 %v3067
        %v3181 = vunpack.c.l.b16 %v3068
        %v3182 = vunpack.c.l.b16 %v3069
        %v3183 = vunpack.c.l.b16 %v3070
        %v3184 = vunpack.c.l.b16 %v3071
        %v3185 = vunpack.c.l.b16 %v3072
        %v3186 = vunpack.c.l.b16 %v3073
        %v3187 = vunpack.c.l.b16 %v3074
        %v3188 = vunpack.c.l.b16 %v3075
        %v3189 = vunpack.c.l.b16 %v3076
        %v3190 = vunpack.c.l.b16 %v3077
        %v3191 = vunpack.c.l.b16 %v3078
        %v3192 = vpack.c.b16 %v3161, %v3160
        %v3193 = vpack.c.b16 %v3163, %v3162
        %v3194 = vpack.c.b16 %v3165, %v3164
        %v3195 = vpack.c.b16 %v3167, %v3166
        %v3196 = vpack.c.b16 %v3169, %v3168
        %v3197 = vpack.c.b16 %v3171, %v3170
        %v3198 = vpack.c.b16 %v3173, %v3172
        %v3199 = vpack.c.b16 %v3175, %v3174
        %v3200 = vpack.c.b16 %v3177, %v3176
        %v3201 = vpack.c.b16 %v3179, %v3178
        %v3202 = vpack.c.b16 %v3181, %v3180
        %v3203 = vpack.c.b16 %v3183, %v3182
        %v3204 = vpack.c.b16 %v3185, %v3184
        %v3205 = vpack.c.b16 %v3187, %v3186
        %v3206 = vpack.c.b16 %v3189, %v3188
        %v3207 = vpack.c.b16 %v3191, %v3190
        %v3240 = vunpack.c.l.b16 %v3112
        %v3241 = vunpack.c.l.b16 %v3113
        %v3242 = vunpack.c.l.b16 %v3114
        %v3243 = vunpack.c.l.b16 %v3115
        %v3244 = vunpack.c.l.b16 %v3116
        %v3245 = vunpack.c.l.b16 %v3117
        %v3246 = vunpack.c.l.b16 %v3118
        %v3247 = vunpack.c.l.b16 %v3119
        %v3248 = vunpack.c.l.b16 %v3120
        %v3249 = vunpack.c.l.b16 %v3121
        %v3250 = vunpack.c.l.b16 %v3122
        %v3251 = vunpack.c.l.b16 %v3123
        %v3252 = vunpack.c.l.b16 %v3124
        %v3253 = vunpack.c.l.b16 %v3125
        %v3254 = vunpack.c.l.b16 %v3126
        %v3255 = vunpack.c.l.b16 %v3127
        %v3256 = vpack.c.b16 %v3241, %v3240
        %v3257 = vpack.c.b16 %v3243, %v3242
        %v3258 = vpack.c.b16 %v3245, %v3244
        %v3259 = vpack.c.b16 %v3247, %v3246
        %v3260 = vpack.c.b16 %v3249, %v3248
        %v3261 = vpack.c.b16 %v3251, %v3250
        %v3262 = vpack.c.b16 %v3253, %v3252
        %v3263 = vpack.c.b16 %v3255, %v3254
        %3272 = vmatpush.bf16.msra.mxu0 %v3263
        %3273 = vmatpush.bf16.msra.mxu0 %v3262
        %3274 = vmatpush.bf16.msra.mxu0 %v3261
        %3275 = vmatpush.bf16.msra.mxu0 %v3260
        %3276 = vmatpush.bf16.msra.mxu0 %v3259
        %3277 = vmatpush.bf16.msra.mxu0 %v3258
        %3278 = vmatpush.bf16.msra.mxu0 %v3257
        %3279 = vmatpush.bf16.msra.mxu0 %v3256
        %3280 = vmatmul.bf16.gmra.mxu0 %v3192
        %v3281 = vpop.f32.mrf.mxu0
        %v3282 = vadd.f32 0.0, %v3281
        %v3283 = vpop.f32.mrf.mxu0
        %v3284 = vadd.f32 0.0, %v3283
        %3285 = vmatmul.bf16.gmra.mxu0 %v3193
        %v3286 = vpop.f32.mrf.mxu0
        %v3287 = vadd.f32 0.0, %v3286
        %v3288 = vpop.f32.mrf.mxu0
        %v3289 = vadd.f32 0.0, %v3288
        %3290 = vmatmul.bf16.gmra.mxu0 %v3194
        %v3291 = vpop.f32.mrf.mxu0
        %v3292 = vadd.f32 0.0, %v3291
        %v3293 = vpop.f32.mrf.mxu0
        %v3294 = vadd.f32 0.0, %v3293
        %3295 = vmatmul.bf16.gmra.mxu0 %v3195
        %v3296 = vpop.f32.mrf.mxu0
        %v3297 = vadd.f32 0.0, %v3296
        %v3298 = vpop.f32.mrf.mxu0
        %v3299 = vadd.f32 0.0, %v3298
        %3300 = vmatmul.bf16.gmra.mxu0 %v3196
        %v3301 = vpop.f32.mrf.mxu0
        %v3302 = vadd.f32 0.0, %v3301
        %v3303 = vpop.f32.mrf.mxu0
        %v3304 = vadd.f32 0.0, %v3303
        %3305 = vmatmul.bf16.gmra.mxu0 %v3197
        %v3306 = vpop.f32.mrf.mxu0
        %v3307 = vadd.f32 0.0, %v3306
        %v3308 = vpop.f32.mrf.mxu0
        %v3309 = vadd.f32 0.0, %v3308
        %3310 = vmatmul.bf16.gmra.mxu0 %v3198
        %v3311 = vpop.f32.mrf.mxu0
        %v3312 = vadd.f32 0.0, %v3311
        %v3313 = vpop.f32.mrf.mxu0
        %v3314 = vadd.f32 0.0, %v3313
        %3315 = vmatmul.bf16.gmra.mxu0 %v3199
        %v3316 = vpop.f32.mrf.mxu0
        %v3317 = vadd.f32 0.0, %v3316
        %v3318 = vpop.f32.mrf.mxu0
        %v3319 = vadd.f32 0.0, %v3318
        %3320 = vmatmul.bf16.gmra.mxu0 %v3200
        %v3321 = vpop.f32.mrf.mxu0
        %v3322 = vadd.f32 0.0, %v3321
        %v3323 = vpop.f32.mrf.mxu0
        %v3324 = vadd.f32 0.0, %v3323
        %3325 = vmatmul.bf16.gmra.mxu0 %v3201
        %v3326 = vpop.f32.mrf.mxu0
        %v3327 = vadd.f32 0.0, %v3326
        %v3328 = vpop.f32.mrf.mxu0
        %v3329 = vadd.f32 0.0, %v3328
        %3330 = vmatmul.bf16.gmra.mxu0 %v3202
        %v3331 = vpop.f32.mrf.mxu0
        %v3332 = vadd.f32 0.0, %v3331
        %v3333 = vpop.f32.mrf.mxu0
        %v3334 = vadd.f32 0.0, %v3333
        %3335 = vmatmul.bf16.gmra.mxu0 %v3203
        %v3336 = vpop.f32.mrf.mxu0
        %v3337 = vadd.f32 0.0, %v3336
        %v3338 = vpop.f32.mrf.mxu0
        %v3339 = vadd.f32 0.0, %v3338
        %3340 = vmatmul.bf16.gmra.mxu0 %v3204
        %v3341 = vpop.f32.mrf.mxu0
        %v3342 = vadd.f32 0.0, %v3341
        %v3343 = vpop.f32.mrf.mxu0
        %v3344 = vadd.f32 0.0, %v3343
        %3345 = vmatmul.bf16.gmra.mxu0 %v3205
        %v3346 = vpop.f32.mrf.mxu0
        %v3347 = vadd.f32 0.0, %v3346
        %v3348 = vpop.f32.mrf.mxu0
        %v3349 = vadd.f32 0.0, %v3348
        %3350 = vmatmul.bf16.gmra.mxu0 %v3206
        %v3351 = vpop.f32.mrf.mxu0
        %v3352 = vadd.f32 0.0, %v3351
        %v3353 = vpop.f32.mrf.mxu0
        %v3354 = vadd.f32 0.0, %v3353
        %3355 = vmatmul.bf16.gmra.mxu0 %v3207
        %v3356 = vpop.f32.mrf.mxu0
        %v3357 = vadd.f32 0.0, %v3356
        %v3358 = vpop.f32.mrf.mxu0
        %v3359 = vadd.f32 0.0, %v3358
        %3360 = vdwg.mxu0
        %v3361 = vadd.f32 %v3079, %v3282
        %v3362 = vadd.f32 %v3080, %v3284
        %v3363 = vadd.f32 %v3081, %v3287
        %v3364 = vadd.f32 %v3082, %v3289
        %v3365 = vadd.f32 %v3083, %v3292
        %v3366 = vadd.f32 %v3084, %v3294
        %v3367 = vadd.f32 %v3085, %v3297
        %v3368 = vadd.f32 %v3086, %v3299
        %v3369 = vadd.f32 %v3087, %v3302
        %v3370 = vadd.f32 %v3088, %v3304
        %v3371 = vadd.f32 %v3089, %v3307
        %v3372 = vadd.f32 %v3090, %v3309
        %v3373 = vadd.f32 %v3091, %v3312
        %v3374 = vadd.f32 %v3092, %v3314
        %v3375 = vadd.f32 %v3093, %v3317
        %v3376 = vadd.f32 %v3094, %v3319
        %v3377 = vadd.f32 %v3095, %v3322
        %v3378 = vadd.f32 %v3096, %v3324
        %v3379 = vadd.f32 %v3097, %v3327
        %v3380 = vadd.f32 %v3098, %v3329
        %v3381 = vadd.f32 %v3099, %v3332
        %v3382 = vadd.f32 %v3100, %v3334
        %v3383 = vadd.f32 %v3101, %v3337
        %v3384 = vadd.f32 %v3102, %v3339
        %v3385 = vadd.f32 %v3103, %v3342
        %v3386 = vadd.f32 %v3104, %v3344
        %v3387 = vadd.f32 %v3105, %v3347
        %v3388 = vadd.f32 %v3106, %v3349
        %v3389 = vadd.f32 %v3107, %v3352
        %v3390 = vadd.f32 %v3108, %v3354
        %v3391 = vadd.f32 %v3109, %v3357
        %v3392 = vadd.f32 %v3110, %v3359
        %3393 = vst [vmem:[#allocation3] sm:$0xff] %v3361
        %3394 = vst [vmem:[#allocation3 + $0x8] sm:$0xff] %v3362
        %3395 = vst [vmem:[#allocation3 + $0x10] sm:$0xff] %v3363
        %3396 = vst [vmem:[#allocation3 + $0x18] sm:$0xff] %v3364
        %3397 = vst [vmem:[#allocation3 + $0x20] sm:$0xff] %v3365
        %3398 = vst [vmem:[#allocation3 + $0x28] sm:$0xff] %v3366
        %3399 = vst [vmem:[#allocation3 + $0x30] sm:$0xff] %v3367
        %3400 = vst [vmem:[#allocation3 + $0x38] sm:$0xff] %v3368
        %3401 = vst [vmem:[#allocation3 + $0x40] sm:$0xff] %v3369
        %3402 = vst [vmem:[#allocation3 + $0x48] sm:$0xff] %v3370
        %3403 = vst [vmem:[#allocation3 + $0x50] sm:$0xff] %v3371
        %3404 = vst [vmem:[#allocation3 + $0x58] sm:$0xff] %v3372
        %3405 = vst [vmem:[#allocation3 + $0x60] sm:$0xff] %v3373
        %3406 = vst [vmem:[#allocation3 + $0x68] sm:$0xff] %v3374
        %3407 = vst [vmem:[#allocation3 + $0x70] sm:$0xff] %v3375
        %3408 = vst [vmem:[#allocation3 + $0x78] sm:$0xff] %v3376
        %3409 = vst [vmem:[#allocation3 + $0x80] sm:$0xff] %v3377
        %3410 = vst [vmem:[#allocation3 + $0x88] sm:$0xff] %v3378
        %3411 = vst [vmem:[#allocation3 + $0x90] sm:$0xff] %v3379
        %3412 = vst [vmem:[#allocation3 + $0x98] sm:$0xff] %v3380
        %3413 = vst [vmem:[#allocation3 + $0xa0] sm:$0xff] %v3381
        %3414 = vst [vmem:[#allocation3 + $0xa8] sm:$0xff] %v3382
        %3415 = vst [vmem:[#allocation3 + $0xb0] sm:$0xff] %v3383
        %3416 = vst [vmem:[#allocation3 + $0xb8] sm:$0xff] %v3384
        %3417 = vst [vmem:[#allocation3 + $0xc0] sm:$0xff] %v3385
        %3418 = vst [vmem:[#allocation3 + $0xc8] sm:$0xff] %v3386
        %3419 = vst [vmem:[#allocation3 + $0xd0] sm:$0xff] %v3387
        %3420 = vst [vmem:[#allocation3 + $0xd8] sm:$0xff] %v3388
        %3421 = vst [vmem:[#allocation3 + $0xe0] sm:$0xff] %v3389
        %3422 = vst [vmem:[#allocation3 + $0xe8] sm:$0xff] %v3390
        %3423 = vst [vmem:[#allocation3 + $0xf0] sm:$0xff] %v3391
        %3424 = vst [vmem:[#allocation3 + $0xf8] sm:$0xff] %v3392
        %v3425 = vld [vmem:[%s292 + $0x8] sm:$0xf]
        %v3426 = vld [vmem:[%s292 + $0xc] sm:$0xf]
        %v3427 = vld [vmem:[%s292 + $0x10] sm:$0x1]
        %v3428 = vld [vmem:[%s292 + $0x20] sm:$0xf]
        %v3429 = vld [vmem:[%s292 + $0x24] sm:$0xf]
        %v3430 = vld [vmem:[%s292 + $0x28] sm:$0x1]
        %v3431 = vld [vmem:[%s292 + $0x38] sm:$0xf]
        %v3432 = vld [vmem:[%s292 + $0x3c] sm:$0xf]
        %v3433 = vld [vmem:[%s292 + $0x40] sm:$0x1]
        %v3434 = vld [vmem:[%s292 + $0x50] sm:$0xf]
        %v3435 = vld [vmem:[%s292 + $0x54] sm:$0xf]
        %v3436 = vld [vmem:[%s292 + $0x58] sm:$0x1]
        %v3437 = vld [vmem:[%s292 + $0x68] sm:$0xf]
        %v3438 = vld [vmem:[%s292 + $0x6c] sm:$0xf]
        %v3439 = vld [vmem:[%s292 + $0x70] sm:$0x1]
        %v3440 = vld [vmem:[%s292 + $0x80] sm:$0xf]
        %v3441 = vld [vmem:[%s292 + $0x84] sm:$0xf]
        %v3442 = vld [vmem:[%s292 + $0x88] sm:$0x1]
        %v3443 = vld [vmem:[%s292 + $0x98] sm:$0xf]
        %v3444 = vld [vmem:[%s292 + $0x9c] sm:$0xf]
        %v3445 = vld [vmem:[%s292 + $0xa0] sm:$0x1]
        %v3446 = vld [vmem:[%s292 + $0xb0] sm:$0xf]
        %v3447 = vld [vmem:[%s292 + $0xb4] sm:$0xf]
        %v3448 = vld [vmem:[%s292 + $0xb8] sm:$0x1]
        %v3449 = vld [vmem:[%s292 + $0xc8] sm:$0xf]
        %v3450 = vld [vmem:[%s292 + $0xcc] sm:$0xf]
        %v3451 = vld [vmem:[%s292 + $0xd0] sm:$0x1]
        %v3452 = vld [vmem:[%s292 + $0xe0] sm:$0xf]
        %v3453 = vld [vmem:[%s292 + $0xe4] sm:$0xf]
        %v3454 = vld [vmem:[%s292 + $0xe8] sm:$0x1]
        %v3455 = vld [vmem:[%s292 + $0xf8] sm:$0xf]
        %v3456 = vld [vmem:[%s292 + $0xfc] sm:$0xf]
        %v3457 = vld [vmem:[%s292 + $0x100] sm:$0x1]
        %v3458 = vld [vmem:[%s292 + $0x110] sm:$0xf]
        %v3459 = vld [vmem:[%s292 + $0x114] sm:$0xf]
        %v3460 = vld [vmem:[%s292 + $0x118] sm:$0x1]
        %v3461 = vld [vmem:[%s292 + $0x128] sm:$0xf]
        %v3462 = vld [vmem:[%s292 + $0x12c] sm:$0xf]
        %v3463 = vld [vmem:[%s292 + $0x130] sm:$0x1]
        %v3464 = vld [vmem:[%s292 + $0x140] sm:$0xf]
        %v3465 = vld [vmem:[%s292 + $0x144] sm:$0xf]
        %v3466 = vld [vmem:[%s292 + $0x148] sm:$0x1]
        %v3467 = vld [vmem:[%s292 + $0x158] sm:$0xf]
        %v3468 = vld [vmem:[%s292 + $0x15c] sm:$0xf]
        %v3469 = vld [vmem:[%s292 + $0x160] sm:$0x1]
        %v3470 = vld [vmem:[%s292 + $0x170] sm:$0xf]
        %v3471 = vld [vmem:[%s292 + $0x174] sm:$0xf]
        %v3472 = vld [vmem:[%s292 + $0x178] sm:$0x1]
        %v3474 = vshrl.u32 %v3425, 16
        %v3476 = vrot.slane %v3474, 4
        %v3477 = vshll.u32 %v3425, 16
        %v3479 = vrot.slane %v3477, 5
        %v3480 = vor.u32 %v3476, %v3479
        %v3481 = vrot.slane %v3480, 4
        %v3483 = vshll.u32 %v3426, 16
        %v3485 = vrot.slane %v3483, 5
        %v3486 = vsel %vm1634, %v3481, %v3485
        %v3487 = vshrl.u32 %v3426, 16
        %v3489 = vrot.slane %v3487, 4
        %v3490 = vor.u32 %v3489, %v3485
        %v3491 = vrot.slane %v3490, 4
        %v3493 = vshll.u32 %v3427, 16
        %v3495 = vrot.slane %v3493, 5
        %v3496 = vsel %vm1634, %v3491, %v3495
        %v3498 = vshrl.u32 %v3428, 16
        %v3500 = vrot.slane %v3498, 4
        %v3501 = vshll.u32 %v3428, 16
        %v3503 = vrot.slane %v3501, 5
        %v3504 = vor.u32 %v3500, %v3503
        %v3505 = vrot.slane %v3504, 4
        %v3507 = vshll.u32 %v3429, 16
        %v3509 = vrot.slane %v3507, 5
        %v3510 = vsel %vm1634, %v3505, %v3509
        %v3511 = vshrl.u32 %v3429, 16
        %v3513 = vrot.slane %v3511, 4
        %v3514 = vor.u32 %v3513, %v3509
        %v3515 = vrot.slane %v3514, 4
        %v3517 = vshll.u32 %v3430, 16
        %v3519 = vrot.slane %v3517, 5
        %v3520 = vsel %vm1634, %v3515, %v3519
        %v3522 = vshrl.u32 %v3431, 16
        %v3524 = vrot.slane %v3522, 4
        %v3525 = vshll.u32 %v3431, 16
        %v3527 = vrot.slane %v3525, 5
        %v3528 = vor.u32 %v3524, %v3527
        %v3529 = vrot.slane %v3528, 4
        %v3531 = vshll.u32 %v3432, 16
        %v3533 = vrot.slane %v3531, 5
        %v3534 = vsel %vm1634, %v3529, %v3533
        %v3535 = vshrl.u32 %v3432, 16
        %v3537 = vrot.slane %v3535, 4
        %v3538 = vor.u32 %v3537, %v3533
        %v3539 = vrot.slane %v3538, 4
        %v3541 = vshll.u32 %v3433, 16
        %v3543 = vrot.slane %v3541, 5
        %v3544 = vsel %vm1634, %v3539, %v3543
        %v3546 = vshrl.u32 %v3434, 16
        %v3548 = vrot.slane %v3546, 4
        %v3549 = vshll.u32 %v3434, 16
        %v3551 = vrot.slane %v3549, 5
        %v3552 = vor.u32 %v3548, %v3551
        %v3553 = vrot.slane %v3552, 4
        %v3555 = vshll.u32 %v3435, 16
        %v3557 = vrot.slane %v3555, 5
        %v3558 = vsel %vm1634, %v3553, %v3557
        %v3559 = vshrl.u32 %v3435, 16
        %v3561 = vrot.slane %v3559, 4
        %v3562 = vor.u32 %v3561, %v3557
        %v3563 = vrot.slane %v3562, 4
        %v3565 = vshll.u32 %v3436, 16
        %v3567 = vrot.slane %v3565, 5
        %v3568 = vsel %vm1634, %v3563, %v3567
        %v3570 = vshrl.u32 %v3437, 16
        %v3572 = vrot.slane %v3570, 4
        %v3573 = vshll.u32 %v3437, 16
        %v3575 = vrot.slane %v3573, 5
        %v3576 = vor.u32 %v3572, %v3575
        %v3577 = vrot.slane %v3576, 4
        %v3579 = vshll.u32 %v3438, 16
        %v3581 = vrot.slane %v3579, 5
        %v3582 = vsel %vm1634, %v3577, %v3581
        %v3583 = vshrl.u32 %v3438, 16
        %v3585 = vrot.slane %v3583, 4
        %v3586 = vor.u32 %v3585, %v3581
        %v3587 = vrot.slane %v3586, 4
        %v3589 = vshll.u32 %v3439, 16
        %v3591 = vrot.slane %v3589, 5
        %v3592 = vsel %vm1634, %v3587, %v3591
        %v3594 = vshrl.u32 %v3440, 16
        %v3596 = vrot.slane %v3594, 4
        %v3597 = vshll.u32 %v3440, 16
        %v3599 = vrot.slane %v3597, 5
        %v3600 = vor.u32 %v3596, %v3599
        %v3601 = vrot.slane %v3600, 4
        %v3603 = vshll.u32 %v3441, 16
        %v3605 = vrot.slane %v3603, 5
        %v3606 = vsel %vm1634, %v3601, %v3605
        %v3607 = vshrl.u32 %v3441, 16
        %v3609 = vrot.slane %v3607, 4
        %v3610 = vor.u32 %v3609, %v3605
        %v3611 = vrot.slane %v3610, 4
        %v3613 = vshll.u32 %v3442, 16
        %v3615 = vrot.slane %v3613, 5
        %v3616 = vsel %vm1634, %v3611, %v3615
        %v3618 = vshrl.u32 %v3443, 16
        %v3620 = vrot.slane %v3618, 4
        %v3621 = vshll.u32 %v3443, 16
        %v3623 = vrot.slane %v3621, 5
        %v3624 = vor.u32 %v3620, %v3623
        %v3625 = vrot.slane %v3624, 4
        %v3627 = vshll.u32 %v3444, 16
        %v3629 = vrot.slane %v3627, 5
        %v3630 = vsel %vm1634, %v3625, %v3629
        %v3631 = vshrl.u32 %v3444, 16
        %v3633 = vrot.slane %v3631, 4
        %v3634 = vor.u32 %v3633, %v3629
        %v3635 = vrot.slane %v3634, 4
        %v3637 = vshll.u32 %v3445, 16
        %v3639 = vrot.slane %v3637, 5
        %v3640 = vsel %vm1634, %v3635, %v3639
        %v3642 = vshrl.u32 %v3446, 16
        %v3644 = vrot.slane %v3642, 4
        %v3645 = vshll.u32 %v3446, 16
        %v3647 = vrot.slane %v3645, 5
        %v3648 = vor.u32 %v3644, %v3647
        %v3649 = vrot.slane %v3648, 4
        %v3651 = vshll.u32 %v3447, 16
        %v3653 = vrot.slane %v3651, 5
        %v3654 = vsel %vm1634, %v3649, %v3653
        %v3655 = vshrl.u32 %v3447, 16
        %v3657 = vrot.slane %v3655, 4
        %v3658 = vor.u32 %v3657, %v3653
        %v3659 = vrot.slane %v3658, 4
        %v3661 = vshll.u32 %v3448, 16
        %v3663 = vrot.slane %v3661, 5
        %v3664 = vsel %vm1634, %v3659, %v3663
        %v3666 = vshrl.u32 %v3449, 16
        %v3668 = vrot.slane %v3666, 4
        %v3669 = vshll.u32 %v3449, 16
        %v3671 = vrot.slane %v3669, 5
        %v3672 = vor.u32 %v3668, %v3671
        %v3673 = vrot.slane %v3672, 4
        %v3675 = vshll.u32 %v3450, 16
        %v3677 = vrot.slane %v3675, 5
        %v3678 = vsel %vm1634, %v3673, %v3677
        %v3679 = vshrl.u32 %v3450, 16
        %v3681 = vrot.slane %v3679, 4
        %v3682 = vor.u32 %v3681, %v3677
        %v3683 = vrot.slane %v3682, 4
        %v3685 = vshll.u32 %v3451, 16
        %v3687 = vrot.slane %v3685, 5
        %v3688 = vsel %vm1634, %v3683, %v3687
        %v3690 = vshrl.u32 %v3452, 16
        %v3692 = vrot.slane %v3690, 4
        %v3693 = vshll.u32 %v3452, 16
        %v3695 = vrot.slane %v3693, 5
        %v3696 = vor.u32 %v3692, %v3695
        %v3697 = vrot.slane %v3696, 4
        %v3699 = vshll.u32 %v3453, 16
        %v3701 = vrot.slane %v3699, 5
        %v3702 = vsel %vm1634, %v3697, %v3701
        %v3703 = vshrl.u32 %v3453, 16
        %v3705 = vrot.slane %v3703, 4
        %v3706 = vor.u32 %v3705, %v3701
        %v3707 = vrot.slane %v3706, 4
        %v3709 = vshll.u32 %v3454, 16
        %v3711 = vrot.slane %v3709, 5
        %v3712 = vsel %vm1634, %v3707, %v3711
        %v3714 = vshrl.u32 %v3455, 16
        %v3716 = vrot.slane %v3714, 4
        %v3717 = vshll.u32 %v3455, 16
        %v3719 = vrot.slane %v3717, 5
        %v3720 = vor.u32 %v3716, %v3719
        %v3721 = vrot.slane %v3720, 4
        %v3723 = vshll.u32 %v3456, 16
        %v3725 = vrot.slane %v3723, 5
        %v3726 = vsel %vm1634, %v3721, %v3725
        %v3727 = vshrl.u32 %v3456, 16
        %v3729 = vrot.slane %v3727, 4
        %v3730 = vor.u32 %v3729, %v3725
        %v3731 = vrot.slane %v3730, 4
        %v3733 = vshll.u32 %v3457, 16
        %v3735 = vrot.slane %v3733, 5
        %v3736 = vsel %vm1634, %v3731, %v3735
        %v3738 = vshrl.u32 %v3458, 16
        %v3740 = vrot.slane %v3738, 4
        %v3741 = vshll.u32 %v3458, 16
        %v3743 = vrot.slane %v3741, 5
        %v3744 = vor.u32 %v3740, %v3743
        %v3745 = vrot.slane %v3744, 4
        %v3747 = vshll.u32 %v3459, 16
        %v3749 = vrot.slane %v3747, 5
        %v3750 = vsel %vm1634, %v3745, %v3749
        %v3751 = vshrl.u32 %v3459, 16
        %v3753 = vrot.slane %v3751, 4
        %v3754 = vor.u32 %v3753, %v3749
        %v3755 = vrot.slane %v3754, 4
        %v3757 = vshll.u32 %v3460, 16
        %v3759 = vrot.slane %v3757, 5
        %v3760 = vsel %vm1634, %v3755, %v3759
        %v3762 = vshrl.u32 %v3461, 16
        %v3764 = vrot.slane %v3762, 4
        %v3765 = vshll.u32 %v3461, 16
        %v3767 = vrot.slane %v3765, 5
        %v3768 = vor.u32 %v3764, %v3767
        %v3769 = vrot.slane %v3768, 4
        %v3771 = vshll.u32 %v3462, 16
        %v3773 = vrot.slane %v3771, 5
        %v3774 = vsel %vm1634, %v3769, %v3773
        %v3775 = vshrl.u32 %v3462, 16
        %v3777 = vrot.slane %v3775, 4
        %v3778 = vor.u32 %v3777, %v3773
        %v3779 = vrot.slane %v3778, 4
        %v3781 = vshll.u32 %v3463, 16
        %v3783 = vrot.slane %v3781, 5
        %v3784 = vsel %vm1634, %v3779, %v3783
        %v3786 = vshrl.u32 %v3464, 16
        %v3788 = vrot.slane %v3786, 4
        %v3789 = vshll.u32 %v3464, 16
        %v3791 = vrot.slane %v3789, 5
        %v3792 = vor.u32 %v3788, %v3791
        %v3793 = vrot.slane %v3792, 4
        %v3795 = vshll.u32 %v3465, 16
        %v3797 = vrot.slane %v3795, 5
        %v3798 = vsel %vm1634, %v3793, %v3797
        %v3799 = vshrl.u32 %v3465, 16
        %v3801 = vrot.slane %v3799, 4
        %v3802 = vor.u32 %v3801, %v3797
        %v3803 = vrot.slane %v3802, 4
        %v3805 = vshll.u32 %v3466, 16
        %v3807 = vrot.slane %v3805, 5
        %v3808 = vsel %vm1634, %v3803, %v3807
        %v3810 = vshrl.u32 %v3467, 16
        %v3812 = vrot.slane %v3810, 4
        %v3813 = vshll.u32 %v3467, 16
        %v3815 = vrot.slane %v3813, 5
        %v3816 = vor.u32 %v3812, %v3815
        %v3817 = vrot.slane %v3816, 4
        %v3819 = vshll.u32 %v3468, 16
        %v3821 = vrot.slane %v3819, 5
        %v3822 = vsel %vm1634, %v3817, %v3821
        %v3823 = vshrl.u32 %v3468, 16
        %v3825 = vrot.slane %v3823, 4
        %v3826 = vor.u32 %v3825, %v3821
        %v3827 = vrot.slane %v3826, 4
        %v3829 = vshll.u32 %v3469, 16
        %v3831 = vrot.slane %v3829, 5
        %v3832 = vsel %vm1634, %v3827, %v3831
        %v3834 = vshrl.u32 %v3470, 16
        %v3836 = vrot.slane %v3834, 4
        %v3837 = vshll.u32 %v3470, 16
        %v3839 = vrot.slane %v3837, 5
        %v3840 = vor.u32 %v3836, %v3839
        %v3841 = vrot.slane %v3840, 4
        %v3843 = vshll.u32 %v3471, 16
        %v3845 = vrot.slane %v3843, 5
        %v3846 = vsel %vm1634, %v3841, %v3845
        %v3847 = vshrl.u32 %v3471, 16
        %v3849 = vrot.slane %v3847, 4
        %v3850 = vor.u32 %v3849, %v3845
        %v3851 = vrot.slane %v3850, 4
        %v3853 = vshll.u32 %v3472, 16
        %v3855 = vrot.slane %v3853, 5
        %v3856 = vsel %vm1634, %v3851, %v3855
        %v3857 = vld [vmem:[#allocation3] sm:$0xff]
        %v3858 = vld [vmem:[#allocation3 + $0x8] sm:$0xff]
        %v3859 = vld [vmem:[#allocation3 + $0x10] sm:$0xff]
        %v3860 = vld [vmem:[#allocation3 + $0x18] sm:$0xff]
        %v3861 = vld [vmem:[#allocation3 + $0x20] sm:$0xff]
        %v3862 = vld [vmem:[#allocation3 + $0x28] sm:$0xff]
        %v3863 = vld [vmem:[#allocation3 + $0x30] sm:$0xff]
        %v3864 = vld [vmem:[#allocation3 + $0x38] sm:$0xff]
        %v3865 = vld [vmem:[#allocation3 + $0x40] sm:$0xff]
        %v3866 = vld [vmem:[#allocation3 + $0x48] sm:$0xff]
        %v3867 = vld [vmem:[#allocation3 + $0x50] sm:$0xff]
        %v3868 = vld [vmem:[#allocation3 + $0x58] sm:$0xff]
        %v3869 = vld [vmem:[#allocation3 + $0x60] sm:$0xff]
        %v3870 = vld [vmem:[#allocation3 + $0x68] sm:$0xff]
        %v3871 = vld [vmem:[#allocation3 + $0x70] sm:$0xff]
        %v3872 = vld [vmem:[#allocation3 + $0x78] sm:$0xff]
        %v3873 = vld [vmem:[#allocation3 + $0x80] sm:$0xff]
        %v3874 = vld [vmem:[#allocation3 + $0x88] sm:$0xff]
        %v3875 = vld [vmem:[#allocation3 + $0x90] sm:$0xff]
        %v3876 = vld [vmem:[#allocation3 + $0x98] sm:$0xff]
        %v3877 = vld [vmem:[#allocation3 + $0xa0] sm:$0xff]
        %v3878 = vld [vmem:[#allocation3 + $0xa8] sm:$0xff]
        %v3879 = vld [vmem:[#allocation3 + $0xb0] sm:$0xff]
        %v3880 = vld [vmem:[#allocation3 + $0xb8] sm:$0xff]
        %v3881 = vld [vmem:[#allocation3 + $0xc0] sm:$0xff]
        %v3882 = vld [vmem:[#allocation3 + $0xc8] sm:$0xff]
        %v3883 = vld [vmem:[#allocation3 + $0xd0] sm:$0xff]
        %v3884 = vld [vmem:[#allocation3 + $0xd8] sm:$0xff]
        %v3885 = vld [vmem:[#allocation3 + $0xe0] sm:$0xff]
        %v3886 = vld [vmem:[#allocation3 + $0xe8] sm:$0xff]
        %v3887 = vld [vmem:[#allocation3 + $0xf0] sm:$0xff]
        %v3888 = vld [vmem:[#allocation3 + $0xf8] sm:$0xff]
        %s3889 = scalar_lea.vmem [#allocation7], 320
        %v3890 = vld [vmem:[%s3889] sm:$0xf]
        %v3891 = vld [vmem:[%s3889 + $0x4] sm:$0xf]
        %v3892 = vld [vmem:[%s3889 + $0x8] sm:$0xf]
        %v3893 = vld [vmem:[%s3889 + $0xc] sm:$0xf]
        %v3894 = vld [vmem:[%s3889 + $0x10] sm:$0xf]
        %v3895 = vld [vmem:[%s3889 + $0x14] sm:$0xf]
        %v3896 = vld [vmem:[%s3889 + $0x18] sm:$0xf]
        %v3897 = vld [vmem:[%s3889 + $0x1c] sm:$0xf]
        %v3898 = vld [vmem:[%s3889 + $0x20] sm:$0xf]
        %v3899 = vld [vmem:[%s3889 + $0x24] sm:$0xf]
        %v3900 = vld [vmem:[%s3889 + $0x28] sm:$0xf]
        %v3901 = vld [vmem:[%s3889 + $0x2c] sm:$0xf]
        %v3902 = vld [vmem:[%s3889 + $0x30] sm:$0xf]
        %v3903 = vld [vmem:[%s3889 + $0x34] sm:$0xf]
        %v3904 = vld [vmem:[%s3889 + $0x38] sm:$0xf]
        %v3905 = vld [vmem:[%s3889 + $0x3c] sm:$0xf]
        %v3906 = vunpack.c.l.b16 %v3486
        %v3907 = vunpack.c.l.b16 %v3496
        %v3908 = vunpack.c.l.b16 %v3510
        %v3909 = vunpack.c.l.b16 %v3520
        %v3910 = vunpack.c.l.b16 %v3534
        %v3911 = vunpack.c.l.b16 %v3544
        %v3912 = vunpack.c.l.b16 %v3558
        %v3913 = vunpack.c.l.b16 %v3568
        %v3914 = vunpack.c.l.b16 %v3582
        %v3915 = vunpack.c.l.b16 %v3592
        %v3916 = vunpack.c.l.b16 %v3606
        %v3917 = vunpack.c.l.b16 %v3616
        %v3918 = vunpack.c.l.b16 %v3630
        %v3919 = vunpack.c.l.b16 %v3640
        %v3920 = vunpack.c.l.b16 %v3654
        %v3921 = vunpack.c.l.b16 %v3664
        %v3922 = vunpack.c.l.b16 %v3678
        %v3923 = vunpack.c.l.b16 %v3688
        %v3924 = vunpack.c.l.b16 %v3702
        %v3925 = vunpack.c.l.b16 %v3712
        %v3926 = vunpack.c.l.b16 %v3726
        %v3927 = vunpack.c.l.b16 %v3736
        %v3928 = vunpack.c.l.b16 %v3750
        %v3929 = vunpack.c.l.b16 %v3760
        %v3930 = vunpack.c.l.b16 %v3774
        %v3931 = vunpack.c.l.b16 %v3784
        %v3932 = vunpack.c.l.b16 %v3798
        %v3933 = vunpack.c.l.b16 %v3808
        %v3934 = vunpack.c.l.b16 %v3822
        %v3935 = vunpack.c.l.b16 %v3832
        %v3936 = vunpack.c.l.b16 %v3846
        %v3937 = vunpack.c.l.b16 %v3856
        %v3938 = vpack.c.b16 %v3907, %v3906
        %v3939 = vpack.c.b16 %v3909, %v3908
        %v3940 = vpack.c.b16 %v3911, %v3910
        %v3941 = vpack.c.b16 %v3913, %v3912
        %v3942 = vpack.c.b16 %v3915, %v3914
        %v3943 = vpack.c.b16 %v3917, %v3916
        %v3944 = vpack.c.b16 %v3919, %v3918
        %v3945 = vpack.c.b16 %v3921, %v3920
        %v3946 = vpack.c.b16 %v3923, %v3922
        %v3947 = vpack.c.b16 %v3925, %v3924
        %v3948 = vpack.c.b16 %v3927, %v3926
        %v3949 = vpack.c.b16 %v3929, %v3928
        %v3950 = vpack.c.b16 %v3931, %v3930
        %v3951 = vpack.c.b16 %v3933, %v3932
        %v3952 = vpack.c.b16 %v3935, %v3934
        %v3953 = vpack.c.b16 %v3937, %v3936
        %v3986 = vunpack.c.l.b16 %v3890
        %v3987 = vunpack.c.l.b16 %v3891
        %v3988 = vunpack.c.l.b16 %v3892
        %v3989 = vunpack.c.l.b16 %v3893
        %v3990 = vunpack.c.l.b16 %v3894
        %v3991 = vunpack.c.l.b16 %v3895
        %v3992 = vunpack.c.l.b16 %v3896
        %v3993 = vunpack.c.l.b16 %v3897
        %v3994 = vunpack.c.l.b16 %v3898
        %v3995 = vunpack.c.l.b16 %v3899
        %v3996 = vunpack.c.l.b16 %v3900
        %v3997 = vunpack.c.l.b16 %v3901
        %v3998 = vunpack.c.l.b16 %v3902
        %v3999 = vunpack.c.l.b16 %v3903
        %v4000 = vunpack.c.l.b16 %v3904
        %v4001 = vunpack.c.l.b16 %v3905
        %v4002 = vpack.c.b16 %v3987, %v3986
        %v4003 = vpack.c.b16 %v3989, %v3988
        %v4004 = vpack.c.b16 %v3991, %v3990
        %v4005 = vpack.c.b16 %v3993, %v3992
        %v4006 = vpack.c.b16 %v3995, %v3994
        %v4007 = vpack.c.b16 %v3997, %v3996
        %v4008 = vpack.c.b16 %v3999, %v3998
        %v4009 = vpack.c.b16 %v4001, %v4000
        %4018 = vmatpush.bf16.msra.mxu0 %v4009
        %4019 = vmatpush.bf16.msra.mxu0 %v4008
        %4020 = vmatpush.bf16.msra.mxu0 %v4007
        %4021 = vmatpush.bf16.msra.mxu0 %v4006
        %4022 = vmatpush.bf16.msra.mxu0 %v4005
        %4023 = vmatpush.bf16.msra.mxu0 %v4004
        %4024 = vmatpush.bf16.msra.mxu0 %v4003
        %4025 = vmatpush.bf16.msra.mxu0 %v4002
        %4026 = vmatmul.bf16.gmra.mxu0 %v3938
        %v4027 = vpop.f32.mrf.mxu0
        %v4028 = vadd.f32 0.0, %v4027
        %v4029 = vpop.f32.mrf.mxu0
        %v4030 = vadd.f32 0.0, %v4029
        %4031 = vmatmul.bf16.gmra.mxu0 %v3939
        %v4032 = vpop.f32.mrf.mxu0
        %v4033 = vadd.f32 0.0, %v4032
        %v4034 = vpop.f32.mrf.mxu0
        %v4035 = vadd.f32 0.0, %v4034
        %4036 = vmatmul.bf16.gmra.mxu0 %v3940
        %v4037 = vpop.f32.mrf.mxu0
        %v4038 = vadd.f32 0.0, %v4037
        %v4039 = vpop.f32.mrf.mxu0
        %v4040 = vadd.f32 0.0, %v4039
        %4041 = vmatmul.bf16.gmra.mxu0 %v3941
        %v4042 = vpop.f32.mrf.mxu0
        %v4043 = vadd.f32 0.0, %v4042
        %v4044 = vpop.f32.mrf.mxu0
        %v4045 = vadd.f32 0.0, %v4044
        %4046 = vmatmul.bf16.gmra.mxu0 %v3942
        %v4047 = vpop.f32.mrf.mxu0
        %v4048 = vadd.f32 0.0, %v4047
        %v4049 = vpop.f32.mrf.mxu0
        %v4050 = vadd.f32 0.0, %v4049
        %4051 = vmatmul.bf16.gmra.mxu0 %v3943
        %v4052 = vpop.f32.mrf.mxu0
        %v4053 = vadd.f32 0.0, %v4052
        %v4054 = vpop.f32.mrf.mxu0
        %v4055 = vadd.f32 0.0, %v4054
        %4056 = vmatmul.bf16.gmra.mxu0 %v3944
        %v4057 = vpop.f32.mrf.mxu0
        %v4058 = vadd.f32 0.0, %v4057
        %v4059 = vpop.f32.mrf.mxu0
        %v4060 = vadd.f32 0.0, %v4059
        %4061 = vmatmul.bf16.gmra.mxu0 %v3945
        %v4062 = vpop.f32.mrf.mxu0
        %v4063 = vadd.f32 0.0, %v4062
        %v4064 = vpop.f32.mrf.mxu0
        %v4065 = vadd.f32 0.0, %v4064
        %4066 = vmatmul.bf16.gmra.mxu0 %v3946
        %v4067 = vpop.f32.mrf.mxu0
        %v4068 = vadd.f32 0.0, %v4067
        %v4069 = vpop.f32.mrf.mxu0
        %v4070 = vadd.f32 0.0, %v4069
        %4071 = vmatmul.bf16.gmra.mxu0 %v3947
        %v4072 = vpop.f32.mrf.mxu0
        %v4073 = vadd.f32 0.0, %v4072
        %v4074 = vpop.f32.mrf.mxu0
        %v4075 = vadd.f32 0.0, %v4074
        %4076 = vmatmul.bf16.gmra.mxu0 %v3948
        %v4077 = vpop.f32.mrf.mxu0
        %v4078 = vadd.f32 0.0, %v4077
        %v4079 = vpop.f32.mrf.mxu0
        %v4080 = vadd.f32 0.0, %v4079
        %4081 = vmatmul.bf16.gmra.mxu0 %v3949
        %v4082 = vpop.f32.mrf.mxu0
        %v4083 = vadd.f32 0.0, %v4082
        %v4084 = vpop.f32.mrf.mxu0
        %v4085 = vadd.f32 0.0, %v4084
        %4086 = vmatmul.bf16.gmra.mxu0 %v3950
        %v4087 = vpop.f32.mrf.mxu0
        %v4088 = vadd.f32 0.0, %v4087
        %v4089 = vpop.f32.mrf.mxu0
        %v4090 = vadd.f32 0.0, %v4089
        %4091 = vmatmul.bf16.gmra.mxu0 %v3951
        %v4092 = vpop.f32.mrf.mxu0
        %v4093 = vadd.f32 0.0, %v4092
        %v4094 = vpop.f32.mrf.mxu0
        %v4095 = vadd.f32 0.0, %v4094
        %4096 = vmatmul.bf16.gmra.mxu0 %v3952
        %v4097 = vpop.f32.mrf.mxu0
        %v4098 = vadd.f32 0.0, %v4097
        %v4099 = vpop.f32.mrf.mxu0
        %v4100 = vadd.f32 0.0, %v4099
        %4101 = vmatmul.bf16.gmra.mxu0 %v3953
        %v4102 = vpop.f32.mrf.mxu0
        %v4103 = vadd.f32 0.0, %v4102
        %v4104 = vpop.f32.mrf.mxu0
        %v4105 = vadd.f32 0.0, %v4104
        %4106 = vdwg.mxu0
        %v4107 = vadd.f32 %v3857, %v4028
        %v4108 = vadd.f32 %v3858, %v4030
        %v4109 = vadd.f32 %v3859, %v4033
        %v4110 = vadd.f32 %v3860, %v4035
        %v4111 = vadd.f32 %v3861, %v4038
        %v4112 = vadd.f32 %v3862, %v4040
        %v4113 = vadd.f32 %v3863, %v4043
        %v4114 = vadd.f32 %v3864, %v4045
        %v4115 = vadd.f32 %v3865, %v4048
        %v4116 = vadd.f32 %v3866, %v4050
        %v4117 = vadd.f32 %v3867, %v4053
        %v4118 = vadd.f32 %v3868, %v4055
        %v4119 = vadd.f32 %v3869, %v4058
        %v4120 = vadd.f32 %v3870, %v4060
        %v4121 = vadd.f32 %v3871, %v4063
        %v4122 = vadd.f32 %v3872, %v4065
        %v4123 = vadd.f32 %v3873, %v4068
        %v4124 = vadd.f32 %v3874, %v4070
        %v4125 = vadd.f32 %v3875, %v4073
        %v4126 = vadd.f32 %v3876, %v4075
        %v4127 = vadd.f32 %v3877, %v4078
        %v4128 = vadd.f32 %v3878, %v4080
        %v4129 = vadd.f32 %v3879, %v4083
        %v4130 = vadd.f32 %v3880, %v4085
        %v4131 = vadd.f32 %v3881, %v4088
        %v4132 = vadd.f32 %v3882, %v4090
        %v4133 = vadd.f32 %v3883, %v4093
        %v4134 = vadd.f32 %v3884, %v4095
        %v4135 = vadd.f32 %v3885, %v4098
        %v4136 = vadd.f32 %v3886, %v4100
        %v4137 = vadd.f32 %v3887, %v4103
        %v4138 = vadd.f32 %v3888, %v4105
        %4139 = vst [vmem:[#allocation3] sm:$0xff] %v4107
        %4140 = vst [vmem:[#allocation3 + $0x8] sm:$0xff] %v4108
        %4141 = vst [vmem:[#allocation3 + $0x10] sm:$0xff] %v4109
        %4142 = vst [vmem:[#allocation3 + $0x18] sm:$0xff] %v4110
        %4143 = vst [vmem:[#allocation3 + $0x20] sm:$0xff] %v4111
        %4144 = vst [vmem:[#allocation3 + $0x28] sm:$0xff] %v4112
        %4145 = vst [vmem:[#allocation3 + $0x30] sm:$0xff] %v4113
        %4146 = vst [vmem:[#allocation3 + $0x38] sm:$0xff] %v4114
        %4147 = vst [vmem:[#allocation3 + $0x40] sm:$0xff] %v4115
        %4148 = vst [vmem:[#allocation3 + $0x48] sm:$0xff] %v4116
        %4149 = vst [vmem:[#allocation3 + $0x50] sm:$0xff] %v4117
        %4150 = vst [vmem:[#allocation3 + $0x58] sm:$0xff] %v4118
        %4151 = vst [vmem:[#allocation3 + $0x60] sm:$0xff] %v4119
        %4152 = vst [vmem:[#allocation3 + $0x68] sm:$0xff] %v4120
        %4153 = vst [vmem:[#allocation3 + $0x70] sm:$0xff] %v4121
        %4154 = vst [vmem:[#allocation3 + $0x78] sm:$0xff] %v4122
        %4155 = vst [vmem:[#allocation3 + $0x80] sm:$0xff] %v4123
        %4156 = vst [vmem:[#allocation3 + $0x88] sm:$0xff] %v4124
        %4157 = vst [vmem:[#allocation3 + $0x90] sm:$0xff] %v4125
        %4158 = vst [vmem:[#allocation3 + $0x98] sm:$0xff] %v4126
        %4159 = vst [vmem:[#allocation3 + $0xa0] sm:$0xff] %v4127
        %4160 = vst [vmem:[#allocation3 + $0xa8] sm:$0xff] %v4128
        %4161 = vst [vmem:[#allocation3 + $0xb0] sm:$0xff] %v4129
        %4162 = vst [vmem:[#allocation3 + $0xb8] sm:$0xff] %v4130
        %4163 = vst [vmem:[#allocation3 + $0xc0] sm:$0xff] %v4131
        %4164 = vst [vmem:[#allocation3 + $0xc8] sm:$0xff] %v4132
        %4165 = vst [vmem:[#allocation3 + $0xd0] sm:$0xff] %v4133
        %4166 = vst [vmem:[#allocation3 + $0xd8] sm:$0xff] %v4134
        %4167 = vst [vmem:[#allocation3 + $0xe0] sm:$0xff] %v4135
        %4168 = vst [vmem:[#allocation3 + $0xe8] sm:$0xff] %v4136
        %4169 = vst [vmem:[#allocation3 + $0xf0] sm:$0xff] %v4137
        %4170 = vst [vmem:[#allocation3 + $0xf8] sm:$0xff] %v4138
        %s4171 = scalar_lea.vmem [#allocation2], 48
        %v4172 = vld [vmem:[%s4171 + $0x4] sm:$0x8]
        %v4173 = vld [vmem:[%s4171 + $0x8] sm:$0xf]
        %v4174 = vld [vmem:[%s4171 + $0xc] sm:$0xf]
        %v4175 = vld [vmem:[%s4171 + $0x1c] sm:$0x8]
        %v4176 = vld [vmem:[%s4171 + $0x20] sm:$0xf]
        %v4177 = vld [vmem:[%s4171 + $0x24] sm:$0xf]
        %v4178 = vld [vmem:[%s4171 + $0x34] sm:$0x8]
        %v4179 = vld [vmem:[%s4171 + $0x38] sm:$0xf]
        %v4180 = vld [vmem:[%s4171 + $0x3c] sm:$0xf]
        %v4181 = vld [vmem:[%s4171 + $0x4c] sm:$0x8]
        %v4182 = vld [vmem:[%s4171 + $0x50] sm:$0xf]
        %v4183 = vld [vmem:[%s4171 + $0x54] sm:$0xf]
        %v4184 = vld [vmem:[%s4171 + $0x64] sm:$0x8]
        %v4185 = vld [vmem:[%s4171 + $0x68] sm:$0xf]
        %v4186 = vld [vmem:[%s4171 + $0x6c] sm:$0xf]
        %v4187 = vld [vmem:[%s4171 + $0x7c] sm:$0x8]
        %v4188 = vld [vmem:[%s4171 + $0x80] sm:$0xf]
        %v4189 = vld [vmem:[%s4171 + $0x84] sm:$0xf]
        %v4190 = vld [vmem:[%s4171 + $0x94] sm:$0x8]
        %v4191 = vld [vmem:[%s4171 + $0x98] sm:$0xf]
        %v4192 = vld [vmem:[%s4171 + $0x9c] sm:$0xf]
        %v4193 = vld [vmem:[%s4171 + $0xac] sm:$0x8]
        %v4194 = vld [vmem:[%s4171 + $0xb0] sm:$0xf]
        %v4195 = vld [vmem:[%s4171 + $0xb4] sm:$0xf]
        %v4196 = vld [vmem:[%s4171 + $0xc4] sm:$0x8]
        %v4197 = vld [vmem:[%s4171 + $0xc8] sm:$0xf]
        %v4198 = vld [vmem:[%s4171 + $0xcc] sm:$0xf]
        %v4199 = vld [vmem:[%s4171 + $0xdc] sm:$0x8]
        %v4200 = vld [vmem:[%s4171 + $0xe0] sm:$0xf]
        %v4201 = vld [vmem:[%s4171 + $0xe4] sm:$0xf]
        %v4202 = vld [vmem:[%s4171 + $0xf4] sm:$0x8]
        %v4203 = vld [vmem:[%s4171 + $0xf8] sm:$0xf]
        %v4204 = vld [vmem:[%s4171 + $0xfc] sm:$0xf]
        %v4205 = vld [vmem:[%s4171 + $0x10c] sm:$0x8]
        %v4206 = vld [vmem:[%s4171 + $0x110] sm:$0xf]
        %v4207 = vld [vmem:[%s4171 + $0x114] sm:$0xf]
        %v4208 = vld [vmem:[%s4171 + $0x124] sm:$0x8]
        %v4209 = vld [vmem:[%s4171 + $0x128] sm:$0xf]
        %v4210 = vld [vmem:[%s4171 + $0x12c] sm:$0xf]
        %v4211 = vld [vmem:[%s4171 + $0x13c] sm:$0x8]
        %v4212 = vld [vmem:[%s4171 + $0x140] sm:$0xf]
        %v4213 = vld [vmem:[%s4171 + $0x144] sm:$0xf]
        %v4214 = vld [vmem:[%s4171 + $0x154] sm:$0x8]
        %v4215 = vld [vmem:[%s4171 + $0x158] sm:$0xf]
        %v4216 = vld [vmem:[%s4171 + $0x15c] sm:$0xf]
        %v4217 = vld [vmem:[%s4171 + $0x16c] sm:$0x8]
        %v4218 = vld [vmem:[%s4171 + $0x170] sm:$0xf]
        %v4219 = vld [vmem:[%s4171 + $0x174] sm:$0xf]
        %v4221 = vshrl.u32 %v4172, 16
        %v4223 = vrot.slane %v4221, 7
        %v4224 = vrot.slane %v4223, 4
        %v4226 = vshrl.u32 %v4173, 16
        %v4228 = vrot.slane %v4226, 7
        %v4229 = vshll.u32 %v4173, 16
        %v4231 = vor.u32 %v4228, %v4229
        %v4232 = vsel %vm540, %v4224, %v4231
        %v4233 = vrot.slane %v4228, 4
        %v4235 = vshrl.u32 %v4174, 16
        %v4237 = vrot.slane %v4235, 7
        %v4238 = vshll.u32 %v4174, 16
        %v4240 = vor.u32 %v4237, %v4238
        %v4241 = vsel %vm540, %v4233, %v4240
        %v4243 = vshrl.u32 %v4175, 16
        %v4245 = vrot.slane %v4243, 7
        %v4246 = vrot.slane %v4245, 4
        %v4248 = vshrl.u32 %v4176, 16
        %v4250 = vrot.slane %v4248, 7
        %v4251 = vshll.u32 %v4176, 16
        %v4253 = vor.u32 %v4250, %v4251
        %v4254 = vsel %vm540, %v4246, %v4253
        %v4255 = vrot.slane %v4250, 4
        %v4257 = vshrl.u32 %v4177, 16
        %v4259 = vrot.slane %v4257, 7
        %v4260 = vshll.u32 %v4177, 16
        %v4262 = vor.u32 %v4259, %v4260
        %v4263 = vsel %vm540, %v4255, %v4262
        %v4265 = vshrl.u32 %v4178, 16
        %v4267 = vrot.slane %v4265, 7
        %v4268 = vrot.slane %v4267, 4
        %v4270 = vshrl.u32 %v4179, 16
        %v4272 = vrot.slane %v4270, 7
        %v4273 = vshll.u32 %v4179, 16
        %v4275 = vor.u32 %v4272, %v4273
        %v4276 = vsel %vm540, %v4268, %v4275
        %v4277 = vrot.slane %v4272, 4
        %v4279 = vshrl.u32 %v4180, 16
        %v4281 = vrot.slane %v4279, 7
        %v4282 = vshll.u32 %v4180, 16
        %v4284 = vor.u32 %v4281, %v4282
        %v4285 = vsel %vm540, %v4277, %v4284
        %v4287 = vshrl.u32 %v4181, 16
        %v4289 = vrot.slane %v4287, 7
        %v4290 = vrot.slane %v4289, 4
        %v4292 = vshrl.u32 %v4182, 16
        %v4294 = vrot.slane %v4292, 7
        %v4295 = vshll.u32 %v4182, 16
        %v4297 = vor.u32 %v4294, %v4295
        %v4298 = vsel %vm540, %v4290, %v4297
        %v4299 = vrot.slane %v4294, 4
        %v4301 = vshrl.u32 %v4183, 16
        %v4303 = vrot.slane %v4301, 7
        %v4304 = vshll.u32 %v4183, 16
        %v4306 = vor.u32 %v4303, %v4304
        %v4307 = vsel %vm540, %v4299, %v4306
        %v4309 = vshrl.u32 %v4184, 16
        %v4311 = vrot.slane %v4309, 7
        %v4312 = vrot.slane %v4311, 4
        %v4314 = vshrl.u32 %v4185, 16
        %v4316 = vrot.slane %v4314, 7
        %v4317 = vshll.u32 %v4185, 16
        %v4319 = vor.u32 %v4316, %v4317
        %v4320 = vsel %vm540, %v4312, %v4319
        %v4321 = vrot.slane %v4316, 4
        %v4323 = vshrl.u32 %v4186, 16
        %v4325 = vrot.slane %v4323, 7
        %v4326 = vshll.u32 %v4186, 16
        %v4328 = vor.u32 %v4325, %v4326
        %v4329 = vsel %vm540, %v4321, %v4328
        %v4331 = vshrl.u32 %v4187, 16
        %v4333 = vrot.slane %v4331, 7
        %v4334 = vrot.slane %v4333, 4
        %v4336 = vshrl.u32 %v4188, 16
        %v4338 = vrot.slane %v4336, 7
        %v4339 = vshll.u32 %v4188, 16
        %v4341 = vor.u32 %v4338, %v4339
        %v4342 = vsel %vm540, %v4334, %v4341
        %v4343 = vrot.slane %v4338, 4
        %v4345 = vshrl.u32 %v4189, 16
        %v4347 = vrot.slane %v4345, 7
        %v4348 = vshll.u32 %v4189, 16
        %v4350 = vor.u32 %v4347, %v4348
        %v4351 = vsel %vm540, %v4343, %v4350
        %v4353 = vshrl.u32 %v4190, 16
        %v4355 = vrot.slane %v4353, 7
        %v4356 = vrot.slane %v4355, 4
        %v4358 = vshrl.u32 %v4191, 16
        %v4360 = vrot.slane %v4358, 7
        %v4361 = vshll.u32 %v4191, 16
        %v4363 = vor.u32 %v4360, %v4361
        %v4364 = vsel %vm540, %v4356, %v4363
        %v4365 = vrot.slane %v4360, 4
        %v4367 = vshrl.u32 %v4192, 16
        %v4369 = vrot.slane %v4367, 7
        %v4370 = vshll.u32 %v4192, 16
        %v4372 = vor.u32 %v4369, %v4370
        %v4373 = vsel %vm540, %v4365, %v4372
        %v4375 = vshrl.u32 %v4193, 16
        %v4377 = vrot.slane %v4375, 7
        %v4378 = vrot.slane %v4377, 4
        %v4380 = vshrl.u32 %v4194, 16
        %v4382 = vrot.slane %v4380, 7
        %v4383 = vshll.u32 %v4194, 16
        %v4385 = vor.u32 %v4382, %v4383
        %v4386 = vsel %vm540, %v4378, %v4385
        %v4387 = vrot.slane %v4382, 4
        %v4389 = vshrl.u32 %v4195, 16
        %v4391 = vrot.slane %v4389, 7
        %v4392 = vshll.u32 %v4195, 16
        %v4394 = vor.u32 %v4391, %v4392
        %v4395 = vsel %vm540, %v4387, %v4394
        %v4397 = vshrl.u32 %v4196, 16
        %v4399 = vrot.slane %v4397, 7
        %v4400 = vrot.slane %v4399, 4
        %v4402 = vshrl.u32 %v4197, 16
        %v4404 = vrot.slane %v4402, 7
        %v4405 = vshll.u32 %v4197, 16
        %v4407 = vor.u32 %v4404, %v4405
        %v4408 = vsel %vm540, %v4400, %v4407
        %v4409 = vrot.slane %v4404, 4
        %v4411 = vshrl.u32 %v4198, 16
        %v4413 = vrot.slane %v4411, 7
        %v4414 = vshll.u32 %v4198, 16
        %v4416 = vor.u32 %v4413, %v4414
        %v4417 = vsel %vm540, %v4409, %v4416
        %v4419 = vshrl.u32 %v4199, 16
        %v4421 = vrot.slane %v4419, 7
        %v4422 = vrot.slane %v4421, 4
        %v4424 = vshrl.u32 %v4200, 16
        %v4426 = vrot.slane %v4424, 7
        %v4427 = vshll.u32 %v4200, 16
        %v4429 = vor.u32 %v4426, %v4427
        %v4430 = vsel %vm540, %v4422, %v4429
        %v4431 = vrot.slane %v4426, 4
        %v4433 = vshrl.u32 %v4201, 16
        %v4435 = vrot.slane %v4433, 7
        %v4436 = vshll.u32 %v4201, 16
        %v4438 = vor.u32 %v4435, %v4436
        %v4439 = vsel %vm540, %v4431, %v4438
        %v4441 = vshrl.u32 %v4202, 16
        %v4443 = vrot.slane %v4441, 7
        %v4444 = vrot.slane %v4443, 4
        %v4446 = vshrl.u32 %v4203, 16
        %v4448 = vrot.slane %v4446, 7
        %v4449 = vshll.u32 %v4203, 16
        %v4451 = vor.u32 %v4448, %v4449
        %v4452 = vsel %vm540, %v4444, %v4451
        %v4453 = vrot.slane %v4448, 4
        %v4455 = vshrl.u32 %v4204, 16
        %v4457 = vrot.slane %v4455, 7
        %v4458 = vshll.u32 %v4204, 16
        %v4460 = vor.u32 %v4457, %v4458
        %v4461 = vsel %vm540, %v4453, %v4460
        %v4463 = vshrl.u32 %v4205, 16
        %v4465 = vrot.slane %v4463, 7
        %v4466 = vrot.slane %v4465, 4
        %v4468 = vshrl.u32 %v4206, 16
        %v4470 = vrot.slane %v4468, 7
        %v4471 = vshll.u32 %v4206, 16
        %v4473 = vor.u32 %v4470, %v4471
        %v4474 = vsel %vm540, %v4466, %v4473
        %v4475 = vrot.slane %v4470, 4
        %v4477 = vshrl.u32 %v4207, 16
        %v4479 = vrot.slane %v4477, 7
        %v4480 = vshll.u32 %v4207, 16
        %v4482 = vor.u32 %v4479, %v4480
        %v4483 = vsel %vm540, %v4475, %v4482
        %v4485 = vshrl.u32 %v4208, 16
        %v4487 = vrot.slane %v4485, 7
        %v4488 = vrot.slane %v4487, 4
        %v4490 = vshrl.u32 %v4209, 16
        %v4492 = vrot.slane %v4490, 7
        %v4493 = vshll.u32 %v4209, 16
        %v4495 = vor.u32 %v4492, %v4493
        %v4496 = vsel %vm540, %v4488, %v4495
        %v4497 = vrot.slane %v4492, 4
        %v4499 = vshrl.u32 %v4210, 16
        %v4501 = vrot.slane %v4499, 7
        %v4502 = vshll.u32 %v4210, 16
        %v4504 = vor.u32 %v4501, %v4502
        %v4505 = vsel %vm540, %v4497, %v4504
        %v4507 = vshrl.u32 %v4211, 16
        %v4509 = vrot.slane %v4507, 7
        %v4510 = vrot.slane %v4509, 4
        %v4512 = vshrl.u32 %v4212, 16
        %v4514 = vrot.slane %v4512, 7
        %v4515 = vshll.u32 %v4212, 16
        %v4517 = vor.u32 %v4514, %v4515
        %v4518 = vsel %vm540, %v4510, %v4517
        %v4519 = vrot.slane %v4514, 4
        %v4521 = vshrl.u32 %v4213, 16
        %v4523 = vrot.slane %v4521, 7
        %v4524 = vshll.u32 %v4213, 16
        %v4526 = vor.u32 %v4523, %v4524
        %v4527 = vsel %vm540, %v4519, %v4526
        %v4529 = vshrl.u32 %v4214, 16
        %v4531 = vrot.slane %v4529, 7
        %v4532 = vrot.slane %v4531, 4
        %v4534 = vshrl.u32 %v4215, 16
        %v4536 = vrot.slane %v4534, 7
        %v4537 = vshll.u32 %v4215, 16
        %v4539 = vor.u32 %v4536, %v4537
        %v4540 = vsel %vm540, %v4532, %v4539
        %v4541 = vrot.slane %v4536, 4
        %v4543 = vshrl.u32 %v4216, 16
        %v4545 = vrot.slane %v4543, 7
        %v4546 = vshll.u32 %v4216, 16
        %v4548 = vor.u32 %v4545, %v4546
        %v4549 = vsel %vm540, %v4541, %v4548
        %v4551 = vshrl.u32 %v4217, 16
        %v4553 = vrot.slane %v4551, 7
        %v4554 = vrot.slane %v4553, 4
        %v4556 = vshrl.u32 %v4218, 16
        %v4558 = vrot.slane %v4556, 7
        %v4559 = vshll.u32 %v4218, 16
        %v4561 = vor.u32 %v4558, %v4559
        %v4562 = vsel %vm540, %v4554, %v4561
        %v4563 = vrot.slane %v4558, 4
        %v4565 = vshrl.u32 %v4219, 16
        %v4567 = vrot.slane %v4565, 7
        %v4568 = vshll.u32 %v4219, 16
        %v4570 = vor.u32 %v4567, %v4568
        %v4571 = vsel %vm540, %v4563, %v4570
        %v4572 = vld [vmem:[#allocation3] sm:$0xff]
        %v4573 = vld [vmem:[#allocation3 + $0x8] sm:$0xff]
        %v4574 = vld [vmem:[#allocation3 + $0x10] sm:$0xff]
        %v4575 = vld [vmem:[#allocation3 + $0x18] sm:$0xff]
        %v4576 = vld [vmem:[#allocation3 + $0x20] sm:$0xff]
        %v4577 = vld [vmem:[#allocation3 + $0x28] sm:$0xff]
        %v4578 = vld [vmem:[#allocation3 + $0x30] sm:$0xff]
        %v4579 = vld [vmem:[#allocation3 + $0x38] sm:$0xff]
        %v4580 = vld [vmem:[#allocation3 + $0x40] sm:$0xff]
        %v4581 = vld [vmem:[#allocation3 + $0x48] sm:$0xff]
        %v4582 = vld [vmem:[#allocation3 + $0x50] sm:$0xff]
        %v4583 = vld [vmem:[#allocation3 + $0x58] sm:$0xff]
        %v4584 = vld [vmem:[#allocation3 + $0x60] sm:$0xff]
        %v4585 = vld [vmem:[#allocation3 + $0x68] sm:$0xff]
        %v4586 = vld [vmem:[#allocation3 + $0x70] sm:$0xff]
        %v4587 = vld [vmem:[#allocation3 + $0x78] sm:$0xff]
        %v4588 = vld [vmem:[#allocation3 + $0x80] sm:$0xff]
        %v4589 = vld [vmem:[#allocation3 + $0x88] sm:$0xff]
        %v4590 = vld [vmem:[#allocation3 + $0x90] sm:$0xff]
        %v4591 = vld [vmem:[#allocation3 + $0x98] sm:$0xff]
        %v4592 = vld [vmem:[#allocation3 + $0xa0] sm:$0xff]
        %v4593 = vld [vmem:[#allocation3 + $0xa8] sm:$0xff]
        %v4594 = vld [vmem:[#allocation3 + $0xb0] sm:$0xff]
        %v4595 = vld [vmem:[#allocation3 + $0xb8] sm:$0xff]
        %v4596 = vld [vmem:[#allocation3 + $0xc0] sm:$0xff]
        %v4597 = vld [vmem:[#allocation3 + $0xc8] sm:$0xff]
        %v4598 = vld [vmem:[#allocation3 + $0xd0] sm:$0xff]
        %v4599 = vld [vmem:[#allocation3 + $0xd8] sm:$0xff]
        %v4600 = vld [vmem:[#allocation3 + $0xe0] sm:$0xff]
        %v4601 = vld [vmem:[#allocation3 + $0xe8] sm:$0xff]
        %v4602 = vld [vmem:[#allocation3 + $0xf0] sm:$0xff]
        %v4603 = vld [vmem:[#allocation3 + $0xf8] sm:$0xff]
        %s4604 = scalar_lea.vmem [#allocation7], 384
        %v4605 = vld [vmem:[%s4604] sm:$0xf]
        %v4606 = vld [vmem:[%s4604 + $0x4] sm:$0xf]
        %v4607 = vld [vmem:[%s4604 + $0x8] sm:$0xf]
        %v4608 = vld [vmem:[%s4604 + $0xc] sm:$0xf]
        %v4609 = vld [vmem:[%s4604 + $0x10] sm:$0xf]
        %v4610 = vld [vmem:[%s4604 + $0x14] sm:$0xf]
        %v4611 = vld [vmem:[%s4604 + $0x18] sm:$0xf]
        %v4612 = vld [vmem:[%s4604 + $0x1c] sm:$0xf]
        %v4613 = vld [vmem:[%s4604 + $0x20] sm:$0xf]
        %v4614 = vld [vmem:[%s4604 + $0x24] sm:$0xf]
        %v4615 = vld [vmem:[%s4604 + $0x28] sm:$0xf]
        %v4616 = vld [vmem:[%s4604 + $0x2c] sm:$0xf]
        %v4617 = vld [vmem:[%s4604 + $0x30] sm:$0xf]
        %v4618 = vld [vmem:[%s4604 + $0x34] sm:$0xf]
        %v4619 = vld [vmem:[%s4604 + $0x38] sm:$0xf]
        %v4620 = vld [vmem:[%s4604 + $0x3c] sm:$0xf]
        %v4621 = vunpack.c.l.b16 %v4232
        %v4622 = vunpack.c.l.b16 %v4241
        %v4623 = vunpack.c.l.b16 %v4254
        %v4624 = vunpack.c.l.b16 %v4263
        %v4625 = vunpack.c.l.b16 %v4276
        %v4626 = vunpack.c.l.b16 %v4285
        %v4627 = vunpack.c.l.b16 %v4298
        %v4628 = vunpack.c.l.b16 %v4307
        %v4629 = vunpack.c.l.b16 %v4320
        %v4630 = vunpack.c.l.b16 %v4329
        %v4631 = vunpack.c.l.b16 %v4342
        %v4632 = vunpack.c.l.b16 %v4351
        %v4633 = vunpack.c.l.b16 %v4364
        %v4634 = vunpack.c.l.b16 %v4373
        %v4635 = vunpack.c.l.b16 %v4386
        %v4636 = vunpack.c.l.b16 %v4395
        %v4637 = vunpack.c.l.b16 %v4408
        %v4638 = vunpack.c.l.b16 %v4417
        %v4639 = vunpack.c.l.b16 %v4430
        %v4640 = vunpack.c.l.b16 %v4439
        %v4641 = vunpack.c.l.b16 %v4452
        %v4642 = vunpack.c.l.b16 %v4461
        %v4643 = vunpack.c.l.b16 %v4474
        %v4644 = vunpack.c.l.b16 %v4483
        %v4645 = vunpack.c.l.b16 %v4496
        %v4646 = vunpack.c.l.b16 %v4505
        %v4647 = vunpack.c.l.b16 %v4518
        %v4648 = vunpack.c.l.b16 %v4527
        %v4649 = vunpack.c.l.b16 %v4540
        %v4650 = vunpack.c.l.b16 %v4549
        %v4651 = vunpack.c.l.b16 %v4562
        %v4652 = vunpack.c.l.b16 %v4571
        %v4653 = vpack.c.b16 %v4622, %v4621
        %v4654 = vpack.c.b16 %v4624, %v4623
        %v4655 = vpack.c.b16 %v4626, %v4625
        %v4656 = vpack.c.b16 %v4628, %v4627
        %v4657 = vpack.c.b16 %v4630, %v4629
        %v4658 = vpack.c.b16 %v4632, %v4631
        %v4659 = vpack.c.b16 %v4634, %v4633
        %v4660 = vpack.c.b16 %v4636, %v4635
        %v4661 = vpack.c.b16 %v4638, %v4637
        %v4662 = vpack.c.b16 %v4640, %v4639
        %v4663 = vpack.c.b16 %v4642, %v4641
        %v4664 = vpack.c.b16 %v4644, %v4643
        %v4665 = vpack.c.b16 %v4646, %v4645
        %v4666 = vpack.c.b16 %v4648, %v4647
        %v4667 = vpack.c.b16 %v4650, %v4649
        %v4668 = vpack.c.b16 %v4652, %v4651
        %v4701 = vunpack.c.l.b16 %v4605
        %v4702 = vunpack.c.l.b16 %v4606
        %v4703 = vunpack.c.l.b16 %v4607
        %v4704 = vunpack.c.l.b16 %v4608
        %v4705 = vunpack.c.l.b16 %v4609
        %v4706 = vunpack.c.l.b16 %v4610
        %v4707 = vunpack.c.l.b16 %v4611
        %v4708 = vunpack.c.l.b16 %v4612
        %v4709 = vunpack.c.l.b16 %v4613
        %v4710 = vunpack.c.l.b16 %v4614
        %v4711 = vunpack.c.l.b16 %v4615
        %v4712 = vunpack.c.l.b16 %v4616
        %v4713 = vunpack.c.l.b16 %v4617
        %v4714 = vunpack.c.l.b16 %v4618
        %v4715 = vunpack.c.l.b16 %v4619
        %v4716 = vunpack.c.l.b16 %v4620
        %v4717 = vpack.c.b16 %v4702, %v4701
        %v4718 = vpack.c.b16 %v4704, %v4703
        %v4719 = vpack.c.b16 %v4706, %v4705
        %v4720 = vpack.c.b16 %v4708, %v4707
        %v4721 = vpack.c.b16 %v4710, %v4709
        %v4722 = vpack.c.b16 %v4712, %v4711
        %v4723 = vpack.c.b16 %v4714, %v4713
        %v4724 = vpack.c.b16 %v4716, %v4715
        %4733 = vmatpush.bf16.msra.mxu0 %v4724
        %4734 = vmatpush.bf16.msra.mxu0 %v4723
        %4735 = vmatpush.bf16.msra.mxu0 %v4722
        %4736 = vmatpush.bf16.msra.mxu0 %v4721
        %4737 = vmatpush.bf16.msra.mxu0 %v4720
        %4738 = vmatpush.bf16.msra.mxu0 %v4719
        %4739 = vmatpush.bf16.msra.mxu0 %v4718
        %4740 = vmatpush.bf16.msra.mxu0 %v4717
        %4741 = vmatmul.bf16.gmra.mxu0 %v4653
        %v4742 = vpop.f32.mrf.mxu0
        %v4743 = vadd.f32 0.0, %v4742
        %v4744 = vpop.f32.mrf.mxu0
        %v4745 = vadd.f32 0.0, %v4744
        %4746 = vmatmul.bf16.gmra.mxu0 %v4654
        %v4747 = vpop.f32.mrf.mxu0
        %v4748 = vadd.f32 0.0, %v4747
        %v4749 = vpop.f32.mrf.mxu0
        %v4750 = vadd.f32 0.0, %v4749
        %4751 = vmatmul.bf16.gmra.mxu0 %v4655
        %v4752 = vpop.f32.mrf.mxu0
        %v4753 = vadd.f32 0.0, %v4752
        %v4754 = vpop.f32.mrf.mxu0
        %v4755 = vadd.f32 0.0, %v4754
        %4756 = vmatmul.bf16.gmra.mxu0 %v4656
        %v4757 = vpop.f32.mrf.mxu0
        %v4758 = vadd.f32 0.0, %v4757
        %v4759 = vpop.f32.mrf.mxu0
        %v4760 = vadd.f32 0.0, %v4759
        %4761 = vmatmul.bf16.gmra.mxu0 %v4657
        %v4762 = vpop.f32.mrf.mxu0
        %v4763 = vadd.f32 0.0, %v4762
        %v4764 = vpop.f32.mrf.mxu0
        %v4765 = vadd.f32 0.0, %v4764
        %4766 = vmatmul.bf16.gmra.mxu0 %v4658
        %v4767 = vpop.f32.mrf.mxu0
        %v4768 = vadd.f32 0.0, %v4767
        %v4769 = vpop.f32.mrf.mxu0
        %v4770 = vadd.f32 0.0, %v4769
        %4771 = vmatmul.bf16.gmra.mxu0 %v4659
        %v4772 = vpop.f32.mrf.mxu0
        %v4773 = vadd.f32 0.0, %v4772
        %v4774 = vpop.f32.mrf.mxu0
        %v4775 = vadd.f32 0.0, %v4774
        %4776 = vmatmul.bf16.gmra.mxu0 %v4660
        %v4777 = vpop.f32.mrf.mxu0
        %v4778 = vadd.f32 0.0, %v4777
        %v4779 = vpop.f32.mrf.mxu0
        %v4780 = vadd.f32 0.0, %v4779
        %4781 = vmatmul.bf16.gmra.mxu0 %v4661
        %v4782 = vpop.f32.mrf.mxu0
        %v4783 = vadd.f32 0.0, %v4782
        %v4784 = vpop.f32.mrf.mxu0
        %v4785 = vadd.f32 0.0, %v4784
        %4786 = vmatmul.bf16.gmra.mxu0 %v4662
        %v4787 = vpop.f32.mrf.mxu0
        %v4788 = vadd.f32 0.0, %v4787
        %v4789 = vpop.f32.mrf.mxu0
        %v4790 = vadd.f32 0.0, %v4789
        %4791 = vmatmul.bf16.gmra.mxu0 %v4663
        %v4792 = vpop.f32.mrf.mxu0
        %v4793 = vadd.f32 0.0, %v4792
        %v4794 = vpop.f32.mrf.mxu0
        %v4795 = vadd.f32 0.0, %v4794
        %4796 = vmatmul.bf16.gmra.mxu0 %v4664
        %v4797 = vpop.f32.mrf.mxu0
        %v4798 = vadd.f32 0.0, %v4797
        %v4799 = vpop.f32.mrf.mxu0
        %v4800 = vadd.f32 0.0, %v4799
        %4801 = vmatmul.bf16.gmra.mxu0 %v4665
        %v4802 = vpop.f32.mrf.mxu0
        %v4803 = vadd.f32 0.0, %v4802
        %v4804 = vpop.f32.mrf.mxu0
        %v4805 = vadd.f32 0.0, %v4804
        %4806 = vmatmul.bf16.gmra.mxu0 %v4666
        %v4807 = vpop.f32.mrf.mxu0
        %v4808 = vadd.f32 0.0, %v4807
        %v4809 = vpop.f32.mrf.mxu0
        %v4810 = vadd.f32 0.0, %v4809
        %4811 = vmatmul.bf16.gmra.mxu0 %v4667
        %v4812 = vpop.f32.mrf.mxu0
        %v4813 = vadd.f32 0.0, %v4812
        %v4814 = vpop.f32.mrf.mxu0
        %v4815 = vadd.f32 0.0, %v4814
        %4816 = vmatmul.bf16.gmra.mxu0 %v4668
        %v4817 = vpop.f32.mrf.mxu0
        %v4818 = vadd.f32 0.0, %v4817
        %v4819 = vpop.f32.mrf.mxu0
        %v4820 = vadd.f32 0.0, %v4819
        %4821 = vdwg.mxu0
        %v4822 = vadd.f32 %v4572, %v4743
        %v4823 = vadd.f32 %v4573, %v4745
        %v4824 = vadd.f32 %v4574, %v4748
        %v4825 = vadd.f32 %v4575, %v4750
        %v4826 = vadd.f32 %v4576, %v4753
        %v4827 = vadd.f32 %v4577, %v4755
        %v4828 = vadd.f32 %v4578, %v4758
        %v4829 = vadd.f32 %v4579, %v4760
        %v4830 = vadd.f32 %v4580, %v4763
        %v4831 = vadd.f32 %v4581, %v4765
        %v4832 = vadd.f32 %v4582, %v4768
        %v4833 = vadd.f32 %v4583, %v4770
        %v4834 = vadd.f32 %v4584, %v4773
        %v4835 = vadd.f32 %v4585, %v4775
        %v4836 = vadd.f32 %v4586, %v4778
        %v4837 = vadd.f32 %v4587, %v4780
        %v4838 = vadd.f32 %v4588, %v4783
        %v4839 = vadd.f32 %v4589, %v4785
        %v4840 = vadd.f32 %v4590, %v4788
        %v4841 = vadd.f32 %v4591, %v4790
        %v4842 = vadd.f32 %v4592, %v4793
        %v4843 = vadd.f32 %v4593, %v4795
        %v4844 = vadd.f32 %v4594, %v4798
        %v4845 = vadd.f32 %v4595, %v4800
        %v4846 = vadd.f32 %v4596, %v4803
        %v4847 = vadd.f32 %v4597, %v4805
        %v4848 = vadd.f32 %v4598, %v4808
        %v4849 = vadd.f32 %v4599, %v4810
        %v4850 = vadd.f32 %v4600, %v4813
        %v4851 = vadd.f32 %v4601, %v4815
        %v4852 = vadd.f32 %v4602, %v4818
        %v4853 = vadd.f32 %v4603, %v4820
        %4854 = vst [vmem:[#allocation3] sm:$0xff] %v4822
        %4855 = vst [vmem:[#allocation3 + $0x8] sm:$0xff] %v4823
        %4856 = vst [vmem:[#allocation3 + $0x10] sm:$0xff] %v4824
        %4857 = vst [vmem:[#allocation3 + $0x18] sm:$0xff] %v4825
        %4858 = vst [vmem:[#allocation3 + $0x20] sm:$0xff] %v4826
        %4859 = vst [vmem:[#allocation3 + $0x28] sm:$0xff] %v4827
        %4860 = vst [vmem:[#allocation3 + $0x30] sm:$0xff] %v4828
        %4861 = vst [vmem:[#allocation3 + $0x38] sm:$0xff] %v4829
        %4862 = vst [vmem:[#allocation3 + $0x40] sm:$0xff] %v4830
        %4863 = vst [vmem:[#allocation3 + $0x48] sm:$0xff] %v4831
        %4864 = vst [vmem:[#allocation3 + $0x50] sm:$0xff] %v4832
        %4865 = vst [vmem:[#allocation3 + $0x58] sm:$0xff] %v4833
        %4866 = vst [vmem:[#allocation3 + $0x60] sm:$0xff] %v4834
        %4867 = vst [vmem:[#allocation3 + $0x68] sm:$0xff] %v4835
        %4868 = vst [vmem:[#allocation3 + $0x70] sm:$0xff] %v4836
        %4869 = vst [vmem:[#allocation3 + $0x78] sm:$0xff] %v4837
        %4870 = vst [vmem:[#allocation3 + $0x80] sm:$0xff] %v4838
        %4871 = vst [vmem:[#allocation3 + $0x88] sm:$0xff] %v4839
        %4872 = vst [vmem:[#allocation3 + $0x90] sm:$0xff] %v4840
        %4873 = vst [vmem:[#allocation3 + $0x98] sm:$0xff] %v4841
        %4874 = vst [vmem:[#allocation3 + $0xa0] sm:$0xff] %v4842
        %4875 = vst [vmem:[#allocation3 + $0xa8] sm:$0xff] %v4843
        %4876 = vst [vmem:[#allocation3 + $0xb0] sm:$0xff] %v4844
        %4877 = vst [vmem:[#allocation3 + $0xb8] sm:$0xff] %v4845
        %4878 = vst [vmem:[#allocation3 + $0xc0] sm:$0xff] %v4846
        %4879 = vst [vmem:[#allocation3 + $0xc8] sm:$0xff] %v4847
        %4880 = vst [vmem:[#allocation3 + $0xd0] sm:$0xff] %v4848
        %4881 = vst [vmem:[#allocation3 + $0xd8] sm:$0xff] %v4849
        %4882 = vst [vmem:[#allocation3 + $0xe0] sm:$0xff] %v4850
        %4883 = vst [vmem:[#allocation3 + $0xe8] sm:$0xff] %v4851
        %4884 = vst [vmem:[#allocation3 + $0xf0] sm:$0xff] %v4852
        %4885 = vst [vmem:[#allocation3 + $0xf8] sm:$0xff] %v4853
        %v4886 = vld [vmem:[%s4171 + $0x8] sm:$0xf]
        %v4887 = vld [vmem:[%s4171 + $0xc] sm:$0xf]
        %v4888 = vld [vmem:[%s4171 + $0x20] sm:$0xf]
        %v4889 = vld [vmem:[%s4171 + $0x24] sm:$0xf]
        %v4890 = vld [vmem:[%s4171 + $0x38] sm:$0xf]
        %v4891 = vld [vmem:[%s4171 + $0x3c] sm:$0xf]
        %v4892 = vld [vmem:[%s4171 + $0x50] sm:$0xf]
        %v4893 = vld [vmem:[%s4171 + $0x54] sm:$0xf]
        %v4894 = vld [vmem:[%s4171 + $0x68] sm:$0xf]
        %v4895 = vld [vmem:[%s4171 + $0x6c] sm:$0xf]
        %v4896 = vld [vmem:[%s4171 + $0x80] sm:$0xf]
        %v4897 = vld [vmem:[%s4171 + $0x84] sm:$0xf]
        %v4898 = vld [vmem:[%s4171 + $0x98] sm:$0xf]
        %v4899 = vld [vmem:[%s4171 + $0x9c] sm:$0xf]
        %v4900 = vld [vmem:[%s4171 + $0xb0] sm:$0xf]
        %v4901 = vld [vmem:[%s4171 + $0xb4] sm:$0xf]
        %v4902 = vld [vmem:[%s4171 + $0xc8] sm:$0xf]
        %v4903 = vld [vmem:[%s4171 + $0xcc] sm:$0xf]
        %v4904 = vld [vmem:[%s4171 + $0xe0] sm:$0xf]
        %v4905 = vld [vmem:[%s4171 + $0xe4] sm:$0xf]
        %v4906 = vld [vmem:[%s4171 + $0xf8] sm:$0xf]
        %v4907 = vld [vmem:[%s4171 + $0xfc] sm:$0xf]
        %v4908 = vld [vmem:[%s4171 + $0x110] sm:$0xf]
        %v4909 = vld [vmem:[%s4171 + $0x114] sm:$0xf]
        %v4910 = vld [vmem:[%s4171 + $0x128] sm:$0xf]
        %v4911 = vld [vmem:[%s4171 + $0x12c] sm:$0xf]
        %v4912 = vld [vmem:[%s4171 + $0x140] sm:$0xf]
        %v4913 = vld [vmem:[%s4171 + $0x144] sm:$0xf]
        %v4914 = vld [vmem:[%s4171 + $0x158] sm:$0xf]
        %v4915 = vld [vmem:[%s4171 + $0x15c] sm:$0xf]
        %v4916 = vld [vmem:[%s4171 + $0x170] sm:$0xf]
        %v4917 = vld [vmem:[%s4171 + $0x174] sm:$0xf]
        %v4918 = vld [vmem:[#allocation3] sm:$0xff]
        %v4919 = vld [vmem:[#allocation3 + $0x8] sm:$0xff]
        %v4920 = vld [vmem:[#allocation3 + $0x10] sm:$0xff]
        %v4921 = vld [vmem:[#allocation3 + $0x18] sm:$0xff]
        %v4922 = vld [vmem:[#allocation3 + $0x20] sm:$0xff]
        %v4923 = vld [vmem:[#allocation3 + $0x28] sm:$0xff]
        %v4924 = vld [vmem:[#allocation3 + $0x30] sm:$0xff]
        %v4925 = vld [vmem:[#allocation3 + $0x38] sm:$0xff]
        %v4926 = vld [vmem:[#allocation3 + $0x40] sm:$0xff]
        %v4927 = vld [vmem:[#allocation3 + $0x48] sm:$0xff]
        %v4928 = vld [vmem:[#allocation3 + $0x50] sm:$0xff]
        %v4929 = vld [vmem:[#allocation3 + $0x58] sm:$0xff]
        %v4930 = vld [vmem:[#allocation3 + $0x60] sm:$0xff]
        %v4931 = vld [vmem:[#allocation3 + $0x68] sm:$0xff]
        %v4932 = vld [vmem:[#allocation3 + $0x70] sm:$0xff]
        %v4933 = vld [vmem:[#allocation3 + $0x78] sm:$0xff]
        %v4934 = vld [vmem:[#allocation3 + $0x80] sm:$0xff]
        %v4935 = vld [vmem:[#allocation3 + $0x88] sm:$0xff]
        %v4936 = vld [vmem:[#allocation3 + $0x90] sm:$0xff]
        %v4937 = vld [vmem:[#allocation3 + $0x98] sm:$0xff]
        %v4938 = vld [vmem:[#allocation3 + $0xa0] sm:$0xff]
        %v4939 = vld [vmem:[#allocation3 + $0xa8] sm:$0xff]
        %v4940 = vld [vmem:[#allocation3 + $0xb0] sm:$0xff]
        %v4941 = vld [vmem:[#allocation3 + $0xb8] sm:$0xff]
        %v4942 = vld [vmem:[#allocation3 + $0xc0] sm:$0xff]
        %v4943 = vld [vmem:[#allocation3 + $0xc8] sm:$0xff]
        %v4944 = vld [vmem:[#allocation3 + $0xd0] sm:$0xff]
        %v4945 = vld [vmem:[#allocation3 + $0xd8] sm:$0xff]
        %v4946 = vld [vmem:[#allocation3 + $0xe0] sm:$0xff]
        %v4947 = vld [vmem:[#allocation3 + $0xe8] sm:$0xff]
        %v4948 = vld [vmem:[#allocation3 + $0xf0] sm:$0xff]
        %v4949 = vld [vmem:[#allocation3 + $0xf8] sm:$0xff]
        %s4950 = scalar_lea.vmem [#allocation7], 448
        %v4951 = vld [vmem:[%s4950] sm:$0xf]
        %v4952 = vld [vmem:[%s4950 + $0x4] sm:$0xf]
        %v4953 = vld [vmem:[%s4950 + $0x8] sm:$0xf]
        %v4954 = vld [vmem:[%s4950 + $0xc] sm:$0xf]
        %v4955 = vld [vmem:[%s4950 + $0x10] sm:$0xf]
        %v4956 = vld [vmem:[%s4950 + $0x14] sm:$0xf]
        %v4957 = vld [vmem:[%s4950 + $0x18] sm:$0xf]
        %v4958 = vld [vmem:[%s4950 + $0x1c] sm:$0xf]
        %v4959 = vld [vmem:[%s4950 + $0x20] sm:$0xf]
        %v4960 = vld [vmem:[%s4950 + $0x24] sm:$0xf]
        %v4961 = vld [vmem:[%s4950 + $0x28] sm:$0xf]
        %v4962 = vld [vmem:[%s4950 + $0x2c] sm:$0xf]
        %v4963 = vld [vmem:[%s4950 + $0x30] sm:$0xf]
        %v4964 = vld [vmem:[%s4950 + $0x34] sm:$0xf]
        %v4965 = vld [vmem:[%s4950 + $0x38] sm:$0xf]
        %v4966 = vld [vmem:[%s4950 + $0x3c] sm:$0xf]
        %v4999 = vunpack.c.l.b16 %v4886
        %v5000 = vunpack.c.l.b16 %v4887
        %v5001 = vunpack.c.l.b16 %v4888
        %v5002 = vunpack.c.l.b16 %v4889
        %v5003 = vunpack.c.l.b16 %v4890
        %v5004 = vunpack.c.l.b16 %v4891
        %v5005 = vunpack.c.l.b16 %v4892
        %v5006 = vunpack.c.l.b16 %v4893
        %v5007 = vunpack.c.l.b16 %v4894
        %v5008 = vunpack.c.l.b16 %v4895
        %v5009 = vunpack.c.l.b16 %v4896
        %v5010 = vunpack.c.l.b16 %v4897
        %v5011 = vunpack.c.l.b16 %v4898
        %v5012 = vunpack.c.l.b16 %v4899
        %v5013 = vunpack.c.l.b16 %v4900
        %v5014 = vunpack.c.l.b16 %v4901
        %v5015 = vunpack.c.l.b16 %v4902
        %v5016 = vunpack.c.l.b16 %v4903
        %v5017 = vunpack.c.l.b16 %v4904
        %v5018 = vunpack.c.l.b16 %v4905
        %v5019 = vunpack.c.l.b16 %v4906
        %v5020 = vunpack.c.l.b16 %v4907
        %v5021 = vunpack.c.l.b16 %v4908
        %v5022 = vunpack.c.l.b16 %v4909
        %v5023 = vunpack.c.l.b16 %v4910
        %v5024 = vunpack.c.l.b16 %v4911
        %v5025 = vunpack.c.l.b16 %v4912
        %v5026 = vunpack.c.l.b16 %v4913
        %v5027 = vunpack.c.l.b16 %v4914
        %v5028 = vunpack.c.l.b16 %v4915
        %v5029 = vunpack.c.l.b16 %v4916
        %v5030 = vunpack.c.l.b16 %v4917
        %v5031 = vpack.c.b16 %v5000, %v4999
        %v5032 = vpack.c.b16 %v5002, %v5001
        %v5033 = vpack.c.b16 %v5004, %v5003
        %v5034 = vpack.c.b16 %v5006, %v5005
        %v5035 = vpack.c.b16 %v5008, %v5007
        %v5036 = vpack.c.b16 %v5010, %v5009
        %v5037 = vpack.c.b16 %v5012, %v5011
        %v5038 = vpack.c.b16 %v5014, %v5013
        %v5039 = vpack.c.b16 %v5016, %v5015
        %v5040 = vpack.c.b16 %v5018, %v5017
        %v5041 = vpack.c.b16 %v5020, %v5019
        %v5042 = vpack.c.b16 %v5022, %v5021
        %v5043 = vpack.c.b16 %v5024, %v5023
        %v5044 = vpack.c.b16 %v5026, %v5025
        %v5045 = vpack.c.b16 %v5028, %v5027
        %v5046 = vpack.c.b16 %v5030, %v5029
        %v5079 = vunpack.c.l.b16 %v4951
        %v5080 = vunpack.c.l.b16 %v4952
        %v5081 = vunpack.c.l.b16 %v4953
        %v5082 = vunpack.c.l.b16 %v4954
        %v5083 = vunpack.c.l.b16 %v4955
        %v5084 = vunpack.c.l.b16 %v4956
        %v5085 = vunpack.c.l.b16 %v4957
        %v5086 = vunpack.c.l.b16 %v4958
        %v5087 = vunpack.c.l.b16 %v4959
        %v5088 = vunpack.c.l.b16 %v4960
        %v5089 = vunpack.c.l.b16 %v4961
        %v5090 = vunpack.c.l.b16 %v4962
        %v5091 = vunpack.c.l.b16 %v4963
        %v5092 = vunpack.c.l.b16 %v4964
        %v5093 = vunpack.c.l.b16 %v4965
        %v5094 = vunpack.c.l.b16 %v4966
        %v5095 = vpack.c.b16 %v5080, %v5079
        %v5096 = vpack.c.b16 %v5082, %v5081
        %v5097 = vpack.c.b16 %v5084, %v5083
        %v5098 = vpack.c.b16 %v5086, %v5085
        %v5099 = vpack.c.b16 %v5088, %v5087
        %v5100 = vpack.c.b16 %v5090, %v5089
        %v5101 = vpack.c.b16 %v5092, %v5091
        %v5102 = vpack.c.b16 %v5094, %v5093
        %5111 = vmatpush.bf16.msra.mxu0 %v5102
        %5112 = vmatpush.bf16.msra.mxu0 %v5101
        %5113 = vmatpush.bf16.msra.mxu0 %v5100
        %5114 = vmatpush.bf16.msra.mxu0 %v5099
        %5115 = vmatpush.bf16.msra.mxu0 %v5098
        %5116 = vmatpush.bf16.msra.mxu0 %v5097
        %5117 = vmatpush.bf16.msra.mxu0 %v5096
        %5118 = vmatpush.bf16.msra.mxu0 %v5095
        %5119 = vmatmul.bf16.gmra.mxu0 %v5031
        %v5120 = vpop.f32.mrf.mxu0
        %v5121 = vadd.f32 0.0, %v5120
        %v5122 = vpop.f32.mrf.mxu0
        %v5123 = vadd.f32 0.0, %v5122
        %5124 = vmatmul.bf16.gmra.mxu0 %v5032
        %v5125 = vpop.f32.mrf.mxu0
        %v5126 = vadd.f32 0.0, %v5125
        %v5127 = vpop.f32.mrf.mxu0
        %v5128 = vadd.f32 0.0, %v5127
        %5129 = vmatmul.bf16.gmra.mxu0 %v5033
        %v5130 = vpop.f32.mrf.mxu0
        %v5131 = vadd.f32 0.0, %v5130
        %v5132 = vpop.f32.mrf.mxu0
        %v5133 = vadd.f32 0.0, %v5132
        %5134 = vmatmul.bf16.gmra.mxu0 %v5034
        %v5135 = vpop.f32.mrf.mxu0
        %v5136 = vadd.f32 0.0, %v5135
        %v5137 = vpop.f32.mrf.mxu0
        %v5138 = vadd.f32 0.0, %v5137
        %5139 = vmatmul.bf16.gmra.mxu0 %v5035
        %v5140 = vpop.f32.mrf.mxu0
        %v5141 = vadd.f32 0.0, %v5140
        %v5142 = vpop.f32.mrf.mxu0
        %v5143 = vadd.f32 0.0, %v5142
        %5144 = vmatmul.bf16.gmra.mxu0 %v5036
        %v5145 = vpop.f32.mrf.mxu0
        %v5146 = vadd.f32 0.0, %v5145
        %v5147 = vpop.f32.mrf.mxu0
        %v5148 = vadd.f32 0.0, %v5147
        %5149 = vmatmul.bf16.gmra.mxu0 %v5037
        %v5150 = vpop.f32.mrf.mxu0
        %v5151 = vadd.f32 0.0, %v5150
        %v5152 = vpop.f32.mrf.mxu0
        %v5153 = vadd.f32 0.0, %v5152
        %5154 = vmatmul.bf16.gmra.mxu0 %v5038
        %v5155 = vpop.f32.mrf.mxu0
        %v5156 = vadd.f32 0.0, %v5155
        %v5157 = vpop.f32.mrf.mxu0
        %v5158 = vadd.f32 0.0, %v5157
        %5159 = vmatmul.bf16.gmra.mxu0 %v5039
        %v5160 = vpop.f32.mrf.mxu0
        %v5161 = vadd.f32 0.0, %v5160
        %v5162 = vpop.f32.mrf.mxu0
        %v5163 = vadd.f32 0.0, %v5162
        %5164 = vmatmul.bf16.gmra.mxu0 %v5040
        %v5165 = vpop.f32.mrf.mxu0
        %v5166 = vadd.f32 0.0, %v5165
        %v5167 = vpop.f32.mrf.mxu0
        %v5168 = vadd.f32 0.0, %v5167
        %5169 = vmatmul.bf16.gmra.mxu0 %v5041
        %v5170 = vpop.f32.mrf.mxu0
        %v5171 = vadd.f32 0.0, %v5170
        %v5172 = vpop.f32.mrf.mxu0
        %v5173 = vadd.f32 0.0, %v5172
        %5174 = vmatmul.bf16.gmra.mxu0 %v5042
        %v5175 = vpop.f32.mrf.mxu0
        %v5176 = vadd.f32 0.0, %v5175
        %v5177 = vpop.f32.mrf.mxu0
        %v5178 = vadd.f32 0.0, %v5177
        %5179 = vmatmul.bf16.gmra.mxu0 %v5043
        %v5180 = vpop.f32.mrf.mxu0
        %v5181 = vadd.f32 0.0, %v5180
        %v5182 = vpop.f32.mrf.mxu0
        %v5183 = vadd.f32 0.0, %v5182
        %5184 = vmatmul.bf16.gmra.mxu0 %v5044
        %v5185 = vpop.f32.mrf.mxu0
        %v5186 = vadd.f32 0.0, %v5185
        %v5187 = vpop.f32.mrf.mxu0
        %v5188 = vadd.f32 0.0, %v5187
        %5189 = vmatmul.bf16.gmra.mxu0 %v5045
        %v5190 = vpop.f32.mrf.mxu0
        %v5191 = vadd.f32 0.0, %v5190
        %v5192 = vpop.f32.mrf.mxu0
        %v5193 = vadd.f32 0.0, %v5192
        %5194 = vmatmul.bf16.gmra.mxu0 %v5046
        %v5195 = vpop.f32.mrf.mxu0
        %v5196 = vadd.f32 0.0, %v5195
        %v5197 = vpop.f32.mrf.mxu0
        %v5198 = vadd.f32 0.0, %v5197
        %5199 = vdwg.mxu0
        %v5200 = vadd.f32 %v4918, %v5121
        %v5201 = vadd.f32 %v4919, %v5123
        %v5202 = vadd.f32 %v4920, %v5126
        %v5203 = vadd.f32 %v4921, %v5128
        %v5204 = vadd.f32 %v4922, %v5131
        %v5205 = vadd.f32 %v4923, %v5133
        %v5206 = vadd.f32 %v4924, %v5136
        %v5207 = vadd.f32 %v4925, %v5138
        %v5208 = vadd.f32 %v4926, %v5141
        %v5209 = vadd.f32 %v4927, %v5143
        %v5210 = vadd.f32 %v4928, %v5146
        %v5211 = vadd.f32 %v4929, %v5148
        %v5212 = vadd.f32 %v4930, %v5151
        %v5213 = vadd.f32 %v4931, %v5153
        %v5214 = vadd.f32 %v4932, %v5156
        %v5215 = vadd.f32 %v4933, %v5158
        %v5216 = vadd.f32 %v4934, %v5161
        %v5217 = vadd.f32 %v4935, %v5163
        %v5218 = vadd.f32 %v4936, %v5166
        %v5219 = vadd.f32 %v4937, %v5168
        %v5220 = vadd.f32 %v4938, %v5171
        %v5221 = vadd.f32 %v4939, %v5173
        %v5222 = vadd.f32 %v4940, %v5176
        %v5223 = vadd.f32 %v4941, %v5178
        %v5224 = vadd.f32 %v4942, %v5181
        %v5225 = vadd.f32 %v4943, %v5183
        %v5226 = vadd.f32 %v4944, %v5186
        %v5227 = vadd.f32 %v4945, %v5188
        %v5228 = vadd.f32 %v4946, %v5191
        %v5229 = vadd.f32 %v4947, %v5193
        %v5230 = vadd.f32 %v4948, %v5196
        %v5231 = vadd.f32 %v4949, %v5198
        %5232 = vst [vmem:[#allocation3] sm:$0xff] %v5200
        %5233 = vst [vmem:[#allocation3 + $0x8] sm:$0xff] %v5201
        %5234 = vst [vmem:[#allocation3 + $0x10] sm:$0xff] %v5202
        %5235 = vst [vmem:[#allocation3 + $0x18] sm:$0xff] %v5203
        %5236 = vst [vmem:[#allocation3 + $0x20] sm:$0xff] %v5204
        %5237 = vst [vmem:[#allocation3 + $0x28] sm:$0xff] %v5205
        %5238 = vst [vmem:[#allocation3 + $0x30] sm:$0xff] %v5206
        %5239 = vst [vmem:[#allocation3 + $0x38] sm:$0xff] %v5207
        %5240 = vst [vmem:[#allocation3 + $0x40] sm:$0xff] %v5208
        %5241 = vst [vmem:[#allocation3 + $0x48] sm:$0xff] %v5209
        %5242 = vst [vmem:[#allocation3 + $0x50] sm:$0xff] %v5210
        %5243 = vst [vmem:[#allocation3 + $0x58] sm:$0xff] %v5211
        %5244 = vst [vmem:[#allocation3 + $0x60] sm:$0xff] %v5212
        %5245 = vst [vmem:[#allocation3 + $0x68] sm:$0xff] %v5213
        %5246 = vst [vmem:[#allocation3 + $0x70] sm:$0xff] %v5214
        %5247 = vst [vmem:[#allocation3 + $0x78] sm:$0xff] %v5215
        %5248 = vst [vmem:[#allocation3 + $0x80] sm:$0xff] %v5216
        %5249 = vst [vmem:[#allocation3 + $0x88] sm:$0xff] %v5217
        %5250 = vst [vmem:[#allocation3 + $0x90] sm:$0xff] %v5218
        %5251 = vst [vmem:[#allocation3 + $0x98] sm:$0xff] %v5219
        %5252 = vst [vmem:[#allocation3 + $0xa0] sm:$0xff] %v5220
        %5253 = vst [vmem:[#allocation3 + $0xa8] sm:$0xff] %v5221
        %5254 = vst [vmem:[#allocation3 + $0xb0] sm:$0xff] %v5222
        %5255 = vst [vmem:[#allocation3 + $0xb8] sm:$0xff] %v5223
        %5256 = vst [vmem:[#allocation3 + $0xc0] sm:$0xff] %v5224
        %5257 = vst [vmem:[#allocation3 + $0xc8] sm:$0xff] %v5225
        %5258 = vst [vmem:[#allocation3 + $0xd0] sm:$0xff] %v5226
        %5259 = vst [vmem:[#allocation3 + $0xd8] sm:$0xff] %v5227
        %5260 = vst [vmem:[#allocation3 + $0xe0] sm:$0xff] %v5228
        %5261 = vst [vmem:[#allocation3 + $0xe8] sm:$0xff] %v5229
        %5262 = vst [vmem:[#allocation3 + $0xf0] sm:$0xff] %v5230
        %5263 = vst [vmem:[#allocation3 + $0xf8] sm:$0xff] %v5231
        %v5264 = vld [vmem:[%s4171 + $0x8] sm:$0xf]
        %v5265 = vld [vmem:[%s4171 + $0xc] sm:$0xf]
        %v5266 = vld [vmem:[%s4171 + $0x10] sm:$0x1]
        %v5267 = vld [vmem:[%s4171 + $0x20] sm:$0xf]
        %v5268 = vld [vmem:[%s4171 + $0x24] sm:$0xf]
        %v5269 = vld [vmem:[%s4171 + $0x28] sm:$0x1]
        %v5270 = vld [vmem:[%s4171 + $0x38] sm:$0xf]
        %v5271 = vld [vmem:[%s4171 + $0x3c] sm:$0xf]
        %v5272 = vld [vmem:[%s4171 + $0x40] sm:$0x1]
        %v5273 = vld [vmem:[%s4171 + $0x50] sm:$0xf]
        %v5274 = vld [vmem:[%s4171 + $0x54] sm:$0xf]
        %v5275 = vld [vmem:[%s4171 + $0x58] sm:$0x1]
        %v5276 = vld [vmem:[%s4171 + $0x68] sm:$0xf]
        %v5277 = vld [vmem:[%s4171 + $0x6c] sm:$0xf]
        %v5278 = vld [vmem:[%s4171 + $0x70] sm:$0x1]
        %v5279 = vld [vmem:[%s4171 + $0x80] sm:$0xf]
        %v5280 = vld [vmem:[%s4171 + $0x84] sm:$0xf]
        %v5281 = vld [vmem:[%s4171 + $0x88] sm:$0x1]
        %v5282 = vld [vmem:[%s4171 + $0x98] sm:$0xf]
        %v5283 = vld [vmem:[%s4171 + $0x9c] sm:$0xf]
        %v5284 = vld [vmem:[%s4171 + $0xa0] sm:$0x1]
        %v5285 = vld [vmem:[%s4171 + $0xb0] sm:$0xf]
        %v5286 = vld [vmem:[%s4171 + $0xb4] sm:$0xf]
        %v5287 = vld [vmem:[%s4171 + $0xb8] sm:$0x1]
        %v5288 = vld [vmem:[%s4171 + $0xc8] sm:$0xf]
        %v5289 = vld [vmem:[%s4171 + $0xcc] sm:$0xf]
        %v5290 = vld [vmem:[%s4171 + $0xd0] sm:$0x1]
        %v5291 = vld [vmem:[%s4171 + $0xe0] sm:$0xf]
        %v5292 = vld [vmem:[%s4171 + $0xe4] sm:$0xf]
        %v5293 = vld [vmem:[%s4171 + $0xe8] sm:$0x1]
        %v5294 = vld [vmem:[%s4171 + $0xf8] sm:$0xf]
        %v5295 = vld [vmem:[%s4171 + $0xfc] sm:$0xf]
        %v5296 = vld [vmem:[%s4171 + $0x100] sm:$0x1]
        %v5297 = vld [vmem:[%s4171 + $0x110] sm:$0xf]
        %v5298 = vld [vmem:[%s4171 + $0x114] sm:$0xf]
        %v5299 = vld [vmem:[%s4171 + $0x118] sm:$0x1]
        %v5300 = vld [vmem:[%s4171 + $0x128] sm:$0xf]
        %v5301 = vld [vmem:[%s4171 + $0x12c] sm:$0xf]
        %v5302 = vld [vmem:[%s4171 + $0x130] sm:$0x1]
        %v5303 = vld [vmem:[%s4171 + $0x140] sm:$0xf]
        %v5304 = vld [vmem:[%s4171 + $0x144] sm:$0xf]
        %v5305 = vld [vmem:[%s4171 + $0x148] sm:$0x1]
        %v5306 = vld [vmem:[%s4171 + $0x158] sm:$0xf]
        %v5307 = vld [vmem:[%s4171 + $0x15c] sm:$0xf]
        %v5308 = vld [vmem:[%s4171 + $0x160] sm:$0x1]
        %v5309 = vld [vmem:[%s4171 + $0x170] sm:$0xf]
        %v5310 = vld [vmem:[%s4171 + $0x174] sm:$0xf]
        %v5311 = vld [vmem:[%s4171 + $0x178] sm:$0x1]
        %v5313 = vshrl.u32 %v5264, 16
        %v5315 = vrot.slane %v5313, 4
        %v5316 = vshll.u32 %v5264, 16
        %v5318 = vrot.slane %v5316, 5
        %v5319 = vor.u32 %v5315, %v5318
        %v5320 = vrot.slane %v5319, 4
        %v5322 = vshll.u32 %v5265, 16
        %v5324 = vrot.slane %v5322, 5
        %v5325 = vsel %vm1634, %v5320, %v5324
        %v5326 = vshrl.u32 %v5265, 16
        %v5328 = vrot.slane %v5326, 4
        %v5329 = vor.u32 %v5328, %v5324
        %v5330 = vrot.slane %v5329, 4
        %v5332 = vshll.u32 %v5266, 16
        %v5334 = vrot.slane %v5332, 5
        %v5335 = vsel %vm1634, %v5330, %v5334
        %v5337 = vshrl.u32 %v5267, 16
        %v5339 = vrot.slane %v5337, 4
        %v5340 = vshll.u32 %v5267, 16
        %v5342 = vrot.slane %v5340, 5
        %v5343 = vor.u32 %v5339, %v5342
        %v5344 = vrot.slane %v5343, 4
        %v5346 = vshll.u32 %v5268, 16
        %v5348 = vrot.slane %v5346, 5
        %v5349 = vsel %vm1634, %v5344, %v5348
        %v5350 = vshrl.u32 %v5268, 16
        %v5352 = vrot.slane %v5350, 4
        %v5353 = vor.u32 %v5352, %v5348
        %v5354 = vrot.slane %v5353, 4
        %v5356 = vshll.u32 %v5269, 16
        %v5358 = vrot.slane %v5356, 5
        %v5359 = vsel %vm1634, %v5354, %v5358
        %v5361 = vshrl.u32 %v5270, 16
        %v5363 = vrot.slane %v5361, 4
        %v5364 = vshll.u32 %v5270, 16
        %v5366 = vrot.slane %v5364, 5
        %v5367 = vor.u32 %v5363, %v5366
        %v5368 = vrot.slane %v5367, 4
        %v5370 = vshll.u32 %v5271, 16
        %v5372 = vrot.slane %v5370, 5
        %v5373 = vsel %vm1634, %v5368, %v5372
        %v5374 = vshrl.u32 %v5271, 16
        %v5376 = vrot.slane %v5374, 4
        %v5377 = vor.u32 %v5376, %v5372
        %v5378 = vrot.slane %v5377, 4
        %v5380 = vshll.u32 %v5272, 16
        %v5382 = vrot.slane %v5380, 5
        %v5383 = vsel %vm1634, %v5378, %v5382
        %v5385 = vshrl.u32 %v5273, 16
        %v5387 = vrot.slane %v5385, 4
        %v5388 = vshll.u32 %v5273, 16
        %v5390 = vrot.slane %v5388, 5
        %v5391 = vor.u32 %v5387, %v5390
        %v5392 = vrot.slane %v5391, 4
        %v5394 = vshll.u32 %v5274, 16
        %v5396 = vrot.slane %v5394, 5
        %v5397 = vsel %vm1634, %v5392, %v5396
        %v5398 = vshrl.u32 %v5274, 16
        %v5400 = vrot.slane %v5398, 4
        %v5401 = vor.u32 %v5400, %v5396
        %v5402 = vrot.slane %v5401, 4
        %v5404 = vshll.u32 %v5275, 16
        %v5406 = vrot.slane %v5404, 5
        %v5407 = vsel %vm1634, %v5402, %v5406
        %v5409 = vshrl.u32 %v5276, 16
        %v5411 = vrot.slane %v5409, 4
        %v5412 = vshll.u32 %v5276, 16
        %v5414 = vrot.slane %v5412, 5
        %v5415 = vor.u32 %v5411, %v5414
        %v5416 = vrot.slane %v5415, 4
        %v5418 = vshll.u32 %v5277, 16
        %v5420 = vrot.slane %v5418, 5
        %v5421 = vsel %vm1634, %v5416, %v5420
        %v5422 = vshrl.u32 %v5277, 16
        %v5424 = vrot.slane %v5422, 4
        %v5425 = vor.u32 %v5424, %v5420
        %v5426 = vrot.slane %v5425, 4
        %v5428 = vshll.u32 %v5278, 16
        %v5430 = vrot.slane %v5428, 5
        %v5431 = vsel %vm1634, %v5426, %v5430
        %v5433 = vshrl.u32 %v5279, 16
        %v5435 = vrot.slane %v5433, 4
        %v5436 = vshll.u32 %v5279, 16
        %v5438 = vrot.slane %v5436, 5
        %v5439 = vor.u32 %v5435, %v5438
        %v5440 = vrot.slane %v5439, 4
        %v5442 = vshll.u32 %v5280, 16
        %v5444 = vrot.slane %v5442, 5
        %v5445 = vsel %vm1634, %v5440, %v5444
        %v5446 = vshrl.u32 %v5280, 16
        %v5448 = vrot.slane %v5446, 4
        %v5449 = vor.u32 %v5448, %v5444
        %v5450 = vrot.slane %v5449, 4
        %v5452 = vshll.u32 %v5281, 16
        %v5454 = vrot.slane %v5452, 5
        %v5455 = vsel %vm1634, %v5450, %v5454
        %v5457 = vshrl.u32 %v5282, 16
        %v5459 = vrot.slane %v5457, 4
        %v5460 = vshll.u32 %v5282, 16
        %v5462 = vrot.slane %v5460, 5
        %v5463 = vor.u32 %v5459, %v5462
        %v5464 = vrot.slane %v5463, 4
        %v5466 = vshll.u32 %v5283, 16
        %v5468 = vrot.slane %v5466, 5
        %v5469 = vsel %vm1634, %v5464, %v5468
        %v5470 = vshrl.u32 %v5283, 16
        %v5472 = vrot.slane %v5470, 4
        %v5473 = vor.u32 %v5472, %v5468
        %v5474 = vrot.slane %v5473, 4
        %v5476 = vshll.u32 %v5284, 16
        %v5478 = vrot.slane %v5476, 5
        %v5479 = vsel %vm1634, %v5474, %v5478
        %v5481 = vshrl.u32 %v5285, 16
        %v5483 = vrot.slane %v5481, 4
        %v5484 = vshll.u32 %v5285, 16
        %v5486 = vrot.slane %v5484, 5
        %v5487 = vor.u32 %v5483, %v5486
        %v5488 = vrot.slane %v5487, 4
        %v5490 = vshll.u32 %v5286, 16
        %v5492 = vrot.slane %v5490, 5
        %v5493 = vsel %vm1634, %v5488, %v5492
        %v5494 = vshrl.u32 %v5286, 16
        %v5496 = vrot.slane %v5494, 4
        %v5497 = vor.u32 %v5496, %v5492
        %v5498 = vrot.slane %v5497, 4
        %v5500 = vshll.u32 %v5287, 16
        %v5502 = vrot.slane %v5500, 5
        %v5503 = vsel %vm1634, %v5498, %v5502
        %v5505 = vshrl.u32 %v5288, 16
        %v5507 = vrot.slane %v5505, 4
        %v5508 = vshll.u32 %v5288, 16
        %v5510 = vrot.slane %v5508, 5
        %v5511 = vor.u32 %v5507, %v5510
        %v5512 = vrot.slane %v5511, 4
        %v5514 = vshll.u32 %v5289, 16
        %v5516 = vrot.slane %v5514, 5
        %v5517 = vsel %vm1634, %v5512, %v5516
        %v5518 = vshrl.u32 %v5289, 16
        %v5520 = vrot.slane %v5518, 4
        %v5521 = vor.u32 %v5520, %v5516
        %v5522 = vrot.slane %v5521, 4
        %v5524 = vshll.u32 %v5290, 16
        %v5526 = vrot.slane %v5524, 5
        %v5527 = vsel %vm1634, %v5522, %v5526
        %v5529 = vshrl.u32 %v5291, 16
        %v5531 = vrot.slane %v5529, 4
        %v5532 = vshll.u32 %v5291, 16
        %v5534 = vrot.slane %v5532, 5
        %v5535 = vor.u32 %v5531, %v5534
        %v5536 = vrot.slane %v5535, 4
        %v5538 = vshll.u32 %v5292, 16
        %v5540 = vrot.slane %v5538, 5
        %v5541 = vsel %vm1634, %v5536, %v5540
        %v5542 = vshrl.u32 %v5292, 16
        %v5544 = vrot.slane %v5542, 4
        %v5545 = vor.u32 %v5544, %v5540
        %v5546 = vrot.slane %v5545, 4
        %v5548 = vshll.u32 %v5293, 16
        %v5550 = vrot.slane %v5548, 5
        %v5551 = vsel %vm1634, %v5546, %v5550
        %v5553 = vshrl.u32 %v5294, 16
        %v5555 = vrot.slane %v5553, 4
        %v5556 = vshll.u32 %v5294, 16
        %v5558 = vrot.slane %v5556, 5
        %v5559 = vor.u32 %v5555, %v5558
        %v5560 = vrot.slane %v5559, 4
        %v5562 = vshll.u32 %v5295, 16
        %v5564 = vrot.slane %v5562, 5
        %v5565 = vsel %vm1634, %v5560, %v5564
        %v5566 = vshrl.u32 %v5295, 16
        %v5568 = vrot.slane %v5566, 4
        %v5569 = vor.u32 %v5568, %v5564
        %v5570 = vrot.slane %v5569, 4
        %v5572 = vshll.u32 %v5296, 16
        %v5574 = vrot.slane %v5572, 5
        %v5575 = vsel %vm1634, %v5570, %v5574
        %v5577 = vshrl.u32 %v5297, 16
        %v5579 = vrot.slane %v5577, 4
        %v5580 = vshll.u32 %v5297, 16
        %v5582 = vrot.slane %v5580, 5
        %v5583 = vor.u32 %v5579, %v5582
        %v5584 = vrot.slane %v5583, 4
        %v5586 = vshll.u32 %v5298, 16
        %v5588 = vrot.slane %v5586, 5
        %v5589 = vsel %vm1634, %v5584, %v5588
        %v5590 = vshrl.u32 %v5298, 16
        %v5592 = vrot.slane %v5590, 4
        %v5593 = vor.u32 %v5592, %v5588
        %v5594 = vrot.slane %v5593, 4
        %v5596 = vshll.u32 %v5299, 16
        %v5598 = vrot.slane %v5596, 5
        %v5599 = vsel %vm1634, %v5594, %v5598
        %v5601 = vshrl.u32 %v5300, 16
        %v5603 = vrot.slane %v5601, 4
        %v5604 = vshll.u32 %v5300, 16
        %v5606 = vrot.slane %v5604, 5
        %v5607 = vor.u32 %v5603, %v5606
        %v5608 = vrot.slane %v5607, 4
        %v5610 = vshll.u32 %v5301, 16
        %v5612 = vrot.slane %v5610, 5
        %v5613 = vsel %vm1634, %v5608, %v5612
        %v5614 = vshrl.u32 %v5301, 16
        %v5616 = vrot.slane %v5614, 4
        %v5617 = vor.u32 %v5616, %v5612
        %v5618 = vrot.slane %v5617, 4
        %v5620 = vshll.u32 %v5302, 16
        %v5622 = vrot.slane %v5620, 5
        %v5623 = vsel %vm1634, %v5618, %v5622
        %v5625 = vshrl.u32 %v5303, 16
        %v5627 = vrot.slane %v5625, 4
        %v5628 = vshll.u32 %v5303, 16
        %v5630 = vrot.slane %v5628, 5
        %v5631 = vor.u32 %v5627, %v5630
        %v5632 = vrot.slane %v5631, 4
        %v5634 = vshll.u32 %v5304, 16
        %v5636 = vrot.slane %v5634, 5
        %v5637 = vsel %vm1634, %v5632, %v5636
        %v5638 = vshrl.u32 %v5304, 16
        %v5640 = vrot.slane %v5638, 4
        %v5641 = vor.u32 %v5640, %v5636
        %v5642 = vrot.slane %v5641, 4
        %v5644 = vshll.u32 %v5305, 16
        %v5646 = vrot.slane %v5644, 5
        %v5647 = vsel %vm1634, %v5642, %v5646
        %v5649 = vshrl.u32 %v5306, 16
        %v5651 = vrot.slane %v5649, 4
        %v5652 = vshll.u32 %v5306, 16
        %v5654 = vrot.slane %v5652, 5
        %v5655 = vor.u32 %v5651, %v5654
        %v5656 = vrot.slane %v5655, 4
        %v5658 = vshll.u32 %v5307, 16
        %v5660 = vrot.slane %v5658, 5
        %v5661 = vsel %vm1634, %v5656, %v5660
        %v5662 = vshrl.u32 %v5307, 16
        %v5664 = vrot.slane %v5662, 4
        %v5665 = vor.u32 %v5664, %v5660
        %v5666 = vrot.slane %v5665, 4
        %v5668 = vshll.u32 %v5308, 16
        %v5670 = vrot.slane %v5668, 5
        %v5671 = vsel %vm1634, %v5666, %v5670
        %v5673 = vshrl.u32 %v5309, 16
        %v5675 = vrot.slane %v5673, 4
        %v5676 = vshll.u32 %v5309, 16
        %v5678 = vrot.slane %v5676, 5
        %v5679 = vor.u32 %v5675, %v5678
        %v5680 = vrot.slane %v5679, 4
        %v5682 = vshll.u32 %v5310, 16
        %v5684 = vrot.slane %v5682, 5
        %v5685 = vsel %vm1634, %v5680, %v5684
        %v5686 = vshrl.u32 %v5310, 16
        %v5688 = vrot.slane %v5686, 4
        %v5689 = vor.u32 %v5688, %v5684
        %v5690 = vrot.slane %v5689, 4
        %v5692 = vshll.u32 %v5311, 16
        %v5694 = vrot.slane %v5692, 5
        %v5695 = vsel %vm1634, %v5690, %v5694
        %v5696 = vld [vmem:[#allocation3] sm:$0xff]
        %v5697 = vld [vmem:[#allocation3 + $0x8] sm:$0xff]
        %v5698 = vld [vmem:[#allocation3 + $0x10] sm:$0xff]
        %v5699 = vld [vmem:[#allocation3 + $0x18] sm:$0xff]
        %v5700 = vld [vmem:[#allocation3 + $0x20] sm:$0xff]
        %v5701 = vld [vmem:[#allocation3 + $0x28] sm:$0xff]
        %v5702 = vld [vmem:[#allocation3 + $0x30] sm:$0xff]
        %v5703 = vld [vmem:[#allocation3 + $0x38] sm:$0xff]
        %v5704 = vld [vmem:[#allocation3 + $0x40] sm:$0xff]
        %v5705 = vld [vmem:[#allocation3 + $0x48] sm:$0xff]
        %v5706 = vld [vmem:[#allocation3 + $0x50] sm:$0xff]
        %v5707 = vld [vmem:[#allocation3 + $0x58] sm:$0xff]
        %v5708 = vld [vmem:[#allocation3 + $0x60] sm:$0xff]
        %v5709 = vld [vmem:[#allocation3 + $0x68] sm:$0xff]
        %v5710 = vld [vmem:[#allocation3 + $0x70] sm:$0xff]
        %v5711 = vld [vmem:[#allocation3 + $0x78] sm:$0xff]
        %v5712 = vld [vmem:[#allocation3 + $0x80] sm:$0xff]
        %v5713 = vld [vmem:[#allocation3 + $0x88] sm:$0xff]
        %v5714 = vld [vmem:[#allocation3 + $0x90] sm:$0xff]
        %v5715 = vld [vmem:[#allocation3 + $0x98] sm:$0xff]
        %v5716 = vld [vmem:[#allocation3 + $0xa0] sm:$0xff]
        %v5717 = vld [vmem:[#allocation3 + $0xa8] sm:$0xff]
        %v5718 = vld [vmem:[#allocation3 + $0xb0] sm:$0xff]
        %v5719 = vld [vmem:[#allocation3 + $0xb8] sm:$0xff]
        %v5720 = vld [vmem:[#allocation3 + $0xc0] sm:$0xff]
        %v5721 = vld [vmem:[#allocation3 + $0xc8] sm:$0xff]
        %v5722 = vld [vmem:[#allocation3 + $0xd0] sm:$0xff]
        %v5723 = vld [vmem:[#allocation3 + $0xd8] sm:$0xff]
        %v5724 = vld [vmem:[#allocation3 + $0xe0] sm:$0xff]
        %v5725 = vld [vmem:[#allocation3 + $0xe8] sm:$0xff]
        %v5726 = vld [vmem:[#allocation3 + $0xf0] sm:$0xff]
        %v5727 = vld [vmem:[#allocation3 + $0xf8] sm:$0xff]
        %s5728 = scalar_lea.vmem [#allocation7], 512
        %v5729 = vld [vmem:[%s5728] sm:$0xf]
        %v5730 = vld [vmem:[%s5728 + $0x4] sm:$0xf]
        %v5731 = vld [vmem:[%s5728 + $0x8] sm:$0xf]
        %v5732 = vld [vmem:[%s5728 + $0xc] sm:$0xf]
        %v5733 = vld [vmem:[%s5728 + $0x10] sm:$0xf]
        %v5734 = vld [vmem:[%s5728 + $0x14] sm:$0xf]
        %v5735 = vld [vmem:[%s5728 + $0x18] sm:$0xf]
        %v5736 = vld [vmem:[%s5728 + $0x1c] sm:$0xf]
        %v5737 = vld [vmem:[%s5728 + $0x20] sm:$0xf]
        %v5738 = vld [vmem:[%s5728 + $0x24] sm:$0xf]
        %v5739 = vld [vmem:[%s5728 + $0x28] sm:$0xf]
        %v5740 = vld [vmem:[%s5728 + $0x2c] sm:$0xf]
        %v5741 = vld [vmem:[%s5728 + $0x30] sm:$0xf]
        %v5742 = vld [vmem:[%s5728 + $0x34] sm:$0xf]
        %v5743 = vld [vmem:[%s5728 + $0x38] sm:$0xf]
        %v5744 = vld [vmem:[%s5728 + $0x3c] sm:$0xf]
        %v5745 = vunpack.c.l.b16 %v5325
        %v5746 = vunpack.c.l.b16 %v5335
        %v5747 = vunpack.c.l.b16 %v5349
        %v5748 = vunpack.c.l.b16 %v5359
        %v5749 = vunpack.c.l.b16 %v5373
        %v5750 = vunpack.c.l.b16 %v5383
        %v5751 = vunpack.c.l.b16 %v5397
        %v5752 = vunpack.c.l.b16 %v5407
        %v5753 = vunpack.c.l.b16 %v5421
        %v5754 = vunpack.c.l.b16 %v5431
        %v5755 = vunpack.c.l.b16 %v5445
        %v5756 = vunpack.c.l.b16 %v5455
        %v5757 = vunpack.c.l.b16 %v5469
        %v5758 = vunpack.c.l.b16 %v5479
        %v5759 = vunpack.c.l.b16 %v5493
        %v5760 = vunpack.c.l.b16 %v5503
        %v5761 = vunpack.c.l.b16 %v5517
        %v5762 = vunpack.c.l.b16 %v5527
        %v5763 = vunpack.c.l.b16 %v5541
        %v5764 = vunpack.c.l.b16 %v5551
        %v5765 = vunpack.c.l.b16 %v5565
        %v5766 = vunpack.c.l.b16 %v5575
        %v5767 = vunpack.c.l.b16 %v5589
        %v5768 = vunpack.c.l.b16 %v5599
        %v5769 = vunpack.c.l.b16 %v5613
        %v5770 = vunpack.c.l.b16 %v5623
        %v5771 = vunpack.c.l.b16 %v5637
        %v5772 = vunpack.c.l.b16 %v5647
        %v5773 = vunpack.c.l.b16 %v5661
        %v5774 = vunpack.c.l.b16 %v5671
        %v5775 = vunpack.c.l.b16 %v5685
        %v5776 = vunpack.c.l.b16 %v5695
        %v5777 = vpack.c.b16 %v5746, %v5745
        %v5778 = vpack.c.b16 %v5748, %v5747
        %v5779 = vpack.c.b16 %v5750, %v5749
        %v5780 = vpack.c.b16 %v5752, %v5751
        %v5781 = vpack.c.b16 %v5754, %v5753
        %v5782 = vpack.c.b16 %v5756, %v5755
        %v5783 = vpack.c.b16 %v5758, %v5757
        %v5784 = vpack.c.b16 %v5760, %v5759
        %v5785 = vpack.c.b16 %v5762, %v5761
        %v5786 = vpack.c.b16 %v5764, %v5763
        %v5787 = vpack.c.b16 %v5766, %v5765
        %v5788 = vpack.c.b16 %v5768, %v5767
        %v5789 = vpack.c.b16 %v5770, %v5769
        %v5790 = vpack.c.b16 %v5772, %v5771
        %v5791 = vpack.c.b16 %v5774, %v5773
        %v5792 = vpack.c.b16 %v5776, %v5775
        %v5825 = vunpack.c.l.b16 %v5729
        %v5826 = vunpack.c.l.b16 %v5730
        %v5827 = vunpack.c.l.b16 %v5731
        %v5828 = vunpack.c.l.b16 %v5732
        %v5829 = vunpack.c.l.b16 %v5733
        %v5830 = vunpack.c.l.b16 %v5734
        %v5831 = vunpack.c.l.b16 %v5735
        %v5832 = vunpack.c.l.b16 %v5736
        %v5833 = vunpack.c.l.b16 %v5737
        %v5834 = vunpack.c.l.b16 %v5738
        %v5835 = vunpack.c.l.b16 %v5739
        %v5836 = vunpack.c.l.b16 %v5740
        %v5837 = vunpack.c.l.b16 %v5741
        %v5838 = vunpack.c.l.b16 %v5742
        %v5839 = vunpack.c.l.b16 %v5743
        %v5840 = vunpack.c.l.b16 %v5744
        %v5841 = vpack.c.b16 %v5826, %v5825
        %v5842 = vpack.c.b16 %v5828, %v5827
        %v5843 = vpack.c.b16 %v5830, %v5829
        %v5844 = vpack.c.b16 %v5832, %v5831
        %v5845 = vpack.c.b16 %v5834, %v5833
        %v5846 = vpack.c.b16 %v5836, %v5835
        %v5847 = vpack.c.b16 %v5838, %v5837
        %v5848 = vpack.c.b16 %v5840, %v5839
        %5857 = vmatpush.bf16.msra.mxu0 %v5848
        %5858 = vmatpush.bf16.msra.mxu0 %v5847
        %5859 = vmatpush.bf16.msra.mxu0 %v5846
        %5860 = vmatpush.bf16.msra.mxu0 %v5845
        %5861 = vmatpush.bf16.msra.mxu0 %v5844
        %5862 = vmatpush.bf16.msra.mxu0 %v5843
        %5863 = vmatpush.bf16.msra.mxu0 %v5842
        %5864 = vmatpush.bf16.msra.mxu0 %v5841
        %5865 = vmatmul.bf16.gmra.mxu0 %v5777
        %v5866 = vpop.f32.mrf.mxu0
        %v5867 = vadd.f32 0.0, %v5866
        %v5868 = vpop.f32.mrf.mxu0
        %v5869 = vadd.f32 0.0, %v5868
        %5870 = vmatmul.bf16.gmra.mxu0 %v5778
        %v5871 = vpop.f32.mrf.mxu0
        %v5872 = vadd.f32 0.0, %v5871
        %v5873 = vpop.f32.mrf.mxu0
        %v5874 = vadd.f32 0.0, %v5873
        %5875 = vmatmul.bf16.gmra.mxu0 %v5779
        %v5876 = vpop.f32.mrf.mxu0
        %v5877 = vadd.f32 0.0, %v5876
        %v5878 = vpop.f32.mrf.mxu0
        %v5879 = vadd.f32 0.0, %v5878
        %5880 = vmatmul.bf16.gmra.mxu0 %v5780
        %v5881 = vpop.f32.mrf.mxu0
        %v5882 = vadd.f32 0.0, %v5881
        %v5883 = vpop.f32.mrf.mxu0
        %v5884 = vadd.f32 0.0, %v5883
        %5885 = vmatmul.bf16.gmra.mxu0 %v5781
        %v5886 = vpop.f32.mrf.mxu0
        %v5887 = vadd.f32 0.0, %v5886
        %v5888 = vpop.f32.mrf.mxu0
        %v5889 = vadd.f32 0.0, %v5888
        %5890 = vmatmul.bf16.gmra.mxu0 %v5782
        %v5891 = vpop.f32.mrf.mxu0
        %v5892 = vadd.f32 0.0, %v5891
        %v5893 = vpop.f32.mrf.mxu0
        %v5894 = vadd.f32 0.0, %v5893
        %5895 = vmatmul.bf16.gmra.mxu0 %v5783
        %v5896 = vpop.f32.mrf.mxu0
        %v5897 = vadd.f32 0.0, %v5896
        %v5898 = vpop.f32.mrf.mxu0
        %v5899 = vadd.f32 0.0, %v5898
        %5900 = vmatmul.bf16.gmra.mxu0 %v5784
        %v5901 = vpop.f32.mrf.mxu0
        %v5902 = vadd.f32 0.0, %v5901
        %v5903 = vpop.f32.mrf.mxu0
        %v5904 = vadd.f32 0.0, %v5903
        %5905 = vmatmul.bf16.gmra.mxu0 %v5785
        %v5906 = vpop.f32.mrf.mxu0
        %v5907 = vadd.f32 0.0, %v5906
        %v5908 = vpop.f32.mrf.mxu0
        %v5909 = vadd.f32 0.0, %v5908
        %5910 = vmatmul.bf16.gmra.mxu0 %v5786
        %v5911 = vpop.f32.mrf.mxu0
        %v5912 = vadd.f32 0.0, %v5911
        %v5913 = vpop.f32.mrf.mxu0
        %v5914 = vadd.f32 0.0, %v5913
        %5915 = vmatmul.bf16.gmra.mxu0 %v5787
        %v5916 = vpop.f32.mrf.mxu0
        %v5917 = vadd.f32 0.0, %v5916
        %v5918 = vpop.f32.mrf.mxu0
        %v5919 = vadd.f32 0.0, %v5918
        %5920 = vmatmul.bf16.gmra.mxu0 %v5788
        %v5921 = vpop.f32.mrf.mxu0
        %v5922 = vadd.f32 0.0, %v5921
        %v5923 = vpop.f32.mrf.mxu0
        %v5924 = vadd.f32 0.0, %v5923
        %5925 = vmatmul.bf16.gmra.mxu0 %v5789
        %v5926 = vpop.f32.mrf.mxu0
        %v5927 = vadd.f32 0.0, %v5926
        %v5928 = vpop.f32.mrf.mxu0
        %v5929 = vadd.f32 0.0, %v5928
        %5930 = vmatmul.bf16.gmra.mxu0 %v5790
        %v5931 = vpop.f32.mrf.mxu0
        %v5932 = vadd.f32 0.0, %v5931
        %v5933 = vpop.f32.mrf.mxu0
        %v5934 = vadd.f32 0.0, %v5933
        %5935 = vmatmul.bf16.gmra.mxu0 %v5791
        %v5936 = vpop.f32.mrf.mxu0
        %v5937 = vadd.f32 0.0, %v5936
        %v5938 = vpop.f32.mrf.mxu0
        %v5939 = vadd.f32 0.0, %v5938
        %5940 = vmatmul.bf16.gmra.mxu0 %v5792
        %v5941 = vpop.f32.mrf.mxu0
        %v5942 = vadd.f32 0.0, %v5941
        %v5943 = vpop.f32.mrf.mxu0
        %v5944 = vadd.f32 0.0, %v5943
        %5945 = vdwg.mxu0
        %v5946 = vadd.f32 %v5696, %v5867
        %v5947 = vadd.f32 %v5697, %v5869
        %v5948 = vadd.f32 %v5698, %v5872
        %v5949 = vadd.f32 %v5699, %v5874
        %v5950 = vadd.f32 %v5700, %v5877
        %v5951 = vadd.f32 %v5701, %v5879
        %v5952 = vadd.f32 %v5702, %v5882
        %v5953 = vadd.f32 %v5703, %v5884
        %v5954 = vadd.f32 %v5704, %v5887
        %v5955 = vadd.f32 %v5705, %v5889
        %v5956 = vadd.f32 %v5706, %v5892
        %v5957 = vadd.f32 %v5707, %v5894
        %v5958 = vadd.f32 %v5708, %v5897
        %v5959 = vadd.f32 %v5709, %v5899
        %v5960 = vadd.f32 %v5710, %v5902
        %v5961 = vadd.f32 %v5711, %v5904
        %v5962 = vadd.f32 %v5712, %v5907
        %v5963 = vadd.f32 %v5713, %v5909
        %v5964 = vadd.f32 %v5714, %v5912
        %v5965 = vadd.f32 %v5715, %v5914
        %v5966 = vadd.f32 %v5716, %v5917
        %v5967 = vadd.f32 %v5717, %v5919
        %v5968 = vadd.f32 %v5718, %v5922
        %v5969 = vadd.f32 %v5719, %v5924
        %v5970 = vadd.f32 %v5720, %v5927
        %v5971 = vadd.f32 %v5721, %v5929
        %v5972 = vadd.f32 %v5722, %v5932
        %v5973 = vadd.f32 %v5723, %v5934
        %v5974 = vadd.f32 %v5724, %v5937
        %v5975 = vadd.f32 %v5725, %v5939
        %v5976 = vadd.f32 %v5726, %v5942
        %v5977 = vadd.f32 %v5727, %v5944
        %5978 = vst [vmem:[#allocation3] sm:$0xff] %v5946
        %5979 = vst [vmem:[#allocation3 + $0x8] sm:$0xff] %v5947
        %5980 = vst [vmem:[#allocation3 + $0x10] sm:$0xff] %v5948
        %5981 = vst [vmem:[#allocation3 + $0x18] sm:$0xff] %v5949
        %5982 = vst [vmem:[#allocation3 + $0x20] sm:$0xff] %v5950
        %5983 = vst [vmem:[#allocation3 + $0x28] sm:$0xff] %v5951
        %5984 = vst [vmem:[#allocation3 + $0x30] sm:$0xff] %v5952
        %5985 = vst [vmem:[#allocation3 + $0x38] sm:$0xff] %v5953
        %5986 = vst [vmem:[#allocation3 + $0x40] sm:$0xff] %v5954
        %5987 = vst [vmem:[#allocation3 + $0x48] sm:$0xff] %v5955
        %5988 = vst [vmem:[#allocation3 + $0x50] sm:$0xff] %v5956
        %5989 = vst [vmem:[#allocation3 + $0x58] sm:$0xff] %v5957
        %5990 = vst [vmem:[#allocation3 + $0x60] sm:$0xff] %v5958
        %5991 = vst [vmem:[#allocation3 + $0x68] sm:$0xff] %v5959
        %5992 = vst [vmem:[#allocation3 + $0x70] sm:$0xff] %v5960
        %5993 = vst [vmem:[#allocation3 + $0x78] sm:$0xff] %v5961
        %5994 = vst [vmem:[#allocation3 + $0x80] sm:$0xff] %v5962
        %5995 = vst [vmem:[#allocation3 + $0x88] sm:$0xff] %v5963
        %5996 = vst [vmem:[#allocation3 + $0x90] sm:$0xff] %v5964
        %5997 = vst [vmem:[#allocation3 + $0x98] sm:$0xff] %v5965
        %5998 = vst [vmem:[#allocation3 + $0xa0] sm:$0xff] %v5966
        %5999 = vst [vmem:[#allocation3 + $0xa8] sm:$0xff] %v5967
        %6000 = vst [vmem:[#allocation3 + $0xb0] sm:$0xff] %v5968
        %6001 = vst [vmem:[#allocation3 + $0xb8] sm:$0xff] %v5969
        %6002 = vst [vmem:[#allocation3 + $0xc0] sm:$0xff] %v5970
        %6003 = vst [vmem:[#allocation3 + $0xc8] sm:$0xff] %v5971
        %6004 = vst [vmem:[#allocation3 + $0xd0] sm:$0xff] %v5972
        %6005 = vst [vmem:[#allocation3 + $0xd8] sm:$0xff] %v5973
        %6006 = vst [vmem:[#allocation3 + $0xe0] sm:$0xff] %v5974
        %6007 = vst [vmem:[#allocation3 + $0xe8] sm:$0xff] %v5975
        %6008 = vst [vmem:[#allocation3 + $0xf0] sm:$0xff] %v5976
        %6009 = vst [vmem:[#allocation3 + $0xf8] sm:$0xff] %v5977
        %v6010 = vld [vmem:[#allocation3] sm:$0xff]
        %v6011 = vld [vmem:[#allocation3 + $0x8] sm:$0xff]
        %v6012 = vld [vmem:[#allocation3 + $0x10] sm:$0xff]
        %v6013 = vld [vmem:[#allocation3 + $0x18] sm:$0xff]
        %v6014 = vld [vmem:[#allocation3 + $0x20] sm:$0xff]
        %v6015 = vld [vmem:[#allocation3 + $0x28] sm:$0xff]
        %v6016 = vld [vmem:[#allocation3 + $0x30] sm:$0xff]
        %v6017 = vld [vmem:[#allocation3 + $0x38] sm:$0xff]
        %v6018 = vld [vmem:[#allocation3 + $0x40] sm:$0xff]
        %v6019 = vld [vmem:[#allocation3 + $0x48] sm:$0xff]
        %v6020 = vld [vmem:[#allocation3 + $0x50] sm:$0xff]
        %v6021 = vld [vmem:[#allocation3 + $0x58] sm:$0xff]
        %v6022 = vld [vmem:[#allocation3 + $0x60] sm:$0xff]
        %v6023 = vld [vmem:[#allocation3 + $0x68] sm:$0xff]
        %v6024 = vld [vmem:[#allocation3 + $0x70] sm:$0xff]
        %v6025 = vld [vmem:[#allocation3 + $0x78] sm:$0xff]
        %v6026 = vld [vmem:[#allocation3 + $0x80] sm:$0xff]
        %v6027 = vld [vmem:[#allocation3 + $0x88] sm:$0xff]
        %v6028 = vld [vmem:[#allocation3 + $0x90] sm:$0xff]
        %v6029 = vld [vmem:[#allocation3 + $0x98] sm:$0xff]
        %v6030 = vld [vmem:[#allocation3 + $0xa0] sm:$0xff]
        %v6031 = vld [vmem:[#allocation3 + $0xa8] sm:$0xff]
        %v6032 = vld [vmem:[#allocation3 + $0xb0] sm:$0xff]
        %v6033 = vld [vmem:[#allocation3 + $0xb8] sm:$0xff]
        %v6034 = vld [vmem:[#allocation3 + $0xc0] sm:$0xff]
        %v6035 = vld [vmem:[#allocation3 + $0xc8] sm:$0xff]
        %v6036 = vld [vmem:[#allocation3 + $0xd0] sm:$0xff]
        %v6037 = vld [vmem:[#allocation3 + $0xd8] sm:$0xff]
        %v6038 = vld [vmem:[#allocation3 + $0xe0] sm:$0xff]
        %v6039 = vld [vmem:[#allocation3 + $0xe8] sm:$0xff]
        %v6040 = vld [vmem:[#allocation3 + $0xf0] sm:$0xff]
        %v6041 = vld [vmem:[#allocation3 + $0xf8] sm:$0xff]
        %v6042 = vld [vmem:[%s2] sm:$0x1]
        %v6044 = vperm.slane %v6042, 0
        %v6046 = vadd.f32 %v6010, %v6044
        %v6047 = vadd.f32 %v6011, %v6044
        %v6048 = vadd.f32 %v6012, %v6044
        %v6049 = vadd.f32 %v6013, %v6044
        %v6050 = vadd.f32 %v6014, %v6044
        %v6051 = vadd.f32 %v6015, %v6044
        %v6052 = vadd.f32 %v6016, %v6044
        %v6053 = vadd.f32 %v6017, %v6044
        %v6054 = vadd.f32 %v6018, %v6044
        %v6055 = vadd.f32 %v6019, %v6044
        %v6056 = vadd.f32 %v6020, %v6044
        %v6057 = vadd.f32 %v6021, %v6044
        %v6058 = vadd.f32 %v6022, %v6044
        %v6059 = vadd.f32 %v6023, %v6044
        %v6060 = vadd.f32 %v6024, %v6044
        %v6061 = vadd.f32 %v6025, %v6044
        %v6062 = vadd.f32 %v6026, %v6044
        %v6063 = vadd.f32 %v6027, %v6044
        %v6064 = vadd.f32 %v6028, %v6044
        %v6065 = vadd.f32 %v6029, %v6044
        %v6066 = vadd.f32 %v6030, %v6044
        %v6067 = vadd.f32 %v6031, %v6044
        %v6068 = vadd.f32 %v6032, %v6044
        %v6069 = vadd.f32 %v6033, %v6044
        %v6070 = vadd.f32 %v6034, %v6044
        %v6071 = vadd.f32 %v6035, %v6044
        %v6072 = vadd.f32 %v6036, %v6044
        %v6073 = vadd.f32 %v6037, %v6044
        %v6074 = vadd.f32 %v6038, %v6044
        %v6075 = vadd.f32 %v6039, %v6044
        %v6076 = vadd.f32 %v6040, %v6044
        %v6077 = vadd.f32 %v6041, %v6044
        %v6078 = vmax.f32 %v6046, 0.0
        %v6079 = vmax.f32 %v6047, 0.0
        %v6080 = vmax.f32 %v6048, 0.0
        %v6081 = vmax.f32 %v6049, 0.0
        %v6082 = vmax.f32 %v6050, 0.0
        %v6083 = vmax.f32 %v6051, 0.0
        %v6084 = vmax.f32 %v6052, 0.0
        %v6085 = vmax.f32 %v6053, 0.0
        %v6086 = vmax.f32 %v6054, 0.0
        %v6087 = vmax.f32 %v6055, 0.0
        %v6088 = vmax.f32 %v6056, 0.0
        %v6089 = vmax.f32 %v6057, 0.0
        %v6090 = vmax.f32 %v6058, 0.0
        %v6091 = vmax.f32 %v6059, 0.0
        %v6092 = vmax.f32 %v6060, 0.0
        %v6093 = vmax.f32 %v6061, 0.0
        %v6094 = vmax.f32 %v6062, 0.0
        %v6095 = vmax.f32 %v6063, 0.0
        %v6096 = vmax.f32 %v6064, 0.0
        %v6097 = vmax.f32 %v6065, 0.0
        %v6098 = vmax.f32 %v6066, 0.0
        %v6099 = vmax.f32 %v6067, 0.0
        %v6100 = vmax.f32 %v6068, 0.0
        %v6101 = vmax.f32 %v6069, 0.0
        %v6102 = vmax.f32 %v6070, 0.0
        %v6103 = vmax.f32 %v6071, 0.0
        %v6104 = vmax.f32 %v6072, 0.0
        %v6105 = vmax.f32 %v6073, 0.0
        %v6106 = vmax.f32 %v6074, 0.0
        %v6107 = vmax.f32 %v6075, 0.0
        %v6108 = vmax.f32 %v6076, 0.0
        %v6109 = vmax.f32 %v6077, 0.0
        %v6110 = vpack.c.bf16 %v6078, %v6078
        %v6111 = vpack.c.bf16 %v6079, %v6079
        %v6112 = vpack.c.bf16 %v6080, %v6080
        %v6113 = vpack.c.bf16 %v6081, %v6081
        %v6114 = vpack.c.bf16 %v6082, %v6082
        %v6115 = vpack.c.bf16 %v6083, %v6083
        %v6116 = vpack.c.bf16 %v6084, %v6084
        %v6117 = vpack.c.bf16 %v6085, %v6085
        %v6118 = vpack.c.bf16 %v6086, %v6086
        %v6119 = vpack.c.bf16 %v6087, %v6087
        %v6120 = vpack.c.bf16 %v6088, %v6088
        %v6121 = vpack.c.bf16 %v6089, %v6089
        %v6122 = vpack.c.bf16 %v6090, %v6090
        %v6123 = vpack.c.bf16 %v6091, %v6091
        %v6124 = vpack.c.bf16 %v6092, %v6092
        %v6125 = vpack.c.bf16 %v6093, %v6093
        %v6126 = vpack.c.bf16 %v6094, %v6094
        %v6127 = vpack.c.bf16 %v6095, %v6095
        %v6128 = vpack.c.bf16 %v6096, %v6096
        %v6129 = vpack.c.bf16 %v6097, %v6097
        %v6130 = vpack.c.bf16 %v6098, %v6098
        %v6131 = vpack.c.bf16 %v6099, %v6099
        %v6132 = vpack.c.bf16 %v6100, %v6100
        %v6133 = vpack.c.bf16 %v6101, %v6101
        %v6134 = vpack.c.bf16 %v6102, %v6102
        %v6135 = vpack.c.bf16 %v6103, %v6103
        %v6136 = vpack.c.bf16 %v6104, %v6104
        %v6137 = vpack.c.bf16 %v6105, %v6105
        %v6138 = vpack.c.bf16 %v6106, %v6106
        %v6139 = vpack.c.bf16 %v6107, %v6107
        %v6140 = vpack.c.bf16 %v6108, %v6108
        %v6141 = vpack.c.bf16 %v6109, %v6109
        %6142 = vst [vmem:[%s292 + $0x8] sm:$0xf] %v6110
        %6143 = vst [vmem:[%s292 + $0xc] sm:$0xf] %v6111
        %6144 = vst [vmem:[%s292 + $0x20] sm:$0xf] %v6112
        %6145 = vst [vmem:[%s292 + $0x24] sm:$0xf] %v6113
        %6146 = vst [vmem:[%s292 + $0x38] sm:$0xf] %v6114
        %6147 = vst [vmem:[%s292 + $0x3c] sm:$0xf] %v6115
        %6148 = vst [vmem:[%s292 + $0x50] sm:$0xf] %v6116
        %6149 = vst [vmem:[%s292 + $0x54] sm:$0xf] %v6117
        %6150 = vst [vmem:[%s292 + $0x68] sm:$0xf] %v6118
        %6151 = vst [vmem:[%s292 + $0x6c] sm:$0xf] %v6119
        %6152 = vst [vmem:[%s292 + $0x80] sm:$0xf] %v6120
        %6153 = vst [vmem:[%s292 + $0x84] sm:$0xf] %v6121
        %6154 = vst [vmem:[%s292 + $0x98] sm:$0xf] %v6122
        %6155 = vst [vmem:[%s292 + $0x9c] sm:$0xf] %v6123
        %6156 = vst [vmem:[%s292 + $0xb0] sm:$0xf] %v6124
        %6157 = vst [vmem:[%s292 + $0xb4] sm:$0xf] %v6125
        %6158 = vst [vmem:[%s292 + $0xc8] sm:$0xf] %v6126
        %6159 = vst [vmem:[%s292 + $0xcc] sm:$0xf] %v6127
        %6160 = vst [vmem:[%s292 + $0xe0] sm:$0xf] %v6128
        %6161 = vst [vmem:[%s292 + $0xe4] sm:$0xf] %v6129
        %6162 = vst [vmem:[%s292 + $0xf8] sm:$0xf] %v6130
        %6163 = vst [vmem:[%s292 + $0xfc] sm:$0xf] %v6131
        %6164 = vst [vmem:[%s292 + $0x110] sm:$0xf] %v6132
        %6165 = vst [vmem:[%s292 + $0x114] sm:$0xf] %v6133
        %6166 = vst [vmem:[%s292 + $0x128] sm:$0xf] %v6134
        %6167 = vst [vmem:[%s292 + $0x12c] sm:$0xf] %v6135
        %6168 = vst [vmem:[%s292 + $0x140] sm:$0xf] %v6136
        %6169 = vst [vmem:[%s292 + $0x144] sm:$0xf] %v6137
        %6170 = vst [vmem:[%s292 + $0x158] sm:$0xf] %v6138
        %6171 = vst [vmem:[%s292 + $0x15c] sm:$0xf] %v6139
        %6172 = vst [vmem:[%s292 + $0x170] sm:$0xf] %v6140
        %6173 = vst [vmem:[%s292 + $0x174] sm:$0xf] %v6141
        %6174 = vst [vmem:[#allocation3] sm:$0xff] 0.0
        %6175 = vst [vmem:[#allocation3 + $0x8] sm:$0xff] 0.0
        %6176 = vst [vmem:[#allocation3 + $0x10] sm:$0xff] 0.0
        %6177 = vst [vmem:[#allocation3 + $0x18] sm:$0xff] 0.0
        %6178 = vst [vmem:[#allocation3 + $0x20] sm:$0xff] 0.0
        %6179 = vst [vmem:[#allocation3 + $0x28] sm:$0xff] 0.0
        %6180 = vst [vmem:[#allocation3 + $0x30] sm:$0xff] 0.0
        %6181 = vst [vmem:[#allocation3 + $0x38] sm:$0xff] 0.0
        %6182 = vst [vmem:[#allocation3 + $0x40] sm:$0xff] 0.0
        %6183 = vst [vmem:[#allocation3 + $0x48] sm:$0xff] 0.0
        %6184 = vst [vmem:[#allocation3 + $0x50] sm:$0xff] 0.0
        %6185 = vst [vmem:[#allocation3 + $0x58] sm:$0xff] 0.0
        %6186 = vst [vmem:[#allocation3 + $0x60] sm:$0xff] 0.0
        %6187 = vst [vmem:[#allocation3 + $0x68] sm:$0xff] 0.0
        %6188 = vst [vmem:[#allocation3 + $0x70] sm:$0xff] 0.0
        %6189 = vst [vmem:[#allocation3 + $0x78] sm:$0xff] 0.0
        %6190 = vst [vmem:[#allocation3 + $0x80] sm:$0xff] 0.0
        %6191 = vst [vmem:[#allocation3 + $0x88] sm:$0xff] 0.0
        %6192 = vst [vmem:[#allocation3 + $0x90] sm:$0xff] 0.0
        %6193 = vst [vmem:[#allocation3 + $0x98] sm:$0xff] 0.0
        %6194 = vst [vmem:[#allocation3 + $0xa0] sm:$0xff] 0.0
        %6195 = vst [vmem:[#allocation3 + $0xa8] sm:$0xff] 0.0
        %6196 = vst [vmem:[#allocation3 + $0xb0] sm:$0xff] 0.0
        %6197 = vst [vmem:[#allocation3 + $0xb8] sm:$0xff] 0.0
        %6198 = vst [vmem:[#allocation3 + $0xc0] sm:$0xff] 0.0
        %6199 = vst [vmem:[#allocation3 + $0xc8] sm:$0xff] 0.0
        %6200 = vst [vmem:[#allocation3 + $0xd0] sm:$0xff] 0.0
        %6201 = vst [vmem:[#allocation3 + $0xd8] sm:$0xff] 0.0
        %6202 = vst [vmem:[#allocation3 + $0xe0] sm:$0xff] 0.0
        %6203 = vst [vmem:[#allocation3 + $0xe8] sm:$0xff] 0.0
        %6204 = vst [vmem:[#allocation3 + $0xf0] sm:$0xff] 0.0
        %6205 = vst [vmem:[#allocation3 + $0xf8] sm:$0xff] 0.0
        %v6206 = vld [vmem:[#allocation2 + $0x4] sm:$0x8]
        %v6207 = vld [vmem:[#allocation2 + $0x8] sm:$0xf]
        %v6208 = vld [vmem:[#allocation2 + $0xc] sm:$0xf]
        %v6209 = vld [vmem:[#allocation2 + $0x1c] sm:$0x8]
        %v6210 = vld [vmem:[#allocation2 + $0x20] sm:$0xf]
        %v6211 = vld [vmem:[#allocation2 + $0x24] sm:$0xf]
        %v6212 = vld [vmem:[#allocation2 + $0x34] sm:$0x8]
        %v6213 = vld [vmem:[#allocation2 + $0x38] sm:$0xf]
        %v6214 = vld [vmem:[#allocation2 + $0x3c] sm:$0xf]
        %v6215 = vld [vmem:[#allocation2 + $0x4c] sm:$0x8]
        %v6216 = vld [vmem:[#allocation2 + $0x50] sm:$0xf]
        %v6217 = vld [vmem:[#allocation2 + $0x54] sm:$0xf]
        %v6218 = vld [vmem:[#allocation2 + $0x64] sm:$0x8]
        %v6219 = vld [vmem:[#allocation2 + $0x68] sm:$0xf]
        %v6220 = vld [vmem:[#allocation2 + $0x6c] sm:$0xf]
        %v6221 = vld [vmem:[#allocation2 + $0x7c] sm:$0x8]
        %v6222 = vld [vmem:[#allocation2 + $0x80] sm:$0xf]
        %v6223 = vld [vmem:[#allocation2 + $0x84] sm:$0xf]
        %v6224 = vld [vmem:[#allocation2 + $0x94] sm:$0x8]
        %v6225 = vld [vmem:[#allocation2 + $0x98] sm:$0xf]
        %v6226 = vld [vmem:[#allocation2 + $0x9c] sm:$0xf]
        %v6227 = vld [vmem:[#allocation2 + $0xac] sm:$0x8]
        %v6228 = vld [vmem:[#allocation2 + $0xb0] sm:$0xf]
        %v6229 = vld [vmem:[#allocation2 + $0xb4] sm:$0xf]
        %v6230 = vld [vmem:[#allocation2 + $0xc4] sm:$0x8]
        %v6231 = vld [vmem:[#allocation2 + $0xc8] sm:$0xf]
        %v6232 = vld [vmem:[#allocation2 + $0xcc] sm:$0xf]
        %v6233 = vld [vmem:[#allocation2 + $0xdc] sm:$0x8]
        %v6234 = vld [vmem:[#allocation2 + $0xe0] sm:$0xf]
        %v6235 = vld [vmem:[#allocation2 + $0xe4] sm:$0xf]
        %v6236 = vld [vmem:[#allocation2 + $0xf4] sm:$0x8]
        %v6237 = vld [vmem:[#allocation2 + $0xf8] sm:$0xf]
        %v6238 = vld [vmem:[#allocation2 + $0xfc] sm:$0xf]
        %v6239 = vld [vmem:[#allocation2 + $0x10c] sm:$0x8]
        %v6240 = vld [vmem:[#allocation2 + $0x110] sm:$0xf]
        %v6241 = vld [vmem:[#allocation2 + $0x114] sm:$0xf]
        %v6242 = vld [vmem:[#allocation2 + $0x124] sm:$0x8]
        %v6243 = vld [vmem:[#allocation2 + $0x128] sm:$0xf]
        %v6244 = vld [vmem:[#allocation2 + $0x12c] sm:$0xf]
        %v6245 = vld [vmem:[#allocation2 + $0x13c] sm:$0x8]
        %v6246 = vld [vmem:[#allocation2 + $0x140] sm:$0xf]
        %v6247 = vld [vmem:[#allocation2 + $0x144] sm:$0xf]
        %v6248 = vld [vmem:[#allocation2 + $0x154] sm:$0x8]
        %v6249 = vld [vmem:[#allocation2 + $0x158] sm:$0xf]
        %v6250 = vld [vmem:[#allocation2 + $0x15c] sm:$0xf]
        %v6251 = vld [vmem:[#allocation2 + $0x16c] sm:$0x8]
        %v6252 = vld [vmem:[#allocation2 + $0x170] sm:$0xf]
        %v6253 = vld [vmem:[#allocation2 + $0x174] sm:$0xf]
        %v6255 = vshrl.u32 %v6206, 16
        %v6257 = vrot.slane %v6255, 7
        %v6258 = vrot.slane %v6257, 4
        %v6260 = vshrl.u32 %v6207, 16
        %v6262 = vrot.slane %v6260, 7
        %v6263 = vshll.u32 %v6207, 16
        %v6265 = vor.u32 %v6262, %v6263
        %v6266 = vsel %vm540, %v6258, %v6265
        %v6267 = vrot.slane %v6262, 4
        %v6269 = vshrl.u32 %v6208, 16
        %v6271 = vrot.slane %v6269, 7
        %v6272 = vshll.u32 %v6208, 16
        %v6274 = vor.u32 %v6271, %v6272
        %v6275 = vsel %vm540, %v6267, %v6274
        %v6277 = vshrl.u32 %v6209, 16
        %v6279 = vrot.slane %v6277, 7
        %v6280 = vrot.slane %v6279, 4
        %v6282 = vshrl.u32 %v6210, 16
        %v6284 = vrot.slane %v6282, 7
        %v6285 = vshll.u32 %v6210, 16
        %v6287 = vor.u32 %v6284, %v6285
        %v6288 = vsel %vm540, %v6280, %v6287
        %v6289 = vrot.slane %v6284, 4
        %v6291 = vshrl.u32 %v6211, 16
        %v6293 = vrot.slane %v6291, 7
        %v6294 = vshll.u32 %v6211, 16
        %v6296 = vor.u32 %v6293, %v6294
        %v6297 = vsel %vm540, %v6289, %v6296
        %v6299 = vshrl.u32 %v6212, 16
        %v6301 = vrot.slane %v6299, 7
        %v6302 = vrot.slane %v6301, 4
        %v6304 = vshrl.u32 %v6213, 16
        %v6306 = vrot.slane %v6304, 7
        %v6307 = vshll.u32 %v6213, 16
        %v6309 = vor.u32 %v6306, %v6307
        %v6310 = vsel %vm540, %v6302, %v6309
        %v6311 = vrot.slane %v6306, 4
        %v6313 = vshrl.u32 %v6214, 16
        %v6315 = vrot.slane %v6313, 7
        %v6316 = vshll.u32 %v6214, 16
        %v6318 = vor.u32 %v6315, %v6316
        %v6319 = vsel %vm540, %v6311, %v6318
        %v6321 = vshrl.u32 %v6215, 16
        %v6323 = vrot.slane %v6321, 7
        %v6324 = vrot.slane %v6323, 4
        %v6326 = vshrl.u32 %v6216, 16
        %v6328 = vrot.slane %v6326, 7
        %v6329 = vshll.u32 %v6216, 16
        %v6331 = vor.u32 %v6328, %v6329
        %v6332 = vsel %vm540, %v6324, %v6331
        %v6333 = vrot.slane %v6328, 4
        %v6335 = vshrl.u32 %v6217, 16
        %v6337 = vrot.slane %v6335, 7
        %v6338 = vshll.u32 %v6217, 16
        %v6340 = vor.u32 %v6337, %v6338
        %v6341 = vsel %vm540, %v6333, %v6340
        %v6343 = vshrl.u32 %v6218, 16
        %v6345 = vrot.slane %v6343, 7
        %v6346 = vrot.slane %v6345, 4
        %v6348 = vshrl.u32 %v6219, 16
        %v6350 = vrot.slane %v6348, 7
        %v6351 = vshll.u32 %v6219, 16
        %v6353 = vor.u32 %v6350, %v6351
        %v6354 = vsel %vm540, %v6346, %v6353
        %v6355 = vrot.slane %v6350, 4
        %v6357 = vshrl.u32 %v6220, 16
        %v6359 = vrot.slane %v6357, 7
        %v6360 = vshll.u32 %v6220, 16
        %v6362 = vor.u32 %v6359, %v6360
        %v6363 = vsel %vm540, %v6355, %v6362
        %v6365 = vshrl.u32 %v6221, 16
        %v6367 = vrot.slane %v6365, 7
        %v6368 = vrot.slane %v6367, 4
        %v6370 = vshrl.u32 %v6222, 16
        %v6372 = vrot.slane %v6370, 7
        %v6373 = vshll.u32 %v6222, 16
        %v6375 = vor.u32 %v6372, %v6373
        %v6376 = vsel %vm540, %v6368, %v6375
        %v6377 = vrot.slane %v6372, 4
        %v6379 = vshrl.u32 %v6223, 16
        %v6381 = vrot.slane %v6379, 7
        %v6382 = vshll.u32 %v6223, 16
        %v6384 = vor.u32 %v6381, %v6382
        %v6385 = vsel %vm540, %v6377, %v6384
        %v6387 = vshrl.u32 %v6224, 16
        %v6389 = vrot.slane %v6387, 7
        %v6390 = vrot.slane %v6389, 4
        %v6392 = vshrl.u32 %v6225, 16
        %v6394 = vrot.slane %v6392, 7
        %v6395 = vshll.u32 %v6225, 16
        %v6397 = vor.u32 %v6394, %v6395
        %v6398 = vsel %vm540, %v6390, %v6397
        %v6399 = vrot.slane %v6394, 4
        %v6401 = vshrl.u32 %v6226, 16
        %v6403 = vrot.slane %v6401, 7
        %v6404 = vshll.u32 %v6226, 16
        %v6406 = vor.u32 %v6403, %v6404
        %v6407 = vsel %vm540, %v6399, %v6406
        %v6409 = vshrl.u32 %v6227, 16
        %v6411 = vrot.slane %v6409, 7
        %v6412 = vrot.slane %v6411, 4
        %v6414 = vshrl.u32 %v6228, 16
        %v6416 = vrot.slane %v6414, 7
        %v6417 = vshll.u32 %v6228, 16
        %v6419 = vor.u32 %v6416, %v6417
        %v6420 = vsel %vm540, %v6412, %v6419
        %v6421 = vrot.slane %v6416, 4
        %v6423 = vshrl.u32 %v6229, 16
        %v6425 = vrot.slane %v6423, 7
        %v6426 = vshll.u32 %v6229, 16
        %v6428 = vor.u32 %v6425, %v6426
        %v6429 = vsel %vm540, %v6421, %v6428
        %v6431 = vshrl.u32 %v6230, 16
        %v6433 = vrot.slane %v6431, 7
        %v6434 = vrot.slane %v6433, 4
        %v6436 = vshrl.u32 %v6231, 16
        %v6438 = vrot.slane %v6436, 7
        %v6439 = vshll.u32 %v6231, 16
        %v6441 = vor.u32 %v6438, %v6439
        %v6442 = vsel %vm540, %v6434, %v6441
        %v6443 = vrot.slane %v6438, 4
        %v6445 = vshrl.u32 %v6232, 16
        %v6447 = vrot.slane %v6445, 7
        %v6448 = vshll.u32 %v6232, 16
        %v6450 = vor.u32 %v6447, %v6448
        %v6451 = vsel %vm540, %v6443, %v6450
        %v6453 = vshrl.u32 %v6233, 16
        %v6455 = vrot.slane %v6453, 7
        %v6456 = vrot.slane %v6455, 4
        %v6458 = vshrl.u32 %v6234, 16
        %v6460 = vrot.slane %v6458, 7
        %v6461 = vshll.u32 %v6234, 16
        %v6463 = vor.u32 %v6460, %v6461
        %v6464 = vsel %vm540, %v6456, %v6463
        %v6465 = vrot.slane %v6460, 4
        %v6467 = vshrl.u32 %v6235, 16
        %v6469 = vrot.slane %v6467, 7
        %v6470 = vshll.u32 %v6235, 16
        %v6472 = vor.u32 %v6469, %v6470
        %v6473 = vsel %vm540, %v6465, %v6472
        %v6475 = vshrl.u32 %v6236, 16
        %v6477 = vrot.slane %v6475, 7
        %v6478 = vrot.slane %v6477, 4
        %v6480 = vshrl.u32 %v6237, 16
        %v6482 = vrot.slane %v6480, 7
        %v6483 = vshll.u32 %v6237, 16
        %v6485 = vor.u32 %v6482, %v6483
        %v6486 = vsel %vm540, %v6478, %v6485
        %v6487 = vrot.slane %v6482, 4
        %v6489 = vshrl.u32 %v6238, 16
        %v6491 = vrot.slane %v6489, 7
        %v6492 = vshll.u32 %v6238, 16
        %v6494 = vor.u32 %v6491, %v6492
        %v6495 = vsel %vm540, %v6487, %v6494
        %v6497 = vshrl.u32 %v6239, 16
        %v6499 = vrot.slane %v6497, 7
        %v6500 = vrot.slane %v6499, 4
        %v6502 = vshrl.u32 %v6240, 16
        %v6504 = vrot.slane %v6502, 7
        %v6505 = vshll.u32 %v6240, 16
        %v6507 = vor.u32 %v6504, %v6505
        %v6508 = vsel %vm540, %v6500, %v6507
        %v6509 = vrot.slane %v6504, 4
        %v6511 = vshrl.u32 %v6241, 16
        %v6513 = vrot.slane %v6511, 7
        %v6514 = vshll.u32 %v6241, 16
        %v6516 = vor.u32 %v6513, %v6514
        %v6517 = vsel %vm540, %v6509, %v6516
        %v6519 = vshrl.u32 %v6242, 16
        %v6521 = vrot.slane %v6519, 7
        %v6522 = vrot.slane %v6521, 4
        %v6524 = vshrl.u32 %v6243, 16
        %v6526 = vrot.slane %v6524, 7
        %v6527 = vshll.u32 %v6243, 16
        %v6529 = vor.u32 %v6526, %v6527
        %v6530 = vsel %vm540, %v6522, %v6529
        %v6531 = vrot.slane %v6526, 4
        %v6533 = vshrl.u32 %v6244, 16
        %v6535 = vrot.slane %v6533, 7
        %v6536 = vshll.u32 %v6244, 16
        %v6538 = vor.u32 %v6535, %v6536
        %v6539 = vsel %vm540, %v6531, %v6538
        %v6541 = vshrl.u32 %v6245, 16
        %v6543 = vrot.slane %v6541, 7
        %v6544 = vrot.slane %v6543, 4
        %v6546 = vshrl.u32 %v6246, 16
        %v6548 = vrot.slane %v6546, 7
        %v6549 = vshll.u32 %v6246, 16
        %v6551 = vor.u32 %v6548, %v6549
        %v6552 = vsel %vm540, %v6544, %v6551
        %v6553 = vrot.slane %v6548, 4
        %v6555 = vshrl.u32 %v6247, 16
        %v6557 = vrot.slane %v6555, 7
        %v6558 = vshll.u32 %v6247, 16
        %v6560 = vor.u32 %v6557, %v6558
        %v6561 = vsel %vm540, %v6553, %v6560
        %v6563 = vshrl.u32 %v6248, 16
        %v6565 = vrot.slane %v6563, 7
        %v6566 = vrot.slane %v6565, 4
        %v6568 = vshrl.u32 %v6249, 16
        %v6570 = vrot.slane %v6568, 7
        %v6571 = vshll.u32 %v6249, 16
        %v6573 = vor.u32 %v6570, %v6571
        %v6574 = vsel %vm540, %v6566, %v6573
        %v6575 = vrot.slane %v6570, 4
        %v6577 = vshrl.u32 %v6250, 16
        %v6579 = vrot.slane %v6577, 7
        %v6580 = vshll.u32 %v6250, 16
        %v6582 = vor.u32 %v6579, %v6580
        %v6583 = vsel %vm540, %v6575, %v6582
        %v6585 = vshrl.u32 %v6251, 16
        %v6587 = vrot.slane %v6585, 7
        %v6588 = vrot.slane %v6587, 4
        %v6590 = vshrl.u32 %v6252, 16
        %v6592 = vrot.slane %v6590, 7
        %v6593 = vshll.u32 %v6252, 16
        %v6595 = vor.u32 %v6592, %v6593
        %v6596 = vsel %vm540, %v6588, %v6595
        %v6597 = vrot.slane %v6592, 4
        %v6599 = vshrl.u32 %v6253, 16
        %v6601 = vrot.slane %v6599, 7
        %v6602 = vshll.u32 %v6253, 16
        %v6604 = vor.u32 %v6601, %v6602
        %v6605 = vsel %vm540, %v6597, %v6604
        %v6606 = vld [vmem:[#allocation3] sm:$0xff]
        %v6607 = vld [vmem:[#allocation3 + $0x8] sm:$0xff]
        %v6608 = vld [vmem:[#allocation3 + $0x10] sm:$0xff]
        %v6609 = vld [vmem:[#allocation3 + $0x18] sm:$0xff]
        %v6610 = vld [vmem:[#allocation3 + $0x20] sm:$0xff]
        %v6611 = vld [vmem:[#allocation3 + $0x28] sm:$0xff]
        %v6612 = vld [vmem:[#allocation3 + $0x30] sm:$0xff]
        %v6613 = vld [vmem:[#allocation3 + $0x38] sm:$0xff]
        %v6614 = vld [vmem:[#allocation3 + $0x40] sm:$0xff]
        %v6615 = vld [vmem:[#allocation3 + $0x48] sm:$0xff]
        %v6616 = vld [vmem:[#allocation3 + $0x50] sm:$0xff]
        %v6617 = vld [vmem:[#allocation3 + $0x58] sm:$0xff]
        %v6618 = vld [vmem:[#allocation3 + $0x60] sm:$0xff]
        %v6619 = vld [vmem:[#allocation3 + $0x68] sm:$0xff]
        %v6620 = vld [vmem:[#allocation3 + $0x70] sm:$0xff]
        %v6621 = vld [vmem:[#allocation3 + $0x78] sm:$0xff]
        %v6622 = vld [vmem:[#allocation3 + $0x80] sm:$0xff]
        %v6623 = vld [vmem:[#allocation3 + $0x88] sm:$0xff]
        %v6624 = vld [vmem:[#allocation3 + $0x90] sm:$0xff]
        %v6625 = vld [vmem:[#allocation3 + $0x98] sm:$0xff]
        %v6626 = vld [vmem:[#allocation3 + $0xa0] sm:$0xff]
        %v6627 = vld [vmem:[#allocation3 + $0xa8] sm:$0xff]
        %v6628 = vld [vmem:[#allocation3 + $0xb0] sm:$0xff]
        %v6629 = vld [vmem:[#allocation3 + $0xb8] sm:$0xff]
        %v6630 = vld [vmem:[#allocation3 + $0xc0] sm:$0xff]
        %v6631 = vld [vmem:[#allocation3 + $0xc8] sm:$0xff]
        %v6632 = vld [vmem:[#allocation3 + $0xd0] sm:$0xff]
        %v6633 = vld [vmem:[#allocation3 + $0xd8] sm:$0xff]
        %v6634 = vld [vmem:[#allocation3 + $0xe0] sm:$0xff]
        %v6635 = vld [vmem:[#allocation3 + $0xe8] sm:$0xff]
        %v6636 = vld [vmem:[#allocation3 + $0xf0] sm:$0xff]
        %v6637 = vld [vmem:[#allocation3 + $0xf8] sm:$0xff]
        %v6638 = vld [vmem:[#allocation9] sm:$0xf]
        %v6639 = vld [vmem:[#allocation9 + $0x4] sm:$0xf]
        %v6640 = vld [vmem:[#allocation9 + $0x8] sm:$0xf]
        %v6641 = vld [vmem:[#allocation9 + $0xc] sm:$0xf]
        %v6642 = vld [vmem:[#allocation9 + $0x10] sm:$0xf]
        %v6643 = vld [vmem:[#allocation9 + $0x14] sm:$0xf]
        %v6644 = vld [vmem:[#allocation9 + $0x18] sm:$0xf]
        %v6645 = vld [vmem:[#allocation9 + $0x1c] sm:$0xf]
        %v6646 = vld [vmem:[#allocation9 + $0x20] sm:$0xf]
        %v6647 = vld [vmem:[#allocation9 + $0x24] sm:$0xf]
        %v6648 = vld [vmem:[#allocation9 + $0x28] sm:$0xf]
        %v6649 = vld [vmem:[#allocation9 + $0x2c] sm:$0xf]
        %v6650 = vld [vmem:[#allocation9 + $0x30] sm:$0xf]
        %v6651 = vld [vmem:[#allocation9 + $0x34] sm:$0xf]
        %v6652 = vld [vmem:[#allocation9 + $0x38] sm:$0xf]
        %v6653 = vld [vmem:[#allocation9 + $0x3c] sm:$0xf]
        %v6654 = vunpack.c.l.b16 %v6266
        %v6655 = vunpack.c.l.b16 %v6275
        %v6656 = vunpack.c.l.b16 %v6288
        %v6657 = vunpack.c.l.b16 %v6297
        %v6658 = vunpack.c.l.b16 %v6310
        %v6659 = vunpack.c.l.b16 %v6319
        %v6660 = vunpack.c.l.b16 %v6332
        %v6661 = vunpack.c.l.b16 %v6341
        %v6662 = vunpack.c.l.b16 %v6354
        %v6663 = vunpack.c.l.b16 %v6363
        %v6664 = vunpack.c.l.b16 %v6376
        %v6665 = vunpack.c.l.b16 %v6385
        %v6666 = vunpack.c.l.b16 %v6398
        %v6667 = vunpack.c.l.b16 %v6407
        %v6668 = vunpack.c.l.b16 %v6420
        %v6669 = vunpack.c.l.b16 %v6429
        %v6670 = vunpack.c.l.b16 %v6442
        %v6671 = vunpack.c.l.b16 %v6451
        %v6672 = vunpack.c.l.b16 %v6464
        %v6673 = vunpack.c.l.b16 %v6473
        %v6674 = vunpack.c.l.b16 %v6486
        %v6675 = vunpack.c.l.b16 %v6495
        %v6676 = vunpack.c.l.b16 %v6508
        %v6677 = vunpack.c.l.b16 %v6517
        %v6678 = vunpack.c.l.b16 %v6530
        %v6679 = vunpack.c.l.b16 %v6539
        %v6680 = vunpack.c.l.b16 %v6552
        %v6681 = vunpack.c.l.b16 %v6561
        %v6682 = vunpack.c.l.b16 %v6574
        %v6683 = vunpack.c.l.b16 %v6583
        %v6684 = vunpack.c.l.b16 %v6596
        %v6685 = vunpack.c.l.b16 %v6605
        %v6686 = vpack.c.b16 %v6655, %v6654
        %v6687 = vpack.c.b16 %v6657, %v6656
        %v6688 = vpack.c.b16 %v6659, %v6658
        %v6689 = vpack.c.b16 %v6661, %v6660
        %v6690 = vpack.c.b16 %v6663, %v6662
        %v6691 = vpack.c.b16 %v6665, %v6664
        %v6692 = vpack.c.b16 %v6667, %v6666
        %v6693 = vpack.c.b16 %v6669, %v6668
        %v6694 = vpack.c.b16 %v6671, %v6670
        %v6695 = vpack.c.b16 %v6673, %v6672
        %v6696 = vpack.c.b16 %v6675, %v6674
        %v6697 = vpack.c.b16 %v6677, %v6676
        %v6698 = vpack.c.b16 %v6679, %v6678
        %v6699 = vpack.c.b16 %v6681, %v6680
        %v6700 = vpack.c.b16 %v6683, %v6682
        %v6701 = vpack.c.b16 %v6685, %v6684
        %v6734 = vunpack.c.l.b16 %v6638
        %v6735 = vunpack.c.l.b16 %v6639
        %v6736 = vunpack.c.l.b16 %v6640
        %v6737 = vunpack.c.l.b16 %v6641
        %v6738 = vunpack.c.l.b16 %v6642
        %v6739 = vunpack.c.l.b16 %v6643
        %v6740 = vunpack.c.l.b16 %v6644
        %v6741 = vunpack.c.l.b16 %v6645
        %v6742 = vunpack.c.l.b16 %v6646
        %v6743 = vunpack.c.l.b16 %v6647
        %v6744 = vunpack.c.l.b16 %v6648
        %v6745 = vunpack.c.l.b16 %v6649
        %v6746 = vunpack.c.l.b16 %v6650
        %v6747 = vunpack.c.l.b16 %v6651
        %v6748 = vunpack.c.l.b16 %v6652
        %v6749 = vunpack.c.l.b16 %v6653
        %v6750 = vpack.c.b16 %v6735, %v6734
        %v6751 = vpack.c.b16 %v6737, %v6736
        %v6752 = vpack.c.b16 %v6739, %v6738
        %v6753 = vpack.c.b16 %v6741, %v6740
        %v6754 = vpack.c.b16 %v6743, %v6742
        %v6755 = vpack.c.b16 %v6745, %v6744
        %v6756 = vpack.c.b16 %v6747, %v6746
        %v6757 = vpack.c.b16 %v6749, %v6748
        %6766 = vmatpush.bf16.msra.mxu0 %v6757
        %6767 = vmatpush.bf16.msra.mxu0 %v6756
        %6768 = vmatpush.bf16.msra.mxu0 %v6755
        %6769 = vmatpush.bf16.msra.mxu0 %v6754
        %6770 = vmatpush.bf16.msra.mxu0 %v6753
        %6771 = vmatpush.bf16.msra.mxu0 %v6752
        %6772 = vmatpush.bf16.msra.mxu0 %v6751
        %6773 = vmatpush.bf16.msra.mxu0 %v6750
        %6774 = vmatmul.bf16.gmra.mxu0 %v6686
        %v6775 = vpop.f32.mrf.mxu0
        %v6776 = vadd.f32 0.0, %v6775
        %v6777 = vpop.f32.mrf.mxu0
        %v6778 = vadd.f32 0.0, %v6777
        %6779 = vmatmul.bf16.gmra.mxu0 %v6687
        %v6780 = vpop.f32.mrf.mxu0
        %v6781 = vadd.f32 0.0, %v6780
        %v6782 = vpop.f32.mrf.mxu0
        %v6783 = vadd.f32 0.0, %v6782
        %6784 = vmatmul.bf16.gmra.mxu0 %v6688
        %v6785 = vpop.f32.mrf.mxu0
        %v6786 = vadd.f32 0.0, %v6785
        %v6787 = vpop.f32.mrf.mxu0
        %v6788 = vadd.f32 0.0, %v6787
        %6789 = vmatmul.bf16.gmra.mxu0 %v6689
        %v6790 = vpop.f32.mrf.mxu0
        %v6791 = vadd.f32 0.0, %v6790
        %v6792 = vpop.f32.mrf.mxu0
        %v6793 = vadd.f32 0.0, %v6792
        %6794 = vmatmul.bf16.gmra.mxu0 %v6690
        %v6795 = vpop.f32.mrf.mxu0
        %v6796 = vadd.f32 0.0, %v6795
        %v6797 = vpop.f32.mrf.mxu0
        %v6798 = vadd.f32 0.0, %v6797
        %6799 = vmatmul.bf16.gmra.mxu0 %v6691
        %v6800 = vpop.f32.mrf.mxu0
        %v6801 = vadd.f32 0.0, %v6800
        %v6802 = vpop.f32.mrf.mxu0
        %v6803 = vadd.f32 0.0, %v6802
        %6804 = vmatmul.bf16.gmra.mxu0 %v6692
        %v6805 = vpop.f32.mrf.mxu0
        %v6806 = vadd.f32 0.0, %v6805
        %v6807 = vpop.f32.mrf.mxu0
        %v6808 = vadd.f32 0.0, %v6807
        %6809 = vmatmul.bf16.gmra.mxu0 %v6693
        %v6810 = vpop.f32.mrf.mxu0
        %v6811 = vadd.f32 0.0, %v6810
        %v6812 = vpop.f32.mrf.mxu0
        %v6813 = vadd.f32 0.0, %v6812
        %6814 = vmatmul.bf16.gmra.mxu0 %v6694
        %v6815 = vpop.f32.mrf.mxu0
        %v6816 = vadd.f32 0.0, %v6815
        %v6817 = vpop.f32.mrf.mxu0
        %v6818 = vadd.f32 0.0, %v6817
        %6819 = vmatmul.bf16.gmra.mxu0 %v6695
        %v6820 = vpop.f32.mrf.mxu0
        %v6821 = vadd.f32 0.0, %v6820
        %v6822 = vpop.f32.mrf.mxu0
        %v6823 = vadd.f32 0.0, %v6822
        %6824 = vmatmul.bf16.gmra.mxu0 %v6696
        %v6825 = vpop.f32.mrf.mxu0
        %v6826 = vadd.f32 0.0, %v6825
        %v6827 = vpop.f32.mrf.mxu0
        %v6828 = vadd.f32 0.0, %v6827
        %6829 = vmatmul.bf16.gmra.mxu0 %v6697
        %v6830 = vpop.f32.mrf.mxu0
        %v6831 = vadd.f32 0.0, %v6830
        %v6832 = vpop.f32.mrf.mxu0
        %v6833 = vadd.f32 0.0, %v6832
        %6834 = vmatmul.bf16.gmra.mxu0 %v6698
        %v6835 = vpop.f32.mrf.mxu0
        %v6836 = vadd.f32 0.0, %v6835
        %v6837 = vpop.f32.mrf.mxu0
        %v6838 = vadd.f32 0.0, %v6837
        %6839 = vmatmul.bf16.gmra.mxu0 %v6699
        %v6840 = vpop.f32.mrf.mxu0
        %v6841 = vadd.f32 0.0, %v6840
        %v6842 = vpop.f32.mrf.mxu0
        %v6843 = vadd.f32 0.0, %v6842
        %6844 = vmatmul.bf16.gmra.mxu0 %v6700
        %v6845 = vpop.f32.mrf.mxu0
        %v6846 = vadd.f32 0.0, %v6845
        %v6847 = vpop.f32.mrf.mxu0
        %v6848 = vadd.f32 0.0, %v6847
        %6849 = vmatmul.bf16.gmra.mxu0 %v6701
        %v6850 = vpop.f32.mrf.mxu0
        %v6851 = vadd.f32 0.0, %v6850
        %v6852 = vpop.f32.mrf.mxu0
        %v6853 = vadd.f32 0.0, %v6852
        %6854 = vdwg.mxu0
        %v6855 = vadd.f32 %v6606, %v6776
        %v6856 = vadd.f32 %v6607, %v6778
        %v6857 = vadd.f32 %v6608, %v6781
        %v6858 = vadd.f32 %v6609, %v6783
        %v6859 = vadd.f32 %v6610, %v6786
        %v6860 = vadd.f32 %v6611, %v6788
        %v6861 = vadd.f32 %v6612, %v6791
        %v6862 = vadd.f32 %v6613, %v6793
        %v6863 = vadd.f32 %v6614, %v6796
        %v6864 = vadd.f32 %v6615, %v6798
        %v6865 = vadd.f32 %v6616, %v6801
        %v6866 = vadd.f32 %v6617, %v6803
        %v6867 = vadd.f32 %v6618, %v6806
        %v6868 = vadd.f32 %v6619, %v6808
        %v6869 = vadd.f32 %v6620, %v6811
        %v6870 = vadd.f32 %v6621, %v6813
        %v6871 = vadd.f32 %v6622, %v6816
        %v6872 = vadd.f32 %v6623, %v6818
        %v6873 = vadd.f32 %v6624, %v6821
        %v6874 = vadd.f32 %v6625, %v6823
        %v6875 = vadd.f32 %v6626, %v6826
        %v6876 = vadd.f32 %v6627, %v6828
        %v6877 = vadd.f32 %v6628, %v6831
        %v6878 = vadd.f32 %v6629, %v6833
        %v6879 = vadd.f32 %v6630, %v6836
        %v6880 = vadd.f32 %v6631, %v6838
        %v6881 = vadd.f32 %v6632, %v6841
        %v6882 = vadd.f32 %v6633, %v6843
        %v6883 = vadd.f32 %v6634, %v6846
        %v6884 = vadd.f32 %v6635, %v6848
        %v6885 = vadd.f32 %v6636, %v6851
        %v6886 = vadd.f32 %v6637, %v6853
        %6887 = vst [vmem:[#allocation3] sm:$0xff] %v6855
        %6888 = vst [vmem:[#allocation3 + $0x8] sm:$0xff] %v6856
        %6889 = vst [vmem:[#allocation3 + $0x10] sm:$0xff] %v6857
        %6890 = vst [vmem:[#allocation3 + $0x18] sm:$0xff] %v6858
        %6891 = vst [vmem:[#allocation3 + $0x20] sm:$0xff] %v6859
        %6892 = vst [vmem:[#allocation3 + $0x28] sm:$0xff] %v6860
        %6893 = vst [vmem:[#allocation3 + $0x30] sm:$0xff] %v6861
        %6894 = vst [vmem:[#allocation3 + $0x38] sm:$0xff] %v6862
        %6895 = vst [vmem:[#allocation3 + $0x40] sm:$0xff] %v6863
        %6896 = vst [vmem:[#allocation3 + $0x48] sm:$0xff] %v6864
        %6897 = vst [vmem:[#allocation3 + $0x50] sm:$0xff] %v6865
        %6898 = vst [vmem:[#allocation3 + $0x58] sm:$0xff] %v6866
        %6899 = vst [vmem:[#allocation3 + $0x60] sm:$0xff] %v6867
        %6900 = vst [vmem:[#allocation3 + $0x68] sm:$0xff] %v6868
        %6901 = vst [vmem:[#allocation3 + $0x70] sm:$0xff] %v6869
        %6902 = vst [vmem:[#allocation3 + $0x78] sm:$0xff] %v6870
        %6903 = vst [vmem:[#allocation3 + $0x80] sm:$0xff] %v6871
        %6904 = vst [vmem:[#allocation3 + $0x88] sm:$0xff] %v6872
        %6905 = vst [vmem:[#allocation3 + $0x90] sm:$0xff] %v6873
        %6906 = vst [vmem:[#allocation3 + $0x98] sm:$0xff] %v6874
        %6907 = vst [vmem:[#allocation3 + $0xa0] sm:$0xff] %v6875
        %6908 = vst [vmem:[#allocation3 + $0xa8] sm:$0xff] %v6876
        %6909 = vst [vmem:[#allocation3 + $0xb0] sm:$0xff] %v6877
        %6910 = vst [vmem:[#allocation3 + $0xb8] sm:$0xff] %v6878
        %6911 = vst [vmem:[#allocation3 + $0xc0] sm:$0xff] %v6879
        %6912 = vst [vmem:[#allocation3 + $0xc8] sm:$0xff] %v6880
        %6913 = vst [vmem:[#allocation3 + $0xd0] sm:$0xff] %v6881
        %6914 = vst [vmem:[#allocation3 + $0xd8] sm:$0xff] %v6882
        %6915 = vst [vmem:[#allocation3 + $0xe0] sm:$0xff] %v6883
        %6916 = vst [vmem:[#allocation3 + $0xe8] sm:$0xff] %v6884
        %6917 = vst [vmem:[#allocation3 + $0xf0] sm:$0xff] %v6885
        %6918 = vst [vmem:[#allocation3 + $0xf8] sm:$0xff] %v6886
        %v6919 = vld [vmem:[#allocation2 + $0x8] sm:$0xf]
        %v6920 = vld [vmem:[#allocation2 + $0xc] sm:$0xf]
        %v6921 = vld [vmem:[#allocation2 + $0x20] sm:$0xf]
        %v6922 = vld [vmem:[#allocation2 + $0x24] sm:$0xf]
        %v6923 = vld [vmem:[#allocation2 + $0x38] sm:$0xf]
        %v6924 = vld [vmem:[#allocation2 + $0x3c] sm:$0xf]
        %v6925 = vld [vmem:[#allocation2 + $0x50] sm:$0xf]
        %v6926 = vld [vmem:[#allocation2 + $0x54] sm:$0xf]
        %v6927 = vld [vmem:[#allocation2 + $0x68] sm:$0xf]
        %v6928 = vld [vmem:[#allocation2 + $0x6c] sm:$0xf]
        %v6929 = vld [vmem:[#allocation2 + $0x80] sm:$0xf]
        %v6930 = vld [vmem:[#allocation2 + $0x84] sm:$0xf]
        %v6931 = vld [vmem:[#allocation2 + $0x98] sm:$0xf]
        %v6932 = vld [vmem:[#allocation2 + $0x9c] sm:$0xf]
        %v6933 = vld [vmem:[#allocation2 + $0xb0] sm:$0xf]
        %v6934 = vld [vmem:[#allocation2 + $0xb4] sm:$0xf]
        %v6935 = vld [vmem:[#allocation2 + $0xc8] sm:$0xf]
        %v6936 = vld [vmem:[#allocation2 + $0xcc] sm:$0xf]
        %v6937 = vld [vmem:[#allocation2 + $0xe0] sm:$0xf]
        %v6938 = vld [vmem:[#allocation2 + $0xe4] sm:$0xf]
        %v6939 = vld [vmem:[#allocation2 + $0xf8] sm:$0xf]
        %v6940 = vld [vmem:[#allocation2 + $0xfc] sm:$0xf]
        %v6941 = vld [vmem:[#allocation2 + $0x110] sm:$0xf]
        %v6942 = vld [vmem:[#allocation2 + $0x114] sm:$0xf]
        %v6943 = vld [vmem:[#allocation2 + $0x128] sm:$0xf]
        %v6944 = vld [vmem:[#allocation2 + $0x12c] sm:$0xf]
        %v6945 = vld [vmem:[#allocation2 + $0x140] sm:$0xf]
        %v6946 = vld [vmem:[#allocation2 + $0x144] sm:$0xf]
        %v6947 = vld [vmem:[#allocation2 + $0x158] sm:$0xf]
        %v6948 = vld [vmem:[#allocation2 + $0x15c] sm:$0xf]
        %v6949 = vld [vmem:[#allocation2 + $0x170] sm:$0xf]
        %v6950 = vld [vmem:[#allocation2 + $0x174] sm:$0xf]
        %v6951 = vld [vmem:[#allocation3] sm:$0xff]
        %v6952 = vld [vmem:[#allocation3 + $0x8] sm:$0xff]
        %v6953 = vld [vmem:[#allocation3 + $0x10] sm:$0xff]
        %v6954 = vld [vmem:[#allocation3 + $0x18] sm:$0xff]
        %v6955 = vld [vmem:[#allocation3 + $0x20] sm:$0xff]
        %v6956 = vld [vmem:[#allocation3 + $0x28] sm:$0xff]
        %v6957 = vld [vmem:[#allocation3 + $0x30] sm:$0xff]
        %v6958 = vld [vmem:[#allocation3 + $0x38] sm:$0xff]
        %v6959 = vld [vmem:[#allocation3 + $0x40] sm:$0xff]
        %v6960 = vld [vmem:[#allocation3 + $0x48] sm:$0xff]
        %v6961 = vld [vmem:[#allocation3 + $0x50] sm:$0xff]
        %v6962 = vld [vmem:[#allocation3 + $0x58] sm:$0xff]
        %v6963 = vld [vmem:[#allocation3 + $0x60] sm:$0xff]
        %v6964 = vld [vmem:[#allocation3 + $0x68] sm:$0xff]
        %v6965 = vld [vmem:[#allocation3 + $0x70] sm:$0xff]
        %v6966 = vld [vmem:[#allocation3 + $0x78] sm:$0xff]
        %v6967 = vld [vmem:[#allocation3 + $0x80] sm:$0xff]
        %v6968 = vld [vmem:[#allocation3 + $0x88] sm:$0xff]
        %v6969 = vld [vmem:[#allocation3 + $0x90] sm:$0xff]
        %v6970 = vld [vmem:[#allocation3 + $0x98] sm:$0xff]
        %v6971 = vld [vmem:[#allocation3 + $0xa0] sm:$0xff]
        %v6972 = vld [vmem:[#allocation3 + $0xa8] sm:$0xff]
        %v6973 = vld [vmem:[#allocation3 + $0xb0] sm:$0xff]
        %v6974 = vld [vmem:[#allocation3 + $0xb8] sm:$0xff]
        %v6975 = vld [vmem:[#allocation3 + $0xc0] sm:$0xff]
        %v6976 = vld [vmem:[#allocation3 + $0xc8] sm:$0xff]
        %v6977 = vld [vmem:[#allocation3 + $0xd0] sm:$0xff]
        %v6978 = vld [vmem:[#allocation3 + $0xd8] sm:$0xff]
        %v6979 = vld [vmem:[#allocation3 + $0xe0] sm:$0xff]
        %v6980 = vld [vmem:[#allocation3 + $0xe8] sm:$0xff]
        %v6981 = vld [vmem:[#allocation3 + $0xf0] sm:$0xff]
        %v6982 = vld [vmem:[#allocation3 + $0xf8] sm:$0xff]
        %s6983 = scalar_lea.vmem [#allocation9], 64
        %v6984 = vld [vmem:[%s6983] sm:$0xf]
        %v6985 = vld [vmem:[%s6983 + $0x4] sm:$0xf]
        %v6986 = vld [vmem:[%s6983 + $0x8] sm:$0xf]
        %v6987 = vld [vmem:[%s6983 + $0xc] sm:$0xf]
        %v6988 = vld [vmem:[%s6983 + $0x10] sm:$0xf]
        %v6989 = vld [vmem:[%s6983 + $0x14] sm:$0xf]
        %v6990 = vld [vmem:[%s6983 + $0x18] sm:$0xf]
        %v6991 = vld [vmem:[%s6983 + $0x1c] sm:$0xf]
        %v6992 = vld [vmem:[%s6983 + $0x20] sm:$0xf]
        %v6993 = vld [vmem:[%s6983 + $0x24] sm:$0xf]
        %v6994 = vld [vmem:[%s6983 + $0x28] sm:$0xf]
        %v6995 = vld [vmem:[%s6983 + $0x2c] sm:$0xf]
        %v6996 = vld [vmem:[%s6983 + $0x30] sm:$0xf]
        %v6997 = vld [vmem:[%s6983 + $0x34] sm:$0xf]
        %v6998 = vld [vmem:[%s6983 + $0x38] sm:$0xf]
        %v6999 = vld [vmem:[%s6983 + $0x3c] sm:$0xf]
        %v7032 = vunpack.c.l.b16 %v6919
        %v7033 = vunpack.c.l.b16 %v6920
        %v7034 = vunpack.c.l.b16 %v6921
        %v7035 = vunpack.c.l.b16 %v6922
        %v7036 = vunpack.c.l.b16 %v6923
        %v7037 = vunpack.c.l.b16 %v6924
        %v7038 = vunpack.c.l.b16 %v6925
        %v7039 = vunpack.c.l.b16 %v6926
        %v7040 = vunpack.c.l.b16 %v6927
        %v7041 = vunpack.c.l.b16 %v6928
        %v7042 = vunpack.c.l.b16 %v6929
        %v7043 = vunpack.c.l.b16 %v6930
        %v7044 = vunpack.c.l.b16 %v6931
        %v7045 = vunpack.c.l.b16 %v6932
        %v7046 = vunpack.c.l.b16 %v6933
        %v7047 = vunpack.c.l.b16 %v6934
        %v7048 = vunpack.c.l.b16 %v6935
        %v7049 = vunpack.c.l.b16 %v6936
        %v7050 = vunpack.c.l.b16 %v6937
        %v7051 = vunpack.c.l.b16 %v6938
        %v7052 = vunpack.c.l.b16 %v6939
        %v7053 = vunpack.c.l.b16 %v6940
        %v7054 = vunpack.c.l.b16 %v6941
        %v7055 = vunpack.c.l.b16 %v6942
        %v7056 = vunpack.c.l.b16 %v6943
        %v7057 = vunpack.c.l.b16 %v6944
        %v7058 = vunpack.c.l.b16 %v6945
        %v7059 = vunpack.c.l.b16 %v6946
        %v7060 = vunpack.c.l.b16 %v6947
        %v7061 = vunpack.c.l.b16 %v6948
        %v7062 = vunpack.c.l.b16 %v6949
        %v7063 = vunpack.c.l.b16 %v6950
        %v7064 = vpack.c.b16 %v7033, %v7032
        %v7065 = vpack.c.b16 %v7035, %v7034
        %v7066 = vpack.c.b16 %v7037, %v7036
        %v7067 = vpack.c.b16 %v7039, %v7038
        %v7068 = vpack.c.b16 %v7041, %v7040
        %v7069 = vpack.c.b16 %v7043, %v7042
        %v7070 = vpack.c.b16 %v7045, %v7044
        %v7071 = vpack.c.b16 %v7047, %v7046
        %v7072 = vpack.c.b16 %v7049, %v7048
        %v7073 = vpack.c.b16 %v7051, %v7050
        %v7074 = vpack.c.b16 %v7053, %v7052
        %v7075 = vpack.c.b16 %v7055, %v7054
        %v7076 = vpack.c.b16 %v7057, %v7056
        %v7077 = vpack.c.b16 %v7059, %v7058
        %v7078 = vpack.c.b16 %v7061, %v7060
        %v7079 = vpack.c.b16 %v7063, %v7062
        %v7112 = vunpack.c.l.b16 %v6984
        %v7113 = vunpack.c.l.b16 %v6985
        %v7114 = vunpack.c.l.b16 %v6986
        %v7115 = vunpack.c.l.b16 %v6987
        %v7116 = vunpack.c.l.b16 %v6988
        %v7117 = vunpack.c.l.b16 %v6989
        %v7118 = vunpack.c.l.b16 %v6990
        %v7119 = vunpack.c.l.b16 %v6991
        %v7120 = vunpack.c.l.b16 %v6992
        %v7121 = vunpack.c.l.b16 %v6993
        %v7122 = vunpack.c.l.b16 %v6994
        %v7123 = vunpack.c.l.b16 %v6995
        %v7124 = vunpack.c.l.b16 %v6996
        %v7125 = vunpack.c.l.b16 %v6997
        %v7126 = vunpack.c.l.b16 %v6998
        %v7127 = vunpack.c.l.b16 %v6999
        %v7128 = vpack.c.b16 %v7113, %v7112
        %v7129 = vpack.c.b16 %v7115, %v7114
        %v7130 = vpack.c.b16 %v7117, %v7116
        %v7131 = vpack.c.b16 %v7119, %v7118
        %v7132 = vpack.c.b16 %v7121, %v7120
        %v7133 = vpack.c.b16 %v7123, %v7122
        %v7134 = vpack.c.b16 %v7125, %v7124
        %v7135 = vpack.c.b16 %v7127, %v7126
        %7144 = vmatpush.bf16.msra.mxu0 %v7135
        %7145 = vmatpush.bf16.msra.mxu0 %v7134
        %7146 = vmatpush.bf16.msra.mxu0 %v7133
        %7147 = vmatpush.bf16.msra.mxu0 %v7132
        %7148 = vmatpush.bf16.msra.mxu0 %v7131
        %7149 = vmatpush.bf16.msra.mxu0 %v7130
        %7150 = vmatpush.bf16.msra.mxu0 %v7129
        %7151 = vmatpush.bf16.msra.mxu0 %v7128
        %7152 = vmatmul.bf16.gmra.mxu0 %v7064
        %v7153 = vpop.f32.mrf.mxu0
        %v7154 = vadd.f32 0.0, %v7153
        %v7155 = vpop.f32.mrf.mxu0
        %v7156 = vadd.f32 0.0, %v7155
        %7157 = vmatmul.bf16.gmra.mxu0 %v7065
        %v7158 = vpop.f32.mrf.mxu0
        %v7159 = vadd.f32 0.0, %v7158
        %v7160 = vpop.f32.mrf.mxu0
        %v7161 = vadd.f32 0.0, %v7160
        %7162 = vmatmul.bf16.gmra.mxu0 %v7066
        %v7163 = vpop.f32.mrf.mxu0
        %v7164 = vadd.f32 0.0, %v7163
        %v7165 = vpop.f32.mrf.mxu0
        %v7166 = vadd.f32 0.0, %v7165
        %7167 = vmatmul.bf16.gmra.mxu0 %v7067
        %v7168 = vpop.f32.mrf.mxu0
        %v7169 = vadd.f32 0.0, %v7168
        %v7170 = vpop.f32.mrf.mxu0
        %v7171 = vadd.f32 0.0, %v7170
        %7172 = vmatmul.bf16.gmra.mxu0 %v7068
        %v7173 = vpop.f32.mrf.mxu0
        %v7174 = vadd.f32 0.0, %v7173
        %v7175 = vpop.f32.mrf.mxu0
        %v7176 = vadd.f32 0.0, %v7175
        %7177 = vmatmul.bf16.gmra.mxu0 %v7069
        %v7178 = vpop.f32.mrf.mxu0
        %v7179 = vadd.f32 0.0, %v7178
        %v7180 = vpop.f32.mrf.mxu0
        %v7181 = vadd.f32 0.0, %v7180
        %7182 = vmatmul.bf16.gmra.mxu0 %v7070
        %v7183 = vpop.f32.mrf.mxu0
        %v7184 = vadd.f32 0.0, %v7183
        %v7185 = vpop.f32.mrf.mxu0
        %v7186 = vadd.f32 0.0, %v7185
        %7187 = vmatmul.bf16.gmra.mxu0 %v7071
        %v7188 = vpop.f32.mrf.mxu0
        %v7189 = vadd.f32 0.0, %v7188
        %v7190 = vpop.f32.mrf.mxu0
        %v7191 = vadd.f32 0.0, %v7190
        %7192 = vmatmul.bf16.gmra.mxu0 %v7072
        %v7193 = vpop.f32.mrf.mxu0
        %v7194 = vadd.f32 0.0, %v7193
        %v7195 = vpop.f32.mrf.mxu0
        %v7196 = vadd.f32 0.0, %v7195
        %7197 = vmatmul.bf16.gmra.mxu0 %v7073
        %v7198 = vpop.f32.mrf.mxu0
        %v7199 = vadd.f32 0.0, %v7198
        %v7200 = vpop.f32.mrf.mxu0
        %v7201 = vadd.f32 0.0, %v7200
        %7202 = vmatmul.bf16.gmra.mxu0 %v7074
        %v7203 = vpop.f32.mrf.mxu0
        %v7204 = vadd.f32 0.0, %v7203
        %v7205 = vpop.f32.mrf.mxu0
        %v7206 = vadd.f32 0.0, %v7205
        %7207 = vmatmul.bf16.gmra.mxu0 %v7075
        %v7208 = vpop.f32.mrf.mxu0
        %v7209 = vadd.f32 0.0, %v7208
        %v7210 = vpop.f32.mrf.mxu0
        %v7211 = vadd.f32 0.0, %v7210
        %7212 = vmatmul.bf16.gmra.mxu0 %v7076
        %v7213 = vpop.f32.mrf.mxu0
        %v7214 = vadd.f32 0.0, %v7213
        %v7215 = vpop.f32.mrf.mxu0
        %v7216 = vadd.f32 0.0, %v7215
        %7217 = vmatmul.bf16.gmra.mxu0 %v7077
        %v7218 = vpop.f32.mrf.mxu0
        %v7219 = vadd.f32 0.0, %v7218
        %v7220 = vpop.f32.mrf.mxu0
        %v7221 = vadd.f32 0.0, %v7220
        %7222 = vmatmul.bf16.gmra.mxu0 %v7078
        %v7223 = vpop.f32.mrf.mxu0
        %v7224 = vadd.f32 0.0, %v7223
        %v7225 = vpop.f32.mrf.mxu0
        %v7226 = vadd.f32 0.0, %v7225
        %7227 = vmatmul.bf16.gmra.mxu0 %v7079
        %v7228 = vpop.f32.mrf.mxu0
        %v7229 = vadd.f32 0.0, %v7228
        %v7230 = vpop.f32.mrf.mxu0
        %v7231 = vadd.f32 0.0, %v7230
        %7232 = vdwg.mxu0
        %v7233 = vadd.f32 %v6951, %v7154
        %v7234 = vadd.f32 %v6952, %v7156
        %v7235 = vadd.f32 %v6953, %v7159
        %v7236 = vadd.f32 %v6954, %v7161
        %v7237 = vadd.f32 %v6955, %v7164
        %v7238 = vadd.f32 %v6956, %v7166
        %v7239 = vadd.f32 %v6957, %v7169
        %v7240 = vadd.f32 %v6958, %v7171
        %v7241 = vadd.f32 %v6959, %v7174
        %v7242 = vadd.f32 %v6960, %v7176
        %v7243 = vadd.f32 %v6961, %v7179
        %v7244 = vadd.f32 %v6962, %v7181
        %v7245 = vadd.f32 %v6963, %v7184
        %v7246 = vadd.f32 %v6964, %v7186
        %v7247 = vadd.f32 %v6965, %v7189
        %v7248 = vadd.f32 %v6966, %v7191
        %v7249 = vadd.f32 %v6967, %v7194
        %v7250 = vadd.f32 %v6968, %v7196
        %v7251 = vadd.f32 %v6969, %v7199
        %v7252 = vadd.f32 %v6970, %v7201
        %v7253 = vadd.f32 %v6971, %v7204
        %v7254 = vadd.f32 %v6972, %v7206
        %v7255 = vadd.f32 %v6973, %v7209
        %v7256 = vadd.f32 %v6974, %v7211
        %v7257 = vadd.f32 %v6975, %v7214
        %v7258 = vadd.f32 %v6976, %v7216
        %v7259 = vadd.f32 %v6977, %v7219
        %v7260 = vadd.f32 %v6978, %v7221
        %v7261 = vadd.f32 %v6979, %v7224
        %v7262 = vadd.f32 %v6980, %v7226
        %v7263 = vadd.f32 %v6981, %v7229
        %v7264 = vadd.f32 %v6982, %v7231
        %7265 = vst [vmem:[#allocation3] sm:$0xff] %v7233
        %7266 = vst [vmem:[#allocation3 + $0x8] sm:$0xff] %v7234
        %7267 = vst [vmem:[#allocation3 + $0x10] sm:$0xff] %v7235
        %7268 = vst [vmem:[#allocation3 + $0x18] sm:$0xff] %v7236
        %7269 = vst [vmem:[#allocation3 + $0x20] sm:$0xff] %v7237
        %7270 = vst [vmem:[#allocation3 + $0x28] sm:$0xff] %v7238
        %7271 = vst [vmem:[#allocation3 + $0x30] sm:$0xff] %v7239
        %7272 = vst [vmem:[#allocation3 + $0x38] sm:$0xff] %v7240
        %7273 = vst [vmem:[#allocation3 + $0x40] sm:$0xff] %v7241
        %7274 = vst [vmem:[#allocation3 + $0x48] sm:$0xff] %v7242
        %7275 = vst [vmem:[#allocation3 + $0x50] sm:$0xff] %v7243
        %7276 = vst [vmem:[#allocation3 + $0x58] sm:$0xff] %v7244
        %7277 = vst [vmem:[#allocation3 + $0x60] sm:$0xff] %v7245
        %7278 = vst [vmem:[#allocation3 + $0x68] sm:$0xff] %v7246
        %7279 = vst [vmem:[#allocation3 + $0x70] sm:$0xff] %v7247
        %7280 = vst [vmem:[#allocation3 + $0x78] sm:$0xff] %v7248
        %7281 = vst [vmem:[#allocation3 + $0x80] sm:$0xff] %v7249
        %7282 = vst [vmem:[#allocation3 + $0x88] sm:$0xff] %v7250
        %7283 = vst [vmem:[#allocation3 + $0x90] sm:$0xff] %v7251
        %7284 = vst [vmem:[#allocation3 + $0x98] sm:$0xff] %v7252
        %7285 = vst [vmem:[#allocation3 + $0xa0] sm:$0xff] %v7253
        %7286 = vst [vmem:[#allocation3 + $0xa8] sm:$0xff] %v7254
        %7287 = vst [vmem:[#allocation3 + $0xb0] sm:$0xff] %v7255
        %7288 = vst [vmem:[#allocation3 + $0xb8] sm:$0xff] %v7256
        %7289 = vst [vmem:[#allocation3 + $0xc0] sm:$0xff] %v7257
        %7290 = vst [vmem:[#allocation3 + $0xc8] sm:$0xff] %v7258
        %7291 = vst [vmem:[#allocation3 + $0xd0] sm:$0xff] %v7259
        %7292 = vst [vmem:[#allocation3 + $0xd8] sm:$0xff] %v7260
        %7293 = vst [vmem:[#allocation3 + $0xe0] sm:$0xff] %v7261
        %7294 = vst [vmem:[#allocation3 + $0xe8] sm:$0xff] %v7262
        %7295 = vst [vmem:[#allocation3 + $0xf0] sm:$0xff] %v7263
        %7296 = vst [vmem:[#allocation3 + $0xf8] sm:$0xff] %v7264
        %v7297 = vld [vmem:[#allocation2 + $0x8] sm:$0xf]
        %v7298 = vld [vmem:[#allocation2 + $0xc] sm:$0xf]
        %v7299 = vld [vmem:[#allocation2 + $0x10] sm:$0x1]
        %v7300 = vld [vmem:[#allocation2 + $0x20] sm:$0xf]
        %v7301 = vld [vmem:[#allocation2 + $0x24] sm:$0xf]
        %v7302 = vld [vmem:[#allocation2 + $0x28] sm:$0x1]
        %v7303 = vld [vmem:[#allocation2 + $0x38] sm:$0xf]
        %v7304 = vld [vmem:[#allocation2 + $0x3c] sm:$0xf]
        %v7305 = vld [vmem:[#allocation2 + $0x40] sm:$0x1]
        %v7306 = vld [vmem:[#allocation2 + $0x50] sm:$0xf]
        %v7307 = vld [vmem:[#allocation2 + $0x54] sm:$0xf]
        %v7308 = vld [vmem:[#allocation2 + $0x58] sm:$0x1]
        %v7309 = vld [vmem:[#allocation2 + $0x68] sm:$0xf]
        %v7310 = vld [vmem:[#allocation2 + $0x6c] sm:$0xf]
        %v7311 = vld [vmem:[#allocation2 + $0x70] sm:$0x1]
        %v7312 = vld [vmem:[#allocation2 + $0x80] sm:$0xf]
        %v7313 = vld [vmem:[#allocation2 + $0x84] sm:$0xf]
        %v7314 = vld [vmem:[#allocation2 + $0x88] sm:$0x1]
        %v7315 = vld [vmem:[#allocation2 + $0x98] sm:$0xf]
        %v7316 = vld [vmem:[#allocation2 + $0x9c] sm:$0xf]
        %v7317 = vld [vmem:[#allocation2 + $0xa0] sm:$0x1]
        %v7318 = vld [vmem:[#allocation2 + $0xb0] sm:$0xf]
        %v7319 = vld [vmem:[#allocation2 + $0xb4] sm:$0xf]
        %v7320 = vld [vmem:[#allocation2 + $0xb8] sm:$0x1]
        %v7321 = vld [vmem:[#allocation2 + $0xc8] sm:$0xf]
        %v7322 = vld [vmem:[#allocation2 + $0xcc] sm:$0xf]
        %v7323 = vld [vmem:[#allocation2 + $0xd0] sm:$0x1]
        %v7324 = vld [vmem:[#allocation2 + $0xe0] sm:$0xf]
        %v7325 = vld [vmem:[#allocation2 + $0xe4] sm:$0xf]
        %v7326 = vld [vmem:[#allocation2 + $0xe8] sm:$0x1]
        %v7327 = vld [vmem:[#allocation2 + $0xf8] sm:$0xf]
        %v7328 = vld [vmem:[#allocation2 + $0xfc] sm:$0xf]
        %v7329 = vld [vmem:[#allocation2 + $0x100] sm:$0x1]
        %v7330 = vld [vmem:[#allocation2 + $0x110] sm:$0xf]
        %v7331 = vld [vmem:[#allocation2 + $0x114] sm:$0xf]
        %v7332 = vld [vmem:[#allocation2 + $0x118] sm:$0x1]
        %v7333 = vld [vmem:[#allocation2 + $0x128] sm:$0xf]
        %v7334 = vld [vmem:[#allocation2 + $0x12c] sm:$0xf]
        %v7335 = vld [vmem:[#allocation2 + $0x130] sm:$0x1]
        %v7336 = vld [vmem:[#allocation2 + $0x140] sm:$0xf]
        %v7337 = vld [vmem:[#allocation2 + $0x144] sm:$0xf]
        %v7338 = vld [vmem:[#allocation2 + $0x148] sm:$0x1]
        %v7339 = vld [vmem:[#allocation2 + $0x158] sm:$0xf]
        %v7340 = vld [vmem:[#allocation2 + $0x15c] sm:$0xf]
        %v7341 = vld [vmem:[#allocation2 + $0x160] sm:$0x1]
        %v7342 = vld [vmem:[#allocation2 + $0x170] sm:$0xf]
        %v7343 = vld [vmem:[#allocation2 + $0x174] sm:$0xf]
        %v7344 = vld [vmem:[#allocation2 + $0x178] sm:$0x1]
        %v7346 = vshrl.u32 %v7297, 16
        %v7348 = vrot.slane %v7346, 4
        %v7349 = vshll.u32 %v7297, 16
        %v7351 = vrot.slane %v7349, 5
        %v7352 = vor.u32 %v7348, %v7351
        %v7353 = vrot.slane %v7352, 4
        %v7355 = vshll.u32 %v7298, 16
        %v7357 = vrot.slane %v7355, 5
        %v7358 = vsel %vm1634, %v7353, %v7357
        %v7359 = vshrl.u32 %v7298, 16
        %v7361 = vrot.slane %v7359, 4
        %v7362 = vor.u32 %v7361, %v7357
        %v7363 = vrot.slane %v7362, 4
        %v7365 = vshll.u32 %v7299, 16
        %v7367 = vrot.slane %v7365, 5
        %v7368 = vsel %vm1634, %v7363, %v7367
        %v7370 = vshrl.u32 %v7300, 16
        %v7372 = vrot.slane %v7370, 4
        %v7373 = vshll.u32 %v7300, 16
        %v7375 = vrot.slane %v7373, 5
        %v7376 = vor.u32 %v7372, %v7375
        %v7377 = vrot.slane %v7376, 4
        %v7379 = vshll.u32 %v7301, 16
        %v7381 = vrot.slane %v7379, 5
        %v7382 = vsel %vm1634, %v7377, %v7381
        %v7383 = vshrl.u32 %v7301, 16
        %v7385 = vrot.slane %v7383, 4
        %v7386 = vor.u32 %v7385, %v7381
        %v7387 = vrot.slane %v7386, 4
        %v7389 = vshll.u32 %v7302, 16
        %v7391 = vrot.slane %v7389, 5
        %v7392 = vsel %vm1634, %v7387, %v7391
        %v7394 = vshrl.u32 %v7303, 16
        %v7396 = vrot.slane %v7394, 4
        %v7397 = vshll.u32 %v7303, 16
        %v7399 = vrot.slane %v7397, 5
        %v7400 = vor.u32 %v7396, %v7399
        %v7401 = vrot.slane %v7400, 4
        %v7403 = vshll.u32 %v7304, 16
        %v7405 = vrot.slane %v7403, 5
        %v7406 = vsel %vm1634, %v7401, %v7405
        %v7407 = vshrl.u32 %v7304, 16
        %v7409 = vrot.slane %v7407, 4
        %v7410 = vor.u32 %v7409, %v7405
        %v7411 = vrot.slane %v7410, 4
        %v7413 = vshll.u32 %v7305, 16
        %v7415 = vrot.slane %v7413, 5
        %v7416 = vsel %vm1634, %v7411, %v7415
        %v7418 = vshrl.u32 %v7306, 16
        %v7420 = vrot.slane %v7418, 4
        %v7421 = vshll.u32 %v7306, 16
        %v7423 = vrot.slane %v7421, 5
        %v7424 = vor.u32 %v7420, %v7423
        %v7425 = vrot.slane %v7424, 4
        %v7427 = vshll.u32 %v7307, 16
        %v7429 = vrot.slane %v7427, 5
        %v7430 = vsel %vm1634, %v7425, %v7429
        %v7431 = vshrl.u32 %v7307, 16
        %v7433 = vrot.slane %v7431, 4
        %v7434 = vor.u32 %v7433, %v7429
        %v7435 = vrot.slane %v7434, 4
        %v7437 = vshll.u32 %v7308, 16
        %v7439 = vrot.slane %v7437, 5
        %v7440 = vsel %vm1634, %v7435, %v7439
        %v7442 = vshrl.u32 %v7309, 16
        %v7444 = vrot.slane %v7442, 4
        %v7445 = vshll.u32 %v7309, 16
        %v7447 = vrot.slane %v7445, 5
        %v7448 = vor.u32 %v7444, %v7447
        %v7449 = vrot.slane %v7448, 4
        %v7451 = vshll.u32 %v7310, 16
        %v7453 = vrot.slane %v7451, 5
        %v7454 = vsel %vm1634, %v7449, %v7453
        %v7455 = vshrl.u32 %v7310, 16
        %v7457 = vrot.slane %v7455, 4
        %v7458 = vor.u32 %v7457, %v7453
        %v7459 = vrot.slane %v7458, 4
        %v7461 = vshll.u32 %v7311, 16
        %v7463 = vrot.slane %v7461, 5
        %v7464 = vsel %vm1634, %v7459, %v7463
        %v7466 = vshrl.u32 %v7312, 16
        %v7468 = vrot.slane %v7466, 4
        %v7469 = vshll.u32 %v7312, 16
        %v7471 = vrot.slane %v7469, 5
        %v7472 = vor.u32 %v7468, %v7471
        %v7473 = vrot.slane %v7472, 4
        %v7475 = vshll.u32 %v7313, 16
        %v7477 = vrot.slane %v7475, 5
        %v7478 = vsel %vm1634, %v7473, %v7477
        %v7479 = vshrl.u32 %v7313, 16
        %v7481 = vrot.slane %v7479, 4
        %v7482 = vor.u32 %v7481, %v7477
        %v7483 = vrot.slane %v7482, 4
        %v7485 = vshll.u32 %v7314, 16
        %v7487 = vrot.slane %v7485, 5
        %v7488 = vsel %vm1634, %v7483, %v7487
        %v7490 = vshrl.u32 %v7315, 16
        %v7492 = vrot.slane %v7490, 4
        %v7493 = vshll.u32 %v7315, 16
        %v7495 = vrot.slane %v7493, 5
        %v7496 = vor.u32 %v7492, %v7495
        %v7497 = vrot.slane %v7496, 4
        %v7499 = vshll.u32 %v7316, 16
        %v7501 = vrot.slane %v7499, 5
        %v7502 = vsel %vm1634, %v7497, %v7501
        %v7503 = vshrl.u32 %v7316, 16
        %v7505 = vrot.slane %v7503, 4
        %v7506 = vor.u32 %v7505, %v7501
        %v7507 = vrot.slane %v7506, 4
        %v7509 = vshll.u32 %v7317, 16
        %v7511 = vrot.slane %v7509, 5
        %v7512 = vsel %vm1634, %v7507, %v7511
        %v7514 = vshrl.u32 %v7318, 16
        %v7516 = vrot.slane %v7514, 4
        %v7517 = vshll.u32 %v7318, 16
        %v7519 = vrot.slane %v7517, 5
        %v7520 = vor.u32 %v7516, %v7519
        %v7521 = vrot.slane %v7520, 4
        %v7523 = vshll.u32 %v7319, 16
        %v7525 = vrot.slane %v7523, 5
        %v7526 = vsel %vm1634, %v7521, %v7525
        %v7527 = vshrl.u32 %v7319, 16
        %v7529 = vrot.slane %v7527, 4
        %v7530 = vor.u32 %v7529, %v7525
        %v7531 = vrot.slane %v7530, 4
        %v7533 = vshll.u32 %v7320, 16
        %v7535 = vrot.slane %v7533, 5
        %v7536 = vsel %vm1634, %v7531, %v7535
        %v7538 = vshrl.u32 %v7321, 16
        %v7540 = vrot.slane %v7538, 4
        %v7541 = vshll.u32 %v7321, 16
        %v7543 = vrot.slane %v7541, 5
        %v7544 = vor.u32 %v7540, %v7543
        %v7545 = vrot.slane %v7544, 4
        %v7547 = vshll.u32 %v7322, 16
        %v7549 = vrot.slane %v7547, 5
        %v7550 = vsel %vm1634, %v7545, %v7549
        %v7551 = vshrl.u32 %v7322, 16
        %v7553 = vrot.slane %v7551, 4
        %v7554 = vor.u32 %v7553, %v7549
        %v7555 = vrot.slane %v7554, 4
        %v7557 = vshll.u32 %v7323, 16
        %v7559 = vrot.slane %v7557, 5
        %v7560 = vsel %vm1634, %v7555, %v7559
        %v7562 = vshrl.u32 %v7324, 16
        %v7564 = vrot.slane %v7562, 4
        %v7565 = vshll.u32 %v7324, 16
        %v7567 = vrot.slane %v7565, 5
        %v7568 = vor.u32 %v7564, %v7567
        %v7569 = vrot.slane %v7568, 4
        %v7571 = vshll.u32 %v7325, 16
        %v7573 = vrot.slane %v7571, 5
        %v7574 = vsel %vm1634, %v7569, %v7573
        %v7575 = vshrl.u32 %v7325, 16
        %v7577 = vrot.slane %v7575, 4
        %v7578 = vor.u32 %v7577, %v7573
        %v7579 = vrot.slane %v7578, 4
        %v7581 = vshll.u32 %v7326, 16
        %v7583 = vrot.slane %v7581, 5
        %v7584 = vsel %vm1634, %v7579, %v7583
        %v7586 = vshrl.u32 %v7327, 16
        %v7588 = vrot.slane %v7586, 4
        %v7589 = vshll.u32 %v7327, 16
        %v7591 = vrot.slane %v7589, 5
        %v7592 = vor.u32 %v7588, %v7591
        %v7593 = vrot.slane %v7592, 4
        %v7595 = vshll.u32 %v7328, 16
        %v7597 = vrot.slane %v7595, 5
        %v7598 = vsel %vm1634, %v7593, %v7597
        %v7599 = vshrl.u32 %v7328, 16
        %v7601 = vrot.slane %v7599, 4
        %v7602 = vor.u32 %v7601, %v7597
        %v7603 = vrot.slane %v7602, 4
        %v7605 = vshll.u32 %v7329, 16
        %v7607 = vrot.slane %v7605, 5
        %v7608 = vsel %vm1634, %v7603, %v7607
        %v7610 = vshrl.u32 %v7330, 16
        %v7612 = vrot.slane %v7610, 4
        %v7613 = vshll.u32 %v7330, 16
        %v7615 = vrot.slane %v7613, 5
        %v7616 = vor.u32 %v7612, %v7615
        %v7617 = vrot.slane %v7616, 4
        %v7619 = vshll.u32 %v7331, 16
        %v7621 = vrot.slane %v7619, 5
        %v7622 = vsel %vm1634, %v7617, %v7621
        %v7623 = vshrl.u32 %v7331, 16
        %v7625 = vrot.slane %v7623, 4
        %v7626 = vor.u32 %v7625, %v7621
        %v7627 = vrot.slane %v7626, 4
        %v7629 = vshll.u32 %v7332, 16
        %v7631 = vrot.slane %v7629, 5
        %v7632 = vsel %vm1634, %v7627, %v7631
        %v7634 = vshrl.u32 %v7333, 16
        %v7636 = vrot.slane %v7634, 4
        %v7637 = vshll.u32 %v7333, 16
        %v7639 = vrot.slane %v7637, 5
        %v7640 = vor.u32 %v7636, %v7639
        %v7641 = vrot.slane %v7640, 4
        %v7643 = vshll.u32 %v7334, 16
        %v7645 = vrot.slane %v7643, 5
        %v7646 = vsel %vm1634, %v7641, %v7645
        %v7647 = vshrl.u32 %v7334, 16
        %v7649 = vrot.slane %v7647, 4
        %v7650 = vor.u32 %v7649, %v7645
        %v7651 = vrot.slane %v7650, 4
        %v7653 = vshll.u32 %v7335, 16
        %v7655 = vrot.slane %v7653, 5
        %v7656 = vsel %vm1634, %v7651, %v7655
        %v7658 = vshrl.u32 %v7336, 16
        %v7660 = vrot.slane %v7658, 4
        %v7661 = vshll.u32 %v7336, 16
        %v7663 = vrot.slane %v7661, 5
        %v7664 = vor.u32 %v7660, %v7663
        %v7665 = vrot.slane %v7664, 4
        %v7667 = vshll.u32 %v7337, 16
        %v7669 = vrot.slane %v7667, 5
        %v7670 = vsel %vm1634, %v7665, %v7669
        %v7671 = vshrl.u32 %v7337, 16
        %v7673 = vrot.slane %v7671, 4
        %v7674 = vor.u32 %v7673, %v7669
        %v7675 = vrot.slane %v7674, 4
        %v7677 = vshll.u32 %v7338, 16
        %v7679 = vrot.slane %v7677, 5
        %v7680 = vsel %vm1634, %v7675, %v7679
        %v7682 = vshrl.u32 %v7339, 16
        %v7684 = vrot.slane %v7682, 4
        %v7685 = vshll.u32 %v7339, 16
        %v7687 = vrot.slane %v7685, 5
        %v7688 = vor.u32 %v7684, %v7687
        %v7689 = vrot.slane %v7688, 4
        %v7691 = vshll.u32 %v7340, 16
        %v7693 = vrot.slane %v7691, 5
        %v7694 = vsel %vm1634, %v7689, %v7693
        %v7695 = vshrl.u32 %v7340, 16
        %v7697 = vrot.slane %v7695, 4
        %v7698 = vor.u32 %v7697, %v7693
        %v7699 = vrot.slane %v7698, 4
        %v7701 = vshll.u32 %v7341, 16
        %v7703 = vrot.slane %v7701, 5
        %v7704 = vsel %vm1634, %v7699, %v7703
        %v7706 = vshrl.u32 %v7342, 16
        %v7708 = vrot.slane %v7706, 4
        %v7709 = vshll.u32 %v7342, 16
        %v7711 = vrot.slane %v7709, 5
        %v7712 = vor.u32 %v7708, %v7711
        %v7713 = vrot.slane %v7712, 4
        %v7715 = vshll.u32 %v7343, 16
        %v7717 = vrot.slane %v7715, 5
        %v7718 = vsel %vm1634, %v7713, %v7717
        %v7719 = vshrl.u32 %v7343, 16
        %v7721 = vrot.slane %v7719, 4
        %v7722 = vor.u32 %v7721, %v7717
        %v7723 = vrot.slane %v7722, 4
        %v7725 = vshll.u32 %v7344, 16
        %v7727 = vrot.slane %v7725, 5
        %v7728 = vsel %vm1634, %v7723, %v7727
        %v7729 = vld [vmem:[#allocation3] sm:$0xff]
        %v7730 = vld [vmem:[#allocation3 + $0x8] sm:$0xff]
        %v7731 = vld [vmem:[#allocation3 + $0x10] sm:$0xff]
        %v7732 = vld [vmem:[#allocation3 + $0x18] sm:$0xff]
        %v7733 = vld [vmem:[#allocation3 + $0x20] sm:$0xff]
        %v7734 = vld [vmem:[#allocation3 + $0x28] sm:$0xff]
        %v7735 = vld [vmem:[#allocation3 + $0x30] sm:$0xff]
        %v7736 = vld [vmem:[#allocation3 + $0x38] sm:$0xff]
        %v7737 = vld [vmem:[#allocation3 + $0x40] sm:$0xff]
        %v7738 = vld [vmem:[#allocation3 + $0x48] sm:$0xff]
        %v7739 = vld [vmem:[#allocation3 + $0x50] sm:$0xff]
        %v7740 = vld [vmem:[#allocation3 + $0x58] sm:$0xff]
        %v7741 = vld [vmem:[#allocation3 + $0x60] sm:$0xff]
        %v7742 = vld [vmem:[#allocation3 + $0x68] sm:$0xff]
        %v7743 = vld [vmem:[#allocation3 + $0x70] sm:$0xff]
        %v7744 = vld [vmem:[#allocation3 + $0x78] sm:$0xff]
        %v7745 = vld [vmem:[#allocation3 + $0x80] sm:$0xff]
        %v7746 = vld [vmem:[#allocation3 + $0x88] sm:$0xff]
        %v7747 = vld [vmem:[#allocation3 + $0x90] sm:$0xff]
        %v7748 = vld [vmem:[#allocation3 + $0x98] sm:$0xff]
        %v7749 = vld [vmem:[#allocation3 + $0xa0] sm:$0xff]
        %v7750 = vld [vmem:[#allocation3 + $0xa8] sm:$0xff]
        %v7751 = vld [vmem:[#allocation3 + $0xb0] sm:$0xff]
        %v7752 = vld [vmem:[#allocation3 + $0xb8] sm:$0xff]
        %v7753 = vld [vmem:[#allocation3 + $0xc0] sm:$0xff]
        %v7754 = vld [vmem:[#allocation3 + $0xc8] sm:$0xff]
        %v7755 = vld [vmem:[#allocation3 + $0xd0] sm:$0xff]
        %v7756 = vld [vmem:[#allocation3 + $0xd8] sm:$0xff]
        %v7757 = vld [vmem:[#allocation3 + $0xe0] sm:$0xff]
        %v7758 = vld [vmem:[#allocation3 + $0xe8] sm:$0xff]
        %v7759 = vld [vmem:[#allocation3 + $0xf0] sm:$0xff]
        %v7760 = vld [vmem:[#allocation3 + $0xf8] sm:$0xff]
        %s7761 = scalar_lea.vmem [#allocation9], 128
        %v7762 = vld [vmem:[%s7761] sm:$0xf]
        %v7763 = vld [vmem:[%s7761 + $0x4] sm:$0xf]
        %v7764 = vld [vmem:[%s7761 + $0x8] sm:$0xf]
        %v7765 = vld [vmem:[%s7761 + $0xc] sm:$0xf]
        %v7766 = vld [vmem:[%s7761 + $0x10] sm:$0xf]
        %v7767 = vld [vmem:[%s7761 + $0x14] sm:$0xf]
        %v7768 = vld [vmem:[%s7761 + $0x18] sm:$0xf]
        %v7769 = vld [vmem:[%s7761 + $0x1c] sm:$0xf]
        %v7770 = vld [vmem:[%s7761 + $0x20] sm:$0xf]
        %v7771 = vld [vmem:[%s7761 + $0x24] sm:$0xf]
        %v7772 = vld [vmem:[%s7761 + $0x28] sm:$0xf]
        %v7773 = vld [vmem:[%s7761 + $0x2c] sm:$0xf]
        %v7774 = vld [vmem:[%s7761 + $0x30] sm:$0xf]
        %v7775 = vld [vmem:[%s7761 + $0x34] sm:$0xf]
        %v7776 = vld [vmem:[%s7761 + $0x38] sm:$0xf]
        %v7777 = vld [vmem:[%s7761 + $0x3c] sm:$0xf]
        %v7778 = vunpack.c.l.b16 %v7358
        %v7779 = vunpack.c.l.b16 %v7368
        %v7780 = vunpack.c.l.b16 %v7382
        %v7781 = vunpack.c.l.b16 %v7392
        %v7782 = vunpack.c.l.b16 %v7406
        %v7783 = vunpack.c.l.b16 %v7416
        %v7784 = vunpack.c.l.b16 %v7430
        %v7785 = vunpack.c.l.b16 %v7440
        %v7786 = vunpack.c.l.b16 %v7454
        %v7787 = vunpack.c.l.b16 %v7464
        %v7788 = vunpack.c.l.b16 %v7478
        %v7789 = vunpack.c.l.b16 %v7488
        %v7790 = vunpack.c.l.b16 %v7502
        %v7791 = vunpack.c.l.b16 %v7512
        %v7792 = vunpack.c.l.b16 %v7526
        %v7793 = vunpack.c.l.b16 %v7536
        %v7794 = vunpack.c.l.b16 %v7550
        %v7795 = vunpack.c.l.b16 %v7560
        %v7796 = vunpack.c.l.b16 %v7574
        %v7797 = vunpack.c.l.b16 %v7584
        %v7798 = vunpack.c.l.b16 %v7598
        %v7799 = vunpack.c.l.b16 %v7608
        %v7800 = vunpack.c.l.b16 %v7622
        %v7801 = vunpack.c.l.b16 %v7632
        %v7802 = vunpack.c.l.b16 %v7646
        %v7803 = vunpack.c.l.b16 %v7656
        %v7804 = vunpack.c.l.b16 %v7670
        %v7805 = vunpack.c.l.b16 %v7680
        %v7806 = vunpack.c.l.b16 %v7694
        %v7807 = vunpack.c.l.b16 %v7704
        %v7808 = vunpack.c.l.b16 %v7718
        %v7809 = vunpack.c.l.b16 %v7728
        %v7810 = vpack.c.b16 %v7779, %v7778
        %v7811 = vpack.c.b16 %v7781, %v7780
        %v7812 = vpack.c.b16 %v7783, %v7782
        %v7813 = vpack.c.b16 %v7785, %v7784
        %v7814 = vpack.c.b16 %v7787, %v7786
        %v7815 = vpack.c.b16 %v7789, %v7788
        %v7816 = vpack.c.b16 %v7791, %v7790
        %v7817 = vpack.c.b16 %v7793, %v7792
        %v7818 = vpack.c.b16 %v7795, %v7794
        %v7819 = vpack.c.b16 %v7797, %v7796
        %v7820 = vpack.c.b16 %v7799, %v7798
        %v7821 = vpack.c.b16 %v7801, %v7800
        %v7822 = vpack.c.b16 %v7803, %v7802
        %v7823 = vpack.c.b16 %v7805, %v7804
        %v7824 = vpack.c.b16 %v7807, %v7806
        %v7825 = vpack.c.b16 %v7809, %v7808
        %v7858 = vunpack.c.l.b16 %v7762
        %v7859 = vunpack.c.l.b16 %v7763
        %v7860 = vunpack.c.l.b16 %v7764
        %v7861 = vunpack.c.l.b16 %v7765
        %v7862 = vunpack.c.l.b16 %v7766
        %v7863 = vunpack.c.l.b16 %v7767
        %v7864 = vunpack.c.l.b16 %v7768
        %v7865 = vunpack.c.l.b16 %v7769
        %v7866 = vunpack.c.l.b16 %v7770
        %v7867 = vunpack.c.l.b16 %v7771
        %v7868 = vunpack.c.l.b16 %v7772
        %v7869 = vunpack.c.l.b16 %v7773
        %v7870 = vunpack.c.l.b16 %v7774
        %v7871 = vunpack.c.l.b16 %v7775
        %v7872 = vunpack.c.l.b16 %v7776
        %v7873 = vunpack.c.l.b16 %v7777
        %v7874 = vpack.c.b16 %v7859, %v7858
        %v7875 = vpack.c.b16 %v7861, %v7860
        %v7876 = vpack.c.b16 %v7863, %v7862
        %v7877 = vpack.c.b16 %v7865, %v7864
        %v7878 = vpack.c.b16 %v7867, %v7866
        %v7879 = vpack.c.b16 %v7869, %v7868
        %v7880 = vpack.c.b16 %v7871, %v7870
        %v7881 = vpack.c.b16 %v7873, %v7872
        %7890 = vmatpush.bf16.msra.mxu0 %v7881
        %7891 = vmatpush.bf16.msra.mxu0 %v7880
        %7892 = vmatpush.bf16.msra.mxu0 %v7879
        %7893 = vmatpush.bf16.msra.mxu0 %v7878
        %7894 = vmatpush.bf16.msra.mxu0 %v7877
        %7895 = vmatpush.bf16.msra.mxu0 %v7876
        %7896 = vmatpush.bf16.msra.mxu0 %v7875
        %7897 = vmatpush.bf16.msra.mxu0 %v7874
        %7898 = vmatmul.bf16.gmra.mxu0 %v7810
        %v7899 = vpop.f32.mrf.mxu0
        %v7900 = vadd.f32 0.0, %v7899
        %v7901 = vpop.f32.mrf.mxu0
        %v7902 = vadd.f32 0.0, %v7901
        %7903 = vmatmul.bf16.gmra.mxu0 %v7811
        %v7904 = vpop.f32.mrf.mxu0
        %v7905 = vadd.f32 0.0, %v7904
        %v7906 = vpop.f32.mrf.mxu0
        %v7907 = vadd.f32 0.0, %v7906
        %7908 = vmatmul.bf16.gmra.mxu0 %v7812
        %v7909 = vpop.f32.mrf.mxu0
        %v7910 = vadd.f32 0.0, %v7909
        %v7911 = vpop.f32.mrf.mxu0
        %v7912 = vadd.f32 0.0, %v7911
        %7913 = vmatmul.bf16.gmra.mxu0 %v7813
        %v7914 = vpop.f32.mrf.mxu0
        %v7915 = vadd.f32 0.0, %v7914
        %v7916 = vpop.f32.mrf.mxu0
        %v7917 = vadd.f32 0.0, %v7916
        %7918 = vmatmul.bf16.gmra.mxu0 %v7814
        %v7919 = vpop.f32.mrf.mxu0
        %v7920 = vadd.f32 0.0, %v7919
        %v7921 = vpop.f32.mrf.mxu0
        %v7922 = vadd.f32 0.0, %v7921
        %7923 = vmatmul.bf16.gmra.mxu0 %v7815
        %v7924 = vpop.f32.mrf.mxu0
        %v7925 = vadd.f32 0.0, %v7924
        %v7926 = vpop.f32.mrf.mxu0
        %v7927 = vadd.f32 0.0, %v7926
        %7928 = vmatmul.bf16.gmra.mxu0 %v7816
        %v7929 = vpop.f32.mrf.mxu0
        %v7930 = vadd.f32 0.0, %v7929
        %v7931 = vpop.f32.mrf.mxu0
        %v7932 = vadd.f32 0.0, %v7931
        %7933 = vmatmul.bf16.gmra.mxu0 %v7817
        %v7934 = vpop.f32.mrf.mxu0
        %v7935 = vadd.f32 0.0, %v7934
        %v7936 = vpop.f32.mrf.mxu0
        %v7937 = vadd.f32 0.0, %v7936
        %7938 = vmatmul.bf16.gmra.mxu0 %v7818
        %v7939 = vpop.f32.mrf.mxu0
        %v7940 = vadd.f32 0.0, %v7939
        %v7941 = vpop.f32.mrf.mxu0
        %v7942 = vadd.f32 0.0, %v7941
        %7943 = vmatmul.bf16.gmra.mxu0 %v7819
        %v7944 = vpop.f32.mrf.mxu0
        %v7945 = vadd.f32 0.0, %v7944
        %v7946 = vpop.f32.mrf.mxu0
        %v7947 = vadd.f32 0.0, %v7946
        %7948 = vmatmul.bf16.gmra.mxu0 %v7820
        %v7949 = vpop.f32.mrf.mxu0
        %v7950 = vadd.f32 0.0, %v7949
        %v7951 = vpop.f32.mrf.mxu0
        %v7952 = vadd.f32 0.0, %v7951
        %7953 = vmatmul.bf16.gmra.mxu0 %v7821
        %v7954 = vpop.f32.mrf.mxu0
        %v7955 = vadd.f32 0.0, %v7954
        %v7956 = vpop.f32.mrf.mxu0
        %v7957 = vadd.f32 0.0, %v7956
        %7958 = vmatmul.bf16.gmra.mxu0 %v7822
        %v7959 = vpop.f32.mrf.mxu0
        %v7960 = vadd.f32 0.0, %v7959
        %v7961 = vpop.f32.mrf.mxu0
        %v7962 = vadd.f32 0.0, %v7961
        %7963 = vmatmul.bf16.gmra.mxu0 %v7823
        %v7964 = vpop.f32.mrf.mxu0
        %v7965 = vadd.f32 0.0, %v7964
        %v7966 = vpop.f32.mrf.mxu0
        %v7967 = vadd.f32 0.0, %v7966
        %7968 = vmatmul.bf16.gmra.mxu0 %v7824
        %v7969 = vpop.f32.mrf.mxu0
        %v7970 = vadd.f32 0.0, %v7969
        %v7971 = vpop.f32.mrf.mxu0
        %v7972 = vadd.f32 0.0, %v7971
        %7973 = vmatmul.bf16.gmra.mxu0 %v7825
        %v7974 = vpop.f32.mrf.mxu0
        %v7975 = vadd.f32 0.0, %v7974
        %v7976 = vpop.f32.mrf.mxu0
        %v7977 = vadd.f32 0.0, %v7976
        %7978 = vdwg.mxu0
        %v7979 = vadd.f32 %v7729, %v7900
        %v7980 = vadd.f32 %v7730, %v7902
        %v7981 = vadd.f32 %v7731, %v7905
        %v7982 = vadd.f32 %v7732, %v7907
        %v7983 = vadd.f32 %v7733, %v7910
        %v7984 = vadd.f32 %v7734, %v7912
        %v7985 = vadd.f32 %v7735, %v7915
        %v7986 = vadd.f32 %v7736, %v7917
        %v7987 = vadd.f32 %v7737, %v7920
        %v7988 = vadd.f32 %v7738, %v7922
        %v7989 = vadd.f32 %v7739, %v7925
        %v7990 = vadd.f32 %v7740, %v7927
        %v7991 = vadd.f32 %v7741, %v7930
        %v7992 = vadd.f32 %v7742, %v7932
        %v7993 = vadd.f32 %v7743, %v7935
        %v7994 = vadd.f32 %v7744, %v7937
        %v7995 = vadd.f32 %v7745, %v7940
        %v7996 = vadd.f32 %v7746, %v7942
        %v7997 = vadd.f32 %v7747, %v7945
        %v7998 = vadd.f32 %v7748, %v7947
        %v7999 = vadd.f32 %v7749, %v7950
        %v8000 = vadd.f32 %v7750, %v7952
        %v8001 = vadd.f32 %v7751, %v7955
        %v8002 = vadd.f32 %v7752, %v7957
        %v8003 = vadd.f32 %v7753, %v7960
        %v8004 = vadd.f32 %v7754, %v7962
        %v8005 = vadd.f32 %v7755, %v7965
        %v8006 = vadd.f32 %v7756, %v7967
        %v8007 = vadd.f32 %v7757, %v7970
        %v8008 = vadd.f32 %v7758, %v7972
        %v8009 = vadd.f32 %v7759, %v7975
        %v8010 = vadd.f32 %v7760, %v7977
        %8011 = vst [vmem:[#allocation3] sm:$0xff] %v7979
        %8012 = vst [vmem:[#allocation3 + $0x8] sm:$0xff] %v7980
        %8013 = vst [vmem:[#allocation3 + $0x10] sm:$0xff] %v7981
        %8014 = vst [vmem:[#allocation3 + $0x18] sm:$0xff] %v7982
        %8015 = vst [vmem:[#allocation3 + $0x20] sm:$0xff] %v7983
        %8016 = vst [vmem:[#allocation3 + $0x28] sm:$0xff] %v7984
        %8017 = vst [vmem:[#allocation3 + $0x30] sm:$0xff] %v7985
        %8018 = vst [vmem:[#allocation3 + $0x38] sm:$0xff] %v7986
        %8019 = vst [vmem:[#allocation3 + $0x40] sm:$0xff] %v7987
        %8020 = vst [vmem:[#allocation3 + $0x48] sm:$0xff] %v7988
        %8021 = vst [vmem:[#allocation3 + $0x50] sm:$0xff] %v7989
        %8022 = vst [vmem:[#allocation3 + $0x58] sm:$0xff] %v7990
        %8023 = vst [vmem:[#allocation3 + $0x60] sm:$0xff] %v7991
        %8024 = vst [vmem:[#allocation3 + $0x68] sm:$0xff] %v7992
        %8025 = vst [vmem:[#allocation3 + $0x70] sm:$0xff] %v7993
        %8026 = vst [vmem:[#allocation3 + $0x78] sm:$0xff] %v7994
        %8027 = vst [vmem:[#allocation3 + $0x80] sm:$0xff] %v7995
        %8028 = vst [vmem:[#allocation3 + $0x88] sm:$0xff] %v7996
        %8029 = vst [vmem:[#allocation3 + $0x90] sm:$0xff] %v7997
        %8030 = vst [vmem:[#allocation3 + $0x98] sm:$0xff] %v7998
        %8031 = vst [vmem:[#allocation3 + $0xa0] sm:$0xff] %v7999
        %8032 = vst [vmem:[#allocation3 + $0xa8] sm:$0xff] %v8000
        %8033 = vst [vmem:[#allocation3 + $0xb0] sm:$0xff] %v8001
        %8034 = vst [vmem:[#allocation3 + $0xb8] sm:$0xff] %v8002
        %8035 = vst [vmem:[#allocation3 + $0xc0] sm:$0xff] %v8003
        %8036 = vst [vmem:[#allocation3 + $0xc8] sm:$0xff] %v8004
        %8037 = vst [vmem:[#allocation3 + $0xd0] sm:$0xff] %v8005
        %8038 = vst [vmem:[#allocation3 + $0xd8] sm:$0xff] %v8006
        %8039 = vst [vmem:[#allocation3 + $0xe0] sm:$0xff] %v8007
        %8040 = vst [vmem:[#allocation3 + $0xe8] sm:$0xff] %v8008
        %8041 = vst [vmem:[#allocation3 + $0xf0] sm:$0xff] %v8009
        %8042 = vst [vmem:[#allocation3 + $0xf8] sm:$0xff] %v8010
        %v8043 = vld [vmem:[%s292 + $0x4] sm:$0x8]
        %v8044 = vld [vmem:[%s292 + $0x8] sm:$0xf]
        %v8045 = vld [vmem:[%s292 + $0xc] sm:$0xf]
        %v8046 = vld [vmem:[%s292 + $0x1c] sm:$0x8]
        %v8047 = vld [vmem:[%s292 + $0x20] sm:$0xf]
        %v8048 = vld [vmem:[%s292 + $0x24] sm:$0xf]
        %v8049 = vld [vmem:[%s292 + $0x34] sm:$0x8]
        %v8050 = vld [vmem:[%s292 + $0x38] sm:$0xf]
        %v8051 = vld [vmem:[%s292 + $0x3c] sm:$0xf]
        %v8052 = vld [vmem:[%s292 + $0x4c] sm:$0x8]
        %v8053 = vld [vmem:[%s292 + $0x50] sm:$0xf]
        %v8054 = vld [vmem:[%s292 + $0x54] sm:$0xf]
        %v8055 = vld [vmem:[%s292 + $0x64] sm:$0x8]
        %v8056 = vld [vmem:[%s292 + $0x68] sm:$0xf]
        %v8057 = vld [vmem:[%s292 + $0x6c] sm:$0xf]
        %v8058 = vld [vmem:[%s292 + $0x7c] sm:$0x8]
        %v8059 = vld [vmem:[%s292 + $0x80] sm:$0xf]
        %v8060 = vld [vmem:[%s292 + $0x84] sm:$0xf]
        %v8061 = vld [vmem:[%s292 + $0x94] sm:$0x8]
        %v8062 = vld [vmem:[%s292 + $0x98] sm:$0xf]
        %v8063 = vld [vmem:[%s292 + $0x9c] sm:$0xf]
        %v8064 = vld [vmem:[%s292 + $0xac] sm:$0x8]
        %v8065 = vld [vmem:[%s292 + $0xb0] sm:$0xf]
        %v8066 = vld [vmem:[%s292 + $0xb4] sm:$0xf]
        %v8067 = vld [vmem:[%s292 + $0xc4] sm:$0x8]
        %v8068 = vld [vmem:[%s292 + $0xc8] sm:$0xf]
        %v8069 = vld [vmem:[%s292 + $0xcc] sm:$0xf]
        %v8070 = vld [vmem:[%s292 + $0xdc] sm:$0x8]
        %v8071 = vld [vmem:[%s292 + $0xe0] sm:$0xf]
        %v8072 = vld [vmem:[%s292 + $0xe4] sm:$0xf]
        %v8073 = vld [vmem:[%s292 + $0xf4] sm:$0x8]
        %v8074 = vld [vmem:[%s292 + $0xf8] sm:$0xf]
        %v8075 = vld [vmem:[%s292 + $0xfc] sm:$0xf]
        %v8076 = vld [vmem:[%s292 + $0x10c] sm:$0x8]
        %v8077 = vld [vmem:[%s292 + $0x110] sm:$0xf]
        %v8078 = vld [vmem:[%s292 + $0x114] sm:$0xf]
        %v8079 = vld [vmem:[%s292 + $0x124] sm:$0x8]
        %v8080 = vld [vmem:[%s292 + $0x128] sm:$0xf]
        %v8081 = vld [vmem:[%s292 + $0x12c] sm:$0xf]
        %v8082 = vld [vmem:[%s292 + $0x13c] sm:$0x8]
        %v8083 = vld [vmem:[%s292 + $0x140] sm:$0xf]
        %v8084 = vld [vmem:[%s292 + $0x144] sm:$0xf]
        %v8085 = vld [vmem:[%s292 + $0x154] sm:$0x8]
        %v8086 = vld [vmem:[%s292 + $0x158] sm:$0xf]
        %v8087 = vld [vmem:[%s292 + $0x15c] sm:$0xf]
        %v8088 = vld [vmem:[%s292 + $0x16c] sm:$0x8]
        %v8089 = vld [vmem:[%s292 + $0x170] sm:$0xf]
        %v8090 = vld [vmem:[%s292 + $0x174] sm:$0xf]
        %v8092 = vshrl.u32 %v8043, 16
        %v8094 = vrot.slane %v8092, 7
        %v8095 = vrot.slane %v8094, 4
        %v8097 = vshrl.u32 %v8044, 16
        %v8099 = vrot.slane %v8097, 7
        %v8100 = vshll.u32 %v8044, 16
        %v8102 = vor.u32 %v8099, %v8100
        %v8103 = vsel %vm540, %v8095, %v8102
        %v8104 = vrot.slane %v8099, 4
        %v8106 = vshrl.u32 %v8045, 16
        %v8108 = vrot.slane %v8106, 7
        %v8109 = vshll.u32 %v8045, 16
        %v8111 = vor.u32 %v8108, %v8109
        %v8112 = vsel %vm540, %v8104, %v8111
        %v8114 = vshrl.u32 %v8046, 16
        %v8116 = vrot.slane %v8114, 7
        %v8117 = vrot.slane %v8116, 4
        %v8119 = vshrl.u32 %v8047, 16
        %v8121 = vrot.slane %v8119, 7
        %v8122 = vshll.u32 %v8047, 16
        %v8124 = vor.u32 %v8121, %v8122
        %v8125 = vsel %vm540, %v8117, %v8124
        %v8126 = vrot.slane %v8121, 4
        %v8128 = vshrl.u32 %v8048, 16
        %v8130 = vrot.slane %v8128, 7
        %v8131 = vshll.u32 %v8048, 16
        %v8133 = vor.u32 %v8130, %v8131
        %v8134 = vsel %vm540, %v8126, %v8133
        %v8136 = vshrl.u32 %v8049, 16
        %v8138 = vrot.slane %v8136, 7
        %v8139 = vrot.slane %v8138, 4
        %v8141 = vshrl.u32 %v8050, 16
        %v8143 = vrot.slane %v8141, 7
        %v8144 = vshll.u32 %v8050, 16
        %v8146 = vor.u32 %v8143, %v8144
        %v8147 = vsel %vm540, %v8139, %v8146
        %v8148 = vrot.slane %v8143, 4
        %v8150 = vshrl.u32 %v8051, 16
        %v8152 = vrot.slane %v8150, 7
        %v8153 = vshll.u32 %v8051, 16
        %v8155 = vor.u32 %v8152, %v8153
        %v8156 = vsel %vm540, %v8148, %v8155
        %v8158 = vshrl.u32 %v8052, 16
        %v8160 = vrot.slane %v8158, 7
        %v8161 = vrot.slane %v8160, 4
        %v8163 = vshrl.u32 %v8053, 16
        %v8165 = vrot.slane %v8163, 7
        %v8166 = vshll.u32 %v8053, 16
        %v8168 = vor.u32 %v8165, %v8166
        %v8169 = vsel %vm540, %v8161, %v8168
        %v8170 = vrot.slane %v8165, 4
        %v8172 = vshrl.u32 %v8054, 16
        %v8174 = vrot.slane %v8172, 7
        %v8175 = vshll.u32 %v8054, 16
        %v8177 = vor.u32 %v8174, %v8175
        %v8178 = vsel %vm540, %v8170, %v8177
        %v8180 = vshrl.u32 %v8055, 16
        %v8182 = vrot.slane %v8180, 7
        %v8183 = vrot.slane %v8182, 4
        %v8185 = vshrl.u32 %v8056, 16
        %v8187 = vrot.slane %v8185, 7
        %v8188 = vshll.u32 %v8056, 16
        %v8190 = vor.u32 %v8187, %v8188
        %v8191 = vsel %vm540, %v8183, %v8190
        %v8192 = vrot.slane %v8187, 4
        %v8194 = vshrl.u32 %v8057, 16
        %v8196 = vrot.slane %v8194, 7
        %v8197 = vshll.u32 %v8057, 16
        %v8199 = vor.u32 %v8196, %v8197
        %v8200 = vsel %vm540, %v8192, %v8199
        %v8202 = vshrl.u32 %v8058, 16
        %v8204 = vrot.slane %v8202, 7
        %v8205 = vrot.slane %v8204, 4
        %v8207 = vshrl.u32 %v8059, 16
        %v8209 = vrot.slane %v8207, 7
        %v8210 = vshll.u32 %v8059, 16
        %v8212 = vor.u32 %v8209, %v8210
        %v8213 = vsel %vm540, %v8205, %v8212
        %v8214 = vrot.slane %v8209, 4
        %v8216 = vshrl.u32 %v8060, 16
        %v8218 = vrot.slane %v8216, 7
        %v8219 = vshll.u32 %v8060, 16
        %v8221 = vor.u32 %v8218, %v8219
        %v8222 = vsel %vm540, %v8214, %v8221
        %v8224 = vshrl.u32 %v8061, 16
        %v8226 = vrot.slane %v8224, 7
        %v8227 = vrot.slane %v8226, 4
        %v8229 = vshrl.u32 %v8062, 16
        %v8231 = vrot.slane %v8229, 7
        %v8232 = vshll.u32 %v8062, 16
        %v8234 = vor.u32 %v8231, %v8232
        %v8235 = vsel %vm540, %v8227, %v8234
        %v8236 = vrot.slane %v8231, 4
        %v8238 = vshrl.u32 %v8063, 16
        %v8240 = vrot.slane %v8238, 7
        %v8241 = vshll.u32 %v8063, 16
        %v8243 = vor.u32 %v8240, %v8241
        %v8244 = vsel %vm540, %v8236, %v8243
        %v8246 = vshrl.u32 %v8064, 16
        %v8248 = vrot.slane %v8246, 7
        %v8249 = vrot.slane %v8248, 4
        %v8251 = vshrl.u32 %v8065, 16
        %v8253 = vrot.slane %v8251, 7
        %v8254 = vshll.u32 %v8065, 16
        %v8256 = vor.u32 %v8253, %v8254
        %v8257 = vsel %vm540, %v8249, %v8256
        %v8258 = vrot.slane %v8253, 4
        %v8260 = vshrl.u32 %v8066, 16
        %v8262 = vrot.slane %v8260, 7
        %v8263 = vshll.u32 %v8066, 16
        %v8265 = vor.u32 %v8262, %v8263
        %v8266 = vsel %vm540, %v8258, %v8265
        %v8268 = vshrl.u32 %v8067, 16
        %v8270 = vrot.slane %v8268, 7
        %v8271 = vrot.slane %v8270, 4
        %v8273 = vshrl.u32 %v8068, 16
        %v8275 = vrot.slane %v8273, 7
        %v8276 = vshll.u32 %v8068, 16
        %v8278 = vor.u32 %v8275, %v8276
        %v8279 = vsel %vm540, %v8271, %v8278
        %v8280 = vrot.slane %v8275, 4
        %v8282 = vshrl.u32 %v8069, 16
        %v8284 = vrot.slane %v8282, 7
        %v8285 = vshll.u32 %v8069, 16
        %v8287 = vor.u32 %v8284, %v8285
        %v8288 = vsel %vm540, %v8280, %v8287
        %v8290 = vshrl.u32 %v8070, 16
        %v8292 = vrot.slane %v8290, 7
        %v8293 = vrot.slane %v8292, 4
        %v8295 = vshrl.u32 %v8071, 16
        %v8297 = vrot.slane %v8295, 7
        %v8298 = vshll.u32 %v8071, 16
        %v8300 = vor.u32 %v8297, %v8298
        %v8301 = vsel %vm540, %v8293, %v8300
        %v8302 = vrot.slane %v8297, 4
        %v8304 = vshrl.u32 %v8072, 16
        %v8306 = vrot.slane %v8304, 7
        %v8307 = vshll.u32 %v8072, 16
        %v8309 = vor.u32 %v8306, %v8307
        %v8310 = vsel %vm540, %v8302, %v8309
        %v8312 = vshrl.u32 %v8073, 16
        %v8314 = vrot.slane %v8312, 7
        %v8315 = vrot.slane %v8314, 4
        %v8317 = vshrl.u32 %v8074, 16
        %v8319 = vrot.slane %v8317, 7
        %v8320 = vshll.u32 %v8074, 16
        %v8322 = vor.u32 %v8319, %v8320
        %v8323 = vsel %vm540, %v8315, %v8322
        %v8324 = vrot.slane %v8319, 4
        %v8326 = vshrl.u32 %v8075, 16
        %v8328 = vrot.slane %v8326, 7
        %v8329 = vshll.u32 %v8075, 16
        %v8331 = vor.u32 %v8328, %v8329
        %v8332 = vsel %vm540, %v8324, %v8331
        %v8334 = vshrl.u32 %v8076, 16
        %v8336 = vrot.slane %v8334, 7
        %v8337 = vrot.slane %v8336, 4
        %v8339 = vshrl.u32 %v8077, 16
        %v8341 = vrot.slane %v8339, 7
        %v8342 = vshll.u32 %v8077, 16
        %v8344 = vor.u32 %v8341, %v8342
        %v8345 = vsel %vm540, %v8337, %v8344
        %v8346 = vrot.slane %v8341, 4
        %v8348 = vshrl.u32 %v8078, 16
        %v8350 = vrot.slane %v8348, 7
        %v8351 = vshll.u32 %v8078, 16
        %v8353 = vor.u32 %v8350, %v8351
        %v8354 = vsel %vm540, %v8346, %v8353
        %v8356 = vshrl.u32 %v8079, 16
        %v8358 = vrot.slane %v8356, 7
        %v8359 = vrot.slane %v8358, 4
        %v8361 = vshrl.u32 %v8080, 16
        %v8363 = vrot.slane %v8361, 7
        %v8364 = vshll.u32 %v8080, 16
        %v8366 = vor.u32 %v8363, %v8364
        %v8367 = vsel %vm540, %v8359, %v8366
        %v8368 = vrot.slane %v8363, 4
        %v8370 = vshrl.u32 %v8081, 16
        %v8372 = vrot.slane %v8370, 7
        %v8373 = vshll.u32 %v8081, 16
        %v8375 = vor.u32 %v8372, %v8373
        %v8376 = vsel %vm540, %v8368, %v8375
        %v8378 = vshrl.u32 %v8082, 16
        %v8380 = vrot.slane %v8378, 7
        %v8381 = vrot.slane %v8380, 4
        %v8383 = vshrl.u32 %v8083, 16
        %v8385 = vrot.slane %v8383, 7
        %v8386 = vshll.u32 %v8083, 16
        %v8388 = vor.u32 %v8385, %v8386
        %v8389 = vsel %vm540, %v8381, %v8388
        %v8390 = vrot.slane %v8385, 4
        %v8392 = vshrl.u32 %v8084, 16
        %v8394 = vrot.slane %v8392, 7
        %v8395 = vshll.u32 %v8084, 16
        %v8397 = vor.u32 %v8394, %v8395
        %v8398 = vsel %vm540, %v8390, %v8397
        %v8400 = vshrl.u32 %v8085, 16
        %v8402 = vrot.slane %v8400, 7
        %v8403 = vrot.slane %v8402, 4
        %v8405 = vshrl.u32 %v8086, 16
        %v8407 = vrot.slane %v8405, 7
        %v8408 = vshll.u32 %v8086, 16
        %v8410 = vor.u32 %v8407, %v8408
        %v8411 = vsel %vm540, %v8403, %v8410
        %v8412 = vrot.slane %v8407, 4
        %v8414 = vshrl.u32 %v8087, 16
        %v8416 = vrot.slane %v8414, 7
        %v8417 = vshll.u32 %v8087, 16
        %v8419 = vor.u32 %v8416, %v8417
        %v8420 = vsel %vm540, %v8412, %v8419
        %v8422 = vshrl.u32 %v8088, 16
        %v8424 = vrot.slane %v8422, 7
        %v8425 = vrot.slane %v8424, 4
        %v8427 = vshrl.u32 %v8089, 16
        %v8429 = vrot.slane %v8427, 7
        %v8430 = vshll.u32 %v8089, 16
        %v8432 = vor.u32 %v8429, %v8430
        %v8433 = vsel %vm540, %v8425, %v8432
        %v8434 = vrot.slane %v8429, 4
        %v8436 = vshrl.u32 %v8090, 16
        %v8438 = vrot.slane %v8436, 7
        %v8439 = vshll.u32 %v8090, 16
        %v8441 = vor.u32 %v8438, %v8439
        %v8442 = vsel %vm540, %v8434, %v8441
        %v8443 = vld [vmem:[#allocation3] sm:$0xff]
        %v8444 = vld [vmem:[#allocation3 + $0x8] sm:$0xff]
        %v8445 = vld [vmem:[#allocation3 + $0x10] sm:$0xff]
        %v8446 = vld [vmem:[#allocation3 + $0x18] sm:$0xff]
        %v8447 = vld [vmem:[#allocation3 + $0x20] sm:$0xff]
        %v8448 = vld [vmem:[#allocation3 + $0x28] sm:$0xff]
        %v8449 = vld [vmem:[#allocation3 + $0x30] sm:$0xff]
        %v8450 = vld [vmem:[#allocation3 + $0x38] sm:$0xff]
        %v8451 = vld [vmem:[#allocation3 + $0x40] sm:$0xff]
        %v8452 = vld [vmem:[#allocation3 + $0x48] sm:$0xff]
        %v8453 = vld [vmem:[#allocation3 + $0x50] sm:$0xff]
        %v8454 = vld [vmem:[#allocation3 + $0x58] sm:$0xff]
        %v8455 = vld [vmem:[#allocation3 + $0x60] sm:$0xff]
        %v8456 = vld [vmem:[#allocation3 + $0x68] sm:$0xff]
        %v8457 = vld [vmem:[#allocation3 + $0x70] sm:$0xff]
        %v8458 = vld [vmem:[#allocation3 + $0x78] sm:$0xff]
        %v8459 = vld [vmem:[#allocation3 + $0x80] sm:$0xff]
        %v8460 = vld [vmem:[#allocation3 + $0x88] sm:$0xff]
        %v8461 = vld [vmem:[#allocation3 + $0x90] sm:$0xff]
        %v8462 = vld [vmem:[#allocation3 + $0x98] sm:$0xff]
        %v8463 = vld [vmem:[#allocation3 + $0xa0] sm:$0xff]
        %v8464 = vld [vmem:[#allocation3 + $0xa8] sm:$0xff]
        %v8465 = vld [vmem:[#allocation3 + $0xb0] sm:$0xff]
        %v8466 = vld [vmem:[#allocation3 + $0xb8] sm:$0xff]
        %v8467 = vld [vmem:[#allocation3 + $0xc0] sm:$0xff]
        %v8468 = vld [vmem:[#allocation3 + $0xc8] sm:$0xff]
        %v8469 = vld [vmem:[#allocation3 + $0xd0] sm:$0xff]
        %v8470 = vld [vmem:[#allocation3 + $0xd8] sm:$0xff]
        %v8471 = vld [vmem:[#allocation3 + $0xe0] sm:$0xff]
        %v8472 = vld [vmem:[#allocation3 + $0xe8] sm:$0xff]
        %v8473 = vld [vmem:[#allocation3 + $0xf0] sm:$0xff]
        %v8474 = vld [vmem:[#allocation3 + $0xf8] sm:$0xff]
        %s8475 = scalar_lea.vmem [#allocation9], 192
        %v8476 = vld [vmem:[%s8475] sm:$0xf]
        %v8477 = vld [vmem:[%s8475 + $0x4] sm:$0xf]
        %v8478 = vld [vmem:[%s8475 + $0x8] sm:$0xf]
        %v8479 = vld [vmem:[%s8475 + $0xc] sm:$0xf]
        %v8480 = vld [vmem:[%s8475 + $0x10] sm:$0xf]
        %v8481 = vld [vmem:[%s8475 + $0x14] sm:$0xf]
        %v8482 = vld [vmem:[%s8475 + $0x18] sm:$0xf]
        %v8483 = vld [vmem:[%s8475 + $0x1c] sm:$0xf]
        %v8484 = vld [vmem:[%s8475 + $0x20] sm:$0xf]
        %v8485 = vld [vmem:[%s8475 + $0x24] sm:$0xf]
        %v8486 = vld [vmem:[%s8475 + $0x28] sm:$0xf]
        %v8487 = vld [vmem:[%s8475 + $0x2c] sm:$0xf]
        %v8488 = vld [vmem:[%s8475 + $0x30] sm:$0xf]
        %v8489 = vld [vmem:[%s8475 + $0x34] sm:$0xf]
        %v8490 = vld [vmem:[%s8475 + $0x38] sm:$0xf]
        %v8491 = vld [vmem:[%s8475 + $0x3c] sm:$0xf]
        %v8492 = vunpack.c.l.b16 %v8103
        %v8493 = vunpack.c.l.b16 %v8112
        %v8494 = vunpack.c.l.b16 %v8125
        %v8495 = vunpack.c.l.b16 %v8134
        %v8496 = vunpack.c.l.b16 %v8147
        %v8497 = vunpack.c.l.b16 %v8156
        %v8498 = vunpack.c.l.b16 %v8169
        %v8499 = vunpack.c.l.b16 %v8178
        %v8500 = vunpack.c.l.b16 %v8191
        %v8501 = vunpack.c.l.b16 %v8200
        %v8502 = vunpack.c.l.b16 %v8213
        %v8503 = vunpack.c.l.b16 %v8222
        %v8504 = vunpack.c.l.b16 %v8235
        %v8505 = vunpack.c.l.b16 %v8244
        %v8506 = vunpack.c.l.b16 %v8257
        %v8507 = vunpack.c.l.b16 %v8266
        %v8508 = vunpack.c.l.b16 %v8279
        %v8509 = vunpack.c.l.b16 %v8288
        %v8510 = vunpack.c.l.b16 %v8301
        %v8511 = vunpack.c.l.b16 %v8310
        %v8512 = vunpack.c.l.b16 %v8323
        %v8513 = vunpack.c.l.b16 %v8332
        %v8514 = vunpack.c.l.b16 %v8345
        %v8515 = vunpack.c.l.b16 %v8354
        %v8516 = vunpack.c.l.b16 %v8367
        %v8517 = vunpack.c.l.b16 %v8376
        %v8518 = vunpack.c.l.b16 %v8389
        %v8519 = vunpack.c.l.b16 %v8398
        %v8520 = vunpack.c.l.b16 %v8411
        %v8521 = vunpack.c.l.b16 %v8420
        %v8522 = vunpack.c.l.b16 %v8433
        %v8523 = vunpack.c.l.b16 %v8442
        %v8524 = vpack.c.b16 %v8493, %v8492
        %v8525 = vpack.c.b16 %v8495, %v8494
        %v8526 = vpack.c.b16 %v8497, %v8496
        %v8527 = vpack.c.b16 %v8499, %v8498
        %v8528 = vpack.c.b16 %v8501, %v8500
        %v8529 = vpack.c.b16 %v8503, %v8502
        %v8530 = vpack.c.b16 %v8505, %v8504
        %v8531 = vpack.c.b16 %v8507, %v8506
        %v8532 = vpack.c.b16 %v8509, %v8508
        %v8533 = vpack.c.b16 %v8511, %v8510
        %v8534 = vpack.c.b16 %v8513, %v8512
        %v8535 = vpack.c.b16 %v8515, %v8514
        %v8536 = vpack.c.b16 %v8517, %v8516
        %v8537 = vpack.c.b16 %v8519, %v8518
        %v8538 = vpack.c.b16 %v8521, %v8520
        %v8539 = vpack.c.b16 %v8523, %v8522
        %v8572 = vunpack.c.l.b16 %v8476
        %v8573 = vunpack.c.l.b16 %v8477
        %v8574 = vunpack.c.l.b16 %v8478
        %v8575 = vunpack.c.l.b16 %v8479
        %v8576 = vunpack.c.l.b16 %v8480
        %v8577 = vunpack.c.l.b16 %v8481
        %v8578 = vunpack.c.l.b16 %v8482
        %v8579 = vunpack.c.l.b16 %v8483
        %v8580 = vunpack.c.l.b16 %v8484
        %v8581 = vunpack.c.l.b16 %v8485
        %v8582 = vunpack.c.l.b16 %v8486
        %v8583 = vunpack.c.l.b16 %v8487
        %v8584 = vunpack.c.l.b16 %v8488
        %v8585 = vunpack.c.l.b16 %v8489
        %v8586 = vunpack.c.l.b16 %v8490
        %v8587 = vunpack.c.l.b16 %v8491
        %v8588 = vpack.c.b16 %v8573, %v8572
        %v8589 = vpack.c.b16 %v8575, %v8574
        %v8590 = vpack.c.b16 %v8577, %v8576
        %v8591 = vpack.c.b16 %v8579, %v8578
        %v8592 = vpack.c.b16 %v8581, %v8580
        %v8593 = vpack.c.b16 %v8583, %v8582
        %v8594 = vpack.c.b16 %v8585, %v8584
        %v8595 = vpack.c.b16 %v8587, %v8586
        %8604 = vmatpush.bf16.msra.mxu0 %v8595
        %8605 = vmatpush.bf16.msra.mxu0 %v8594
        %8606 = vmatpush.bf16.msra.mxu0 %v8593
        %8607 = vmatpush.bf16.msra.mxu0 %v8592
        %8608 = vmatpush.bf16.msra.mxu0 %v8591
        %8609 = vmatpush.bf16.msra.mxu0 %v8590
        %8610 = vmatpush.bf16.msra.mxu0 %v8589
        %8611 = vmatpush.bf16.msra.mxu0 %v8588
        %8612 = vmatmul.bf16.gmra.mxu0 %v8524
        %v8613 = vpop.f32.mrf.mxu0
        %v8614 = vadd.f32 0.0, %v8613
        %v8615 = vpop.f32.mrf.mxu0
        %v8616 = vadd.f32 0.0, %v8615
        %8617 = vmatmul.bf16.gmra.mxu0 %v8525
        %v8618 = vpop.f32.mrf.mxu0
        %v8619 = vadd.f32 0.0, %v8618
        %v8620 = vpop.f32.mrf.mxu0
        %v8621 = vadd.f32 0.0, %v8620
        %8622 = vmatmul.bf16.gmra.mxu0 %v8526
        %v8623 = vpop.f32.mrf.mxu0
        %v8624 = vadd.f32 0.0, %v8623
        %v8625 = vpop.f32.mrf.mxu0
        %v8626 = vadd.f32 0.0, %v8625
        %8627 = vmatmul.bf16.gmra.mxu0 %v8527
        %v8628 = vpop.f32.mrf.mxu0
        %v8629 = vadd.f32 0.0, %v8628
        %v8630 = vpop.f32.mrf.mxu0
        %v8631 = vadd.f32 0.0, %v8630
        %8632 = vmatmul.bf16.gmra.mxu0 %v8528
        %v8633 = vpop.f32.mrf.mxu0
        %v8634 = vadd.f32 0.0, %v8633
        %v8635 = vpop.f32.mrf.mxu0
        %v8636 = vadd.f32 0.0, %v8635
        %8637 = vmatmul.bf16.gmra.mxu0 %v8529
        %v8638 = vpop.f32.mrf.mxu0
        %v8639 = vadd.f32 0.0, %v8638
        %v8640 = vpop.f32.mrf.mxu0
        %v8641 = vadd.f32 0.0, %v8640
        %8642 = vmatmul.bf16.gmra.mxu0 %v8530
        %v8643 = vpop.f32.mrf.mxu0
        %v8644 = vadd.f32 0.0, %v8643
        %v8645 = vpop.f32.mrf.mxu0
        %v8646 = vadd.f32 0.0, %v8645
        %8647 = vmatmul.bf16.gmra.mxu0 %v8531
        %v8648 = vpop.f32.mrf.mxu0
        %v8649 = vadd.f32 0.0, %v8648
        %v8650 = vpop.f32.mrf.mxu0
        %v8651 = vadd.f32 0.0, %v8650
        %8652 = vmatmul.bf16.gmra.mxu0 %v8532
        %v8653 = vpop.f32.mrf.mxu0
        %v8654 = vadd.f32 0.0, %v8653
        %v8655 = vpop.f32.mrf.mxu0
        %v8656 = vadd.f32 0.0, %v8655
        %8657 = vmatmul.bf16.gmra.mxu0 %v8533
        %v8658 = vpop.f32.mrf.mxu0
        %v8659 = vadd.f32 0.0, %v8658
        %v8660 = vpop.f32.mrf.mxu0
        %v8661 = vadd.f32 0.0, %v8660
        %8662 = vmatmul.bf16.gmra.mxu0 %v8534
        %v8663 = vpop.f32.mrf.mxu0
        %v8664 = vadd.f32 0.0, %v8663
        %v8665 = vpop.f32.mrf.mxu0
        %v8666 = vadd.f32 0.0, %v8665
        %8667 = vmatmul.bf16.gmra.mxu0 %v8535
        %v8668 = vpop.f32.mrf.mxu0
        %v8669 = vadd.f32 0.0, %v8668
        %v8670 = vpop.f32.mrf.mxu0
        %v8671 = vadd.f32 0.0, %v8670
        %8672 = vmatmul.bf16.gmra.mxu0 %v8536
        %v8673 = vpop.f32.mrf.mxu0
        %v8674 = vadd.f32 0.0, %v8673
        %v8675 = vpop.f32.mrf.mxu0
        %v8676 = vadd.f32 0.0, %v8675
        %8677 = vmatmul.bf16.gmra.mxu0 %v8537
        %v8678 = vpop.f32.mrf.mxu0
        %v8679 = vadd.f32 0.0, %v8678
        %v8680 = vpop.f32.mrf.mxu0
        %v8681 = vadd.f32 0.0, %v8680
        %8682 = vmatmul.bf16.gmra.mxu0 %v8538
        %v8683 = vpop.f32.mrf.mxu0
        %v8684 = vadd.f32 0.0, %v8683
        %v8685 = vpop.f32.mrf.mxu0
        %v8686 = vadd.f32 0.0, %v8685
        %8687 = vmatmul.bf16.gmra.mxu0 %v8539
        %v8688 = vpop.f32.mrf.mxu0
        %v8689 = vadd.f32 0.0, %v8688
        %v8690 = vpop.f32.mrf.mxu0
        %v8691 = vadd.f32 0.0, %v8690
        %8692 = vdwg.mxu0
        %v8693 = vadd.f32 %v8443, %v8614
        %v8694 = vadd.f32 %v8444, %v8616
        %v8695 = vadd.f32 %v8445, %v8619
        %v8696 = vadd.f32 %v8446, %v8621
        %v8697 = vadd.f32 %v8447, %v8624
        %v8698 = vadd.f32 %v8448, %v8626
        %v8699 = vadd.f32 %v8449, %v8629
        %v8700 = vadd.f32 %v8450, %v8631
        %v8701 = vadd.f32 %v8451, %v8634
        %v8702 = vadd.f32 %v8452, %v8636
        %v8703 = vadd.f32 %v8453, %v8639
        %v8704 = vadd.f32 %v8454, %v8641
        %v8705 = vadd.f32 %v8455, %v8644
        %v8706 = vadd.f32 %v8456, %v8646
        %v8707 = vadd.f32 %v8457, %v8649
        %v8708 = vadd.f32 %v8458, %v8651
        %v8709 = vadd.f32 %v8459, %v8654
        %v8710 = vadd.f32 %v8460, %v8656
        %v8711 = vadd.f32 %v8461, %v8659
        %v8712 = vadd.f32 %v8462, %v8661
        %v8713 = vadd.f32 %v8463, %v8664
        %v8714 = vadd.f32 %v8464, %v8666
        %v8715 = vadd.f32 %v8465, %v8669
        %v8716 = vadd.f32 %v8466, %v8671
        %v8717 = vadd.f32 %v8467, %v8674
        %v8718 = vadd.f32 %v8468, %v8676
        %v8719 = vadd.f32 %v8469, %v8679
        %v8720 = vadd.f32 %v8470, %v8681
        %v8721 = vadd.f32 %v8471, %v8684
        %v8722 = vadd.f32 %v8472, %v8686
        %v8723 = vadd.f32 %v8473, %v8689
        %v8724 = vadd.f32 %v8474, %v8691
        %8725 = vst [vmem:[#allocation3] sm:$0xff] %v8693
        %8726 = vst [vmem:[#allocation3 + $0x8] sm:$0xff] %v8694
        %8727 = vst [vmem:[#allocation3 + $0x10] sm:$0xff] %v8695
        %8728 = vst [vmem:[#allocation3 + $0x18] sm:$0xff] %v8696
        %8729 = vst [vmem:[#allocation3 + $0x20] sm:$0xff] %v8697
        %8730 = vst [vmem:[#allocation3 + $0x28] sm:$0xff] %v8698
        %8731 = vst [vmem:[#allocation3 + $0x30] sm:$0xff] %v8699
        %8732 = vst [vmem:[#allocation3 + $0x38] sm:$0xff] %v8700
        %8733 = vst [vmem:[#allocation3 + $0x40] sm:$0xff] %v8701
        %8734 = vst [vmem:[#allocation3 + $0x48] sm:$0xff] %v8702
        %8735 = vst [vmem:[#allocation3 + $0x50] sm:$0xff] %v8703
        %8736 = vst [vmem:[#allocation3 + $0x58] sm:$0xff] %v8704
        %8737 = vst [vmem:[#allocation3 + $0x60] sm:$0xff] %v8705
        %8738 = vst [vmem:[#allocation3 + $0x68] sm:$0xff] %v8706
        %8739 = vst [vmem:[#allocation3 + $0x70] sm:$0xff] %v8707
        %8740 = vst [vmem:[#allocation3 + $0x78] sm:$0xff] %v8708
        %8741 = vst [vmem:[#allocation3 + $0x80] sm:$0xff] %v8709
        %8742 = vst [vmem:[#allocation3 + $0x88] sm:$0xff] %v8710
        %8743 = vst [vmem:[#allocation3 + $0x90] sm:$0xff] %v8711
        %8744 = vst [vmem:[#allocation3 + $0x98] sm:$0xff] %v8712
        %8745 = vst [vmem:[#allocation3 + $0xa0] sm:$0xff] %v8713
        %8746 = vst [vmem:[#allocation3 + $0xa8] sm:$0xff] %v8714
        %8747 = vst [vmem:[#allocation3 + $0xb0] sm:$0xff] %v8715
        %8748 = vst [vmem:[#allocation3 + $0xb8] sm:$0xff] %v8716
        %8749 = vst [vmem:[#allocation3 + $0xc0] sm:$0xff] %v8717
        %8750 = vst [vmem:[#allocation3 + $0xc8] sm:$0xff] %v8718
        %8751 = vst [vmem:[#allocation3 + $0xd0] sm:$0xff] %v8719
        %8752 = vst [vmem:[#allocation3 + $0xd8] sm:$0xff] %v8720
        %8753 = vst [vmem:[#allocation3 + $0xe0] sm:$0xff] %v8721
        %8754 = vst [vmem:[#allocation3 + $0xe8] sm:$0xff] %v8722
        %8755 = vst [vmem:[#allocation3 + $0xf0] sm:$0xff] %v8723
        %8756 = vst [vmem:[#allocation3 + $0xf8] sm:$0xff] %v8724
        %v8757 = vld [vmem:[%s292 + $0x8] sm:$0xf]
        %v8758 = vld [vmem:[%s292 + $0xc] sm:$0xf]
        %v8759 = vld [vmem:[%s292 + $0x20] sm:$0xf]
        %v8760 = vld [vmem:[%s292 + $0x24] sm:$0xf]
        %v8761 = vld [vmem:[%s292 + $0x38] sm:$0xf]
        %v8762 = vld [vmem:[%s292 + $0x3c] sm:$0xf]
        %v8763 = vld [vmem:[%s292 + $0x50] sm:$0xf]
        %v8764 = vld [vmem:[%s292 + $0x54] sm:$0xf]
        %v8765 = vld [vmem:[%s292 + $0x68] sm:$0xf]
        %v8766 = vld [vmem:[%s292 + $0x6c] sm:$0xf]
        %v8767 = vld [vmem:[%s292 + $0x80] sm:$0xf]
        %v8768 = vld [vmem:[%s292 + $0x84] sm:$0xf]
        %v8769 = vld [vmem:[%s292 + $0x98] sm:$0xf]
        %v8770 = vld [vmem:[%s292 + $0x9c] sm:$0xf]
        %v8771 = vld [vmem:[%s292 + $0xb0] sm:$0xf]
        %v8772 = vld [vmem:[%s292 + $0xb4] sm:$0xf]
        %v8773 = vld [vmem:[%s292 + $0xc8] sm:$0xf]
        %v8774 = vld [vmem:[%s292 + $0xcc] sm:$0xf]
        %v8775 = vld [vmem:[%s292 + $0xe0] sm:$0xf]
        %v8776 = vld [vmem:[%s292 + $0xe4] sm:$0xf]
        %v8777 = vld [vmem:[%s292 + $0xf8] sm:$0xf]
        %v8778 = vld [vmem:[%s292 + $0xfc] sm:$0xf]
        %v8779 = vld [vmem:[%s292 + $0x110] sm:$0xf]
        %v8780 = vld [vmem:[%s292 + $0x114] sm:$0xf]
        %v8781 = vld [vmem:[%s292 + $0x128] sm:$0xf]
        %v8782 = vld [vmem:[%s292 + $0x12c] sm:$0xf]
        %v8783 = vld [vmem:[%s292 + $0x140] sm:$0xf]
        %v8784 = vld [vmem:[%s292 + $0x144] sm:$0xf]
        %v8785 = vld [vmem:[%s292 + $0x158] sm:$0xf]
        %v8786 = vld [vmem:[%s292 + $0x15c] sm:$0xf]
        %v8787 = vld [vmem:[%s292 + $0x170] sm:$0xf]
        %v8788 = vld [vmem:[%s292 + $0x174] sm:$0xf]
        %v8789 = vld [vmem:[#allocation3] sm:$0xff]
        %v8790 = vld [vmem:[#allocation3 + $0x8] sm:$0xff]
        %v8791 = vld [vmem:[#allocation3 + $0x10] sm:$0xff]
        %v8792 = vld [vmem:[#allocation3 + $0x18] sm:$0xff]
        %v8793 = vld [vmem:[#allocation3 + $0x20] sm:$0xff]
        %v8794 = vld [vmem:[#allocation3 + $0x28] sm:$0xff]
        %v8795 = vld [vmem:[#allocation3 + $0x30] sm:$0xff]
        %v8796 = vld [vmem:[#allocation3 + $0x38] sm:$0xff]
        %v8797 = vld [vmem:[#allocation3 + $0x40] sm:$0xff]
        %v8798 = vld [vmem:[#allocation3 + $0x48] sm:$0xff]
        %v8799 = vld [vmem:[#allocation3 + $0x50] sm:$0xff]
        %v8800 = vld [vmem:[#allocation3 + $0x58] sm:$0xff]
        %v8801 = vld [vmem:[#allocation3 + $0x60] sm:$0xff]
        %v8802 = vld [vmem:[#allocation3 + $0x68] sm:$0xff]
        %v8803 = vld [vmem:[#allocation3 + $0x70] sm:$0xff]
        %v8804 = vld [vmem:[#allocation3 + $0x78] sm:$0xff]
        %v8805 = vld [vmem:[#allocation3 + $0x80] sm:$0xff]
        %v8806 = vld [vmem:[#allocation3 + $0x88] sm:$0xff]
        %v8807 = vld [vmem:[#allocation3 + $0x90] sm:$0xff]
        %v8808 = vld [vmem:[#allocation3 + $0x98] sm:$0xff]
        %v8809 = vld [vmem:[#allocation3 + $0xa0] sm:$0xff]
        %v8810 = vld [vmem:[#allocation3 + $0xa8] sm:$0xff]
        %v8811 = vld [vmem:[#allocation3 + $0xb0] sm:$0xff]
        %v8812 = vld [vmem:[#allocation3 + $0xb8] sm:$0xff]
        %v8813 = vld [vmem:[#allocation3 + $0xc0] sm:$0xff]
        %v8814 = vld [vmem:[#allocation3 + $0xc8] sm:$0xff]
        %v8815 = vld [vmem:[#allocation3 + $0xd0] sm:$0xff]
        %v8816 = vld [vmem:[#allocation3 + $0xd8] sm:$0xff]
        %v8817 = vld [vmem:[#allocation3 + $0xe0] sm:$0xff]
        %v8818 = vld [vmem:[#allocation3 + $0xe8] sm:$0xff]
        %v8819 = vld [vmem:[#allocation3 + $0xf0] sm:$0xff]
        %v8820 = vld [vmem:[#allocation3 + $0xf8] sm:$0xff]
        %s8821 = scalar_lea.vmem [#allocation9], 256
        %v8822 = vld [vmem:[%s8821] sm:$0xf]
        %v8823 = vld [vmem:[%s8821 + $0x4] sm:$0xf]
        %v8824 = vld [vmem:[%s8821 + $0x8] sm:$0xf]
        %v8825 = vld [vmem:[%s8821 + $0xc] sm:$0xf]
        %v8826 = vld [vmem:[%s8821 + $0x10] sm:$0xf]
        %v8827 = vld [vmem:[%s8821 + $0x14] sm:$0xf]
        %v8828 = vld [vmem:[%s8821 + $0x18] sm:$0xf]
        %v8829 = vld [vmem:[%s8821 + $0x1c] sm:$0xf]
        %v8830 = vld [vmem:[%s8821 + $0x20] sm:$0xf]
        %v8831 = vld [vmem:[%s8821 + $0x24] sm:$0xf]
        %v8832 = vld [vmem:[%s8821 + $0x28] sm:$0xf]
        %v8833 = vld [vmem:[%s8821 + $0x2c] sm:$0xf]
        %v8834 = vld [vmem:[%s8821 + $0x30] sm:$0xf]
        %v8835 = vld [vmem:[%s8821 + $0x34] sm:$0xf]
        %v8836 = vld [vmem:[%s8821 + $0x38] sm:$0xf]
        %v8837 = vld [vmem:[%s8821 + $0x3c] sm:$0xf]
        %v8870 = vunpack.c.l.b16 %v8757
        %v8871 = vunpack.c.l.b16 %v8758
        %v8872 = vunpack.c.l.b16 %v8759
        %v8873 = vunpack.c.l.b16 %v8760
        %v8874 = vunpack.c.l.b16 %v8761
        %v8875 = vunpack.c.l.b16 %v8762
        %v8876 = vunpack.c.l.b16 %v8763
        %v8877 = vunpack.c.l.b16 %v8764
        %v8878 = vunpack.c.l.b16 %v8765
        %v8879 = vunpack.c.l.b16 %v8766
        %v8880 = vunpack.c.l.b16 %v8767
        %v8881 = vunpack.c.l.b16 %v8768
        %v8882 = vunpack.c.l.b16 %v8769
        %v8883 = vunpack.c.l.b16 %v8770
        %v8884 = vunpack.c.l.b16 %v8771
        %v8885 = vunpack.c.l.b16 %v8772
        %v8886 = vunpack.c.l.b16 %v8773
        %v8887 = vunpack.c.l.b16 %v8774
        %v8888 = vunpack.c.l.b16 %v8775
        %v8889 = vunpack.c.l.b16 %v8776
        %v8890 = vunpack.c.l.b16 %v8777
        %v8891 = vunpack.c.l.b16 %v8778
        %v8892 = vunpack.c.l.b16 %v8779
        %v8893 = vunpack.c.l.b16 %v8780
        %v8894 = vunpack.c.l.b16 %v8781
        %v8895 = vunpack.c.l.b16 %v8782
        %v8896 = vunpack.c.l.b16 %v8783
        %v8897 = vunpack.c.l.b16 %v8784
        %v8898 = vunpack.c.l.b16 %v8785
        %v8899 = vunpack.c.l.b16 %v8786
        %v8900 = vunpack.c.l.b16 %v8787
        %v8901 = vunpack.c.l.b16 %v8788
        %v8902 = vpack.c.b16 %v8871, %v8870
        %v8903 = vpack.c.b16 %v8873, %v8872
        %v8904 = vpack.c.b16 %v8875, %v8874
        %v8905 = vpack.c.b16 %v8877, %v8876
        %v8906 = vpack.c.b16 %v8879, %v8878
        %v8907 = vpack.c.b16 %v8881, %v8880
        %v8908 = vpack.c.b16 %v8883, %v8882
        %v8909 = vpack.c.b16 %v8885, %v8884
        %v8910 = vpack.c.b16 %v8887, %v8886
        %v8911 = vpack.c.b16 %v8889, %v8888
        %v8912 = vpack.c.b16 %v8891, %v8890
        %v8913 = vpack.c.b16 %v8893, %v8892
        %v8914 = vpack.c.b16 %v8895, %v8894
        %v8915 = vpack.c.b16 %v8897, %v8896
        %v8916 = vpack.c.b16 %v8899, %v8898
        %v8917 = vpack.c.b16 %v8901, %v8900
        %v8950 = vunpack.c.l.b16 %v8822
        %v8951 = vunpack.c.l.b16 %v8823
        %v8952 = vunpack.c.l.b16 %v8824
        %v8953 = vunpack.c.l.b16 %v8825
        %v8954 = vunpack.c.l.b16 %v8826
        %v8955 = vunpack.c.l.b16 %v8827
        %v8956 = vunpack.c.l.b16 %v8828
        %v8957 = vunpack.c.l.b16 %v8829
        %v8958 = vunpack.c.l.b16 %v8830
        %v8959 = vunpack.c.l.b16 %v8831
        %v8960 = vunpack.c.l.b16 %v8832
        %v8961 = vunpack.c.l.b16 %v8833
        %v8962 = vunpack.c.l.b16 %v8834
        %v8963 = vunpack.c.l.b16 %v8835
        %v8964 = vunpack.c.l.b16 %v8836
        %v8965 = vunpack.c.l.b16 %v8837
        %v8966 = vpack.c.b16 %v8951, %v8950
        %v8967 = vpack.c.b16 %v8953, %v8952
        %v8968 = vpack.c.b16 %v8955, %v8954
        %v8969 = vpack.c.b16 %v8957, %v8956
        %v8970 = vpack.c.b16 %v8959, %v8958
        %v8971 = vpack.c.b16 %v8961, %v8960
        %v8972 = vpack.c.b16 %v8963, %v8962
        %v8973 = vpack.c.b16 %v8965, %v8964
        %8982 = vmatpush.bf16.msra.mxu0 %v8973
        %8983 = vmatpush.bf16.msra.mxu0 %v8972
        %8984 = vmatpush.bf16.msra.mxu0 %v8971
        %8985 = vmatpush.bf16.msra.mxu0 %v8970
        %8986 = vmatpush.bf16.msra.mxu0 %v8969
        %8987 = vmatpush.bf16.msra.mxu0 %v8968
        %8988 = vmatpush.bf16.msra.mxu0 %v8967
        %8989 = vmatpush.bf16.msra.mxu0 %v8966
        %8990 = vmatmul.bf16.gmra.mxu0 %v8902
        %v8991 = vpop.f32.mrf.mxu0
        %v8992 = vadd.f32 0.0, %v8991
        %v8993 = vpop.f32.mrf.mxu0
        %v8994 = vadd.f32 0.0, %v8993
        %8995 = vmatmul.bf16.gmra.mxu0 %v8903
        %v8996 = vpop.f32.mrf.mxu0
        %v8997 = vadd.f32 0.0, %v8996
        %v8998 = vpop.f32.mrf.mxu0
        %v8999 = vadd.f32 0.0, %v8998
        %9000 = vmatmul.bf16.gmra.mxu0 %v8904
        %v9001 = vpop.f32.mrf.mxu0
        %v9002 = vadd.f32 0.0, %v9001
        %v9003 = vpop.f32.mrf.mxu0
        %v9004 = vadd.f32 0.0, %v9003
        %9005 = vmatmul.bf16.gmra.mxu0 %v8905
        %v9006 = vpop.f32.mrf.mxu0
        %v9007 = vadd.f32 0.0, %v9006
        %v9008 = vpop.f32.mrf.mxu0
        %v9009 = vadd.f32 0.0, %v9008
        %9010 = vmatmul.bf16.gmra.mxu0 %v8906
        %v9011 = vpop.f32.mrf.mxu0
        %v9012 = vadd.f32 0.0, %v9011
        %v9013 = vpop.f32.mrf.mxu0
        %v9014 = vadd.f32 0.0, %v9013
        %9015 = vmatmul.bf16.gmra.mxu0 %v8907
        %v9016 = vpop.f32.mrf.mxu0
        %v9017 = vadd.f32 0.0, %v9016
        %v9018 = vpop.f32.mrf.mxu0
        %v9019 = vadd.f32 0.0, %v9018
        %9020 = vmatmul.bf16.gmra.mxu0 %v8908
        %v9021 = vpop.f32.mrf.mxu0
        %v9022 = vadd.f32 0.0, %v9021
        %v9023 = vpop.f32.mrf.mxu0
        %v9024 = vadd.f32 0.0, %v9023
        %9025 = vmatmul.bf16.gmra.mxu0 %v8909
        %v9026 = vpop.f32.mrf.mxu0
        %v9027 = vadd.f32 0.0, %v9026
        %v9028 = vpop.f32.mrf.mxu0
        %v9029 = vadd.f32 0.0, %v9028
        %9030 = vmatmul.bf16.gmra.mxu0 %v8910
        %v9031 = vpop.f32.mrf.mxu0
        %v9032 = vadd.f32 0.0, %v9031
        %v9033 = vpop.f32.mrf.mxu0
        %v9034 = vadd.f32 0.0, %v9033
        %9035 = vmatmul.bf16.gmra.mxu0 %v8911
        %v9036 = vpop.f32.mrf.mxu0
        %v9037 = vadd.f32 0.0, %v9036
        %v9038 = vpop.f32.mrf.mxu0
        %v9039 = vadd.f32 0.0, %v9038
        %9040 = vmatmul.bf16.gmra.mxu0 %v8912
        %v9041 = vpop.f32.mrf.mxu0
        %v9042 = vadd.f32 0.0, %v9041
        %v9043 = vpop.f32.mrf.mxu0
        %v9044 = vadd.f32 0.0, %v9043
        %9045 = vmatmul.bf16.gmra.mxu0 %v8913
        %v9046 = vpop.f32.mrf.mxu0
        %v9047 = vadd.f32 0.0, %v9046
        %v9048 = vpop.f32.mrf.mxu0
        %v9049 = vadd.f32 0.0, %v9048
        %9050 = vmatmul.bf16.gmra.mxu0 %v8914
        %v9051 = vpop.f32.mrf.mxu0
        %v9052 = vadd.f32 0.0, %v9051
        %v9053 = vpop.f32.mrf.mxu0
        %v9054 = vadd.f32 0.0, %v9053
        %9055 = vmatmul.bf16.gmra.mxu0 %v8915
        %v9056 = vpop.f32.mrf.mxu0
        %v9057 = vadd.f32 0.0, %v9056
        %v9058 = vpop.f32.mrf.mxu0
        %v9059 = vadd.f32 0.0, %v9058
        %9060 = vmatmul.bf16.gmra.mxu0 %v8916
        %v9061 = vpop.f32.mrf.mxu0
        %v9062 = vadd.f32 0.0, %v9061
        %v9063 = vpop.f32.mrf.mxu0
        %v9064 = vadd.f32 0.0, %v9063
        %9065 = vmatmul.bf16.gmra.mxu0 %v8917
        %v9066 = vpop.f32.mrf.mxu0
        %v9067 = vadd.f32 0.0, %v9066
        %v9068 = vpop.f32.mrf.mxu0
        %v9069 = vadd.f32 0.0, %v9068
        %9070 = vdwg.mxu0
        %v9071 = vadd.f32 %v8789, %v8992
        %v9072 = vadd.f32 %v8790, %v8994
        %v9073 = vadd.f32 %v8791, %v8997
        %v9074 = vadd.f32 %v8792, %v8999
        %v9075 = vadd.f32 %v8793, %v9002
        %v9076 = vadd.f32 %v8794, %v9004
        %v9077 = vadd.f32 %v8795, %v9007
        %v9078 = vadd.f32 %v8796, %v9009
        %v9079 = vadd.f32 %v8797, %v9012
        %v9080 = vadd.f32 %v8798, %v9014
        %v9081 = vadd.f32 %v8799, %v9017
        %v9082 = vadd.f32 %v8800, %v9019
        %v9083 = vadd.f32 %v8801, %v9022
        %v9084 = vadd.f32 %v8802, %v9024
        %v9085 = vadd.f32 %v8803, %v9027
        %v9086 = vadd.f32 %v8804, %v9029
        %v9087 = vadd.f32 %v8805, %v9032
        %v9088 = vadd.f32 %v8806, %v9034
        %v9089 = vadd.f32 %v8807, %v9037
        %v9090 = vadd.f32 %v8808, %v9039
        %v9091 = vadd.f32 %v8809, %v9042
        %v9092 = vadd.f32 %v8810, %v9044
        %v9093 = vadd.f32 %v8811, %v9047
        %v9094 = vadd.f32 %v8812, %v9049
        %v9095 = vadd.f32 %v8813, %v9052
        %v9096 = vadd.f32 %v8814, %v9054
        %v9097 = vadd.f32 %v8815, %v9057
        %v9098 = vadd.f32 %v8816, %v9059
        %v9099 = vadd.f32 %v8817, %v9062
        %v9100 = vadd.f32 %v8818, %v9064
        %v9101 = vadd.f32 %v8819, %v9067
        %v9102 = vadd.f32 %v8820, %v9069
        %9103 = vst [vmem:[#allocation3] sm:$0xff] %v9071
        %9104 = vst [vmem:[#allocation3 + $0x8] sm:$0xff] %v9072
        %9105 = vst [vmem:[#allocation3 + $0x10] sm:$0xff] %v9073
        %9106 = vst [vmem:[#allocation3 + $0x18] sm:$0xff] %v9074
        %9107 = vst [vmem:[#allocation3 + $0x20] sm:$0xff] %v9075
        %9108 = vst [vmem:[#allocation3 + $0x28] sm:$0xff] %v9076
        %9109 = vst [vmem:[#allocation3 + $0x30] sm:$0xff] %v9077
        %9110 = vst [vmem:[#allocation3 + $0x38] sm:$0xff] %v9078
        %9111 = vst [vmem:[#allocation3 + $0x40] sm:$0xff] %v9079
        %9112 = vst [vmem:[#allocation3 + $0x48] sm:$0xff] %v9080
        %9113 = vst [vmem:[#allocation3 + $0x50] sm:$0xff] %v9081
        %9114 = vst [vmem:[#allocation3 + $0x58] sm:$0xff] %v9082
        %9115 = vst [vmem:[#allocation3 + $0x60] sm:$0xff] %v9083
        %9116 = vst [vmem:[#allocation3 + $0x68] sm:$0xff] %v9084
        %9117 = vst [vmem:[#allocation3 + $0x70] sm:$0xff] %v9085
        %9118 = vst [vmem:[#allocation3 + $0x78] sm:$0xff] %v9086
        %9119 = vst [vmem:[#allocation3 + $0x80] sm:$0xff] %v9087
        %9120 = vst [vmem:[#allocation3 + $0x88] sm:$0xff] %v9088
        %9121 = vst [vmem:[#allocation3 + $0x90] sm:$0xff] %v9089
        %9122 = vst [vmem:[#allocation3 + $0x98] sm:$0xff] %v9090
        %9123 = vst [vmem:[#allocation3 + $0xa0] sm:$0xff] %v9091
        %9124 = vst [vmem:[#allocation3 + $0xa8] sm:$0xff] %v9092
        %9125 = vst [vmem:[#allocation3 + $0xb0] sm:$0xff] %v9093
        %9126 = vst [vmem:[#allocation3 + $0xb8] sm:$0xff] %v9094
        %9127 = vst [vmem:[#allocation3 + $0xc0] sm:$0xff] %v9095
        %9128 = vst [vmem:[#allocation3 + $0xc8] sm:$0xff] %v9096
        %9129 = vst [vmem:[#allocation3 + $0xd0] sm:$0xff] %v9097
        %9130 = vst [vmem:[#allocation3 + $0xd8] sm:$0xff] %v9098
        %9131 = vst [vmem:[#allocation3 + $0xe0] sm:$0xff] %v9099
        %9132 = vst [vmem:[#allocation3 + $0xe8] sm:$0xff] %v9100
        %9133 = vst [vmem:[#allocation3 + $0xf0] sm:$0xff] %v9101
        %9134 = vst [vmem:[#allocation3 + $0xf8] sm:$0xff] %v9102
        %v9135 = vld [vmem:[%s292 + $0x8] sm:$0xf]
        %v9136 = vld [vmem:[%s292 + $0xc] sm:$0xf]
        %v9137 = vld [vmem:[%s292 + $0x10] sm:$0x1]
        %v9138 = vld [vmem:[%s292 + $0x20] sm:$0xf]
        %v9139 = vld [vmem:[%s292 + $0x24] sm:$0xf]
        %v9140 = vld [vmem:[%s292 + $0x28] sm:$0x1]
        %v9141 = vld [vmem:[%s292 + $0x38] sm:$0xf]
        %v9142 = vld [vmem:[%s292 + $0x3c] sm:$0xf]
        %v9143 = vld [vmem:[%s292 + $0x40] sm:$0x1]
        %v9144 = vld [vmem:[%s292 + $0x50] sm:$0xf]
        %v9145 = vld [vmem:[%s292 + $0x54] sm:$0xf]
        %v9146 = vld [vmem:[%s292 + $0x58] sm:$0x1]
        %v9147 = vld [vmem:[%s292 + $0x68] sm:$0xf]
        %v9148 = vld [vmem:[%s292 + $0x6c] sm:$0xf]
        %v9149 = vld [vmem:[%s292 + $0x70] sm:$0x1]
        %v9150 = vld [vmem:[%s292 + $0x80] sm:$0xf]
        %v9151 = vld [vmem:[%s292 + $0x84] sm:$0xf]
        %v9152 = vld [vmem:[%s292 + $0x88] sm:$0x1]
        %v9153 = vld [vmem:[%s292 + $0x98] sm:$0xf]
        %v9154 = vld [vmem:[%s292 + $0x9c] sm:$0xf]
        %v9155 = vld [vmem:[%s292 + $0xa0] sm:$0x1]
        %v9156 = vld [vmem:[%s292 + $0xb0] sm:$0xf]
        %v9157 = vld [vmem:[%s292 + $0xb4] sm:$0xf]
        %v9158 = vld [vmem:[%s292 + $0xb8] sm:$0x1]
        %v9159 = vld [vmem:[%s292 + $0xc8] sm:$0xf]
        %v9160 = vld [vmem:[%s292 + $0xcc] sm:$0xf]
        %v9161 = vld [vmem:[%s292 + $0xd0] sm:$0x1]
        %v9162 = vld [vmem:[%s292 + $0xe0] sm:$0xf]
        %v9163 = vld [vmem:[%s292 + $0xe4] sm:$0xf]
        %v9164 = vld [vmem:[%s292 + $0xe8] sm:$0x1]
        %v9165 = vld [vmem:[%s292 + $0xf8] sm:$0xf]
        %v9166 = vld [vmem:[%s292 + $0xfc] sm:$0xf]
        %v9167 = vld [vmem:[%s292 + $0x100] sm:$0x1]
        %v9168 = vld [vmem:[%s292 + $0x110] sm:$0xf]
        %v9169 = vld [vmem:[%s292 + $0x114] sm:$0xf]
        %v9170 = vld [vmem:[%s292 + $0x118] sm:$0x1]
        %v9171 = vld [vmem:[%s292 + $0x128] sm:$0xf]
        %v9172 = vld [vmem:[%s292 + $0x12c] sm:$0xf]
        %v9173 = vld [vmem:[%s292 + $0x130] sm:$0x1]
        %v9174 = vld [vmem:[%s292 + $0x140] sm:$0xf]
        %v9175 = vld [vmem:[%s292 + $0x144] sm:$0xf]
        %v9176 = vld [vmem:[%s292 + $0x148] sm:$0x1]
        %v9177 = vld [vmem:[%s292 + $0x158] sm:$0xf]
        %v9178 = vld [vmem:[%s292 + $0x15c] sm:$0xf]
        %v9179 = vld [vmem:[%s292 + $0x160] sm:$0x1]
        %v9180 = vld [vmem:[%s292 + $0x170] sm:$0xf]
        %v9181 = vld [vmem:[%s292 + $0x174] sm:$0xf]
        %v9182 = vld [vmem:[%s292 + $0x178] sm:$0x1]
        %v9184 = vshrl.u32 %v9135, 16
        %v9186 = vrot.slane %v9184, 4
        %v9187 = vshll.u32 %v9135, 16
        %v9189 = vrot.slane %v9187, 5
        %v9190 = vor.u32 %v9186, %v9189
        %v9191 = vrot.slane %v9190, 4
        %v9193 = vshll.u32 %v9136, 16
        %v9195 = vrot.slane %v9193, 5
        %v9196 = vsel %vm1634, %v9191, %v9195
        %v9197 = vshrl.u32 %v9136, 16
        %v9199 = vrot.slane %v9197, 4
        %v9200 = vor.u32 %v9199, %v9195
        %v9201 = vrot.slane %v9200, 4
        %v9203 = vshll.u32 %v9137, 16
        %v9205 = vrot.slane %v9203, 5
        %v9206 = vsel %vm1634, %v9201, %v9205
        %v9208 = vshrl.u32 %v9138, 16
        %v9210 = vrot.slane %v9208, 4
        %v9211 = vshll.u32 %v9138, 16
        %v9213 = vrot.slane %v9211, 5
        %v9214 = vor.u32 %v9210, %v9213
        %v9215 = vrot.slane %v9214, 4
        %v9217 = vshll.u32 %v9139, 16
        %v9219 = vrot.slane %v9217, 5
        %v9220 = vsel %vm1634, %v9215, %v9219
        %v9221 = vshrl.u32 %v9139, 16
        %v9223 = vrot.slane %v9221, 4
        %v9224 = vor.u32 %v9223, %v9219
        %v9225 = vrot.slane %v9224, 4
        %v9227 = vshll.u32 %v9140, 16
        %v9229 = vrot.slane %v9227, 5
        %v9230 = vsel %vm1634, %v9225, %v9229
        %v9232 = vshrl.u32 %v9141, 16
        %v9234 = vrot.slane %v9232, 4
        %v9235 = vshll.u32 %v9141, 16
        %v9237 = vrot.slane %v9235, 5
        %v9238 = vor.u32 %v9234, %v9237
        %v9239 = vrot.slane %v9238, 4
        %v9241 = vshll.u32 %v9142, 16
        %v9243 = vrot.slane %v9241, 5
        %v9244 = vsel %vm1634, %v9239, %v9243
        %v9245 = vshrl.u32 %v9142, 16
        %v9247 = vrot.slane %v9245, 4
        %v9248 = vor.u32 %v9247, %v9243
        %v9249 = vrot.slane %v9248, 4
        %v9251 = vshll.u32 %v9143, 16
        %v9253 = vrot.slane %v9251, 5
        %v9254 = vsel %vm1634, %v9249, %v9253
        %v9256 = vshrl.u32 %v9144, 16
        %v9258 = vrot.slane %v9256, 4
        %v9259 = vshll.u32 %v9144, 16
        %v9261 = vrot.slane %v9259, 5
        %v9262 = vor.u32 %v9258, %v9261
        %v9263 = vrot.slane %v9262, 4
        %v9265 = vshll.u32 %v9145, 16
        %v9267 = vrot.slane %v9265, 5
        %v9268 = vsel %vm1634, %v9263, %v9267
        %v9269 = vshrl.u32 %v9145, 16
        %v9271 = vrot.slane %v9269, 4
        %v9272 = vor.u32 %v9271, %v9267
        %v9273 = vrot.slane %v9272, 4
        %v9275 = vshll.u32 %v9146, 16
        %v9277 = vrot.slane %v9275, 5
        %v9278 = vsel %vm1634, %v9273, %v9277
        %v9280 = vshrl.u32 %v9147, 16
        %v9282 = vrot.slane %v9280, 4
        %v9283 = vshll.u32 %v9147, 16
        %v9285 = vrot.slane %v9283, 5
        %v9286 = vor.u32 %v9282, %v9285
        %v9287 = vrot.slane %v9286, 4
        %v9289 = vshll.u32 %v9148, 16
        %v9291 = vrot.slane %v9289, 5
        %v9292 = vsel %vm1634, %v9287, %v9291
        %v9293 = vshrl.u32 %v9148, 16
        %v9295 = vrot.slane %v9293, 4
        %v9296 = vor.u32 %v9295, %v9291
        %v9297 = vrot.slane %v9296, 4
        %v9299 = vshll.u32 %v9149, 16
        %v9301 = vrot.slane %v9299, 5
        %v9302 = vsel %vm1634, %v9297, %v9301
        %v9304 = vshrl.u32 %v9150, 16
        %v9306 = vrot.slane %v9304, 4
        %v9307 = vshll.u32 %v9150, 16
        %v9309 = vrot.slane %v9307, 5
        %v9310 = vor.u32 %v9306, %v9309
        %v9311 = vrot.slane %v9310, 4
        %v9313 = vshll.u32 %v9151, 16
        %v9315 = vrot.slane %v9313, 5
        %v9316 = vsel %vm1634, %v9311, %v9315
        %v9317 = vshrl.u32 %v9151, 16
        %v9319 = vrot.slane %v9317, 4
        %v9320 = vor.u32 %v9319, %v9315
        %v9321 = vrot.slane %v9320, 4
        %v9323 = vshll.u32 %v9152, 16
        %v9325 = vrot.slane %v9323, 5
        %v9326 = vsel %vm1634, %v9321, %v9325
        %v9328 = vshrl.u32 %v9153, 16
        %v9330 = vrot.slane %v9328, 4
        %v9331 = vshll.u32 %v9153, 16
        %v9333 = vrot.slane %v9331, 5
        %v9334 = vor.u32 %v9330, %v9333
        %v9335 = vrot.slane %v9334, 4
        %v9337 = vshll.u32 %v9154, 16
        %v9339 = vrot.slane %v9337, 5
        %v9340 = vsel %vm1634, %v9335, %v9339
        %v9341 = vshrl.u32 %v9154, 16
        %v9343 = vrot.slane %v9341, 4
        %v9344 = vor.u32 %v9343, %v9339
        %v9345 = vrot.slane %v9344, 4
        %v9347 = vshll.u32 %v9155, 16
        %v9349 = vrot.slane %v9347, 5
        %v9350 = vsel %vm1634, %v9345, %v9349
        %v9352 = vshrl.u32 %v9156, 16
        %v9354 = vrot.slane %v9352, 4
        %v9355 = vshll.u32 %v9156, 16
        %v9357 = vrot.slane %v9355, 5
        %v9358 = vor.u32 %v9354, %v9357
        %v9359 = vrot.slane %v9358, 4
        %v9361 = vshll.u32 %v9157, 16
        %v9363 = vrot.slane %v9361, 5
        %v9364 = vsel %vm1634, %v9359, %v9363
        %v9365 = vshrl.u32 %v9157, 16
        %v9367 = vrot.slane %v9365, 4
        %v9368 = vor.u32 %v9367, %v9363
        %v9369 = vrot.slane %v9368, 4
        %v9371 = vshll.u32 %v9158, 16
        %v9373 = vrot.slane %v9371, 5
        %v9374 = vsel %vm1634, %v9369, %v9373
        %v9376 = vshrl.u32 %v9159, 16
        %v9378 = vrot.slane %v9376, 4
        %v9379 = vshll.u32 %v9159, 16
        %v9381 = vrot.slane %v9379, 5
        %v9382 = vor.u32 %v9378, %v9381
        %v9383 = vrot.slane %v9382, 4
        %v9385 = vshll.u32 %v9160, 16
        %v9387 = vrot.slane %v9385, 5
        %v9388 = vsel %vm1634, %v9383, %v9387
        %v9389 = vshrl.u32 %v9160, 16
        %v9391 = vrot.slane %v9389, 4
        %v9392 = vor.u32 %v9391, %v9387
        %v9393 = vrot.slane %v9392, 4
        %v9395 = vshll.u32 %v9161, 16
        %v9397 = vrot.slane %v9395, 5
        %v9398 = vsel %vm1634, %v9393, %v9397
        %v9400 = vshrl.u32 %v9162, 16
        %v9402 = vrot.slane %v9400, 4
        %v9403 = vshll.u32 %v9162, 16
        %v9405 = vrot.slane %v9403, 5
        %v9406 = vor.u32 %v9402, %v9405
        %v9407 = vrot.slane %v9406, 4
        %v9409 = vshll.u32 %v9163, 16
        %v9411 = vrot.slane %v9409, 5
        %v9412 = vsel %vm1634, %v9407, %v9411
        %v9413 = vshrl.u32 %v9163, 16
        %v9415 = vrot.slane %v9413, 4
        %v9416 = vor.u32 %v9415, %v9411
        %v9417 = vrot.slane %v9416, 4
        %v9419 = vshll.u32 %v9164, 16
        %v9421 = vrot.slane %v9419, 5
        %v9422 = vsel %vm1634, %v9417, %v9421
        %v9424 = vshrl.u32 %v9165, 16
        %v9426 = vrot.slane %v9424, 4
        %v9427 = vshll.u32 %v9165, 16
        %v9429 = vrot.slane %v9427, 5
        %v9430 = vor.u32 %v9426, %v9429
        %v9431 = vrot.slane %v9430, 4
        %v9433 = vshll.u32 %v9166, 16
        %v9435 = vrot.slane %v9433, 5
        %v9436 = vsel %vm1634, %v9431, %v9435
        %v9437 = vshrl.u32 %v9166, 16
        %v9439 = vrot.slane %v9437, 4
        %v9440 = vor.u32 %v9439, %v9435
        %v9441 = vrot.slane %v9440, 4
        %v9443 = vshll.u32 %v9167, 16
        %v9445 = vrot.slane %v9443, 5
        %v9446 = vsel %vm1634, %v9441, %v9445
        %v9448 = vshrl.u32 %v9168, 16
        %v9450 = vrot.slane %v9448, 4
        %v9451 = vshll.u32 %v9168, 16
        %v9453 = vrot.slane %v9451, 5
        %v9454 = vor.u32 %v9450, %v9453
        %v9455 = vrot.slane %v9454, 4
        %v9457 = vshll.u32 %v9169, 16
        %v9459 = vrot.slane %v9457, 5
        %v9460 = vsel %vm1634, %v9455, %v9459
        %v9461 = vshrl.u32 %v9169, 16
        %v9463 = vrot.slane %v9461, 4
        %v9464 = vor.u32 %v9463, %v9459
        %v9465 = vrot.slane %v9464, 4
        %v9467 = vshll.u32 %v9170, 16
        %v9469 = vrot.slane %v9467, 5
        %v9470 = vsel %vm1634, %v9465, %v9469
        %v9472 = vshrl.u32 %v9171, 16
        %v9474 = vrot.slane %v9472, 4
        %v9475 = vshll.u32 %v9171, 16
        %v9477 = vrot.slane %v9475, 5
        %v9478 = vor.u32 %v9474, %v9477
        %v9479 = vrot.slane %v9478, 4
        %v9481 = vshll.u32 %v9172, 16
        %v9483 = vrot.slane %v9481, 5
        %v9484 = vsel %vm1634, %v9479, %v9483
        %v9485 = vshrl.u32 %v9172, 16
        %v9487 = vrot.slane %v9485, 4
        %v9488 = vor.u32 %v9487, %v9483
        %v9489 = vrot.slane %v9488, 4
        %v9491 = vshll.u32 %v9173, 16
        %v9493 = vrot.slane %v9491, 5
        %v9494 = vsel %vm1634, %v9489, %v9493
        %v9496 = vshrl.u32 %v9174, 16
        %v9498 = vrot.slane %v9496, 4
        %v9499 = vshll.u32 %v9174, 16
        %v9501 = vrot.slane %v9499, 5
        %v9502 = vor.u32 %v9498, %v9501
        %v9503 = vrot.slane %v9502, 4
        %v9505 = vshll.u32 %v9175, 16
        %v9507 = vrot.slane %v9505, 5
        %v9508 = vsel %vm1634, %v9503, %v9507
        %v9509 = vshrl.u32 %v9175, 16
        %v9511 = vrot.slane %v9509, 4
        %v9512 = vor.u32 %v9511, %v9507
        %v9513 = vrot.slane %v9512, 4
        %v9515 = vshll.u32 %v9176, 16
        %v9517 = vrot.slane %v9515, 5
        %v9518 = vsel %vm1634, %v9513, %v9517
        %v9520 = vshrl.u32 %v9177, 16
        %v9522 = vrot.slane %v9520, 4
        %v9523 = vshll.u32 %v9177, 16
        %v9525 = vrot.slane %v9523, 5
        %v9526 = vor.u32 %v9522, %v9525
        %v9527 = vrot.slane %v9526, 4
        %v9529 = vshll.u32 %v9178, 16
        %v9531 = vrot.slane %v9529, 5
        %v9532 = vsel %vm1634, %v9527, %v9531
        %v9533 = vshrl.u32 %v9178, 16
        %v9535 = vrot.slane %v9533, 4
        %v9536 = vor.u32 %v9535, %v9531
        %v9537 = vrot.slane %v9536, 4
        %v9539 = vshll.u32 %v9179, 16
        %v9541 = vrot.slane %v9539, 5
        %v9542 = vsel %vm1634, %v9537, %v9541
        %v9544 = vshrl.u32 %v9180, 16
        %v9546 = vrot.slane %v9544, 4
        %v9547 = vshll.u32 %v9180, 16
        %v9549 = vrot.slane %v9547, 5
        %v9550 = vor.u32 %v9546, %v9549
        %v9551 = vrot.slane %v9550, 4
        %v9553 = vshll.u32 %v9181, 16
        %v9555 = vrot.slane %v9553, 5
        %v9556 = vsel %vm1634, %v9551, %v9555
        %v9557 = vshrl.u32 %v9181, 16
        %v9559 = vrot.slane %v9557, 4
        %v9560 = vor.u32 %v9559, %v9555
        %v9561 = vrot.slane %v9560, 4
        %v9563 = vshll.u32 %v9182, 16
        %v9565 = vrot.slane %v9563, 5
        %v9566 = vsel %vm1634, %v9561, %v9565
        %v9567 = vld [vmem:[#allocation3] sm:$0xff]
        %v9568 = vld [vmem:[#allocation3 + $0x8] sm:$0xff]
        %v9569 = vld [vmem:[#allocation3 + $0x10] sm:$0xff]
        %v9570 = vld [vmem:[#allocation3 + $0x18] sm:$0xff]
        %v9571 = vld [vmem:[#allocation3 + $0x20] sm:$0xff]
        %v9572 = vld [vmem:[#allocation3 + $0x28] sm:$0xff]
        %v9573 = vld [vmem:[#allocation3 + $0x30] sm:$0xff]
        %v9574 = vld [vmem:[#allocation3 + $0x38] sm:$0xff]
        %v9575 = vld [vmem:[#allocation3 + $0x40] sm:$0xff]
        %v9576 = vld [vmem:[#allocation3 + $0x48] sm:$0xff]
        %v9577 = vld [vmem:[#allocation3 + $0x50] sm:$0xff]
        %v9578 = vld [vmem:[#allocation3 + $0x58] sm:$0xff]
        %v9579 = vld [vmem:[#allocation3 + $0x60] sm:$0xff]
        %v9580 = vld [vmem:[#allocation3 + $0x68] sm:$0xff]
        %v9581 = vld [vmem:[#allocation3 + $0x70] sm:$0xff]
        %v9582 = vld [vmem:[#allocation3 + $0x78] sm:$0xff]
        %v9583 = vld [vmem:[#allocation3 + $0x80] sm:$0xff]
        %v9584 = vld [vmem:[#allocation3 + $0x88] sm:$0xff]
        %v9585 = vld [vmem:[#allocation3 + $0x90] sm:$0xff]
        %v9586 = vld [vmem:[#allocation3 + $0x98] sm:$0xff]
        %v9587 = vld [vmem:[#allocation3 + $0xa0] sm:$0xff]
        %v9588 = vld [vmem:[#allocation3 + $0xa8] sm:$0xff]
        %v9589 = vld [vmem:[#allocation3 + $0xb0] sm:$0xff]
        %v9590 = vld [vmem:[#allocation3 + $0xb8] sm:$0xff]
        %v9591 = vld [vmem:[#allocation3 + $0xc0] sm:$0xff]
        %v9592 = vld [vmem:[#allocation3 + $0xc8] sm:$0xff]
        %v9593 = vld [vmem:[#allocation3 + $0xd0] sm:$0xff]
        %v9594 = vld [vmem:[#allocation3 + $0xd8] sm:$0xff]
        %v9595 = vld [vmem:[#allocation3 + $0xe0] sm:$0xff]
        %v9596 = vld [vmem:[#allocation3 + $0xe8] sm:$0xff]
        %v9597 = vld [vmem:[#allocation3 + $0xf0] sm:$0xff]
        %v9598 = vld [vmem:[#allocation3 + $0xf8] sm:$0xff]
        %s9599 = scalar_lea.vmem [#allocation9], 320
        %v9600 = vld [vmem:[%s9599] sm:$0xf]
        %v9601 = vld [vmem:[%s9599 + $0x4] sm:$0xf]
        %v9602 = vld [vmem:[%s9599 + $0x8] sm:$0xf]
        %v9603 = vld [vmem:[%s9599 + $0xc] sm:$0xf]
        %v9604 = vld [vmem:[%s9599 + $0x10] sm:$0xf]
        %v9605 = vld [vmem:[%s9599 + $0x14] sm:$0xf]
        %v9606 = vld [vmem:[%s9599 + $0x18] sm:$0xf]
        %v9607 = vld [vmem:[%s9599 + $0x1c] sm:$0xf]
        %v9608 = vld [vmem:[%s9599 + $0x20] sm:$0xf]
        %v9609 = vld [vmem:[%s9599 + $0x24] sm:$0xf]
        %v9610 = vld [vmem:[%s9599 + $0x28] sm:$0xf]
        %v9611 = vld [vmem:[%s9599 + $0x2c] sm:$0xf]
        %v9612 = vld [vmem:[%s9599 + $0x30] sm:$0xf]
        %v9613 = vld [vmem:[%s9599 + $0x34] sm:$0xf]
        %v9614 = vld [vmem:[%s9599 + $0x38] sm:$0xf]
        %v9615 = vld [vmem:[%s9599 + $0x3c] sm:$0xf]
        %v9616 = vunpack.c.l.b16 %v9196
        %v9617 = vunpack.c.l.b16 %v9206
        %v9618 = vunpack.c.l.b16 %v9220
        %v9619 = vunpack.c.l.b16 %v9230
        %v9620 = vunpack.c.l.b16 %v9244
        %v9621 = vunpack.c.l.b16 %v9254
        %v9622 = vunpack.c.l.b16 %v9268
        %v9623 = vunpack.c.l.b16 %v9278
        %v9624 = vunpack.c.l.b16 %v9292
        %v9625 = vunpack.c.l.b16 %v9302
        %v9626 = vunpack.c.l.b16 %v9316
        %v9627 = vunpack.c.l.b16 %v9326
        %v9628 = vunpack.c.l.b16 %v9340
        %v9629 = vunpack.c.l.b16 %v9350
        %v9630 = vunpack.c.l.b16 %v9364
        %v9631 = vunpack.c.l.b16 %v9374
        %v9632 = vunpack.c.l.b16 %v9388
        %v9633 = vunpack.c.l.b16 %v9398
        %v9634 = vunpack.c.l.b16 %v9412
        %v9635 = vunpack.c.l.b16 %v9422
        %v9636 = vunpack.c.l.b16 %v9436
        %v9637 = vunpack.c.l.b16 %v9446
        %v9638 = vunpack.c.l.b16 %v9460
        %v9639 = vunpack.c.l.b16 %v9470
        %v9640 = vunpack.c.l.b16 %v9484
        %v9641 = vunpack.c.l.b16 %v9494
        %v9642 = vunpack.c.l.b16 %v9508
        %v9643 = vunpack.c.l.b16 %v9518
        %v9644 = vunpack.c.l.b16 %v9532
        %v9645 = vunpack.c.l.b16 %v9542
        %v9646 = vunpack.c.l.b16 %v9556
        %v9647 = vunpack.c.l.b16 %v9566
        %v9648 = vpack.c.b16 %v9617, %v9616
        %v9649 = vpack.c.b16 %v9619, %v9618
        %v9650 = vpack.c.b16 %v9621, %v9620
        %v9651 = vpack.c.b16 %v9623, %v9622
        %v9652 = vpack.c.b16 %v9625, %v9624
        %v9653 = vpack.c.b16 %v9627, %v9626
        %v9654 = vpack.c.b16 %v9629, %v9628
        %v9655 = vpack.c.b16 %v9631, %v9630
        %v9656 = vpack.c.b16 %v9633, %v9632
        %v9657 = vpack.c.b16 %v9635, %v9634
        %v9658 = vpack.c.b16 %v9637, %v9636
        %v9659 = vpack.c.b16 %v9639, %v9638
        %v9660 = vpack.c.b16 %v9641, %v9640
        %v9661 = vpack.c.b16 %v9643, %v9642
        %v9662 = vpack.c.b16 %v9645, %v9644
        %v9663 = vpack.c.b16 %v9647, %v9646
        %v9696 = vunpack.c.l.b16 %v9600
        %v9697 = vunpack.c.l.b16 %v9601
        %v9698 = vunpack.c.l.b16 %v9602
        %v9699 = vunpack.c.l.b16 %v9603
        %v9700 = vunpack.c.l.b16 %v9604
        %v9701 = vunpack.c.l.b16 %v9605
        %v9702 = vunpack.c.l.b16 %v9606
        %v9703 = vunpack.c.l.b16 %v9607
        %v9704 = vunpack.c.l.b16 %v9608
        %v9705 = vunpack.c.l.b16 %v9609
        %v9706 = vunpack.c.l.b16 %v9610
        %v9707 = vunpack.c.l.b16 %v9611
        %v9708 = vunpack.c.l.b16 %v9612
        %v9709 = vunpack.c.l.b16 %v9613
        %v9710 = vunpack.c.l.b16 %v9614
        %v9711 = vunpack.c.l.b16 %v9615
        %v9712 = vpack.c.b16 %v9697, %v9696
        %v9713 = vpack.c.b16 %v9699, %v9698
        %v9714 = vpack.c.b16 %v9701, %v9700
        %v9715 = vpack.c.b16 %v9703, %v9702
        %v9716 = vpack.c.b16 %v9705, %v9704
        %v9717 = vpack.c.b16 %v9707, %v9706
        %v9718 = vpack.c.b16 %v9709, %v9708
        %v9719 = vpack.c.b16 %v9711, %v9710
        %9728 = vmatpush.bf16.msra.mxu0 %v9719
        %9729 = vmatpush.bf16.msra.mxu0 %v9718
        %9730 = vmatpush.bf16.msra.mxu0 %v9717
        %9731 = vmatpush.bf16.msra.mxu0 %v9716
        %9732 = vmatpush.bf16.msra.mxu0 %v9715
        %9733 = vmatpush.bf16.msra.mxu0 %v9714
        %9734 = vmatpush.bf16.msra.mxu0 %v9713
        %9735 = vmatpush.bf16.msra.mxu0 %v9712
        %9736 = vmatmul.bf16.gmra.mxu0 %v9648
        %v9737 = vpop.f32.mrf.mxu0
        %v9738 = vadd.f32 0.0, %v9737
        %v9739 = vpop.f32.mrf.mxu0
        %v9740 = vadd.f32 0.0, %v9739
        %9741 = vmatmul.bf16.gmra.mxu0 %v9649
        %v9742 = vpop.f32.mrf.mxu0
        %v9743 = vadd.f32 0.0, %v9742
        %v9744 = vpop.f32.mrf.mxu0
        %v9745 = vadd.f32 0.0, %v9744
        %9746 = vmatmul.bf16.gmra.mxu0 %v9650
        %v9747 = vpop.f32.mrf.mxu0
        %v9748 = vadd.f32 0.0, %v9747
        %v9749 = vpop.f32.mrf.mxu0
        %v9750 = vadd.f32 0.0, %v9749
        %9751 = vmatmul.bf16.gmra.mxu0 %v9651
        %v9752 = vpop.f32.mrf.mxu0
        %v9753 = vadd.f32 0.0, %v9752
        %v9754 = vpop.f32.mrf.mxu0
        %v9755 = vadd.f32 0.0, %v9754
        %9756 = vmatmul.bf16.gmra.mxu0 %v9652
        %v9757 = vpop.f32.mrf.mxu0
        %v9758 = vadd.f32 0.0, %v9757
        %v9759 = vpop.f32.mrf.mxu0
        %v9760 = vadd.f32 0.0, %v9759
        %9761 = vmatmul.bf16.gmra.mxu0 %v9653
        %v9762 = vpop.f32.mrf.mxu0
        %v9763 = vadd.f32 0.0, %v9762
        %v9764 = vpop.f32.mrf.mxu0
        %v9765 = vadd.f32 0.0, %v9764
        %9766 = vmatmul.bf16.gmra.mxu0 %v9654
        %v9767 = vpop.f32.mrf.mxu0
        %v9768 = vadd.f32 0.0, %v9767
        %v9769 = vpop.f32.mrf.mxu0
        %v9770 = vadd.f32 0.0, %v9769
        %9771 = vmatmul.bf16.gmra.mxu0 %v9655
        %v9772 = vpop.f32.mrf.mxu0
        %v9773 = vadd.f32 0.0, %v9772
        %v9774 = vpop.f32.mrf.mxu0
        %v9775 = vadd.f32 0.0, %v9774
        %9776 = vmatmul.bf16.gmra.mxu0 %v9656
        %v9777 = vpop.f32.mrf.mxu0
        %v9778 = vadd.f32 0.0, %v9777
        %v9779 = vpop.f32.mrf.mxu0
        %v9780 = vadd.f32 0.0, %v9779
        %9781 = vmatmul.bf16.gmra.mxu0 %v9657
        %v9782 = vpop.f32.mrf.mxu0
        %v9783 = vadd.f32 0.0, %v9782
        %v9784 = vpop.f32.mrf.mxu0
        %v9785 = vadd.f32 0.0, %v9784
        %9786 = vmatmul.bf16.gmra.mxu0 %v9658
        %v9787 = vpop.f32.mrf.mxu0
        %v9788 = vadd.f32 0.0, %v9787
        %v9789 = vpop.f32.mrf.mxu0
        %v9790 = vadd.f32 0.0, %v9789
        %9791 = vmatmul.bf16.gmra.mxu0 %v9659
        %v9792 = vpop.f32.mrf.mxu0
        %v9793 = vadd.f32 0.0, %v9792
        %v9794 = vpop.f32.mrf.mxu0
        %v9795 = vadd.f32 0.0, %v9794
        %9796 = vmatmul.bf16.gmra.mxu0 %v9660
        %v9797 = vpop.f32.mrf.mxu0
        %v9798 = vadd.f32 0.0, %v9797
        %v9799 = vpop.f32.mrf.mxu0
        %v9800 = vadd.f32 0.0, %v9799
        %9801 = vmatmul.bf16.gmra.mxu0 %v9661
        %v9802 = vpop.f32.mrf.mxu0
        %v9803 = vadd.f32 0.0, %v9802
        %v9804 = vpop.f32.mrf.mxu0
        %v9805 = vadd.f32 0.0, %v9804
        %9806 = vmatmul.bf16.gmra.mxu0 %v9662
        %v9807 = vpop.f32.mrf.mxu0
        %v9808 = vadd.f32 0.0, %v9807
        %v9809 = vpop.f32.mrf.mxu0
        %v9810 = vadd.f32 0.0, %v9809
        %9811 = vmatmul.bf16.gmra.mxu0 %v9663
        %v9812 = vpop.f32.mrf.mxu0
        %v9813 = vadd.f32 0.0, %v9812
        %v9814 = vpop.f32.mrf.mxu0
        %v9815 = vadd.f32 0.0, %v9814
        %9816 = vdwg.mxu0
        %v9817 = vadd.f32 %v9567, %v9738
        %v9818 = vadd.f32 %v9568, %v9740
        %v9819 = vadd.f32 %v9569, %v9743
        %v9820 = vadd.f32 %v9570, %v9745
        %v9821 = vadd.f32 %v9571, %v9748
        %v9822 = vadd.f32 %v9572, %v9750
        %v9823 = vadd.f32 %v9573, %v9753
        %v9824 = vadd.f32 %v9574, %v9755
        %v9825 = vadd.f32 %v9575, %v9758
        %v9826 = vadd.f32 %v9576, %v9760
        %v9827 = vadd.f32 %v9577, %v9763
        %v9828 = vadd.f32 %v9578, %v9765
        %v9829 = vadd.f32 %v9579, %v9768
        %v9830 = vadd.f32 %v9580, %v9770
        %v9831 = vadd.f32 %v9581, %v9773
        %v9832 = vadd.f32 %v9582, %v9775
        %v9833 = vadd.f32 %v9583, %v9778
        %v9834 = vadd.f32 %v9584, %v9780
        %v9835 = vadd.f32 %v9585, %v9783
        %v9836 = vadd.f32 %v9586, %v9785
        %v9837 = vadd.f32 %v9587, %v9788
        %v9838 = vadd.f32 %v9588, %v9790
        %v9839 = vadd.f32 %v9589, %v9793
        %v9840 = vadd.f32 %v9590, %v9795
        %v9841 = vadd.f32 %v9591, %v9798
        %v9842 = vadd.f32 %v9592, %v9800
        %v9843 = vadd.f32 %v9593, %v9803
        %v9844 = vadd.f32 %v9594, %v9805
        %v9845 = vadd.f32 %v9595, %v9808
        %v9846 = vadd.f32 %v9596, %v9810
        %v9847 = vadd.f32 %v9597, %v9813
        %v9848 = vadd.f32 %v9598, %v9815
        %9849 = vst [vmem:[#allocation3] sm:$0xff] %v9817
        %9850 = vst [vmem:[#allocation3 + $0x8] sm:$0xff] %v9818
        %9851 = vst [vmem:[#allocation3 + $0x10] sm:$0xff] %v9819
        %9852 = vst [vmem:[#allocation3 + $0x18] sm:$0xff] %v9820
        %9853 = vst [vmem:[#allocation3 + $0x20] sm:$0xff] %v9821
        %9854 = vst [vmem:[#allocation3 + $0x28] sm:$0xff] %v9822
        %9855 = vst [vmem:[#allocation3 + $0x30] sm:$0xff] %v9823
        %9856 = vst [vmem:[#allocation3 + $0x38] sm:$0xff] %v9824
        %9857 = vst [vmem:[#allocation3 + $0x40] sm:$0xff] %v9825
        %9858 = vst [vmem:[#allocation3 + $0x48] sm:$0xff] %v9826
        %9859 = vst [vmem:[#allocation3 + $0x50] sm:$0xff] %v9827
        %9860 = vst [vmem:[#allocation3 + $0x58] sm:$0xff] %v9828
        %9861 = vst [vmem:[#allocation3 + $0x60] sm:$0xff] %v9829
        %9862 = vst [vmem:[#allocation3 + $0x68] sm:$0xff] %v9830
        %9863 = vst [vmem:[#allocation3 + $0x70] sm:$0xff] %v9831
        %9864 = vst [vmem:[#allocation3 + $0x78] sm:$0xff] %v9832
        %9865 = vst [vmem:[#allocation3 + $0x80] sm:$0xff] %v9833
        %9866 = vst [vmem:[#allocation3 + $0x88] sm:$0xff] %v9834
        %9867 = vst [vmem:[#allocation3 + $0x90] sm:$0xff] %v9835
        %9868 = vst [vmem:[#allocation3 + $0x98] sm:$0xff] %v9836
        %9869 = vst [vmem:[#allocation3 + $0xa0] sm:$0xff] %v9837
        %9870 = vst [vmem:[#allocation3 + $0xa8] sm:$0xff] %v9838
        %9871 = vst [vmem:[#allocation3 + $0xb0] sm:$0xff] %v9839
        %9872 = vst [vmem:[#allocation3 + $0xb8] sm:$0xff] %v9840
        %9873 = vst [vmem:[#allocation3 + $0xc0] sm:$0xff] %v9841
        %9874 = vst [vmem:[#allocation3 + $0xc8] sm:$0xff] %v9842
        %9875 = vst [vmem:[#allocation3 + $0xd0] sm:$0xff] %v9843
        %9876 = vst [vmem:[#allocation3 + $0xd8] sm:$0xff] %v9844
        %9877 = vst [vmem:[#allocation3 + $0xe0] sm:$0xff] %v9845
        %9878 = vst [vmem:[#allocation3 + $0xe8] sm:$0xff] %v9846
        %9879 = vst [vmem:[#allocation3 + $0xf0] sm:$0xff] %v9847
        %9880 = vst [vmem:[#allocation3 + $0xf8] sm:$0xff] %v9848
        %v9881 = vld [vmem:[%s4171 + $0x4] sm:$0x8]
        %v9882 = vld [vmem:[%s4171 + $0x8] sm:$0xf]
        %v9883 = vld [vmem:[%s4171 + $0xc] sm:$0xf]
        %v9884 = vld [vmem:[%s4171 + $0x1c] sm:$0x8]
        %v9885 = vld [vmem:[%s4171 + $0x20] sm:$0xf]
        %v9886 = vld [vmem:[%s4171 + $0x24] sm:$0xf]
        %v9887 = vld [vmem:[%s4171 + $0x34] sm:$0x8]
        %v9888 = vld [vmem:[%s4171 + $0x38] sm:$0xf]
        %v9889 = vld [vmem:[%s4171 + $0x3c] sm:$0xf]
        %v9890 = vld [vmem:[%s4171 + $0x4c] sm:$0x8]
        %v9891 = vld [vmem:[%s4171 + $0x50] sm:$0xf]
        %v9892 = vld [vmem:[%s4171 + $0x54] sm:$0xf]
        %v9893 = vld [vmem:[%s4171 + $0x64] sm:$0x8]
        %v9894 = vld [vmem:[%s4171 + $0x68] sm:$0xf]
        %v9895 = vld [vmem:[%s4171 + $0x6c] sm:$0xf]
        %v9896 = vld [vmem:[%s4171 + $0x7c] sm:$0x8]
        %v9897 = vld [vmem:[%s4171 + $0x80] sm:$0xf]
        %v9898 = vld [vmem:[%s4171 + $0x84] sm:$0xf]
        %v9899 = vld [vmem:[%s4171 + $0x94] sm:$0x8]
        %v9900 = vld [vmem:[%s4171 + $0x98] sm:$0xf]
        %v9901 = vld [vmem:[%s4171 + $0x9c] sm:$0xf]
        %v9902 = vld [vmem:[%s4171 + $0xac] sm:$0x8]
        %v9903 = vld [vmem:[%s4171 + $0xb0] sm:$0xf]
        %v9904 = vld [vmem:[%s4171 + $0xb4] sm:$0xf]
        %v9905 = vld [vmem:[%s4171 + $0xc4] sm:$0x8]
        %v9906 = vld [vmem:[%s4171 + $0xc8] sm:$0xf]
        %v9907 = vld [vmem:[%s4171 + $0xcc] sm:$0xf]
        %v9908 = vld [vmem:[%s4171 + $0xdc] sm:$0x8]
        %v9909 = vld [vmem:[%s4171 + $0xe0] sm:$0xf]
        %v9910 = vld [vmem:[%s4171 + $0xe4] sm:$0xf]
        %v9911 = vld [vmem:[%s4171 + $0xf4] sm:$0x8]
        %v9912 = vld [vmem:[%s4171 + $0xf8] sm:$0xf]
        %v9913 = vld [vmem:[%s4171 + $0xfc] sm:$0xf]
        %v9914 = vld [vmem:[%s4171 + $0x10c] sm:$0x8]
        %v9915 = vld [vmem:[%s4171 + $0x110] sm:$0xf]
        %v9916 = vld [vmem:[%s4171 + $0x114] sm:$0xf]
        %v9917 = vld [vmem:[%s4171 + $0x124] sm:$0x8]
        %v9918 = vld [vmem:[%s4171 + $0x128] sm:$0xf]
        %v9919 = vld [vmem:[%s4171 + $0x12c] sm:$0xf]
        %v9920 = vld [vmem:[%s4171 + $0x13c] sm:$0x8]
        %v9921 = vld [vmem:[%s4171 + $0x140] sm:$0xf]
        %v9922 = vld [vmem:[%s4171 + $0x144] sm:$0xf]
        %v9923 = vld [vmem:[%s4171 + $0x154] sm:$0x8]
        %v9924 = vld [vmem:[%s4171 + $0x158] sm:$0xf]
        %v9925 = vld [vmem:[%s4171 + $0x15c] sm:$0xf]
        %v9926 = vld [vmem:[%s4171 + $0x16c] sm:$0x8]
        %v9927 = vld [vmem:[%s4171 + $0x170] sm:$0xf]
        %v9928 = vld [vmem:[%s4171 + $0x174] sm:$0xf]
        %v9930 = vshrl.u32 %v9881, 16
        %v9932 = vrot.slane %v9930, 7
        %v9933 = vrot.slane %v9932, 4
        %v9935 = vshrl.u32 %v9882, 16
        %v9937 = vrot.slane %v9935, 7
        %v9938 = vshll.u32 %v9882, 16
        %v9940 = vor.u32 %v9937, %v9938
        %v9941 = vsel %vm540, %v9933, %v9940
        %v9942 = vrot.slane %v9937, 4
        %v9944 = vshrl.u32 %v9883, 16
        %v9946 = vrot.slane %v9944, 7
        %v9947 = vshll.u32 %v9883, 16
        %v9949 = vor.u32 %v9946, %v9947
        %v9950 = vsel %vm540, %v9942, %v9949
        %v9952 = vshrl.u32 %v9884, 16
        %v9954 = vrot.slane %v9952, 7
        %v9955 = vrot.slane %v9954, 4
        %v9957 = vshrl.u32 %v9885, 16
        %v9959 = vrot.slane %v9957, 7
        %v9960 = vshll.u32 %v9885, 16
        %v9962 = vor.u32 %v9959, %v9960
        %v9963 = vsel %vm540, %v9955, %v9962
        %v9964 = vrot.slane %v9959, 4
        %v9966 = vshrl.u32 %v9886, 16
        %v9968 = vrot.slane %v9966, 7
        %v9969 = vshll.u32 %v9886, 16
        %v9971 = vor.u32 %v9968, %v9969
        %v9972 = vsel %vm540, %v9964, %v9971
        %v9974 = vshrl.u32 %v9887, 16
        %v9976 = vrot.slane %v9974, 7
        %v9977 = vrot.slane %v9976, 4
        %v9979 = vshrl.u32 %v9888, 16
        %v9981 = vrot.slane %v9979, 7
        %v9982 = vshll.u32 %v9888, 16
        %v9984 = vor.u32 %v9981, %v9982
        %v9985 = vsel %vm540, %v9977, %v9984
        %v9986 = vrot.slane %v9981, 4
        %v9988 = vshrl.u32 %v9889, 16
        %v9990 = vrot.slane %v9988, 7
        %v9991 = vshll.u32 %v9889, 16
        %v9993 = vor.u32 %v9990, %v9991
        %v9994 = vsel %vm540, %v9986, %v9993
        %v9996 = vshrl.u32 %v9890, 16
        %v9998 = vrot.slane %v9996, 7
        %v9999 = vrot.slane %v9998, 4
        %v10001 = vshrl.u32 %v9891, 16
        %v10003 = vrot.slane %v10001, 7
        %v10004 = vshll.u32 %v9891, 16
        %v10006 = vor.u32 %v10003, %v10004
        %v10007 = vsel %vm540, %v9999, %v10006
        %v10008 = vrot.slane %v10003, 4
        %v10010 = vshrl.u32 %v9892, 16
        %v10012 = vrot.slane %v10010, 7
        %v10013 = vshll.u32 %v9892, 16
        %v10015 = vor.u32 %v10012, %v10013
        %v10016 = vsel %vm540, %v10008, %v10015
        %v10018 = vshrl.u32 %v9893, 16
        %v10020 = vrot.slane %v10018, 7
        %v10021 = vrot.slane %v10020, 4
        %v10023 = vshrl.u32 %v9894, 16
        %v10025 = vrot.slane %v10023, 7
        %v10026 = vshll.u32 %v9894, 16
        %v10028 = vor.u32 %v10025, %v10026
        %v10029 = vsel %vm540, %v10021, %v10028
        %v10030 = vrot.slane %v10025, 4
        %v10032 = vshrl.u32 %v9895, 16
        %v10034 = vrot.slane %v10032, 7
        %v10035 = vshll.u32 %v9895, 16
        %v10037 = vor.u32 %v10034, %v10035
        %v10038 = vsel %vm540, %v10030, %v10037
        %v10040 = vshrl.u32 %v9896, 16
        %v10042 = vrot.slane %v10040, 7
        %v10043 = vrot.slane %v10042, 4
        %v10045 = vshrl.u32 %v9897, 16
        %v10047 = vrot.slane %v10045, 7
        %v10048 = vshll.u32 %v9897, 16
        %v10050 = vor.u32 %v10047, %v10048
        %v10051 = vsel %vm540, %v10043, %v10050
        %v10052 = vrot.slane %v10047, 4
        %v10054 = vshrl.u32 %v9898, 16
        %v10056 = vrot.slane %v10054, 7
        %v10057 = vshll.u32 %v9898, 16
        %v10059 = vor.u32 %v10056, %v10057
        %v10060 = vsel %vm540, %v10052, %v10059
        %v10062 = vshrl.u32 %v9899, 16
        %v10064 = vrot.slane %v10062, 7
        %v10065 = vrot.slane %v10064, 4
        %v10067 = vshrl.u32 %v9900, 16
        %v10069 = vrot.slane %v10067, 7
        %v10070 = vshll.u32 %v9900, 16
        %v10072 = vor.u32 %v10069, %v10070
        %v10073 = vsel %vm540, %v10065, %v10072
        %v10074 = vrot.slane %v10069, 4
        %v10076 = vshrl.u32 %v9901, 16
        %v10078 = vrot.slane %v10076, 7
        %v10079 = vshll.u32 %v9901, 16
        %v10081 = vor.u32 %v10078, %v10079
        %v10082 = vsel %vm540, %v10074, %v10081
        %v10084 = vshrl.u32 %v9902, 16
        %v10086 = vrot.slane %v10084, 7
        %v10087 = vrot.slane %v10086, 4
        %v10089 = vshrl.u32 %v9903, 16
        %v10091 = vrot.slane %v10089, 7
        %v10092 = vshll.u32 %v9903, 16
        %v10094 = vor.u32 %v10091, %v10092
        %v10095 = vsel %vm540, %v10087, %v10094
        %v10096 = vrot.slane %v10091, 4
        %v10098 = vshrl.u32 %v9904, 16
        %v10100 = vrot.slane %v10098, 7
        %v10101 = vshll.u32 %v9904, 16
        %v10103 = vor.u32 %v10100, %v10101
        %v10104 = vsel %vm540, %v10096, %v10103
        %v10106 = vshrl.u32 %v9905, 16
        %v10108 = vrot.slane %v10106, 7
        %v10109 = vrot.slane %v10108, 4
        %v10111 = vshrl.u32 %v9906, 16
        %v10113 = vrot.slane %v10111, 7
        %v10114 = vshll.u32 %v9906, 16
        %v10116 = vor.u32 %v10113, %v10114
        %v10117 = vsel %vm540, %v10109, %v10116
        %v10118 = vrot.slane %v10113, 4
        %v10120 = vshrl.u32 %v9907, 16
        %v10122 = vrot.slane %v10120, 7
        %v10123 = vshll.u32 %v9907, 16
        %v10125 = vor.u32 %v10122, %v10123
        %v10126 = vsel %vm540, %v10118, %v10125
        %v10128 = vshrl.u32 %v9908, 16
        %v10130 = vrot.slane %v10128, 7
        %v10131 = vrot.slane %v10130, 4
        %v10133 = vshrl.u32 %v9909, 16
        %v10135 = vrot.slane %v10133, 7
        %v10136 = vshll.u32 %v9909, 16
        %v10138 = vor.u32 %v10135, %v10136
        %v10139 = vsel %vm540, %v10131, %v10138
        %v10140 = vrot.slane %v10135, 4
        %v10142 = vshrl.u32 %v9910, 16
        %v10144 = vrot.slane %v10142, 7
        %v10145 = vshll.u32 %v9910, 16
        %v10147 = vor.u32 %v10144, %v10145
        %v10148 = vsel %vm540, %v10140, %v10147
        %v10150 = vshrl.u32 %v9911, 16
        %v10152 = vrot.slane %v10150, 7
        %v10153 = vrot.slane %v10152, 4
        %v10155 = vshrl.u32 %v9912, 16
        %v10157 = vrot.slane %v10155, 7
        %v10158 = vshll.u32 %v9912, 16
        %v10160 = vor.u32 %v10157, %v10158
        %v10161 = vsel %vm540, %v10153, %v10160
        %v10162 = vrot.slane %v10157, 4
        %v10164 = vshrl.u32 %v9913, 16
        %v10166 = vrot.slane %v10164, 7
        %v10167 = vshll.u32 %v9913, 16
        %v10169 = vor.u32 %v10166, %v10167
        %v10170 = vsel %vm540, %v10162, %v10169
        %v10172 = vshrl.u32 %v9914, 16
        %v10174 = vrot.slane %v10172, 7
        %v10175 = vrot.slane %v10174, 4
        %v10177 = vshrl.u32 %v9915, 16
        %v10179 = vrot.slane %v10177, 7
        %v10180 = vshll.u32 %v9915, 16
        %v10182 = vor.u32 %v10179, %v10180
        %v10183 = vsel %vm540, %v10175, %v10182
        %v10184 = vrot.slane %v10179, 4
        %v10186 = vshrl.u32 %v9916, 16
        %v10188 = vrot.slane %v10186, 7
        %v10189 = vshll.u32 %v9916, 16
        %v10191 = vor.u32 %v10188, %v10189
        %v10192 = vsel %vm540, %v10184, %v10191
        %v10194 = vshrl.u32 %v9917, 16
        %v10196 = vrot.slane %v10194, 7
        %v10197 = vrot.slane %v10196, 4
        %v10199 = vshrl.u32 %v9918, 16
        %v10201 = vrot.slane %v10199, 7
        %v10202 = vshll.u32 %v9918, 16
        %v10204 = vor.u32 %v10201, %v10202
        %v10205 = vsel %vm540, %v10197, %v10204
        %v10206 = vrot.slane %v10201, 4
        %v10208 = vshrl.u32 %v9919, 16
        %v10210 = vrot.slane %v10208, 7
        %v10211 = vshll.u32 %v9919, 16
        %v10213 = vor.u32 %v10210, %v10211
        %v10214 = vsel %vm540, %v10206, %v10213
        %v10216 = vshrl.u32 %v9920, 16
        %v10218 = vrot.slane %v10216, 7
        %v10219 = vrot.slane %v10218, 4
        %v10221 = vshrl.u32 %v9921, 16
        %v10223 = vrot.slane %v10221, 7
        %v10224 = vshll.u32 %v9921, 16
        %v10226 = vor.u32 %v10223, %v10224
        %v10227 = vsel %vm540, %v10219, %v10226
        %v10228 = vrot.slane %v10223, 4
        %v10230 = vshrl.u32 %v9922, 16
        %v10232 = vrot.slane %v10230, 7
        %v10233 = vshll.u32 %v9922, 16
        %v10235 = vor.u32 %v10232, %v10233
        %v10236 = vsel %vm540, %v10228, %v10235
        %v10238 = vshrl.u32 %v9923, 16
        %v10240 = vrot.slane %v10238, 7
        %v10241 = vrot.slane %v10240, 4
        %v10243 = vshrl.u32 %v9924, 16
        %v10245 = vrot.slane %v10243, 7
        %v10246 = vshll.u32 %v9924, 16
        %v10248 = vor.u32 %v10245, %v10246
        %v10249 = vsel %vm540, %v10241, %v10248
        %v10250 = vrot.slane %v10245, 4
        %v10252 = vshrl.u32 %v9925, 16
        %v10254 = vrot.slane %v10252, 7
        %v10255 = vshll.u32 %v9925, 16
        %v10257 = vor.u32 %v10254, %v10255
        %v10258 = vsel %vm540, %v10250, %v10257
        %v10260 = vshrl.u32 %v9926, 16
        %v10262 = vrot.slane %v10260, 7
        %v10263 = vrot.slane %v10262, 4
        %v10265 = vshrl.u32 %v9927, 16
        %v10267 = vrot.slane %v10265, 7
        %v10268 = vshll.u32 %v9927, 16
        %v10270 = vor.u32 %v10267, %v10268
        %v10271 = vsel %vm540, %v10263, %v10270
        %v10272 = vrot.slane %v10267, 4
        %v10274 = vshrl.u32 %v9928, 16
        %v10276 = vrot.slane %v10274, 7
        %v10277 = vshll.u32 %v9928, 16
        %v10279 = vor.u32 %v10276, %v10277
        %v10280 = vsel %vm540, %v10272, %v10279
        %v10281 = vld [vmem:[#allocation3] sm:$0xff]
        %v10282 = vld [vmem:[#allocation3 + $0x8] sm:$0xff]
        %v10283 = vld [vmem:[#allocation3 + $0x10] sm:$0xff]
        %v10284 = vld [vmem:[#allocation3 + $0x18] sm:$0xff]
        %v10285 = vld [vmem:[#allocation3 + $0x20] sm:$0xff]
        %v10286 = vld [vmem:[#allocation3 + $0x28] sm:$0xff]
        %v10287 = vld [vmem:[#allocation3 + $0x30] sm:$0xff]
        %v10288 = vld [vmem:[#allocation3 + $0x38] sm:$0xff]
        %v10289 = vld [vmem:[#allocation3 + $0x40] sm:$0xff]
        %v10290 = vld [vmem:[#allocation3 + $0x48] sm:$0xff]
        %v10291 = vld [vmem:[#allocation3 + $0x50] sm:$0xff]
        %v10292 = vld [vmem:[#allocation3 + $0x58] sm:$0xff]
        %v10293 = vld [vmem:[#allocation3 + $0x60] sm:$0xff]
        %v10294 = vld [vmem:[#allocation3 + $0x68] sm:$0xff]
        %v10295 = vld [vmem:[#allocation3 + $0x70] sm:$0xff]
        %v10296 = vld [vmem:[#allocation3 + $0x78] sm:$0xff]
        %v10297 = vld [vmem:[#allocation3 + $0x80] sm:$0xff]
        %v10298 = vld [vmem:[#allocation3 + $0x88] sm:$0xff]
        %v10299 = vld [vmem:[#allocation3 + $0x90] sm:$0xff]
        %v10300 = vld [vmem:[#allocation3 + $0x98] sm:$0xff]
        %v10301 = vld [vmem:[#allocation3 + $0xa0] sm:$0xff]
        %v10302 = vld [vmem:[#allocation3 + $0xa8] sm:$0xff]
        %v10303 = vld [vmem:[#allocation3 + $0xb0] sm:$0xff]
        %v10304 = vld [vmem:[#allocation3 + $0xb8] sm:$0xff]
        %v10305 = vld [vmem:[#allocation3 + $0xc0] sm:$0xff]
        %v10306 = vld [vmem:[#allocation3 + $0xc8] sm:$0xff]
        %v10307 = vld [vmem:[#allocation3 + $0xd0] sm:$0xff]
        %v10308 = vld [vmem:[#allocation3 + $0xd8] sm:$0xff]
        %v10309 = vld [vmem:[#allocation3 + $0xe0] sm:$0xff]
        %v10310 = vld [vmem:[#allocation3 + $0xe8] sm:$0xff]
        %v10311 = vld [vmem:[#allocation3 + $0xf0] sm:$0xff]
        %v10312 = vld [vmem:[#allocation3 + $0xf8] sm:$0xff]
        %s10313 = scalar_lea.vmem [#allocation9], 384
        %v10314 = vld [vmem:[%s10313] sm:$0xf]
        %v10315 = vld [vmem:[%s10313 + $0x4] sm:$0xf]
        %v10316 = vld [vmem:[%s10313 + $0x8] sm:$0xf]
        %v10317 = vld [vmem:[%s10313 + $0xc] sm:$0xf]
        %v10318 = vld [vmem:[%s10313 + $0x10] sm:$0xf]
        %v10319 = vld [vmem:[%s10313 + $0x14] sm:$0xf]
        %v10320 = vld [vmem:[%s10313 + $0x18] sm:$0xf]
        %v10321 = vld [vmem:[%s10313 + $0x1c] sm:$0xf]
        %v10322 = vld [vmem:[%s10313 + $0x20] sm:$0xf]
        %v10323 = vld [vmem:[%s10313 + $0x24] sm:$0xf]
        %v10324 = vld [vmem:[%s10313 + $0x28] sm:$0xf]
        %v10325 = vld [vmem:[%s10313 + $0x2c] sm:$0xf]
        %v10326 = vld [vmem:[%s10313 + $0x30] sm:$0xf]
        %v10327 = vld [vmem:[%s10313 + $0x34] sm:$0xf]
        %v10328 = vld [vmem:[%s10313 + $0x38] sm:$0xf]
        %v10329 = vld [vmem:[%s10313 + $0x3c] sm:$0xf]
        %v10330 = vunpack.c.l.b16 %v9941
        %v10331 = vunpack.c.l.b16 %v9950
        %v10332 = vunpack.c.l.b16 %v9963
        %v10333 = vunpack.c.l.b16 %v9972
        %v10334 = vunpack.c.l.b16 %v9985
        %v10335 = vunpack.c.l.b16 %v9994
        %v10336 = vunpack.c.l.b16 %v10007
        %v10337 = vunpack.c.l.b16 %v10016
        %v10338 = vunpack.c.l.b16 %v10029
        %v10339 = vunpack.c.l.b16 %v10038
        %v10340 = vunpack.c.l.b16 %v10051
        %v10341 = vunpack.c.l.b16 %v10060
        %v10342 = vunpack.c.l.b16 %v10073
        %v10343 = vunpack.c.l.b16 %v10082
        %v10344 = vunpack.c.l.b16 %v10095
        %v10345 = vunpack.c.l.b16 %v10104
        %v10346 = vunpack.c.l.b16 %v10117
        %v10347 = vunpack.c.l.b16 %v10126
        %v10348 = vunpack.c.l.b16 %v10139
        %v10349 = vunpack.c.l.b16 %v10148
        %v10350 = vunpack.c.l.b16 %v10161
        %v10351 = vunpack.c.l.b16 %v10170
        %v10352 = vunpack.c.l.b16 %v10183
        %v10353 = vunpack.c.l.b16 %v10192
        %v10354 = vunpack.c.l.b16 %v10205
        %v10355 = vunpack.c.l.b16 %v10214
        %v10356 = vunpack.c.l.b16 %v10227
        %v10357 = vunpack.c.l.b16 %v10236
        %v10358 = vunpack.c.l.b16 %v10249
        %v10359 = vunpack.c.l.b16 %v10258
        %v10360 = vunpack.c.l.b16 %v10271
        %v10361 = vunpack.c.l.b16 %v10280
        %v10362 = vpack.c.b16 %v10331, %v10330
        %v10363 = vpack.c.b16 %v10333, %v10332
        %v10364 = vpack.c.b16 %v10335, %v10334
        %v10365 = vpack.c.b16 %v10337, %v10336
        %v10366 = vpack.c.b16 %v10339, %v10338
        %v10367 = vpack.c.b16 %v10341, %v10340
        %v10368 = vpack.c.b16 %v10343, %v10342
        %v10369 = vpack.c.b16 %v10345, %v10344
        %v10370 = vpack.c.b16 %v10347, %v10346
        %v10371 = vpack.c.b16 %v10349, %v10348
        %v10372 = vpack.c.b16 %v10351, %v10350
        %v10373 = vpack.c.b16 %v10353, %v10352
        %v10374 = vpack.c.b16 %v10355, %v10354
        %v10375 = vpack.c.b16 %v10357, %v10356
        %v10376 = vpack.c.b16 %v10359, %v10358
        %v10377 = vpack.c.b16 %v10361, %v10360
        %v10410 = vunpack.c.l.b16 %v10314
        %v10411 = vunpack.c.l.b16 %v10315
        %v10412 = vunpack.c.l.b16 %v10316
        %v10413 = vunpack.c.l.b16 %v10317
        %v10414 = vunpack.c.l.b16 %v10318
        %v10415 = vunpack.c.l.b16 %v10319
        %v10416 = vunpack.c.l.b16 %v10320
        %v10417 = vunpack.c.l.b16 %v10321
        %v10418 = vunpack.c.l.b16 %v10322
        %v10419 = vunpack.c.l.b16 %v10323
        %v10420 = vunpack.c.l.b16 %v10324
        %v10421 = vunpack.c.l.b16 %v10325
        %v10422 = vunpack.c.l.b16 %v10326
        %v10423 = vunpack.c.l.b16 %v10327
        %v10424 = vunpack.c.l.b16 %v10328
        %v10425 = vunpack.c.l.b16 %v10329
        %v10426 = vpack.c.b16 %v10411, %v10410
        %v10427 = vpack.c.b16 %v10413, %v10412
        %v10428 = vpack.c.b16 %v10415, %v10414
        %v10429 = vpack.c.b16 %v10417, %v10416
        %v10430 = vpack.c.b16 %v10419, %v10418
        %v10431 = vpack.c.b16 %v10421, %v10420
        %v10432 = vpack.c.b16 %v10423, %v10422
        %v10433 = vpack.c.b16 %v10425, %v10424
        %10442 = vmatpush.bf16.msra.mxu0 %v10433
        %10443 = vmatpush.bf16.msra.mxu0 %v10432
        %10444 = vmatpush.bf16.msra.mxu0 %v10431
        %10445 = vmatpush.bf16.msra.mxu0 %v10430
        %10446 = vmatpush.bf16.msra.mxu0 %v10429
        %10447 = vmatpush.bf16.msra.mxu0 %v10428
        %10448 = vmatpush.bf16.msra.mxu0 %v10427
        %10449 = vmatpush.bf16.msra.mxu0 %v10426
        %10450 = vmatmul.bf16.gmra.mxu0 %v10362
        %v10451 = vpop.f32.mrf.mxu0
        %v10452 = vadd.f32 0.0, %v10451
        %v10453 = vpop.f32.mrf.mxu0
        %v10454 = vadd.f32 0.0, %v10453
        %10455 = vmatmul.bf16.gmra.mxu0 %v10363
        %v10456 = vpop.f32.mrf.mxu0
        %v10457 = vadd.f32 0.0, %v10456
        %v10458 = vpop.f32.mrf.mxu0
        %v10459 = vadd.f32 0.0, %v10458
        %10460 = vmatmul.bf16.gmra.mxu0 %v10364
        %v10461 = vpop.f32.mrf.mxu0
        %v10462 = vadd.f32 0.0, %v10461
        %v10463 = vpop.f32.mrf.mxu0
        %v10464 = vadd.f32 0.0, %v10463
        %10465 = vmatmul.bf16.gmra.mxu0 %v10365
        %v10466 = vpop.f32.mrf.mxu0
        %v10467 = vadd.f32 0.0, %v10466
        %v10468 = vpop.f32.mrf.mxu0
        %v10469 = vadd.f32 0.0, %v10468
        %10470 = vmatmul.bf16.gmra.mxu0 %v10366
        %v10471 = vpop.f32.mrf.mxu0
        %v10472 = vadd.f32 0.0, %v10471
        %v10473 = vpop.f32.mrf.mxu0
        %v10474 = vadd.f32 0.0, %v10473
        %10475 = vmatmul.bf16.gmra.mxu0 %v10367
        %v10476 = vpop.f32.mrf.mxu0
        %v10477 = vadd.f32 0.0, %v10476
        %v10478 = vpop.f32.mrf.mxu0
        %v10479 = vadd.f32 0.0, %v10478
        %10480 = vmatmul.bf16.gmra.mxu0 %v10368
        %v10481 = vpop.f32.mrf.mxu0
        %v10482 = vadd.f32 0.0, %v10481
        %v10483 = vpop.f32.mrf.mxu0
        %v10484 = vadd.f32 0.0, %v10483
        %10485 = vmatmul.bf16.gmra.mxu0 %v10369
        %v10486 = vpop.f32.mrf.mxu0
        %v10487 = vadd.f32 0.0, %v10486
        %v10488 = vpop.f32.mrf.mxu0
        %v10489 = vadd.f32 0.0, %v10488
        %10490 = vmatmul.bf16.gmra.mxu0 %v10370
        %v10491 = vpop.f32.mrf.mxu0
        %v10492 = vadd.f32 0.0, %v10491
        %v10493 = vpop.f32.mrf.mxu0
        %v10494 = vadd.f32 0.0, %v10493
        %10495 = vmatmul.bf16.gmra.mxu0 %v10371
        %v10496 = vpop.f32.mrf.mxu0
        %v10497 = vadd.f32 0.0, %v10496
        %v10498 = vpop.f32.mrf.mxu0
        %v10499 = vadd.f32 0.0, %v10498
        %10500 = vmatmul.bf16.gmra.mxu0 %v10372
        %v10501 = vpop.f32.mrf.mxu0
        %v10502 = vadd.f32 0.0, %v10501
        %v10503 = vpop.f32.mrf.mxu0
        %v10504 = vadd.f32 0.0, %v10503
        %10505 = vmatmul.bf16.gmra.mxu0 %v10373
        %v10506 = vpop.f32.mrf.mxu0
        %v10507 = vadd.f32 0.0, %v10506
        %v10508 = vpop.f32.mrf.mxu0
        %v10509 = vadd.f32 0.0, %v10508
        %10510 = vmatmul.bf16.gmra.mxu0 %v10374
        %v10511 = vpop.f32.mrf.mxu0
        %v10512 = vadd.f32 0.0, %v10511
        %v10513 = vpop.f32.mrf.mxu0
        %v10514 = vadd.f32 0.0, %v10513
        %10515 = vmatmul.bf16.gmra.mxu0 %v10375
        %v10516 = vpop.f32.mrf.mxu0
        %v10517 = vadd.f32 0.0, %v10516
        %v10518 = vpop.f32.mrf.mxu0
        %v10519 = vadd.f32 0.0, %v10518
        %10520 = vmatmul.bf16.gmra.mxu0 %v10376
        %v10521 = vpop.f32.mrf.mxu0
        %v10522 = vadd.f32 0.0, %v10521
        %v10523 = vpop.f32.mrf.mxu0
        %v10524 = vadd.f32 0.0, %v10523
        %10525 = vmatmul.bf16.gmra.mxu0 %v10377
        %v10526 = vpop.f32.mrf.mxu0
        %v10527 = vadd.f32 0.0, %v10526
        %v10528 = vpop.f32.mrf.mxu0
        %v10529 = vadd.f32 0.0, %v10528
        %10530 = vdwg.mxu0
        %v10531 = vadd.f32 %v10281, %v10452
        %v10532 = vadd.f32 %v10282, %v10454
        %v10533 = vadd.f32 %v10283, %v10457
        %v10534 = vadd.f32 %v10284, %v10459
        %v10535 = vadd.f32 %v10285, %v10462
        %v10536 = vadd.f32 %v10286, %v10464
        %v10537 = vadd.f32 %v10287, %v10467
        %v10538 = vadd.f32 %v10288, %v10469
        %v10539 = vadd.f32 %v10289, %v10472
        %v10540 = vadd.f32 %v10290, %v10474
        %v10541 = vadd.f32 %v10291, %v10477
        %v10542 = vadd.f32 %v10292, %v10479
        %v10543 = vadd.f32 %v10293, %v10482
        %v10544 = vadd.f32 %v10294, %v10484
        %v10545 = vadd.f32 %v10295, %v10487
        %v10546 = vadd.f32 %v10296, %v10489
        %v10547 = vadd.f32 %v10297, %v10492
        %v10548 = vadd.f32 %v10298, %v10494
        %v10549 = vadd.f32 %v10299, %v10497
        %v10550 = vadd.f32 %v10300, %v10499
        %v10551 = vadd.f32 %v10301, %v10502
        %v10552 = vadd.f32 %v10302, %v10504
        %v10553 = vadd.f32 %v10303, %v10507
        %v10554 = vadd.f32 %v10304, %v10509
        %v10555 = vadd.f32 %v10305, %v10512
        %v10556 = vadd.f32 %v10306, %v10514
        %v10557 = vadd.f32 %v10307, %v10517
        %v10558 = vadd.f32 %v10308, %v10519
        %v10559 = vadd.f32 %v10309, %v10522
        %v10560 = vadd.f32 %v10310, %v10524
        %v10561 = vadd.f32 %v10311, %v10527
        %v10562 = vadd.f32 %v10312, %v10529
        %10563 = vst [vmem:[#allocation3] sm:$0xff] %v10531
        %10564 = vst [vmem:[#allocation3 + $0x8] sm:$0xff] %v10532
        %10565 = vst [vmem:[#allocation3 + $0x10] sm:$0xff] %v10533
        %10566 = vst [vmem:[#allocation3 + $0x18] sm:$0xff] %v10534
        %10567 = vst [vmem:[#allocation3 + $0x20] sm:$0xff] %v10535
        %10568 = vst [vmem:[#allocation3 + $0x28] sm:$0xff] %v10536
        %10569 = vst [vmem:[#allocation3 + $0x30] sm:$0xff] %v10537
        %10570 = vst [vmem:[#allocation3 + $0x38] sm:$0xff] %v10538
        %10571 = vst [vmem:[#allocation3 + $0x40] sm:$0xff] %v10539
        %10572 = vst [vmem:[#allocation3 + $0x48] sm:$0xff] %v10540
        %10573 = vst [vmem:[#allocation3 + $0x50] sm:$0xff] %v10541
        %10574 = vst [vmem:[#allocation3 + $0x58] sm:$0xff] %v10542
        %10575 = vst [vmem:[#allocation3 + $0x60] sm:$0xff] %v10543
        %10576 = vst [vmem:[#allocation3 + $0x68] sm:$0xff] %v10544
        %10577 = vst [vmem:[#allocation3 + $0x70] sm:$0xff] %v10545
        %10578 = vst [vmem:[#allocation3 + $0x78] sm:$0xff] %v10546
        %10579 = vst [vmem:[#allocation3 + $0x80] sm:$0xff] %v10547
        %10580 = vst [vmem:[#allocation3 + $0x88] sm:$0xff] %v10548
        %10581 = vst [vmem:[#allocation3 + $0x90] sm:$0xff] %v10549
        %10582 = vst [vmem:[#allocation3 + $0x98] sm:$0xff] %v10550
        %10583 = vst [vmem:[#allocation3 + $0xa0] sm:$0xff] %v10551
        %10584 = vst [vmem:[#allocation3 + $0xa8] sm:$0xff] %v10552
        %10585 = vst [vmem:[#allocation3 + $0xb0] sm:$0xff] %v10553
        %10586 = vst [vmem:[#allocation3 + $0xb8] sm:$0xff] %v10554
        %10587 = vst [vmem:[#allocation3 + $0xc0] sm:$0xff] %v10555
        %10588 = vst [vmem:[#allocation3 + $0xc8] sm:$0xff] %v10556
        %10589 = vst [vmem:[#allocation3 + $0xd0] sm:$0xff] %v10557
        %10590 = vst [vmem:[#allocation3 + $0xd8] sm:$0xff] %v10558
        %10591 = vst [vmem:[#allocation3 + $0xe0] sm:$0xff] %v10559
        %10592 = vst [vmem:[#allocation3 + $0xe8] sm:$0xff] %v10560
        %10593 = vst [vmem:[#allocation3 + $0xf0] sm:$0xff] %v10561
        %10594 = vst [vmem:[#allocation3 + $0xf8] sm:$0xff] %v10562
        %v10595 = vld [vmem:[%s4171 + $0x8] sm:$0xf]
        %v10596 = vld [vmem:[%s4171 + $0xc] sm:$0xf]
        %v10597 = vld [vmem:[%s4171 + $0x20] sm:$0xf]
        %v10598 = vld [vmem:[%s4171 + $0x24] sm:$0xf]
        %v10599 = vld [vmem:[%s4171 + $0x38] sm:$0xf]
        %v10600 = vld [vmem:[%s4171 + $0x3c] sm:$0xf]
        %v10601 = vld [vmem:[%s4171 + $0x50] sm:$0xf]
        %v10602 = vld [vmem:[%s4171 + $0x54] sm:$0xf]
        %v10603 = vld [vmem:[%s4171 + $0x68] sm:$0xf]
        %v10604 = vld [vmem:[%s4171 + $0x6c] sm:$0xf]
        %v10605 = vld [vmem:[%s4171 + $0x80] sm:$0xf]
        %v10606 = vld [vmem:[%s4171 + $0x84] sm:$0xf]
        %v10607 = vld [vmem:[%s4171 + $0x98] sm:$0xf]
        %v10608 = vld [vmem:[%s4171 + $0x9c] sm:$0xf]
        %v10609 = vld [vmem:[%s4171 + $0xb0] sm:$0xf]
        %v10610 = vld [vmem:[%s4171 + $0xb4] sm:$0xf]
        %v10611 = vld [vmem:[%s4171 + $0xc8] sm:$0xf]
        %v10612 = vld [vmem:[%s4171 + $0xcc] sm:$0xf]
        %v10613 = vld [vmem:[%s4171 + $0xe0] sm:$0xf]
        %v10614 = vld [vmem:[%s4171 + $0xe4] sm:$0xf]
        %v10615 = vld [vmem:[%s4171 + $0xf8] sm:$0xf]
        %v10616 = vld [vmem:[%s4171 + $0xfc] sm:$0xf]
        %v10617 = vld [vmem:[%s4171 + $0x110] sm:$0xf]
        %v10618 = vld [vmem:[%s4171 + $0x114] sm:$0xf]
        %v10619 = vld [vmem:[%s4171 + $0x128] sm:$0xf]
        %v10620 = vld [vmem:[%s4171 + $0x12c] sm:$0xf]
        %v10621 = vld [vmem:[%s4171 + $0x140] sm:$0xf]
        %v10622 = vld [vmem:[%s4171 + $0x144] sm:$0xf]
        %v10623 = vld [vmem:[%s4171 + $0x158] sm:$0xf]
        %v10624 = vld [vmem:[%s4171 + $0x15c] sm:$0xf]
        %v10625 = vld [vmem:[%s4171 + $0x170] sm:$0xf]
        %v10626 = vld [vmem:[%s4171 + $0x174] sm:$0xf]
        %v10627 = vld [vmem:[#allocation3] sm:$0xff]
        %v10628 = vld [vmem:[#allocation3 + $0x8] sm:$0xff]
        %v10629 = vld [vmem:[#allocation3 + $0x10] sm:$0xff]
        %v10630 = vld [vmem:[#allocation3 + $0x18] sm:$0xff]
        %v10631 = vld [vmem:[#allocation3 + $0x20] sm:$0xff]
        %v10632 = vld [vmem:[#allocation3 + $0x28] sm:$0xff]
        %v10633 = vld [vmem:[#allocation3 + $0x30] sm:$0xff]
        %v10634 = vld [vmem:[#allocation3 + $0x38] sm:$0xff]
        %v10635 = vld [vmem:[#allocation3 + $0x40] sm:$0xff]
        %v10636 = vld [vmem:[#allocation3 + $0x48] sm:$0xff]
        %v10637 = vld [vmem:[#allocation3 + $0x50] sm:$0xff]
        %v10638 = vld [vmem:[#allocation3 + $0x58] sm:$0xff]
        %v10639 = vld [vmem:[#allocation3 + $0x60] sm:$0xff]
        %v10640 = vld [vmem:[#allocation3 + $0x68] sm:$0xff]
        %v10641 = vld [vmem:[#allocation3 + $0x70] sm:$0xff]
        %v10642 = vld [vmem:[#allocation3 + $0x78] sm:$0xff]
        %v10643 = vld [vmem:[#allocation3 + $0x80] sm:$0xff]
        %v10644 = vld [vmem:[#allocation3 + $0x88] sm:$0xff]
        %v10645 = vld [vmem:[#allocation3 + $0x90] sm:$0xff]
        %v10646 = vld [vmem:[#allocation3 + $0x98] sm:$0xff]
        %v10647 = vld [vmem:[#allocation3 + $0xa0] sm:$0xff]
        %v10648 = vld [vmem:[#allocation3 + $0xa8] sm:$0xff]
        %v10649 = vld [vmem:[#allocation3 + $0xb0] sm:$0xff]
        %v10650 = vld [vmem:[#allocation3 + $0xb8] sm:$0xff]
        %v10651 = vld [vmem:[#allocation3 + $0xc0] sm:$0xff]
        %v10652 = vld [vmem:[#allocation3 + $0xc8] sm:$0xff]
        %v10653 = vld [vmem:[#allocation3 + $0xd0] sm:$0xff]
        %v10654 = vld [vmem:[#allocation3 + $0xd8] sm:$0xff]
        %v10655 = vld [vmem:[#allocation3 + $0xe0] sm:$0xff]
        %v10656 = vld [vmem:[#allocation3 + $0xe8] sm:$0xff]
        %v10657 = vld [vmem:[#allocation3 + $0xf0] sm:$0xff]
        %v10658 = vld [vmem:[#allocation3 + $0xf8] sm:$0xff]
        %s10659 = scalar_lea.vmem [#allocation9], 448
        %v10660 = vld [vmem:[%s10659] sm:$0xf]
        %v10661 = vld [vmem:[%s10659 + $0x4] sm:$0xf]
        %v10662 = vld [vmem:[%s10659 + $0x8] sm:$0xf]
        %v10663 = vld [vmem:[%s10659 + $0xc] sm:$0xf]
        %v10664 = vld [vmem:[%s10659 + $0x10] sm:$0xf]
        %v10665 = vld [vmem:[%s10659 + $0x14] sm:$0xf]
        %v10666 = vld [vmem:[%s10659 + $0x18] sm:$0xf]
        %v10667 = vld [vmem:[%s10659 + $0x1c] sm:$0xf]
        %v10668 = vld [vmem:[%s10659 + $0x20] sm:$0xf]
        %v10669 = vld [vmem:[%s10659 + $0x24] sm:$0xf]
        %v10670 = vld [vmem:[%s10659 + $0x28] sm:$0xf]
        %v10671 = vld [vmem:[%s10659 + $0x2c] sm:$0xf]
        %v10672 = vld [vmem:[%s10659 + $0x30] sm:$0xf]
        %v10673 = vld [vmem:[%s10659 + $0x34] sm:$0xf]
        %v10674 = vld [vmem:[%s10659 + $0x38] sm:$0xf]
        %v10675 = vld [vmem:[%s10659 + $0x3c] sm:$0xf]
        %v10708 = vunpack.c.l.b16 %v10595
        %v10709 = vunpack.c.l.b16 %v10596
        %v10710 = vunpack.c.l.b16 %v10597
        %v10711 = vunpack.c.l.b16 %v10598
        %v10712 = vunpack.c.l.b16 %v10599
        %v10713 = vunpack.c.l.b16 %v10600
        %v10714 = vunpack.c.l.b16 %v10601
        %v10715 = vunpack.c.l.b16 %v10602
        %v10716 = vunpack.c.l.b16 %v10603
        %v10717 = vunpack.c.l.b16 %v10604
        %v10718 = vunpack.c.l.b16 %v10605
        %v10719 = vunpack.c.l.b16 %v10606
        %v10720 = vunpack.c.l.b16 %v10607
        %v10721 = vunpack.c.l.b16 %v10608
        %v10722 = vunpack.c.l.b16 %v10609
        %v10723 = vunpack.c.l.b16 %v10610
        %v10724 = vunpack.c.l.b16 %v10611
        %v10725 = vunpack.c.l.b16 %v10612
        %v10726 = vunpack.c.l.b16 %v10613
        %v10727 = vunpack.c.l.b16 %v10614
        %v10728 = vunpack.c.l.b16 %v10615
        %v10729 = vunpack.c.l.b16 %v10616
        %v10730 = vunpack.c.l.b16 %v10617
        %v10731 = vunpack.c.l.b16 %v10618
        %v10732 = vunpack.c.l.b16 %v10619
        %v10733 = vunpack.c.l.b16 %v10620
        %v10734 = vunpack.c.l.b16 %v10621
        %v10735 = vunpack.c.l.b16 %v10622
        %v10736 = vunpack.c.l.b16 %v10623
        %v10737 = vunpack.c.l.b16 %v10624
        %v10738 = vunpack.c.l.b16 %v10625
        %v10739 = vunpack.c.l.b16 %v10626
        %v10740 = vpack.c.b16 %v10709, %v10708
        %v10741 = vpack.c.b16 %v10711, %v10710
        %v10742 = vpack.c.b16 %v10713, %v10712
        %v10743 = vpack.c.b16 %v10715, %v10714
        %v10744 = vpack.c.b16 %v10717, %v10716
        %v10745 = vpack.c.b16 %v10719, %v10718
        %v10746 = vpack.c.b16 %v10721, %v10720
        %v10747 = vpack.c.b16 %v10723, %v10722
        %v10748 = vpack.c.b16 %v10725, %v10724
        %v10749 = vpack.c.b16 %v10727, %v10726
        %v10750 = vpack.c.b16 %v10729, %v10728
        %v10751 = vpack.c.b16 %v10731, %v10730
        %v10752 = vpack.c.b16 %v10733, %v10732
        %v10753 = vpack.c.b16 %v10735, %v10734
        %v10754 = vpack.c.b16 %v10737, %v10736
        %v10755 = vpack.c.b16 %v10739, %v10738
        %v10788 = vunpack.c.l.b16 %v10660
        %v10789 = vunpack.c.l.b16 %v10661
        %v10790 = vunpack.c.l.b16 %v10662
        %v10791 = vunpack.c.l.b16 %v10663
        %v10792 = vunpack.c.l.b16 %v10664
        %v10793 = vunpack.c.l.b16 %v10665
        %v10794 = vunpack.c.l.b16 %v10666
        %v10795 = vunpack.c.l.b16 %v10667
        %v10796 = vunpack.c.l.b16 %v10668
        %v10797 = vunpack.c.l.b16 %v10669
        %v10798 = vunpack.c.l.b16 %v10670
        %v10799 = vunpack.c.l.b16 %v10671
        %v10800 = vunpack.c.l.b16 %v10672
        %v10801 = vunpack.c.l.b16 %v10673
        %v10802 = vunpack.c.l.b16 %v10674
        %v10803 = vunpack.c.l.b16 %v10675
        %v10804 = vpack.c.b16 %v10789, %v10788
        %v10805 = vpack.c.b16 %v10791, %v10790
        %v10806 = vpack.c.b16 %v10793, %v10792
        %v10807 = vpack.c.b16 %v10795, %v10794
        %v10808 = vpack.c.b16 %v10797, %v10796
        %v10809 = vpack.c.b16 %v10799, %v10798
        %v10810 = vpack.c.b16 %v10801, %v10800
        %v10811 = vpack.c.b16 %v10803, %v10802
        %10820 = vmatpush.bf16.msra.mxu0 %v10811
        %10821 = vmatpush.bf16.msra.mxu0 %v10810
        %10822 = vmatpush.bf16.msra.mxu0 %v10809
        %10823 = vmatpush.bf16.msra.mxu0 %v10808
        %10824 = vmatpush.bf16.msra.mxu0 %v10807
        %10825 = vmatpush.bf16.msra.mxu0 %v10806
        %10826 = vmatpush.bf16.msra.mxu0 %v10805
        %10827 = vmatpush.bf16.msra.mxu0 %v10804
        %10828 = vmatmul.bf16.gmra.mxu0 %v10740
        %v10829 = vpop.f32.mrf.mxu0
        %v10830 = vadd.f32 0.0, %v10829
        %v10831 = vpop.f32.mrf.mxu0
        %v10832 = vadd.f32 0.0, %v10831
        %10833 = vmatmul.bf16.gmra.mxu0 %v10741
        %v10834 = vpop.f32.mrf.mxu0
        %v10835 = vadd.f32 0.0, %v10834
        %v10836 = vpop.f32.mrf.mxu0
        %v10837 = vadd.f32 0.0, %v10836
        %10838 = vmatmul.bf16.gmra.mxu0 %v10742
        %v10839 = vpop.f32.mrf.mxu0
        %v10840 = vadd.f32 0.0, %v10839
        %v10841 = vpop.f32.mrf.mxu0
        %v10842 = vadd.f32 0.0, %v10841
        %10843 = vmatmul.bf16.gmra.mxu0 %v10743
        %v10844 = vpop.f32.mrf.mxu0
        %v10845 = vadd.f32 0.0, %v10844
        %v10846 = vpop.f32.mrf.mxu0
        %v10847 = vadd.f32 0.0, %v10846
        %10848 = vmatmul.bf16.gmra.mxu0 %v10744
        %v10849 = vpop.f32.mrf.mxu0
        %v10850 = vadd.f32 0.0, %v10849
        %v10851 = vpop.f32.mrf.mxu0
        %v10852 = vadd.f32 0.0, %v10851
        %10853 = vmatmul.bf16.gmra.mxu0 %v10745
        %v10854 = vpop.f32.mrf.mxu0
        %v10855 = vadd.f32 0.0, %v10854
        %v10856 = vpop.f32.mrf.mxu0
        %v10857 = vadd.f32 0.0, %v10856
        %10858 = vmatmul.bf16.gmra.mxu0 %v10746
        %v10859 = vpop.f32.mrf.mxu0
        %v10860 = vadd.f32 0.0, %v10859
        %v10861 = vpop.f32.mrf.mxu0
        %v10862 = vadd.f32 0.0, %v10861
        %10863 = vmatmul.bf16.gmra.mxu0 %v10747
        %v10864 = vpop.f32.mrf.mxu0
        %v10865 = vadd.f32 0.0, %v10864
        %v10866 = vpop.f32.mrf.mxu0
        %v10867 = vadd.f32 0.0, %v10866
        %10868 = vmatmul.bf16.gmra.mxu0 %v10748
        %v10869 = vpop.f32.mrf.mxu0
        %v10870 = vadd.f32 0.0, %v10869
        %v10871 = vpop.f32.mrf.mxu0
        %v10872 = vadd.f32 0.0, %v10871
        %10873 = vmatmul.bf16.gmra.mxu0 %v10749
        %v10874 = vpop.f32.mrf.mxu0
        %v10875 = vadd.f32 0.0, %v10874
        %v10876 = vpop.f32.mrf.mxu0
        %v10877 = vadd.f32 0.0, %v10876
        %10878 = vmatmul.bf16.gmra.mxu0 %v10750
        %v10879 = vpop.f32.mrf.mxu0
        %v10880 = vadd.f32 0.0, %v10879
        %v10881 = vpop.f32.mrf.mxu0
        %v10882 = vadd.f32 0.0, %v10881
        %10883 = vmatmul.bf16.gmra.mxu0 %v10751
        %v10884 = vpop.f32.mrf.mxu0
        %v10885 = vadd.f32 0.0, %v10884
        %v10886 = vpop.f32.mrf.mxu0
        %v10887 = vadd.f32 0.0, %v10886
        %10888 = vmatmul.bf16.gmra.mxu0 %v10752
        %v10889 = vpop.f32.mrf.mxu0
        %v10890 = vadd.f32 0.0, %v10889
        %v10891 = vpop.f32.mrf.mxu0
        %v10892 = vadd.f32 0.0, %v10891
        %10893 = vmatmul.bf16.gmra.mxu0 %v10753
        %v10894 = vpop.f32.mrf.mxu0
        %v10895 = vadd.f32 0.0, %v10894
        %v10896 = vpop.f32.mrf.mxu0
        %v10897 = vadd.f32 0.0, %v10896
        %10898 = vmatmul.bf16.gmra.mxu0 %v10754
        %v10899 = vpop.f32.mrf.mxu0
        %v10900 = vadd.f32 0.0, %v10899
        %v10901 = vpop.f32.mrf.mxu0
        %v10902 = vadd.f32 0.0, %v10901
        %10903 = vmatmul.bf16.gmra.mxu0 %v10755
        %v10904 = vpop.f32.mrf.mxu0
        %v10905 = vadd.f32 0.0, %v10904
        %v10906 = vpop.f32.mrf.mxu0
        %v10907 = vadd.f32 0.0, %v10906
        %10908 = vdwg.mxu0
        %v10909 = vadd.f32 %v10627, %v10830
        %v10910 = vadd.f32 %v10628, %v10832
        %v10911 = vadd.f32 %v10629, %v10835
        %v10912 = vadd.f32 %v10630, %v10837
        %v10913 = vadd.f32 %v10631, %v10840
        %v10914 = vadd.f32 %v10632, %v10842
        %v10915 = vadd.f32 %v10633, %v10845
        %v10916 = vadd.f32 %v10634, %v10847
        %v10917 = vadd.f32 %v10635, %v10850
        %v10918 = vadd.f32 %v10636, %v10852
        %v10919 = vadd.f32 %v10637, %v10855
        %v10920 = vadd.f32 %v10638, %v10857
        %v10921 = vadd.f32 %v10639, %v10860
        %v10922 = vadd.f32 %v10640, %v10862
        %v10923 = vadd.f32 %v10641, %v10865
        %v10924 = vadd.f32 %v10642, %v10867
        %v10925 = vadd.f32 %v10643, %v10870
        %v10926 = vadd.f32 %v10644, %v10872
        %v10927 = vadd.f32 %v10645, %v10875
        %v10928 = vadd.f32 %v10646, %v10877
        %v10929 = vadd.f32 %v10647, %v10880
        %v10930 = vadd.f32 %v10648, %v10882
        %v10931 = vadd.f32 %v10649, %v10885
        %v10932 = vadd.f32 %v10650, %v10887
        %v10933 = vadd.f32 %v10651, %v10890
        %v10934 = vadd.f32 %v10652, %v10892
        %v10935 = vadd.f32 %v10653, %v10895
        %v10936 = vadd.f32 %v10654, %v10897
        %v10937 = vadd.f32 %v10655, %v10900
        %v10938 = vadd.f32 %v10656, %v10902
        %v10939 = vadd.f32 %v10657, %v10905
        %v10940 = vadd.f32 %v10658, %v10907
        %10941 = vst [vmem:[#allocation3] sm:$0xff] %v10909
        %10942 = vst [vmem:[#allocation3 + $0x8] sm:$0xff] %v10910
        %10943 = vst [vmem:[#allocation3 + $0x10] sm:$0xff] %v10911
        %10944 = vst [vmem:[#allocation3 + $0x18] sm:$0xff] %v10912
        %10945 = vst [vmem:[#allocation3 + $0x20] sm:$0xff] %v10913
        %10946 = vst [vmem:[#allocation3 + $0x28] sm:$0xff] %v10914
        %10947 = vst [vmem:[#allocation3 + $0x30] sm:$0xff] %v10915
        %10948 = vst [vmem:[#allocation3 + $0x38] sm:$0xff] %v10916
        %10949 = vst [vmem:[#allocation3 + $0x40] sm:$0xff] %v10917
        %10950 = vst [vmem:[#allocation3 + $0x48] sm:$0xff] %v10918
        %10951 = vst [vmem:[#allocation3 + $0x50] sm:$0xff] %v10919
        %10952 = vst [vmem:[#allocation3 + $0x58] sm:$0xff] %v10920
        %10953 = vst [vmem:[#allocation3 + $0x60] sm:$0xff] %v10921
        %10954 = vst [vmem:[#allocation3 + $0x68] sm:$0xff] %v10922
        %10955 = vst [vmem:[#allocation3 + $0x70] sm:$0xff] %v10923
        %10956 = vst [vmem:[#allocation3 + $0x78] sm:$0xff] %v10924
        %10957 = vst [vmem:[#allocation3 + $0x80] sm:$0xff] %v10925
        %10958 = vst [vmem:[#allocation3 + $0x88] sm:$0xff] %v10926
        %10959 = vst [vmem:[#allocation3 + $0x90] sm:$0xff] %v10927
        %10960 = vst [vmem:[#allocation3 + $0x98] sm:$0xff] %v10928
        %10961 = vst [vmem:[#allocation3 + $0xa0] sm:$0xff] %v10929
        %10962 = vst [vmem:[#allocation3 + $0xa8] sm:$0xff] %v10930
        %10963 = vst [vmem:[#allocation3 + $0xb0] sm:$0xff] %v10931
        %10964 = vst [vmem:[#allocation3 + $0xb8] sm:$0xff] %v10932
        %10965 = vst [vmem:[#allocation3 + $0xc0] sm:$0xff] %v10933
        %10966 = vst [vmem:[#allocation3 + $0xc8] sm:$0xff] %v10934
        %10967 = vst [vmem:[#allocation3 + $0xd0] sm:$0xff] %v10935
        %10968 = vst [vmem:[#allocation3 + $0xd8] sm:$0xff] %v10936
        %10969 = vst [vmem:[#allocation3 + $0xe0] sm:$0xff] %v10937
        %10970 = vst [vmem:[#allocation3 + $0xe8] sm:$0xff] %v10938
        %10971 = vst [vmem:[#allocation3 + $0xf0] sm:$0xff] %v10939
        %10972 = vst [vmem:[#allocation3 + $0xf8] sm:$0xff] %v10940
        %v10973 = vld [vmem:[%s4171 + $0x8] sm:$0xf]
        %v10974 = vld [vmem:[%s4171 + $0xc] sm:$0xf]
        %v10975 = vld [vmem:[%s4171 + $0x10] sm:$0x1]
        %v10976 = vld [vmem:[%s4171 + $0x20] sm:$0xf]
        %v10977 = vld [vmem:[%s4171 + $0x24] sm:$0xf]
        %v10978 = vld [vmem:[%s4171 + $0x28] sm:$0x1]
        %v10979 = vld [vmem:[%s4171 + $0x38] sm:$0xf]
        %v10980 = vld [vmem:[%s4171 + $0x3c] sm:$0xf]
        %v10981 = vld [vmem:[%s4171 + $0x40] sm:$0x1]
        %v10982 = vld [vmem:[%s4171 + $0x50] sm:$0xf]
        %v10983 = vld [vmem:[%s4171 + $0x54] sm:$0xf]
        %v10984 = vld [vmem:[%s4171 + $0x58] sm:$0x1]
        %v10985 = vld [vmem:[%s4171 + $0x68] sm:$0xf]
        %v10986 = vld [vmem:[%s4171 + $0x6c] sm:$0xf]
        %v10987 = vld [vmem:[%s4171 + $0x70] sm:$0x1]
        %v10988 = vld [vmem:[%s4171 + $0x80] sm:$0xf]
        %v10989 = vld [vmem:[%s4171 + $0x84] sm:$0xf]
        %v10990 = vld [vmem:[%s4171 + $0x88] sm:$0x1]
        %v10991 = vld [vmem:[%s4171 + $0x98] sm:$0xf]
        %v10992 = vld [vmem:[%s4171 + $0x9c] sm:$0xf]
        %v10993 = vld [vmem:[%s4171 + $0xa0] sm:$0x1]
        %v10994 = vld [vmem:[%s4171 + $0xb0] sm:$0xf]
        %v10995 = vld [vmem:[%s4171 + $0xb4] sm:$0xf]
        %v10996 = vld [vmem:[%s4171 + $0xb8] sm:$0x1]
        %v10997 = vld [vmem:[%s4171 + $0xc8] sm:$0xf]
        %v10998 = vld [vmem:[%s4171 + $0xcc] sm:$0xf]
        %v10999 = vld [vmem:[%s4171 + $0xd0] sm:$0x1]
        %v11000 = vld [vmem:[%s4171 + $0xe0] sm:$0xf]
        %v11001 = vld [vmem:[%s4171 + $0xe4] sm:$0xf]
        %v11002 = vld [vmem:[%s4171 + $0xe8] sm:$0x1]
        %v11003 = vld [vmem:[%s4171 + $0xf8] sm:$0xf]
        %v11004 = vld [vmem:[%s4171 + $0xfc] sm:$0xf]
        %v11005 = vld [vmem:[%s4171 + $0x100] sm:$0x1]
        %v11006 = vld [vmem:[%s4171 + $0x110] sm:$0xf]
        %v11007 = vld [vmem:[%s4171 + $0x114] sm:$0xf]
        %v11008 = vld [vmem:[%s4171 + $0x118] sm:$0x1]
        %v11009 = vld [vmem:[%s4171 + $0x128] sm:$0xf]
        %v11010 = vld [vmem:[%s4171 + $0x12c] sm:$0xf]
        %v11011 = vld [vmem:[%s4171 + $0x130] sm:$0x1]
        %v11012 = vld [vmem:[%s4171 + $0x140] sm:$0xf]
        %v11013 = vld [vmem:[%s4171 + $0x144] sm:$0xf]
        %v11014 = vld [vmem:[%s4171 + $0x148] sm:$0x1]
        %v11015 = vld [vmem:[%s4171 + $0x158] sm:$0xf]
        %v11016 = vld [vmem:[%s4171 + $0x15c] sm:$0xf]
        %v11017 = vld [vmem:[%s4171 + $0x160] sm:$0x1]
        %v11018 = vld [vmem:[%s4171 + $0x170] sm:$0xf]
        %v11019 = vld [vmem:[%s4171 + $0x174] sm:$0xf]
        %v11020 = vld [vmem:[%s4171 + $0x178] sm:$0x1]
        %v11022 = vshrl.u32 %v10973, 16
        %v11024 = vrot.slane %v11022, 4
        %v11025 = vshll.u32 %v10973, 16
        %v11027 = vrot.slane %v11025, 5
        %v11028 = vor.u32 %v11024, %v11027
        %v11029 = vrot.slane %v11028, 4
        %v11031 = vshll.u32 %v10974, 16
        %v11033 = vrot.slane %v11031, 5
        %v11034 = vsel %vm1634, %v11029, %v11033
        %v11035 = vshrl.u32 %v10974, 16
        %v11037 = vrot.slane %v11035, 4
        %v11038 = vor.u32 %v11037, %v11033
        %v11039 = vrot.slane %v11038, 4
        %v11041 = vshll.u32 %v10975, 16
        %v11043 = vrot.slane %v11041, 5
        %v11044 = vsel %vm1634, %v11039, %v11043
        %v11046 = vshrl.u32 %v10976, 16
        %v11048 = vrot.slane %v11046, 4
        %v11049 = vshll.u32 %v10976, 16
        %v11051 = vrot.slane %v11049, 5
        %v11052 = vor.u32 %v11048, %v11051
        %v11053 = vrot.slane %v11052, 4
        %v11055 = vshll.u32 %v10977, 16
        %v11057 = vrot.slane %v11055, 5
        %v11058 = vsel %vm1634, %v11053, %v11057
        %v11059 = vshrl.u32 %v10977, 16
        %v11061 = vrot.slane %v11059, 4
        %v11062 = vor.u32 %v11061, %v11057
        %v11063 = vrot.slane %v11062, 4
        %v11065 = vshll.u32 %v10978, 16
        %v11067 = vrot.slane %v11065, 5
        %v11068 = vsel %vm1634, %v11063, %v11067
        %v11070 = vshrl.u32 %v10979, 16
        %v11072 = vrot.slane %v11070, 4
        %v11073 = vshll.u32 %v10979, 16
        %v11075 = vrot.slane %v11073, 5
        %v11076 = vor.u32 %v11072, %v11075
        %v11077 = vrot.slane %v11076, 4
        %v11079 = vshll.u32 %v10980, 16
        %v11081 = vrot.slane %v11079, 5
        %v11082 = vsel %vm1634, %v11077, %v11081
        %v11083 = vshrl.u32 %v10980, 16
        %v11085 = vrot.slane %v11083, 4
        %v11086 = vor.u32 %v11085, %v11081
        %v11087 = vrot.slane %v11086, 4
        %v11089 = vshll.u32 %v10981, 16
        %v11091 = vrot.slane %v11089, 5
        %v11092 = vsel %vm1634, %v11087, %v11091
        %v11094 = vshrl.u32 %v10982, 16
        %v11096 = vrot.slane %v11094, 4
        %v11097 = vshll.u32 %v10982, 16
        %v11099 = vrot.slane %v11097, 5
        %v11100 = vor.u32 %v11096, %v11099
        %v11101 = vrot.slane %v11100, 4
        %v11103 = vshll.u32 %v10983, 16
        %v11105 = vrot.slane %v11103, 5
        %v11106 = vsel %vm1634, %v11101, %v11105
        %v11107 = vshrl.u32 %v10983, 16
        %v11109 = vrot.slane %v11107, 4
        %v11110 = vor.u32 %v11109, %v11105
        %v11111 = vrot.slane %v11110, 4
        %v11113 = vshll.u32 %v10984, 16
        %v11115 = vrot.slane %v11113, 5
        %v11116 = vsel %vm1634, %v11111, %v11115
        %v11118 = vshrl.u32 %v10985, 16
        %v11120 = vrot.slane %v11118, 4
        %v11121 = vshll.u32 %v10985, 16
        %v11123 = vrot.slane %v11121, 5
        %v11124 = vor.u32 %v11120, %v11123
        %v11125 = vrot.slane %v11124, 4
        %v11127 = vshll.u32 %v10986, 16
        %v11129 = vrot.slane %v11127, 5
        %v11130 = vsel %vm1634, %v11125, %v11129
        %v11131 = vshrl.u32 %v10986, 16
        %v11133 = vrot.slane %v11131, 4
        %v11134 = vor.u32 %v11133, %v11129
        %v11135 = vrot.slane %v11134, 4
        %v11137 = vshll.u32 %v10987, 16
        %v11139 = vrot.slane %v11137, 5
        %v11140 = vsel %vm1634, %v11135, %v11139
        %v11142 = vshrl.u32 %v10988, 16
        %v11144 = vrot.slane %v11142, 4
        %v11145 = vshll.u32 %v10988, 16
        %v11147 = vrot.slane %v11145, 5
        %v11148 = vor.u32 %v11144, %v11147
        %v11149 = vrot.slane %v11148, 4
        %v11151 = vshll.u32 %v10989, 16
        %v11153 = vrot.slane %v11151, 5
        %v11154 = vsel %vm1634, %v11149, %v11153
        %v11155 = vshrl.u32 %v10989, 16
        %v11157 = vrot.slane %v11155, 4
        %v11158 = vor.u32 %v11157, %v11153
        %v11159 = vrot.slane %v11158, 4
        %v11161 = vshll.u32 %v10990, 16
        %v11163 = vrot.slane %v11161, 5
        %v11164 = vsel %vm1634, %v11159, %v11163
        %v11166 = vshrl.u32 %v10991, 16
        %v11168 = vrot.slane %v11166, 4
        %v11169 = vshll.u32 %v10991, 16
        %v11171 = vrot.slane %v11169, 5
        %v11172 = vor.u32 %v11168, %v11171
        %v11173 = vrot.slane %v11172, 4
        %v11175 = vshll.u32 %v10992, 16
        %v11177 = vrot.slane %v11175, 5
        %v11178 = vsel %vm1634, %v11173, %v11177
        %v11179 = vshrl.u32 %v10992, 16
        %v11181 = vrot.slane %v11179, 4
        %v11182 = vor.u32 %v11181, %v11177
        %v11183 = vrot.slane %v11182, 4
        %v11185 = vshll.u32 %v10993, 16
        %v11187 = vrot.slane %v11185, 5
        %v11188 = vsel %vm1634, %v11183, %v11187
        %v11190 = vshrl.u32 %v10994, 16
        %v11192 = vrot.slane %v11190, 4
        %v11193 = vshll.u32 %v10994, 16
        %v11195 = vrot.slane %v11193, 5
        %v11196 = vor.u32 %v11192, %v11195
        %v11197 = vrot.slane %v11196, 4
        %v11199 = vshll.u32 %v10995, 16
        %v11201 = vrot.slane %v11199, 5
        %v11202 = vsel %vm1634, %v11197, %v11201
        %v11203 = vshrl.u32 %v10995, 16
        %v11205 = vrot.slane %v11203, 4
        %v11206 = vor.u32 %v11205, %v11201
        %v11207 = vrot.slane %v11206, 4
        %v11209 = vshll.u32 %v10996, 16
        %v11211 = vrot.slane %v11209, 5
        %v11212 = vsel %vm1634, %v11207, %v11211
        %v11214 = vshrl.u32 %v10997, 16
        %v11216 = vrot.slane %v11214, 4
        %v11217 = vshll.u32 %v10997, 16
        %v11219 = vrot.slane %v11217, 5
        %v11220 = vor.u32 %v11216, %v11219
        %v11221 = vrot.slane %v11220, 4
        %v11223 = vshll.u32 %v10998, 16
        %v11225 = vrot.slane %v11223, 5
        %v11226 = vsel %vm1634, %v11221, %v11225
        %v11227 = vshrl.u32 %v10998, 16
        %v11229 = vrot.slane %v11227, 4
        %v11230 = vor.u32 %v11229, %v11225
        %v11231 = vrot.slane %v11230, 4
        %v11233 = vshll.u32 %v10999, 16
        %v11235 = vrot.slane %v11233, 5
        %v11236 = vsel %vm1634, %v11231, %v11235
        %v11238 = vshrl.u32 %v11000, 16
        %v11240 = vrot.slane %v11238, 4
        %v11241 = vshll.u32 %v11000, 16
        %v11243 = vrot.slane %v11241, 5
        %v11244 = vor.u32 %v11240, %v11243
        %v11245 = vrot.slane %v11244, 4
        %v11247 = vshll.u32 %v11001, 16
        %v11249 = vrot.slane %v11247, 5
        %v11250 = vsel %vm1634, %v11245, %v11249
        %v11251 = vshrl.u32 %v11001, 16
        %v11253 = vrot.slane %v11251, 4
        %v11254 = vor.u32 %v11253, %v11249
        %v11255 = vrot.slane %v11254, 4
        %v11257 = vshll.u32 %v11002, 16
        %v11259 = vrot.slane %v11257, 5
        %v11260 = vsel %vm1634, %v11255, %v11259
        %v11262 = vshrl.u32 %v11003, 16
        %v11264 = vrot.slane %v11262, 4
        %v11265 = vshll.u32 %v11003, 16
        %v11267 = vrot.slane %v11265, 5
        %v11268 = vor.u32 %v11264, %v11267
        %v11269 = vrot.slane %v11268, 4
        %v11271 = vshll.u32 %v11004, 16
        %v11273 = vrot.slane %v11271, 5
        %v11274 = vsel %vm1634, %v11269, %v11273
        %v11275 = vshrl.u32 %v11004, 16
        %v11277 = vrot.slane %v11275, 4
        %v11278 = vor.u32 %v11277, %v11273
        %v11279 = vrot.slane %v11278, 4
        %v11281 = vshll.u32 %v11005, 16
        %v11283 = vrot.slane %v11281, 5
        %v11284 = vsel %vm1634, %v11279, %v11283
        %v11286 = vshrl.u32 %v11006, 16
        %v11288 = vrot.slane %v11286, 4
        %v11289 = vshll.u32 %v11006, 16
        %v11291 = vrot.slane %v11289, 5
        %v11292 = vor.u32 %v11288, %v11291
        %v11293 = vrot.slane %v11292, 4
        %v11295 = vshll.u32 %v11007, 16
        %v11297 = vrot.slane %v11295, 5
        %v11298 = vsel %vm1634, %v11293, %v11297
        %v11299 = vshrl.u32 %v11007, 16
        %v11301 = vrot.slane %v11299, 4
        %v11302 = vor.u32 %v11301, %v11297
        %v11303 = vrot.slane %v11302, 4
        %v11305 = vshll.u32 %v11008, 16
        %v11307 = vrot.slane %v11305, 5
        %v11308 = vsel %vm1634, %v11303, %v11307
        %v11310 = vshrl.u32 %v11009, 16
        %v11312 = vrot.slane %v11310, 4
        %v11313 = vshll.u32 %v11009, 16
        %v11315 = vrot.slane %v11313, 5
        %v11316 = vor.u32 %v11312, %v11315
        %v11317 = vrot.slane %v11316, 4
        %v11319 = vshll.u32 %v11010, 16
        %v11321 = vrot.slane %v11319, 5
        %v11322 = vsel %vm1634, %v11317, %v11321
        %v11323 = vshrl.u32 %v11010, 16
        %v11325 = vrot.slane %v11323, 4
        %v11326 = vor.u32 %v11325, %v11321
        %v11327 = vrot.slane %v11326, 4
        %v11329 = vshll.u32 %v11011, 16
        %v11331 = vrot.slane %v11329, 5
        %v11332 = vsel %vm1634, %v11327, %v11331
        %v11334 = vshrl.u32 %v11012, 16
        %v11336 = vrot.slane %v11334, 4
        %v11337 = vshll.u32 %v11012, 16
        %v11339 = vrot.slane %v11337, 5
        %v11340 = vor.u32 %v11336, %v11339
        %v11341 = vrot.slane %v11340, 4
        %v11343 = vshll.u32 %v11013, 16
        %v11345 = vrot.slane %v11343, 5
        %v11346 = vsel %vm1634, %v11341, %v11345
        %v11347 = vshrl.u32 %v11013, 16
        %v11349 = vrot.slane %v11347, 4
        %v11350 = vor.u32 %v11349, %v11345
        %v11351 = vrot.slane %v11350, 4
        %v11353 = vshll.u32 %v11014, 16
        %v11355 = vrot.slane %v11353, 5
        %v11356 = vsel %vm1634, %v11351, %v11355
        %v11358 = vshrl.u32 %v11015, 16
        %v11360 = vrot.slane %v11358, 4
        %v11361 = vshll.u32 %v11015, 16
        %v11363 = vrot.slane %v11361, 5
        %v11364 = vor.u32 %v11360, %v11363
        %v11365 = vrot.slane %v11364, 4
        %v11367 = vshll.u32 %v11016, 16
        %v11369 = vrot.slane %v11367, 5
        %v11370 = vsel %vm1634, %v11365, %v11369
        %v11371 = vshrl.u32 %v11016, 16
        %v11373 = vrot.slane %v11371, 4
        %v11374 = vor.u32 %v11373, %v11369
        %v11375 = vrot.slane %v11374, 4
        %v11377 = vshll.u32 %v11017, 16
        %v11379 = vrot.slane %v11377, 5
        %v11380 = vsel %vm1634, %v11375, %v11379
        %v11382 = vshrl.u32 %v11018, 16
        %v11384 = vrot.slane %v11382, 4
        %v11385 = vshll.u32 %v11018, 16
        %v11387 = vrot.slane %v11385, 5
        %v11388 = vor.u32 %v11384, %v11387
        %v11389 = vrot.slane %v11388, 4
        %v11391 = vshll.u32 %v11019, 16
        %v11393 = vrot.slane %v11391, 5
        %v11394 = vsel %vm1634, %v11389, %v11393
        %v11395 = vshrl.u32 %v11019, 16
        %v11397 = vrot.slane %v11395, 4
        %v11398 = vor.u32 %v11397, %v11393
        %v11399 = vrot.slane %v11398, 4
        %v11401 = vshll.u32 %v11020, 16
        %v11403 = vrot.slane %v11401, 5
        %v11404 = vsel %vm1634, %v11399, %v11403
        %v11405 = vld [vmem:[#allocation3] sm:$0xff]
        %v11406 = vld [vmem:[#allocation3 + $0x8] sm:$0xff]
        %v11407 = vld [vmem:[#allocation3 + $0x10] sm:$0xff]
        %v11408 = vld [vmem:[#allocation3 + $0x18] sm:$0xff]
        %v11409 = vld [vmem:[#allocation3 + $0x20] sm:$0xff]
        %v11410 = vld [vmem:[#allocation3 + $0x28] sm:$0xff]
        %v11411 = vld [vmem:[#allocation3 + $0x30] sm:$0xff]
        %v11412 = vld [vmem:[#allocation3 + $0x38] sm:$0xff]
        %v11413 = vld [vmem:[#allocation3 + $0x40] sm:$0xff]
        %v11414 = vld [vmem:[#allocation3 + $0x48] sm:$0xff]
        %v11415 = vld [vmem:[#allocation3 + $0x50] sm:$0xff]
        %v11416 = vld [vmem:[#allocation3 + $0x58] sm:$0xff]
        %v11417 = vld [vmem:[#allocation3 + $0x60] sm:$0xff]
        %v11418 = vld [vmem:[#allocation3 + $0x68] sm:$0xff]
        %v11419 = vld [vmem:[#allocation3 + $0x70] sm:$0xff]
        %v11420 = vld [vmem:[#allocation3 + $0x78] sm:$0xff]
        %v11421 = vld [vmem:[#allocation3 + $0x80] sm:$0xff]
        %v11422 = vld [vmem:[#allocation3 + $0x88] sm:$0xff]
        %v11423 = vld [vmem:[#allocation3 + $0x90] sm:$0xff]
        %v11424 = vld [vmem:[#allocation3 + $0x98] sm:$0xff]
        %v11425 = vld [vmem:[#allocation3 + $0xa0] sm:$0xff]
        %v11426 = vld [vmem:[#allocation3 + $0xa8] sm:$0xff]
        %v11427 = vld [vmem:[#allocation3 + $0xb0] sm:$0xff]
        %v11428 = vld [vmem:[#allocation3 + $0xb8] sm:$0xff]
        %v11429 = vld [vmem:[#allocation3 + $0xc0] sm:$0xff]
        %v11430 = vld [vmem:[#allocation3 + $0xc8] sm:$0xff]
        %v11431 = vld [vmem:[#allocation3 + $0xd0] sm:$0xff]
        %v11432 = vld [vmem:[#allocation3 + $0xd8] sm:$0xff]
        %v11433 = vld [vmem:[#allocation3 + $0xe0] sm:$0xff]
        %v11434 = vld [vmem:[#allocation3 + $0xe8] sm:$0xff]
        %v11435 = vld [vmem:[#allocation3 + $0xf0] sm:$0xff]
        %v11436 = vld [vmem:[#allocation3 + $0xf8] sm:$0xff]
        %s11437 = scalar_lea.vmem [#allocation9], 512
        %v11438 = vld [vmem:[%s11437] sm:$0xf]
        %v11439 = vld [vmem:[%s11437 + $0x4] sm:$0xf]
        %v11440 = vld [vmem:[%s11437 + $0x8] sm:$0xf]
        %v11441 = vld [vmem:[%s11437 + $0xc] sm:$0xf]
        %v11442 = vld [vmem:[%s11437 + $0x10] sm:$0xf]
        %v11443 = vld [vmem:[%s11437 + $0x14] sm:$0xf]
        %v11444 = vld [vmem:[%s11437 + $0x18] sm:$0xf]
        %v11445 = vld [vmem:[%s11437 + $0x1c] sm:$0xf]
        %v11446 = vld [vmem:[%s11437 + $0x20] sm:$0xf]
        %v11447 = vld [vmem:[%s11437 + $0x24] sm:$0xf]
        %v11448 = vld [vmem:[%s11437 + $0x28] sm:$0xf]
        %v11449 = vld [vmem:[%s11437 + $0x2c] sm:$0xf]
        %v11450 = vld [vmem:[%s11437 + $0x30] sm:$0xf]
        %v11451 = vld [vmem:[%s11437 + $0x34] sm:$0xf]
        %v11452 = vld [vmem:[%s11437 + $0x38] sm:$0xf]
        %v11453 = vld [vmem:[%s11437 + $0x3c] sm:$0xf]
        %v11454 = vunpack.c.l.b16 %v11034
        %v11455 = vunpack.c.l.b16 %v11044
        %v11456 = vunpack.c.l.b16 %v11058
        %v11457 = vunpack.c.l.b16 %v11068
        %v11458 = vunpack.c.l.b16 %v11082
        %v11459 = vunpack.c.l.b16 %v11092
        %v11460 = vunpack.c.l.b16 %v11106
        %v11461 = vunpack.c.l.b16 %v11116
        %v11462 = vunpack.c.l.b16 %v11130
        %v11463 = vunpack.c.l.b16 %v11140
        %v11464 = vunpack.c.l.b16 %v11154
        %v11465 = vunpack.c.l.b16 %v11164
        %v11466 = vunpack.c.l.b16 %v11178
        %v11467 = vunpack.c.l.b16 %v11188
        %v11468 = vunpack.c.l.b16 %v11202
        %v11469 = vunpack.c.l.b16 %v11212
        %v11470 = vunpack.c.l.b16 %v11226
        %v11471 = vunpack.c.l.b16 %v11236
        %v11472 = vunpack.c.l.b16 %v11250
        %v11473 = vunpack.c.l.b16 %v11260
        %v11474 = vunpack.c.l.b16 %v11274
        %v11475 = vunpack.c.l.b16 %v11284
        %v11476 = vunpack.c.l.b16 %v11298
        %v11477 = vunpack.c.l.b16 %v11308
        %v11478 = vunpack.c.l.b16 %v11322
        %v11479 = vunpack.c.l.b16 %v11332
        %v11480 = vunpack.c.l.b16 %v11346
        %v11481 = vunpack.c.l.b16 %v11356
        %v11482 = vunpack.c.l.b16 %v11370
        %v11483 = vunpack.c.l.b16 %v11380
        %v11484 = vunpack.c.l.b16 %v11394
        %v11485 = vunpack.c.l.b16 %v11404
        %v11486 = vpack.c.b16 %v11455, %v11454
        %v11487 = vpack.c.b16 %v11457, %v11456
        %v11488 = vpack.c.b16 %v11459, %v11458
        %v11489 = vpack.c.b16 %v11461, %v11460
        %v11490 = vpack.c.b16 %v11463, %v11462
        %v11491 = vpack.c.b16 %v11465, %v11464
        %v11492 = vpack.c.b16 %v11467, %v11466
        %v11493 = vpack.c.b16 %v11469, %v11468
        %v11494 = vpack.c.b16 %v11471, %v11470
        %v11495 = vpack.c.b16 %v11473, %v11472
        %v11496 = vpack.c.b16 %v11475, %v11474
        %v11497 = vpack.c.b16 %v11477, %v11476
        %v11498 = vpack.c.b16 %v11479, %v11478
        %v11499 = vpack.c.b16 %v11481, %v11480
        %v11500 = vpack.c.b16 %v11483, %v11482
        %v11501 = vpack.c.b16 %v11485, %v11484
        %v11534 = vunpack.c.l.b16 %v11438
        %v11535 = vunpack.c.l.b16 %v11439
        %v11536 = vunpack.c.l.b16 %v11440
        %v11537 = vunpack.c.l.b16 %v11441
        %v11538 = vunpack.c.l.b16 %v11442
        %v11539 = vunpack.c.l.b16 %v11443
        %v11540 = vunpack.c.l.b16 %v11444
        %v11541 = vunpack.c.l.b16 %v11445
        %v11542 = vunpack.c.l.b16 %v11446
        %v11543 = vunpack.c.l.b16 %v11447
        %v11544 = vunpack.c.l.b16 %v11448
        %v11545 = vunpack.c.l.b16 %v11449
        %v11546 = vunpack.c.l.b16 %v11450
        %v11547 = vunpack.c.l.b16 %v11451
        %v11548 = vunpack.c.l.b16 %v11452
        %v11549 = vunpack.c.l.b16 %v11453
        %v11550 = vpack.c.b16 %v11535, %v11534
        %v11551 = vpack.c.b16 %v11537, %v11536
        %v11552 = vpack.c.b16 %v11539, %v11538
        %v11553 = vpack.c.b16 %v11541, %v11540
        %v11554 = vpack.c.b16 %v11543, %v11542
        %v11555 = vpack.c.b16 %v11545, %v11544
        %v11556 = vpack.c.b16 %v11547, %v11546
        %v11557 = vpack.c.b16 %v11549, %v11548
        %11566 = vmatpush.bf16.msra.mxu0 %v11557
        %11567 = vmatpush.bf16.msra.mxu0 %v11556
        %11568 = vmatpush.bf16.msra.mxu0 %v11555
        %11569 = vmatpush.bf16.msra.mxu0 %v11554
        %11570 = vmatpush.bf16.msra.mxu0 %v11553
        %11571 = vmatpush.bf16.msra.mxu0 %v11552
        %11572 = vmatpush.bf16.msra.mxu0 %v11551
        %11573 = vmatpush.bf16.msra.mxu0 %v11550
        %11574 = vmatmul.bf16.gmra.mxu0 %v11486
        %v11575 = vpop.f32.mrf.mxu0
        %v11576 = vadd.f32 0.0, %v11575
        %v11577 = vpop.f32.mrf.mxu0
        %v11578 = vadd.f32 0.0, %v11577
        %11579 = vmatmul.bf16.gmra.mxu0 %v11487
        %v11580 = vpop.f32.mrf.mxu0
        %v11581 = vadd.f32 0.0, %v11580
        %v11582 = vpop.f32.mrf.mxu0
        %v11583 = vadd.f32 0.0, %v11582
        %11584 = vmatmul.bf16.gmra.mxu0 %v11488
        %v11585 = vpop.f32.mrf.mxu0
        %v11586 = vadd.f32 0.0, %v11585
        %v11587 = vpop.f32.mrf.mxu0
        %v11588 = vadd.f32 0.0, %v11587
        %11589 = vmatmul.bf16.gmra.mxu0 %v11489
        %v11590 = vpop.f32.mrf.mxu0
        %v11591 = vadd.f32 0.0, %v11590
        %v11592 = vpop.f32.mrf.mxu0
        %v11593 = vadd.f32 0.0, %v11592
        %11594 = vmatmul.bf16.gmra.mxu0 %v11490
        %v11595 = vpop.f32.mrf.mxu0
        %v11596 = vadd.f32 0.0, %v11595
        %v11597 = vpop.f32.mrf.mxu0
        %v11598 = vadd.f32 0.0, %v11597
        %11599 = vmatmul.bf16.gmra.mxu0 %v11491
        %v11600 = vpop.f32.mrf.mxu0
        %v11601 = vadd.f32 0.0, %v11600
        %v11602 = vpop.f32.mrf.mxu0
        %v11603 = vadd.f32 0.0, %v11602
        %11604 = vmatmul.bf16.gmra.mxu0 %v11492
        %v11605 = vpop.f32.mrf.mxu0
        %v11606 = vadd.f32 0.0, %v11605
        %v11607 = vpop.f32.mrf.mxu0
        %v11608 = vadd.f32 0.0, %v11607
        %11609 = vmatmul.bf16.gmra.mxu0 %v11493
        %v11610 = vpop.f32.mrf.mxu0
        %v11611 = vadd.f32 0.0, %v11610
        %v11612 = vpop.f32.mrf.mxu0
        %v11613 = vadd.f32 0.0, %v11612
        %11614 = vmatmul.bf16.gmra.mxu0 %v11494
        %v11615 = vpop.f32.mrf.mxu0
        %v11616 = vadd.f32 0.0, %v11615
        %v11617 = vpop.f32.mrf.mxu0
        %v11618 = vadd.f32 0.0, %v11617
        %11619 = vmatmul.bf16.gmra.mxu0 %v11495
        %v11620 = vpop.f32.mrf.mxu0
        %v11621 = vadd.f32 0.0, %v11620
        %v11622 = vpop.f32.mrf.mxu0
        %v11623 = vadd.f32 0.0, %v11622
        %11624 = vmatmul.bf16.gmra.mxu0 %v11496
        %v11625 = vpop.f32.mrf.mxu0
        %v11626 = vadd.f32 0.0, %v11625
        %v11627 = vpop.f32.mrf.mxu0
        %v11628 = vadd.f32 0.0, %v11627
        %11629 = vmatmul.bf16.gmra.mxu0 %v11497
        %v11630 = vpop.f32.mrf.mxu0
        %v11631 = vadd.f32 0.0, %v11630
        %v11632 = vpop.f32.mrf.mxu0
        %v11633 = vadd.f32 0.0, %v11632
        %11634 = vmatmul.bf16.gmra.mxu0 %v11498
        %v11635 = vpop.f32.mrf.mxu0
        %v11636 = vadd.f32 0.0, %v11635
        %v11637 = vpop.f32.mrf.mxu0
        %v11638 = vadd.f32 0.0, %v11637
        %11639 = vmatmul.bf16.gmra.mxu0 %v11499
        %v11640 = vpop.f32.mrf.mxu0
        %v11641 = vadd.f32 0.0, %v11640
        %v11642 = vpop.f32.mrf.mxu0
        %v11643 = vadd.f32 0.0, %v11642
        %11644 = vmatmul.bf16.gmra.mxu0 %v11500
        %v11645 = vpop.f32.mrf.mxu0
        %v11646 = vadd.f32 0.0, %v11645
        %v11647 = vpop.f32.mrf.mxu0
        %v11648 = vadd.f32 0.0, %v11647
        %11649 = vmatmul.bf16.gmra.mxu0 %v11501
        %v11650 = vpop.f32.mrf.mxu0
        %v11651 = vadd.f32 0.0, %v11650
        %v11652 = vpop.f32.mrf.mxu0
        %v11653 = vadd.f32 0.0, %v11652
        %11654 = vdwg.mxu0
        %v11655 = vadd.f32 %v11405, %v11576
        %v11656 = vadd.f32 %v11406, %v11578
        %v11657 = vadd.f32 %v11407, %v11581
        %v11658 = vadd.f32 %v11408, %v11583
        %v11659 = vadd.f32 %v11409, %v11586
        %v11660 = vadd.f32 %v11410, %v11588
        %v11661 = vadd.f32 %v11411, %v11591
        %v11662 = vadd.f32 %v11412, %v11593
        %v11663 = vadd.f32 %v11413, %v11596
        %v11664 = vadd.f32 %v11414, %v11598
        %v11665 = vadd.f32 %v11415, %v11601
        %v11666 = vadd.f32 %v11416, %v11603
        %v11667 = vadd.f32 %v11417, %v11606
        %v11668 = vadd.f32 %v11418, %v11608
        %v11669 = vadd.f32 %v11419, %v11611
        %v11670 = vadd.f32 %v11420, %v11613
        %v11671 = vadd.f32 %v11421, %v11616
        %v11672 = vadd.f32 %v11422, %v11618
        %v11673 = vadd.f32 %v11423, %v11621
        %v11674 = vadd.f32 %v11424, %v11623
        %v11675 = vadd.f32 %v11425, %v11626
        %v11676 = vadd.f32 %v11426, %v11628
        %v11677 = vadd.f32 %v11427, %v11631
        %v11678 = vadd.f32 %v11428, %v11633
        %v11679 = vadd.f32 %v11429, %v11636
        %v11680 = vadd.f32 %v11430, %v11638
        %v11681 = vadd.f32 %v11431, %v11641
        %v11682 = vadd.f32 %v11432, %v11643
        %v11683 = vadd.f32 %v11433, %v11646
        %v11684 = vadd.f32 %v11434, %v11648
        %v11685 = vadd.f32 %v11435, %v11651
        %v11686 = vadd.f32 %v11436, %v11653
        %11687 = vst [vmem:[#allocation3] sm:$0xff] %v11655
        %11688 = vst [vmem:[#allocation3 + $0x8] sm:$0xff] %v11656
        %11689 = vst [vmem:[#allocation3 + $0x10] sm:$0xff] %v11657
        %11690 = vst [vmem:[#allocation3 + $0x18] sm:$0xff] %v11658
        %11691 = vst [vmem:[#allocation3 + $0x20] sm:$0xff] %v11659
        %11692 = vst [vmem:[#allocation3 + $0x28] sm:$0xff] %v11660
        %11693 = vst [vmem:[#allocation3 + $0x30] sm:$0xff] %v11661
        %11694 = vst [vmem:[#allocation3 + $0x38] sm:$0xff] %v11662
        %11695 = vst [vmem:[#allocation3 + $0x40] sm:$0xff] %v11663
        %11696 = vst [vmem:[#allocation3 + $0x48] sm:$0xff] %v11664
        %11697 = vst [vmem:[#allocation3 + $0x50] sm:$0xff] %v11665
        %11698 = vst [vmem:[#allocation3 + $0x58] sm:$0xff] %v11666
        %11699 = vst [vmem:[#allocation3 + $0x60] sm:$0xff] %v11667
        %11700 = vst [vmem:[#allocation3 + $0x68] sm:$0xff] %v11668
        %11701 = vst [vmem:[#allocation3 + $0x70] sm:$0xff] %v11669
        %11702 = vst [vmem:[#allocation3 + $0x78] sm:$0xff] %v11670
        %11703 = vst [vmem:[#allocation3 + $0x80] sm:$0xff] %v11671
        %11704 = vst [vmem:[#allocation3 + $0x88] sm:$0xff] %v11672
        %11705 = vst [vmem:[#allocation3 + $0x90] sm:$0xff] %v11673
        %11706 = vst [vmem:[#allocation3 + $0x98] sm:$0xff] %v11674
        %11707 = vst [vmem:[#allocation3 + $0xa0] sm:$0xff] %v11675
        %11708 = vst [vmem:[#allocation3 + $0xa8] sm:$0xff] %v11676
        %11709 = vst [vmem:[#allocation3 + $0xb0] sm:$0xff] %v11677
        %11710 = vst [vmem:[#allocation3 + $0xb8] sm:$0xff] %v11678
        %11711 = vst [vmem:[#allocation3 + $0xc0] sm:$0xff] %v11679
        %11712 = vst [vmem:[#allocation3 + $0xc8] sm:$0xff] %v11680
        %11713 = vst [vmem:[#allocation3 + $0xd0] sm:$0xff] %v11681
        %11714 = vst [vmem:[#allocation3 + $0xd8] sm:$0xff] %v11682
        %11715 = vst [vmem:[#allocation3 + $0xe0] sm:$0xff] %v11683
        %11716 = vst [vmem:[#allocation3 + $0xe8] sm:$0xff] %v11684
        %11717 = vst [vmem:[#allocation3 + $0xf0] sm:$0xff] %v11685
        %11718 = vst [vmem:[#allocation3 + $0xf8] sm:$0xff] %v11686
        %v11719 = vld [vmem:[#allocation3] sm:$0xff]
        %v11720 = vld [vmem:[#allocation3 + $0x8] sm:$0xff]
        %v11721 = vld [vmem:[#allocation3 + $0x10] sm:$0xff]
        %v11722 = vld [vmem:[#allocation3 + $0x18] sm:$0xff]
        %v11723 = vld [vmem:[#allocation3 + $0x20] sm:$0xff]
        %v11724 = vld [vmem:[#allocation3 + $0x28] sm:$0xff]
        %v11725 = vld [vmem:[#allocation3 + $0x30] sm:$0xff]
        %v11726 = vld [vmem:[#allocation3 + $0x38] sm:$0xff]
        %v11727 = vld [vmem:[#allocation3 + $0x40] sm:$0xff]
        %v11728 = vld [vmem:[#allocation3 + $0x48] sm:$0xff]
        %v11729 = vld [vmem:[#allocation3 + $0x50] sm:$0xff]
        %v11730 = vld [vmem:[#allocation3 + $0x58] sm:$0xff]
        %v11731 = vld [vmem:[#allocation3 + $0x60] sm:$0xff]
        %v11732 = vld [vmem:[#allocation3 + $0x68] sm:$0xff]
        %v11733 = vld [vmem:[#allocation3 + $0x70] sm:$0xff]
        %v11734 = vld [vmem:[#allocation3 + $0x78] sm:$0xff]
        %v11735 = vld [vmem:[#allocation3 + $0x80] sm:$0xff]
        %v11736 = vld [vmem:[#allocation3 + $0x88] sm:$0xff]
        %v11737 = vld [vmem:[#allocation3 + $0x90] sm:$0xff]
        %v11738 = vld [vmem:[#allocation3 + $0x98] sm:$0xff]
        %v11739 = vld [vmem:[#allocation3 + $0xa0] sm:$0xff]
        %v11740 = vld [vmem:[#allocation3 + $0xa8] sm:$0xff]
        %v11741 = vld [vmem:[#allocation3 + $0xb0] sm:$0xff]
        %v11742 = vld [vmem:[#allocation3 + $0xb8] sm:$0xff]
        %v11743 = vld [vmem:[#allocation3 + $0xc0] sm:$0xff]
        %v11744 = vld [vmem:[#allocation3 + $0xc8] sm:$0xff]
        %v11745 = vld [vmem:[#allocation3 + $0xd0] sm:$0xff]
        %v11746 = vld [vmem:[#allocation3 + $0xd8] sm:$0xff]
        %v11747 = vld [vmem:[#allocation3 + $0xe0] sm:$0xff]
        %v11748 = vld [vmem:[#allocation3 + $0xe8] sm:$0xff]
        %v11749 = vld [vmem:[#allocation3 + $0xf0] sm:$0xff]
        %v11750 = vld [vmem:[#allocation3 + $0xf8] sm:$0xff]
        %v11751 = vld [vmem:[%s4] sm:$0x1]
        %v11753 = vperm.slane %v11751, 0
        %v11755 = vadd.f32 %v11719, %v11753
        %v11756 = vadd.f32 %v11720, %v11753
        %v11757 = vadd.f32 %v11721, %v11753
        %v11758 = vadd.f32 %v11722, %v11753
        %v11759 = vadd.f32 %v11723, %v11753
        %v11760 = vadd.f32 %v11724, %v11753
        %v11761 = vadd.f32 %v11725, %v11753
        %v11762 = vadd.f32 %v11726, %v11753
        %v11763 = vadd.f32 %v11727, %v11753
        %v11764 = vadd.f32 %v11728, %v11753
        %v11765 = vadd.f32 %v11729, %v11753
        %v11766 = vadd.f32 %v11730, %v11753
        %v11767 = vadd.f32 %v11731, %v11753
        %v11768 = vadd.f32 %v11732, %v11753
        %v11769 = vadd.f32 %v11733, %v11753
        %v11770 = vadd.f32 %v11734, %v11753
        %v11771 = vadd.f32 %v11735, %v11753
        %v11772 = vadd.f32 %v11736, %v11753
        %v11773 = vadd.f32 %v11737, %v11753
        %v11774 = vadd.f32 %v11738, %v11753
        %v11775 = vadd.f32 %v11739, %v11753
        %v11776 = vadd.f32 %v11740, %v11753
        %v11777 = vadd.f32 %v11741, %v11753
        %v11778 = vadd.f32 %v11742, %v11753
        %v11779 = vadd.f32 %v11743, %v11753
        %v11780 = vadd.f32 %v11744, %v11753
        %v11781 = vadd.f32 %v11745, %v11753
        %v11782 = vadd.f32 %v11746, %v11753
        %v11783 = vadd.f32 %v11747, %v11753
        %v11784 = vadd.f32 %v11748, %v11753
        %v11785 = vadd.f32 %v11749, %v11753
        %v11786 = vadd.f32 %v11750, %v11753
        %v11787 = vmax.f32 %v11755, 0.0
        %v11788 = vmax.f32 %v11756, 0.0
        %v11789 = vmax.f32 %v11757, 0.0
        %v11790 = vmax.f32 %v11758, 0.0
        %v11791 = vmax.f32 %v11759, 0.0
        %v11792 = vmax.f32 %v11760, 0.0
        %v11793 = vmax.f32 %v11761, 0.0
        %v11794 = vmax.f32 %v11762, 0.0
        %v11795 = vmax.f32 %v11763, 0.0
        %v11796 = vmax.f32 %v11764, 0.0
        %v11797 = vmax.f32 %v11765, 0.0
        %v11798 = vmax.f32 %v11766, 0.0
        %v11799 = vmax.f32 %v11767, 0.0
        %v11800 = vmax.f32 %v11768, 0.0
        %v11801 = vmax.f32 %v11769, 0.0
        %v11802 = vmax.f32 %v11770, 0.0
        %v11803 = vmax.f32 %v11771, 0.0
        %v11804 = vmax.f32 %v11772, 0.0
        %v11805 = vmax.f32 %v11773, 0.0
        %v11806 = vmax.f32 %v11774, 0.0
        %v11807 = vmax.f32 %v11775, 0.0
        %v11808 = vmax.f32 %v11776, 0.0
        %v11809 = vmax.f32 %v11777, 0.0
        %v11810 = vmax.f32 %v11778, 0.0
        %v11811 = vmax.f32 %v11779, 0.0
        %v11812 = vmax.f32 %v11780, 0.0
        %v11813 = vmax.f32 %v11781, 0.0
        %v11814 = vmax.f32 %v11782, 0.0
        %v11815 = vmax.f32 %v11783, 0.0
        %v11816 = vmax.f32 %v11784, 0.0
        %v11817 = vmax.f32 %v11785, 0.0
        %v11818 = vmax.f32 %v11786, 0.0
        %v11819 = vpack.c.bf16 %v11787, %v11787
        %v11820 = vpack.c.bf16 %v11788, %v11788
        %v11821 = vpack.c.bf16 %v11789, %v11789
        %v11822 = vpack.c.bf16 %v11790, %v11790
        %v11823 = vpack.c.bf16 %v11791, %v11791
        %v11824 = vpack.c.bf16 %v11792, %v11792
        %v11825 = vpack.c.bf16 %v11793, %v11793
        %v11826 = vpack.c.bf16 %v11794, %v11794
        %v11827 = vpack.c.bf16 %v11795, %v11795
        %v11828 = vpack.c.bf16 %v11796, %v11796
        %v11829 = vpack.c.bf16 %v11797, %v11797
        %v11830 = vpack.c.bf16 %v11798, %v11798
        %v11831 = vpack.c.bf16 %v11799, %v11799
        %v11832 = vpack.c.bf16 %v11800, %v11800
        %v11833 = vpack.c.bf16 %v11801, %v11801
        %v11834 = vpack.c.bf16 %v11802, %v11802
        %v11835 = vpack.c.bf16 %v11803, %v11803
        %v11836 = vpack.c.bf16 %v11804, %v11804
        %v11837 = vpack.c.bf16 %v11805, %v11805
        %v11838 = vpack.c.bf16 %v11806, %v11806
        %v11839 = vpack.c.bf16 %v11807, %v11807
        %v11840 = vpack.c.bf16 %v11808, %v11808
        %v11841 = vpack.c.bf16 %v11809, %v11809
        %v11842 = vpack.c.bf16 %v11810, %v11810
        %v11843 = vpack.c.bf16 %v11811, %v11811
        %v11844 = vpack.c.bf16 %v11812, %v11812
        %v11845 = vpack.c.bf16 %v11813, %v11813
        %v11846 = vpack.c.bf16 %v11814, %v11814
        %v11847 = vpack.c.bf16 %v11815, %v11815
        %v11848 = vpack.c.bf16 %v11816, %v11816
        %v11849 = vpack.c.bf16 %v11817, %v11817
        %v11850 = vpack.c.bf16 %v11818, %v11818
        %11851 = vst [vmem:[%s277] sm:$0xf] %v11819
        %11852 = vst [vmem:[%s277 + $0x4] sm:$0xf] %v11820
        %11853 = vst [vmem:[%s277 + $0x8] sm:$0xf] %v11821
        %11854 = vst [vmem:[%s277 + $0xc] sm:$0xf] %v11822
        %11855 = vst [vmem:[%s277 + $0x10] sm:$0xf] %v11823
        %11856 = vst [vmem:[%s277 + $0x14] sm:$0xf] %v11824
        %11857 = vst [vmem:[%s277 + $0x18] sm:$0xf] %v11825
        %11858 = vst [vmem:[%s277 + $0x1c] sm:$0xf] %v11826
        %11859 = vst [vmem:[%s277 + $0x20] sm:$0xf] %v11827
        %11860 = vst [vmem:[%s277 + $0x24] sm:$0xf] %v11828
        %11861 = vst [vmem:[%s277 + $0x28] sm:$0xf] %v11829
        %11862 = vst [vmem:[%s277 + $0x2c] sm:$0xf] %v11830
        %11863 = vst [vmem:[%s277 + $0x30] sm:$0xf] %v11831
        %11864 = vst [vmem:[%s277 + $0x34] sm:$0xf] %v11832
        %11865 = vst [vmem:[%s277 + $0x38] sm:$0xf] %v11833
        %11866 = vst [vmem:[%s277 + $0x3c] sm:$0xf] %v11834
        %11867 = vst [vmem:[%s277 + $0x40] sm:$0xf] %v11835
        %11868 = vst [vmem:[%s277 + $0x44] sm:$0xf] %v11836
        %11869 = vst [vmem:[%s277 + $0x48] sm:$0xf] %v11837
        %11870 = vst [vmem:[%s277 + $0x4c] sm:$0xf] %v11838
        %11871 = vst [vmem:[%s277 + $0x50] sm:$0xf] %v11839
        %11872 = vst [vmem:[%s277 + $0x54] sm:$0xf] %v11840
        %11873 = vst [vmem:[%s277 + $0x58] sm:$0xf] %v11841
        %11874 = vst [vmem:[%s277 + $0x5c] sm:$0xf] %v11842
        %11875 = vst [vmem:[%s277 + $0x60] sm:$0xf] %v11843
        %11876 = vst [vmem:[%s277 + $0x64] sm:$0xf] %v11844
        %11877 = vst [vmem:[%s277 + $0x68] sm:$0xf] %v11845
        %11878 = vst [vmem:[%s277 + $0x6c] sm:$0xf] %v11846
        %11879 = vst [vmem:[%s277 + $0x70] sm:$0xf] %v11847
        %11880 = vst [vmem:[%s277 + $0x74] sm:$0xf] %v11848
        %11881 = vst [vmem:[%s277 + $0x78] sm:$0xf] %v11849
        %11882 = vst [vmem:[%s277 + $0x7c] sm:$0xf] %v11850
        %s11883 = sand.u32 %s141, 1
        %s11884 = scalar_lea.sflag [#allocation6], %s11883
        %s11885 = sand.u32 %s141, 1
        %s11886 = smul.addr %s11885, 128
        %s11887 = scalar_lea.vmem [#allocation10], %s11886
        // Predicated region
        $region53: #{tpu_custom_call.1} parent=39 // pred_check
          %p11888 = pneg %p151
        $region54: #{tpu_custom_call.1} parent=39 // pred_check_branch
          %11890 = sbr.rel (%p11888) target = $region56
        $region55: #{tpu_custom_call.1} parent=39 // pred_region
          %11892 = vsyncadd %s11884, 0
          %s11893 = smul.addr %s23, 32
          %s11894 = smul.addr %s11893, 4
          %s11895 = scalar_lea.hbm %s5, %s11894
          %s11896 = sshll.u32 %s11887, 4
          %s11897 = int_to_ptr.vmem [resolvable:$true] %s11896
          %s11898 = sshll.u32 %s11895, 4
          %s11899 = int_to_ptr.hbm [resolvable:$true] %s11898
          %11904 = dma.vmem_to_hbm [thread:$0]  %s11897, 2048, %s11899, %s11884, 64, 64, 4
        $region56: #{tpu_custom_call.1} parent=39 // pred_fallthru
          _
      $region40: #{tpu_custom_call.1} parent=5 // pred_fallthru
        _
      %p11905 = scmp.le.s32.totalorder 2, %s18
      // Predicated region
      $region57: #{tpu_custom_call.1} parent=5 // pred_check
        %p11906 = pneg %p11905
      $region58: #{tpu_custom_call.1} parent=5 // pred_check_branch
        %11908 = sbr.rel (%p11906) target = $region60
      $region59: #{tpu_custom_call.1} parent=5 // pred_region
        %s11909 = ssub.s32 %s18, 2
        // Predicated region
        $region61: #{tpu_custom_call.1} parent=59 // pred_check
          %p11910 = pneg %p157
        $region62: #{tpu_custom_call.1} parent=59 // pred_check_branch
          %11912 = sbr.rel (%p11910) target = $region64
        $region63: #{tpu_custom_call.1} parent=59 // pred_region
          %s11913 = sand.u32 %s142, 1
          %s11914 = scalar_lea.sflag [#allocation6], %s11913
          %s11915 = sand.u32 %s142, 1
          %s11916 = smul.addr %s11915, 128
          %s11917 = scalar_lea.vmem [#allocation10], %s11916
          %11919 = dma.done %s11914, 2048
        $region64: #{tpu_custom_call.1} parent=59 // pred_fallthru
          _
      $region60: #{tpu_custom_call.1} parent=5 // pred_fallthru
        _
    $region6: #{tpu_custom_call.1} parent=1 // loop_footer
      %s22 = sadd.s32 1, %s18
    $region7: #{tpu_custom_call.1} parent=1 // loop_footer_branch
      %17 = sbr.rel target = $region3
    $region8: #{tpu_custom_call.1} parent=1 // loop_exit
      _
    %11920 = vsyncpa [#allocation5], 1
    %s11921 = scalar_lea.sflag [#allocation5], 1
    %11922 = vsyncpa %s11921, 1
    %11923 = vsyncpa [#allocation8], 1
    %11924 = vsyncpa [#allocation6], 1
    %s11925 = scalar_lea.sflag [#allocation6], 1
    %11926 = vsyncpa %s11925, 1

</llo_original>
